<compile_context>
chip_gen: v7x
topology: tpu7x:2x2x1
jax: 0.10.0
libtpu: 0.0.40
codegen_flags: <defaults>
</compile_context>

<pallas_src>
import functools

import jax
import jax.numpy as jnp
from jax.experimental import pallas as pl
from jax.experimental.pallas import tpu as pltpu

LATENT_DIM = 5
HID1, HID2, HID3, OUT_DIM = 2000, 500, 500, 2000

# Lane-dense padded feature dims (multiples of 128).
HID1_P, HID2_P, HID3_P, OUT_P = 2048, 512, 512, 2048

_VMEM_LIMIT_BYTES = 48 * 1024 * 1024  # <= v7x 64 MiB/TC; fine on v5e/v6e too.


def _round_up(x, m):
    return (x + m - 1) // m * m


def _cdiv(a, b):
    return -(-a // b)


def _decoder_kernel(z_ref, w1_ref, b1_ref, w2_ref, b2_ref,
                    w3_ref, b3_ref, w4_ref, b4_ref, o_ref):
    # ---- Layer 1 on the VPU (K=5 is far too skinny to feed the MXU). ------
    z = z_ref[...]            # (bb, 5)  f32
    w1 = w1_ref[...]          # (5, 2048) f32
    acc = z[:, 0:1] * w1[0:1, :]
    for k in range(1, LATENT_DIM):          # static unroll, 5 broadcast FMAs
        acc = acc + z[:, k:k + 1] * w1[k:k + 1, :]
    # Fused epilogue: bias + ReLU + bf16 cast in one expression.
    h = jnp.maximum(acc + b1_ref[...], 0.0).astype(jnp.bfloat16)

    # ---- Layers 2-4 on the MXU: bf16 operands, f32 accumulation. ----------
    h = jnp.maximum(
        jnp.dot(h, w2_ref[...], preferred_element_type=jnp.float32)
        + b2_ref[...], 0.0).astype(jnp.bfloat16)
    h = jnp.maximum(
        jnp.dot(h, w3_ref[...], preferred_element_type=jnp.float32)
        + b3_ref[...], 0.0).astype(jnp.bfloat16)
    o = jnp.dot(h, w4_ref[...], preferred_element_type=jnp.float32) + b4_ref[...]
    o_ref[...] = o.astype(o_ref.dtype)


def _build_decoder_call(bb, b_pad, out_dtype):
    """pallas_call for a (b_pad, LATENT_DIM) padded input, batch tile bb."""
    def whole(shape):
        # Full-array block, constant block index -> resident in VMEM,
        # DMA'd once by the pipeliner regardless of grid length.
        return pl.BlockSpec(shape, lambda i: (0, 0))

    return pl.pallas_call(
        _decoder_kernel,
        out_shape=jax.ShapeDtypeStruct((b_pad, OUT_P), out_dtype),
        grid_spec=pltpu.PrefetchScalarGridSpec(
            num_scalar_prefetch=0,
            grid=(b_pad // bb,),
            in_specs=[
                pl.BlockSpec((bb, LATENT_DIM), lambda i: (i, 0)),   # z tile
                whole((LATENT_DIM, HID1_P)), whole((1, HID1_P)),    # w1 (f32), b1
                whole((HID1_P, HID2_P)), whole((1, HID2_P)),        # w2 (bf16), b2
                whole((HID2_P, HID3_P)), whole((1, HID3_P)),        # w3 (bf16), b3
                whole((HID3_P, OUT_P)), whole((1, OUT_P)),          # w4 (bf16), b4
            ],
            out_specs=pl.BlockSpec((bb, OUT_P), lambda i: (i, 0)),
        ),
        compiler_params=pltpu.CompilerParams(
            dimension_semantics=("parallel",),
            vmem_limit_bytes=_VMEM_LIMIT_BYTES,
        ),
    )


@functools.partial(jax.jit, static_argnames=("bb", "out_dtype"))
def _decoder_impl(z_pad, w1, b1, w2, b2, w3, b3, w4, b4, *, bb, out_dtype):
    call = _build_decoder_call(bb, z_pad.shape[0], out_dtype)
    return call(z_pad, w1, b1, w2, b2, w3, b3, w4, b4)


def _choose_bb(B):
    """Batch tile: single tile for small B; balanced tiles (<=512) otherwise.

    Balancing (bb ~= cdiv(B, cdiv(B, 256))) avoids a nearly-empty padded tail
    tile for unlucky batch sizes (e.g. B=257), at the cost of one compile per
    distinct tile size.  Cap at 512 so per-step VMEM stays well inside v7x's
    64 MiB/TC; for large B the grid has >=2 steps so both v7x cores are busy.
    """
    if B <= 256:
        return max(8, _round_up(B, 8))
    n_tiles = _cdiv(B, 256)
    return min(512, _round_up(_cdiv(B, n_tiles), 8))


def decoder_forward(z, prepared_params, *, out_dtype=jnp.float32,
                    keep_padded=False, block_b=None):
    """z: (B, LATENT_DIM) float32.  prepared_params: output of prepare_params.

    keep_padded=True returns the raw lane-dense (b_pad, 2048) kernel output
    (no post-kernel slice copy) for downstream consumers that can handle the
    zero-padded tail; default slices to (B, 2000) to match PyTorch semantics.
    out_dtype=jnp.bfloat16 halves output HBM traffic at large batch.
    """
    B = z.shape[0]
    bb = _choose_bb(B) if block_b is None else max(8, (int(block_b) // 8) * 8)
    b_pad = _round_up(B, bb)
    z_pad = jnp.pad(z, ((0, b_pad - B), (0, 0))) if b_pad != B else z

    p = prepared_params
    out = _decoder_impl(z_pad, p["w1"], p["b1"], p["w2"], p["b2"],
                        p["w3"], p["b3"], p["w4"], p["b4"],
                        bb=bb, out_dtype=jnp.dtype(out_dtype))
    if keep_padded:
        return out
    return out[:B, :OUT_DIM]


def init_params(key):
    """Deterministic f32 parameters (PyTorch-Linear-style uniform bounds),
    stored as (in_features, out_features) so each layer is y = x @ W + b."""
    dims = [(LATENT_DIM, HID1), (HID1, HID2), (HID2, HID3), (HID3, OUT_DIM)]
    params = {}
    keys = jax.random.split(key, 2 * len(dims))
    for idx, (fan_in, fan_out) in enumerate(dims):
        bound = 1.0 / (fan_in ** 0.5)
        w = jax.random.uniform(keys[2 * idx], (fan_in, fan_out),
                               minval=-bound, maxval=bound, dtype=jnp.float32)
        b = jax.random.uniform(keys[2 * idx + 1], (1, fan_out),
                               minval=-bound, maxval=bound, dtype=jnp.float32)
        params[f"w{idx + 1}"] = w
        params[f"b{idx + 1}"] = b
    return params


def prepare_params(params):
    """Pad feature dims to lane multiples of 128.  w1 stays f32 (VPU layer);
    w2..w4 are cast to bf16 (MXU operands); biases stay f32.
    Call once and reuse across decoder_forward calls."""
    def pad_w(w, in_p, out_p, dtype):
        in_d, out_d = w.shape
        return jnp.pad(w, ((0, in_p - in_d), (0, out_p - out_d))).astype(dtype)

    def pad_b(b, out_p):
        return jnp.pad(b, ((0, 0), (0, out_p - b.shape[1]))).astype(jnp.float32)

    return {
        "w1": pad_w(params["w1"], LATENT_DIM, HID1_P, jnp.float32),
        "b1": pad_b(params["b1"], HID1_P),
        "w2": pad_w(params["w2"], HID1_P, HID2_P, jnp.bfloat16),
        "b2": pad_b(params["b2"], HID2_P),
        "w3": pad_w(params["w3"], HID2_P, HID3_P, jnp.bfloat16),
        "b3": pad_b(params["b3"], HID3_P),
        "w4": pad_w(params["w4"], HID3_P, OUT_P, jnp.bfloat16),
        "b4": pad_b(params["b4"], OUT_P),
    }


def decoder_reference_f32(z, params):
    h = jnp.maximum(z @ params["w1"] + params["b1"], 0.0)
    h = jnp.maximum(h @ params["w2"] + params["b2"], 0.0)
    h = jnp.maximum(h @ params["w3"] + params["b3"], 0.0)
    return h @ params["w4"] + params["b4"]


def decoder_reference_kernel_numerics(z, params):
    """Mirrors the kernel: f32 layer 1, bf16-operand / f32-accumulate 2-4."""
    def mm(x, w):
        xb = x.astype(jnp.bfloat16).astype(jnp.float32)
        wb = w.astype(jnp.bfloat16).astype(jnp.float32)
        return xb @ wb
    h = jnp.maximum(z @ params["w1"] + params["b1"], 0.0)
    h = jnp.maximum(mm(h, params["w2"]) + params["b2"], 0.0)
    h = jnp.maximum(mm(h, params["w3"]) + params["b3"], 0.0)
    return mm(h, params["w4"]) + params["b4"]


if __name__ == "__main__":
    key = jax.random.PRNGKey(0)
    k_params, k_z1, k_z2 = jax.random.split(key, 3)
    params = init_params(k_params)
    prepared = prepare_params(params)

    # Small batch: single tile, single grid step.
    z_small = jax.random.normal(k_z1, (8, LATENT_DIM), dtype=jnp.float32)
    out_small = jax.block_until_ready(decoder_forward(z_small, prepared))
    assert out_small.shape == (8, OUT_DIM), out_small.shape
    ref_small = decoder_reference_kernel_numerics(z_small, params)
    assert jnp.allclose(out_small, ref_small, atol=1e-2, rtol=1e-2), "mismatch (small)"

    # Larger batch: balanced tiles (bb=200), 3 parallel grid steps.
    z_big = jax.random.normal(k_z2, (600, LATENT_DIM), dtype=jnp.float32)
    out_big = jax.block_until_ready(decoder_forward(z_big, prepared))
    assert out_big.shape == (600, OUT_DIM), out_big.shape
    ref_big = decoder_reference_kernel_numerics(z_big, params)
    assert jnp.allclose(out_big, ref_big, atol=1e-2, rtol=1e-2), "mismatch (big)"

    # Padded lane-dense output path (no post-kernel slice copy).
    out_padded = jax.block_until_ready(
        decoder_forward(z_big, prepared, keep_padded=True))
    assert out_padded.shape == (600, OUT_P), out_padded.shape
    assert jnp.allclose(out_padded[:, :OUT_DIM], ref_big, atol=1e-2, rtol=1e-2)

    # bf16 output path (halves output HBM traffic for large batches).
    out_bf16 = jax.block_until_ready(
        decoder_forward(z_small, prepared, out_dtype=jnp.bfloat16))
    assert out_bf16.dtype == jnp.bfloat16
    assert jnp.allclose(out_bf16.astype(jnp.float32), ref_small,
                        atol=5e-2, rtol=5e-2), "mismatch (bf16 out)"

    # Coarse sanity vs full-f32 reference (bf16 weights -> looser tolerance).
    ref_f32 = decoder_reference_f32(z_small, params)
    assert jnp.allclose(out_small, ref_f32, atol=1e-1, rtol=1e-1), "mismatch vs f32 ref"

    print("KERNEL_OK")
</pallas_src>

<mosaic_0001>
module attributes {stable_mosaic.version = 11 : i64} {
  func.func @_decoder_kernel(%arg0: i32, %arg1: memref<8x5xf32, #tpu.memory_space<vmem>>, %arg2: memref<5x2048xf32, #tpu.memory_space<vmem>>, %arg3: memref<1x2048xf32, #tpu.memory_space<vmem>>, %arg4: memref<2048x512xbf16, #tpu.memory_space<vmem>>, %arg5: memref<1x512xf32, #tpu.memory_space<vmem>>, %arg6: memref<512x512xbf16, #tpu.memory_space<vmem>>, %arg7: memref<1x512xf32, #tpu.memory_space<vmem>>, %arg8: memref<512x2048xbf16, #tpu.memory_space<vmem>>, %arg9: memref<1x2048xf32, #tpu.memory_space<vmem>>, %arg10: memref<8x2048xf32, #tpu.memory_space<vmem>>) attributes {dimension_semantics = [#tpu.dimension_semantics<parallel>], iteration_bounds = array<i64: 1>, scalar_prefetch = 0 : i64, scratch_operands = 0 : i64, tpu.core_type = #tpu.core_type<tc>, window_params = [{transform_indices = @transform_0, window_bounds = array<i64: 8, 5>}, {pipeline_mode = #tpu.pipeline_mode<synchronous>, transform_indices = @transform_1, window_bounds = array<i64: 5, 2048>}, {pipeline_mode = #tpu.pipeline_mode<synchronous>, transform_indices = @transform_2, window_bounds = array<i64: 1, 2048>}, {pipeline_mode = #tpu.pipeline_mode<synchronous>, transform_indices = @transform_3, window_bounds = array<i64: 2048, 512>}, {pipeline_mode = #tpu.pipeline_mode<synchronous>, transform_indices = @transform_4, window_bounds = array<i64: 1, 512>}, {pipeline_mode = #tpu.pipeline_mode<synchronous>, transform_indices = @transform_5, window_bounds = array<i64: 512, 512>}, {pipeline_mode = #tpu.pipeline_mode<synchronous>, transform_indices = @transform_6, window_bounds = array<i64: 1, 512>}, {pipeline_mode = #tpu.pipeline_mode<synchronous>, transform_indices = @transform_7, window_bounds = array<i64: 512, 2048>}, {pipeline_mode = #tpu.pipeline_mode<synchronous>, transform_indices = @transform_8, window_bounds = array<i64: 1, 2048>}, {transform_indices = @transform_9, window_bounds = array<i64: 8, 2048>}]} {
    %c0 = arith.constant 0 : index
    %c0_0 = arith.constant 0 : index
    %0 = vector.load %arg1[%c0, %c0_0] : memref<8x5xf32, #tpu.memory_space<vmem>>, vector<8x5xf32>
    %c0_1 = arith.constant 0 : index
    %c0_2 = arith.constant 0 : index
    %1 = vector.load %arg2[%c0_1, %c0_2] : memref<5x2048xf32, #tpu.memory_space<vmem>>, vector<5x2048xf32>
    %2 = vector.extract_strided_slice %0 {offsets = [0, 0], sizes = [8, 1], strides = [1, 1]} : vector<8x5xf32> to vector<8x1xf32>
    %3 = vector.extract_strided_slice %1 {offsets = [0, 0], sizes = [1, 2048], strides = [1, 1]} : vector<5x2048xf32> to vector<1x2048xf32>
    %4 = vector.broadcast %2 : vector<8x1xf32> to vector<8x2048xf32>
    %5 = vector.broadcast %3 : vector<1x2048xf32> to vector<8x2048xf32>
    %6 = arith.mulf %4, %5 : vector<8x2048xf32>
    %7 = vector.extract_strided_slice %0 {offsets = [0, 1], sizes = [8, 1], strides = [1, 1]} : vector<8x5xf32> to vector<8x1xf32>
    %8 = vector.extract_strided_slice %1 {offsets = [1, 0], sizes = [1, 2048], strides = [1, 1]} : vector<5x2048xf32> to vector<1x2048xf32>
    %9 = vector.broadcast %7 : vector<8x1xf32> to vector<8x2048xf32>
    %10 = vector.broadcast %8 : vector<1x2048xf32> to vector<8x2048xf32>
    %11 = arith.mulf %9, %10 : vector<8x2048xf32>
    %12 = arith.addf %6, %11 : vector<8x2048xf32>
    %13 = vector.extract_strided_slice %0 {offsets = [0, 2], sizes = [8, 1], strides = [1, 1]} : vector<8x5xf32> to vector<8x1xf32>
    %14 = vector.extract_strided_slice %1 {offsets = [2, 0], sizes = [1, 2048], strides = [1, 1]} : vector<5x2048xf32> to vector<1x2048xf32>
    %15 = vector.broadcast %13 : vector<8x1xf32> to vector<8x2048xf32>
    %16 = vector.broadcast %14 : vector<1x2048xf32> to vector<8x2048xf32>
    %17 = arith.mulf %15, %16 : vector<8x2048xf32>
    %18 = arith.addf %12, %17 : vector<8x2048xf32>
    %19 = vector.extract_strided_slice %0 {offsets = [0, 3], sizes = [8, 1], strides = [1, 1]} : vector<8x5xf32> to vector<8x1xf32>
    %20 = vector.extract_strided_slice %1 {offsets = [3, 0], sizes = [1, 2048], strides = [1, 1]} : vector<5x2048xf32> to vector<1x2048xf32>
    %21 = vector.broadcast %19 : vector<8x1xf32> to vector<8x2048xf32>
    %22 = vector.broadcast %20 : vector<1x2048xf32> to vector<8x2048xf32>
    %23 = arith.mulf %21, %22 : vector<8x2048xf32>
    %24 = arith.addf %18, %23 : vector<8x2048xf32>
    %25 = vector.extract_strided_slice %0 {offsets = [0, 4], sizes = [8, 1], strides = [1, 1]} : vector<8x5xf32> to vector<8x1xf32>
    %26 = vector.extract_strided_slice %1 {offsets = [4, 0], sizes = [1, 2048], strides = [1, 1]} : vector<5x2048xf32> to vector<1x2048xf32>
    %27 = vector.broadcast %25 : vector<8x1xf32> to vector<8x2048xf32>
    %28 = vector.broadcast %26 : vector<1x2048xf32> to vector<8x2048xf32>
    %29 = arith.mulf %27, %28 : vector<8x2048xf32>
    %30 = arith.addf %24, %29 : vector<8x2048xf32>
    %c0_3 = arith.constant 0 : index
    %c0_4 = arith.constant 0 : index
    %31 = vector.load %arg3[%c0_3, %c0_4] : memref<1x2048xf32, #tpu.memory_space<vmem>>, vector<1x2048xf32>
    %32 = vector.broadcast %31 : vector<1x2048xf32> to vector<8x2048xf32>
    %33 = arith.addf %30, %32 : vector<8x2048xf32>
    %cst = arith.constant 0.000000e+00 : f32
    %34 = vector.broadcast %cst : f32 to vector<8x2048xf32>
    %35 = arith.maximumf %33, %34 : vector<8x2048xf32>
    %36 = arith.truncf %35 : vector<8x2048xf32> to vector<8x2048xbf16>
    %c0_5 = arith.constant 0 : index
    %c0_6 = arith.constant 0 : index
    %37 = vector.load %arg4[%c0_5, %c0_6] : memref<2048x512xbf16, #tpu.memory_space<vmem>>, vector<2048x512xbf16>
    %cst_7 = arith.constant dense<0.000000e+00> : vector<8x512xf32>
    %38 = tpu.matmul %36, %37, %cst_7 {dimension_numbers = #tpu.dot_dimension_numbers<[1], [0], [0], [1], [0, 0, 1, 1], [], []>} : vector<8x2048xbf16>, vector<2048x512xbf16>, vector<8x512xf32> -> vector<8x512xf32>
    %c0_8 = arith.constant 0 : index
    %c0_9 = arith.constant 0 : index
    %39 = vector.load %arg5[%c0_8, %c0_9] : memref<1x512xf32, #tpu.memory_space<vmem>>, vector<1x512xf32>
    %40 = vector.broadcast %39 : vector<1x512xf32> to vector<8x512xf32>
    %41 = arith.addf %38, %40 : vector<8x512xf32>
    %cst_10 = arith.constant 0.000000e+00 : f32
    %42 = vector.broadcast %cst_10 : f32 to vector<8x512xf32>
    %43 = arith.maximumf %41, %42 : vector<8x512xf32>
    %44 = arith.truncf %43 : vector<8x512xf32> to vector<8x512xbf16>
    %c0_11 = arith.constant 0 : index
    %c0_12 = arith.constant 0 : index
    %45 = vector.load %arg6[%c0_11, %c0_12] : memref<512x512xbf16, #tpu.memory_space<vmem>>, vector<512x512xbf16>
    %cst_13 = arith.constant dense<0.000000e+00> : vector<8x512xf32>
    %46 = tpu.matmul %44, %45, %cst_13 {dimension_numbers = #tpu.dot_dimension_numbers<[1], [0], [0], [1], [0, 0, 1, 1], [], []>} : vector<8x512xbf16>, vector<512x512xbf16>, vector<8x512xf32> -> vector<8x512xf32>
    %c0_14 = arith.constant 0 : index
    %c0_15 = arith.constant 0 : index
    %47 = vector.load %arg7[%c0_14, %c0_15] : memref<1x512xf32, #tpu.memory_space<vmem>>, vector<1x512xf32>
    %48 = vector.broadcast %47 : vector<1x512xf32> to vector<8x512xf32>
    %49 = arith.addf %46, %48 : vector<8x512xf32>
    %cst_16 = arith.constant 0.000000e+00 : f32
    %50 = vector.broadcast %cst_16 : f32 to vector<8x512xf32>
    %51 = arith.maximumf %49, %50 : vector<8x512xf32>
    %52 = arith.truncf %51 : vector<8x512xf32> to vector<8x512xbf16>
    %c0_17 = arith.constant 0 : index
    %c0_18 = arith.constant 0 : index
    %53 = vector.load %arg8[%c0_17, %c0_18] : memref<512x2048xbf16, #tpu.memory_space<vmem>>, vector<512x2048xbf16>
    %cst_19 = arith.constant dense<0.000000e+00> : vector<8x2048xf32>
    %54 = tpu.matmul %52, %53, %cst_19 {dimension_numbers = #tpu.dot_dimension_numbers<[1], [0], [0], [1], [0, 0, 1, 1], [], []>} : vector<8x512xbf16>, vector<512x2048xbf16>, vector<8x2048xf32> -> vector<8x2048xf32>
    %c0_20 = arith.constant 0 : index
    %c0_21 = arith.constant 0 : index
    %55 = vector.load %arg9[%c0_20, %c0_21] : memref<1x2048xf32, #tpu.memory_space<vmem>>, vector<1x2048xf32>
    %56 = vector.broadcast %55 : vector<1x2048xf32> to vector<8x2048xf32>
    %57 = arith.addf %54, %56 : vector<8x2048xf32>
    %c0_22 = arith.constant 0 : index
    %c0_23 = arith.constant 0 : index
    %58 = vector.load %arg10[%c0_22, %c0_23] : memref<8x2048xf32, #tpu.memory_space<vmem>>, vector<8x2048xf32>
    tpu.vector_store %arg10[%c0_22, %c0_23], %57 {strides = array<i32>} : memref<8x2048xf32, #tpu.memory_space<vmem>>, vector<8x2048xf32>,
    return
  }
  func.func @transform_0(%arg0: i32) -> (i32, i32) {
    %c0_i32 = arith.constant 0 : i32
    %c0_i32_0 = arith.constant 0 : i32
    return %arg0, %c0_i32 : i32, i32
  }
  func.func @transform_1(%arg0: i32) -> (i32, i32) {
    %c0_i32 = arith.constant 0 : i32
    %c0_i32_0 = arith.constant 0 : i32
    %c0_i32_1 = arith.constant 0 : i32
    return %c0_i32, %c0_i32_0 : i32, i32
  }
  func.func @transform_2(%arg0: i32) -> (i32, i32) {
    %c0_i32 = arith.constant 0 : i32
    %c0_i32_0 = arith.constant 0 : i32
    %c0_i32_1 = arith.constant 0 : i32
    return %c0_i32, %c0_i32_0 : i32, i32
  }
  func.func @transform_3(%arg0: i32) -> (i32, i32) {
    %c0_i32 = arith.constant 0 : i32
    %c0_i32_0 = arith.constant 0 : i32
    %c0_i32_1 = arith.constant 0 : i32
    return %c0_i32, %c0_i32_0 : i32, i32
  }
  func.func @transform_4(%arg0: i32) -> (i32, i32) {
    %c0_i32 = arith.constant 0 : i32
    %c0_i32_0 = arith.constant 0 : i32
    %c0_i32_1 = arith.constant 0 : i32
    return %c0_i32, %c0_i32_0 : i32, i32
  }
  func.func @transform_5(%arg0: i32) -> (i32, i32) {
    %c0_i32 = arith.constant 0 : i32
    %c0_i32_0 = arith.constant 0 : i32
    %c0_i32_1 = arith.constant 0 : i32
    return %c0_i32, %c0_i32_0 : i32, i32
  }
  func.func @transform_6(%arg0: i32) -> (i32, i32) {
    %c0_i32 = arith.constant 0 : i32
    %c0_i32_0 = arith.constant 0 : i32
    %c0_i32_1 = arith.constant 0 : i32
    return %c0_i32, %c0_i32_0 : i32, i32
  }
  func.func @transform_7(%arg0: i32) -> (i32, i32) {
    %c0_i32 = arith.constant 0 : i32
    %c0_i32_0 = arith.constant 0 : i32
    %c0_i32_1 = arith.constant 0 : i32
    return %c0_i32, %c0_i32_0 : i32, i32
  }
  func.func @transform_8(%arg0: i32) -> (i32, i32) {
    %c0_i32 = arith.constant 0 : i32
    %c0_i32_0 = arith.constant 0 : i32
    %c0_i32_1 = arith.constant 0 : i32
    return %c0_i32, %c0_i32_0 : i32, i32
  }
  func.func @transform_9(%arg0: i32) -> (i32, i32) {
    %c0_i32 = arith.constant 0 : i32
    %c0_i32_0 = arith.constant 0 : i32
    return %arg0, %c0_i32 : i32, i32
  }
}

</mosaic_0001>

<llo_original>
// kernel: _decoder_impl.1
$region0: #{_decoder_impl.1}
  #allocation0 [shape = 'u32[]', space=smem, size = 0x4, offset = 0x4, fixed_abs, tag = 'smem constant byte address 0x4 - core index']
  #allocation1 [shape = 'u32[144,128]{1,0:T(1,128)}', space=vmem, size = 0x12000, scoped, tag = 'internal scratch']
  %s0 = inlined_call_operand.hbm [shape: f32[8,5], index: 0, kind: input, shape index: {}]
  %s1 = inlined_call_operand.hbm [shape: f32[5,2048], index: 1, kind: input, shape index: {}]
  %s2 = inlined_call_operand.hbm [shape: f32[1,2048], index: 2, kind: input, shape index: {}]
  %s3 = inlined_call_operand.hbm [shape: bf16[2048,512], index: 3, kind: input, shape index: {}]
  %s4 = inlined_call_operand.hbm [shape: f32[1,512], index: 4, kind: input, shape index: {}]
  %s5 = inlined_call_operand.hbm [shape: bf16[512,512], index: 5, kind: input, shape index: {}]
  %s6 = inlined_call_operand.hbm [shape: f32[1,512], index: 6, kind: input, shape index: {}]
  %s7 = inlined_call_operand.hbm [shape: bf16[512,2048], index: 7, kind: input, shape index: {}]
  %s8 = inlined_call_operand.hbm [shape: f32[1,2048], index: 8, kind: input, shape index: {}]
  %s9 = inlined_call_operand.hbm [shape: f32[8,2048], index: 9, kind: output, shape index: {}]
  %s10 = sld [smem:[#allocation0]]
  $region82: #{_decoder_impl.1} parent=0
    _
  %s12 = ssub.s32 1, %s10
  %s13 = scalar_select 0, %s12, %s10
  $region1: #{_decoder_impl.1} parent=0
    #allocation2 [shape = 'u8[4096]{0}', space=vmem, size = 0x1000, scoped, tag = 'input window, operand 0, single buffered']
    #allocation3 [shape = 's32[1]{0}', space=sflag, size = 0x4, scoped, tag = 'scoped memory for _decoder_impl.1']
    #allocation4 [shape = 's32[1]{0}', space=sflag, size = 0x4, scoped, tag = 'scoped memory for _decoder_impl.1']
    #allocation5 [shape = 'u8[65536]{0}', space=vmem, size = 0x10000, scoped, tag = 'input window, operand 1, single buffered']
    #allocation6 [shape = 's32[1]{0}', space=sflag, size = 0x4, scoped, tag = 'scoped memory for _decoder_impl.1']
    #allocation7 [shape = 'u8[8192]{0}', space=vmem, size = 0x2000, scoped, tag = 'input window, operand 2, single buffered']
    #allocation8 [shape = 'u8[2097152]{0}', space=vmem, size = 0x200000, scoped, tag = 'input window, operand 3, single buffered']
    #allocation9 [shape = 's32[1]{0}', space=sflag, size = 0x4, scoped, tag = 'scoped memory for _decoder_impl.1']
    #allocation10 [shape = 'u8[2048]{0}', space=vmem, size = 0x800, scoped, tag = 'input window, operand 4, single buffered']
    #allocation11 [shape = 'u8[524288]{0}', space=vmem, size = 0x80000, scoped, tag = 'input window, operand 5, single buffered']
    #allocation12 [shape = 's32[1]{0}', space=sflag, size = 0x4, scoped, tag = 'scoped memory for _decoder_impl.1']
    #allocation13 [shape = 'u8[2048]{0}', space=vmem, size = 0x800, scoped, tag = 'input window, operand 6, single buffered']
    #allocation14 [shape = 'u8[2097152]{0}', space=vmem, size = 0x200000, scoped, tag = 'input window, operand 7, single buffered']
    #allocation15 [shape = 's32[1]{0}', space=sflag, size = 0x4, scoped, tag = 'scoped memory for _decoder_impl.1']
    #allocation16 [shape = 'u8[8192]{0}', space=vmem, size = 0x2000, scoped, tag = 'input window, operand 8, single buffered']
    #allocation17 [shape = 'u8[65536]{0}', space=vmem, size = 0x10000, scoped, tag = 'output window, operand 0, single buffered']
    %14 = vsyncpa [#allocation3], 0
    %15 = vsyncpa [#allocation6], 0
    %16 = vsyncpa [#allocation9], 0
    %17 = vsyncpa [#allocation12], 0
    %18 = vsyncpa [#allocation15], 0
    %19 = vsyncpa [#allocation4], 0
    // Predicated region
    $region2: #{_decoder_impl.1} parent=1 // pred_check
      _
    $region3: #{_decoder_impl.1} parent=1 // pred_check_branch
      %21 = sbr.rel (0) target = $region5
    $region4: #{_decoder_impl.1} parent=1 // pred_region
      %s23 = ssub.s32 128, 128
      %24 = vsyncadd [#allocation3], %s23
      %s26 = sshll.u32 [#allocation2], 4
      %s27 = int_to_ptr.vmem [resolvable:$true] %s26
      %29 = dma.hbm_to_vmem [thread:$0]  %s0, 128, %s27, [#allocation3]
    $region5: #{_decoder_impl.1} parent=1 // pred_fallthru
      _
    // Predicated region
    $region6: #{_decoder_impl.1} parent=1 // pred_check
      _
    $region7: #{_decoder_impl.1} parent=1 // pred_check_branch
      %31 = sbr.rel (0) target = $region9
    $region8: #{_decoder_impl.1} parent=1 // pred_region
      %s33 = ssub.s32 2048, 2048
      %34 = vsyncadd [#allocation6], %s33
      %s36 = sshll.u32 [#allocation5], 4
      %s37 = int_to_ptr.vmem [resolvable:$true] %s36
      %39 = dma.hbm_to_vmem [thread:$0]  %s1, 2048, %s37, [#allocation6]
    $region9: #{_decoder_impl.1} parent=1 // pred_fallthru
      _
    // Predicated region
    $region10: #{_decoder_impl.1} parent=1 // pred_check
      _
    $region11: #{_decoder_impl.1} parent=1 // pred_check_branch
      %41 = sbr.rel (0) target = $region13
    $region12: #{_decoder_impl.1} parent=1 // pred_region
      %s43 = ssub.s32 256, 256
      %44 = vsyncadd [#allocation6], %s43
      %s46 = sshll.u32 [#allocation7], 4
      %s47 = int_to_ptr.vmem [resolvable:$true] %s46
      %49 = dma.hbm_to_vmem [thread:$0]  %s2, 256, %s47, [#allocation6]
    $region13: #{_decoder_impl.1} parent=1 // pred_fallthru
      _
    // Predicated region
    $region14: #{_decoder_impl.1} parent=1 // pred_check
      _
    $region15: #{_decoder_impl.1} parent=1 // pred_check_branch
      %51 = sbr.rel (0) target = $region17
    $region16: #{_decoder_impl.1} parent=1 // pred_region
      %s53 = ssub.s32 65536, 65536
      %54 = vsyncadd [#allocation9], %s53
      %s55 = sshll.u32 [#allocation8], 4
      %s56 = int_to_ptr.vmem [resolvable:$true] %s55
      %61 = dma.hbm_to_vmem [thread:$0]  %s3, 65536, %s56, [#allocation9], 256, 256, 16
    $region17: #{_decoder_impl.1} parent=1 // pred_fallthru
      _
    // Predicated region
    $region18: #{_decoder_impl.1} parent=1 // pred_check
      _
    $region19: #{_decoder_impl.1} parent=1 // pred_check_branch
      %63 = sbr.rel (0) target = $region21
    $region20: #{_decoder_impl.1} parent=1 // pred_region
      %s65 = ssub.s32 64, 64
      %66 = vsyncadd [#allocation9], %s65
      %s68 = sshll.u32 [#allocation10], 4
      %s69 = int_to_ptr.vmem [resolvable:$true] %s68
      %71 = dma.hbm_to_vmem [thread:$0]  %s4, 64, %s69, [#allocation9]
    $region21: #{_decoder_impl.1} parent=1 // pred_fallthru
      _
    // Predicated region
    $region22: #{_decoder_impl.1} parent=1 // pred_check
      _
    $region23: #{_decoder_impl.1} parent=1 // pred_check_branch
      %73 = sbr.rel (0) target = $region25
    $region24: #{_decoder_impl.1} parent=1 // pred_region
      %s75 = ssub.s32 16384, 16384
      %76 = vsyncadd [#allocation12], %s75
      %s77 = sshll.u32 [#allocation11], 4
      %s78 = int_to_ptr.vmem [resolvable:$true] %s77
      %83 = dma.hbm_to_vmem [thread:$0]  %s5, 16384, %s78, [#allocation12], 256, 256, 16
    $region25: #{_decoder_impl.1} parent=1 // pred_fallthru
      _
    // Predicated region
    $region26: #{_decoder_impl.1} parent=1 // pred_check
      _
    $region27: #{_decoder_impl.1} parent=1 // pred_check_branch
      %85 = sbr.rel (0) target = $region29
    $region28: #{_decoder_impl.1} parent=1 // pred_region
      %s87 = ssub.s32 64, 64
      %88 = vsyncadd [#allocation12], %s87
      %s90 = sshll.u32 [#allocation13], 4
      %s91 = int_to_ptr.vmem [resolvable:$true] %s90
      %93 = dma.hbm_to_vmem [thread:$0]  %s6, 64, %s91, [#allocation12]
    $region29: #{_decoder_impl.1} parent=1 // pred_fallthru
      _
    // Predicated region
    $region30: #{_decoder_impl.1} parent=1 // pred_check
      _
    $region31: #{_decoder_impl.1} parent=1 // pred_check_branch
      %95 = sbr.rel (0) target = $region33
    $region32: #{_decoder_impl.1} parent=1 // pred_region
      %s97 = ssub.s32 65536, 65536
      %98 = vsyncadd [#allocation15], %s97
      %s99 = sshll.u32 [#allocation14], 4
      %s100 = int_to_ptr.vmem [resolvable:$true] %s99
      %105 = dma.hbm_to_vmem [thread:$0]  %s7, 65536, %s100, [#allocation15], 1024, 1024, 64
    $region33: #{_decoder_impl.1} parent=1 // pred_fallthru
      _
    // Predicated region
    $region34: #{_decoder_impl.1} parent=1 // pred_check
      _
    $region35: #{_decoder_impl.1} parent=1 // pred_check_branch
      %107 = sbr.rel (0) target = $region37
    $region36: #{_decoder_impl.1} parent=1 // pred_region
      %s109 = ssub.s32 256, 256
      %110 = vsyncadd [#allocation15], %s109
      %s112 = sshll.u32 [#allocation16], 4
      %s113 = int_to_ptr.vmem [resolvable:$true] %s112
      %115 = dma.hbm_to_vmem [thread:$0]  %s8, 256, %s113, [#allocation15]
    $region37: #{_decoder_impl.1} parent=1 // pred_fallthru
      _
    // Predicated region
    $region38: #{_decoder_impl.1} parent=1 // pred_check
      _
    $region39: #{_decoder_impl.1} parent=1 // pred_check_branch
      %117 = sbr.rel (0) target = $region41
    $region40: #{_decoder_impl.1} parent=1 // pred_region
      %118 = dma.done [#allocation3], 128
    $region41: #{_decoder_impl.1} parent=1 // pred_fallthru
      _
    // Predicated region
    $region42: #{_decoder_impl.1} parent=1 // pred_check
      _
    $region43: #{_decoder_impl.1} parent=1 // pred_check_branch
      %120 = sbr.rel (0) target = $region45
    $region44: #{_decoder_impl.1} parent=1 // pred_region
      %121 = dma.done [#allocation6], 2048
    $region45: #{_decoder_impl.1} parent=1 // pred_fallthru
      _
    // Predicated region
    $region46: #{_decoder_impl.1} parent=1 // pred_check
      _
    $region47: #{_decoder_impl.1} parent=1 // pred_check_branch
      %123 = sbr.rel (0) target = $region49
    $region48: #{_decoder_impl.1} parent=1 // pred_region
      %124 = dma.done [#allocation6], 256
    $region49: #{_decoder_impl.1} parent=1 // pred_fallthru
      _
    // Predicated region
    $region50: #{_decoder_impl.1} parent=1 // pred_check
      _
    $region51: #{_decoder_impl.1} parent=1 // pred_check_branch
      %126 = sbr.rel (0) target = $region53
    $region52: #{_decoder_impl.1} parent=1 // pred_region
      %127 = dma.done [#allocation9], 65536
    $region53: #{_decoder_impl.1} parent=1 // pred_fallthru
      _
    // Predicated region
    $region54: #{_decoder_impl.1} parent=1 // pred_check
      _
    $region55: #{_decoder_impl.1} parent=1 // pred_check_branch
      %129 = sbr.rel (0) target = $region57
    $region56: #{_decoder_impl.1} parent=1 // pred_region
      %130 = dma.done [#allocation9], 64
    $region57: #{_decoder_impl.1} parent=1 // pred_fallthru
      _
    // Predicated region
    $region58: #{_decoder_impl.1} parent=1 // pred_check
      _
    $region59: #{_decoder_impl.1} parent=1 // pred_check_branch
      %132 = sbr.rel (0) target = $region61
    $region60: #{_decoder_impl.1} parent=1 // pred_region
      %133 = dma.done [#allocation12], 16384
    $region61: #{_decoder_impl.1} parent=1 // pred_fallthru
      _
    // Predicated region
    $region62: #{_decoder_impl.1} parent=1 // pred_check
      _
    $region63: #{_decoder_impl.1} parent=1 // pred_check_branch
      %135 = sbr.rel (0) target = $region65
    $region64: #{_decoder_impl.1} parent=1 // pred_region
      %136 = dma.done [#allocation12], 64
    $region65: #{_decoder_impl.1} parent=1 // pred_fallthru
      _
    // Predicated region
    $region66: #{_decoder_impl.1} parent=1 // pred_check
      _
    $region67: #{_decoder_impl.1} parent=1 // pred_check_branch
      %138 = sbr.rel (0) target = $region69
    $region68: #{_decoder_impl.1} parent=1 // pred_region
      %139 = dma.done [#allocation15], 65536
    $region69: #{_decoder_impl.1} parent=1 // pred_fallthru
      _
    // Predicated region
    $region70: #{_decoder_impl.1} parent=1 // pred_check
      _
    $region71: #{_decoder_impl.1} parent=1 // pred_check_branch
      %141 = sbr.rel (0) target = $region73
    $region72: #{_decoder_impl.1} parent=1 // pred_region
      %142 = dma.done [#allocation15], 256
    $region73: #{_decoder_impl.1} parent=1 // pred_fallthru
      _
    %v143 = vld [vmem:[#allocation2] sm:$0xff]
    %v144 = vld [vmem:[#allocation5] sm:$0x1f]
    %v145 = vld [vmem:[#allocation5 + $0x8] sm:$0x1f]
    %v146 = vld [vmem:[#allocation5 + $0x10] sm:$0x1f]
    %v147 = vld [vmem:[#allocation5 + $0x18] sm:$0x1f]
    %v148 = vld [vmem:[#allocation5 + $0x20] sm:$0x1f]
    %v149 = vld [vmem:[#allocation5 + $0x28] sm:$0x1f]
    %v150 = vld [vmem:[#allocation5 + $0x30] sm:$0x1f]
    %v151 = vld [vmem:[#allocation5 + $0x38] sm:$0x1f]
    %v152 = vld [vmem:[#allocation5 + $0x40] sm:$0x1f]
    %v153 = vld [vmem:[#allocation5 + $0x48] sm:$0x1f]
    %v154 = vld [vmem:[#allocation5 + $0x50] sm:$0x1f]
    %v155 = vld [vmem:[#allocation5 + $0x58] sm:$0x1f]
    %v156 = vld [vmem:[#allocation5 + $0x60] sm:$0x1f]
    %v157 = vld [vmem:[#allocation5 + $0x68] sm:$0x1f]
    %v158 = vld [vmem:[#allocation5 + $0x70] sm:$0x1f]
    %v159 = vld [vmem:[#allocation5 + $0x78] sm:$0x1f]
    %161 = vset.pattern.permute.xlu0 0
    %162 = vperm.xlu0 %161, %v143
    %v163 = vpop.permute.xlu0 %162
    %v165 = vlaneseq
    %v166 = vshrl.u32 %v165, 7
    %v167 = vsub.s32 0, %v166
    %v168 = vrot.slane %v144, %v167
    %v169 = vlaneseq
    %v170 = vshrl.u32 %v169, 7
    %v171 = vsub.s32 0, %v170
    %v172 = vrot.slane %v145, %v171
    %v173 = vlaneseq
    %v174 = vshrl.u32 %v173, 7
    %v175 = vsub.s32 0, %v174
    %v176 = vrot.slane %v146, %v175
    %v177 = vlaneseq
    %v178 = vshrl.u32 %v177, 7
    %v179 = vsub.s32 0, %v178
    %v180 = vrot.slane %v147, %v179
    %v181 = vlaneseq
    %v182 = vshrl.u32 %v181, 7
    %v183 = vsub.s32 0, %v182
    %v184 = vrot.slane %v148, %v183
    %v185 = vlaneseq
    %v186 = vshrl.u32 %v185, 7
    %v187 = vsub.s32 0, %v186
    %v188 = vrot.slane %v149, %v187
    %v189 = vlaneseq
    %v190 = vshrl.u32 %v189, 7
    %v191 = vsub.s32 0, %v190
    %v192 = vrot.slane %v150, %v191
    %v193 = vlaneseq
    %v194 = vshrl.u32 %v193, 7
    %v195 = vsub.s32 0, %v194
    %v196 = vrot.slane %v151, %v195
    %v197 = vlaneseq
    %v198 = vshrl.u32 %v197, 7
    %v199 = vsub.s32 0, %v198
    %v200 = vrot.slane %v152, %v199
    %v201 = vlaneseq
    %v202 = vshrl.u32 %v201, 7
    %v203 = vsub.s32 0, %v202
    %v204 = vrot.slane %v153, %v203
    %v205 = vlaneseq
    %v206 = vshrl.u32 %v205, 7
    %v207 = vsub.s32 0, %v206
    %v208 = vrot.slane %v154, %v207
    %v209 = vlaneseq
    %v210 = vshrl.u32 %v209, 7
    %v211 = vsub.s32 0, %v210
    %v212 = vrot.slane %v155, %v211
    %v213 = vlaneseq
    %v214 = vshrl.u32 %v213, 7
    %v215 = vsub.s32 0, %v214
    %v216 = vrot.slane %v156, %v215
    %v217 = vlaneseq
    %v218 = vshrl.u32 %v217, 7
    %v219 = vsub.s32 0, %v218
    %v220 = vrot.slane %v157, %v219
    %v221 = vlaneseq
    %v222 = vshrl.u32 %v221, 7
    %v223 = vsub.s32 0, %v222
    %v224 = vrot.slane %v158, %v223
    %v225 = vlaneseq
    %v226 = vshrl.u32 %v225, 7
    %v227 = vsub.s32 0, %v226
    %v228 = vrot.slane %v159, %v227
    %v229 = vmul.f32 %v163, %v168
    %v230 = vmul.f32 %v163, %v172
    %v231 = vmul.f32 %v163, %v176
    %v232 = vmul.f32 %v163, %v180
    %v233 = vmul.f32 %v163, %v184
    %v234 = vmul.f32 %v163, %v188
    %v235 = vmul.f32 %v163, %v192
    %v236 = vmul.f32 %v163, %v196
    %v237 = vmul.f32 %v163, %v200
    %v238 = vmul.f32 %v163, %v204
    %v239 = vmul.f32 %v163, %v208
    %v240 = vmul.f32 %v163, %v212
    %v241 = vmul.f32 %v163, %v216
    %v242 = vmul.f32 %v163, %v220
    %v243 = vmul.f32 %v163, %v224
    %v244 = vmul.f32 %v163, %v228
    %245 = vset.pattern.permute.xlu0 1
    %246 = vperm.xlu0 %245, %v143
    %v247 = vpop.permute.xlu0 %246
    %v249 = vlaneseq
    %v250 = vshrl.u32 %v249, 7
    %v251 = vsub.s32 1, %v250
    %v252 = vrot.slane %v144, %v251
    %v253 = vlaneseq
    %v254 = vshrl.u32 %v253, 7
    %v255 = vsub.s32 1, %v254
    %v256 = vrot.slane %v145, %v255
    %v257 = vlaneseq
    %v258 = vshrl.u32 %v257, 7
    %v259 = vsub.s32 1, %v258
    %v260 = vrot.slane %v146, %v259
    %v261 = vlaneseq
    %v262 = vshrl.u32 %v261, 7
    %v263 = vsub.s32 1, %v262
    %v264 = vrot.slane %v147, %v263
    %v265 = vlaneseq
    %v266 = vshrl.u32 %v265, 7
    %v267 = vsub.s32 1, %v266
    %v268 = vrot.slane %v148, %v267
    %v269 = vlaneseq
    %v270 = vshrl.u32 %v269, 7
    %v271 = vsub.s32 1, %v270
    %v272 = vrot.slane %v149, %v271
    %v273 = vlaneseq
    %v274 = vshrl.u32 %v273, 7
    %v275 = vsub.s32 1, %v274
    %v276 = vrot.slane %v150, %v275
    %v277 = vlaneseq
    %v278 = vshrl.u32 %v277, 7
    %v279 = vsub.s32 1, %v278
    %v280 = vrot.slane %v151, %v279
    %v281 = vlaneseq
    %v282 = vshrl.u32 %v281, 7
    %v283 = vsub.s32 1, %v282
    %v284 = vrot.slane %v152, %v283
    %v285 = vlaneseq
    %v286 = vshrl.u32 %v285, 7
    %v287 = vsub.s32 1, %v286
    %v288 = vrot.slane %v153, %v287
    %v289 = vlaneseq
    %v290 = vshrl.u32 %v289, 7
    %v291 = vsub.s32 1, %v290
    %v292 = vrot.slane %v154, %v291
    %v293 = vlaneseq
    %v294 = vshrl.u32 %v293, 7
    %v295 = vsub.s32 1, %v294
    %v296 = vrot.slane %v155, %v295
    %v297 = vlaneseq
    %v298 = vshrl.u32 %v297, 7
    %v299 = vsub.s32 1, %v298
    %v300 = vrot.slane %v156, %v299
    %v301 = vlaneseq
    %v302 = vshrl.u32 %v301, 7
    %v303 = vsub.s32 1, %v302
    %v304 = vrot.slane %v157, %v303
    %v305 = vlaneseq
    %v306 = vshrl.u32 %v305, 7
    %v307 = vsub.s32 1, %v306
    %v308 = vrot.slane %v158, %v307
    %v309 = vlaneseq
    %v310 = vshrl.u32 %v309, 7
    %v311 = vsub.s32 1, %v310
    %v312 = vrot.slane %v159, %v311
    %v313 = vmul.f32 %v247, %v252
    %v314 = vmul.f32 %v247, %v256
    %v315 = vmul.f32 %v247, %v260
    %v316 = vmul.f32 %v247, %v264
    %v317 = vmul.f32 %v247, %v268
    %v318 = vmul.f32 %v247, %v272
    %v319 = vmul.f32 %v247, %v276
    %v320 = vmul.f32 %v247, %v280
    %v321 = vmul.f32 %v247, %v284
    %v322 = vmul.f32 %v247, %v288
    %v323 = vmul.f32 %v247, %v292
    %v324 = vmul.f32 %v247, %v296
    %v325 = vmul.f32 %v247, %v300
    %v326 = vmul.f32 %v247, %v304
    %v327 = vmul.f32 %v247, %v308
    %v328 = vmul.f32 %v247, %v312
    %v329 = vadd.f32 %v229, %v313
    %v330 = vadd.f32 %v230, %v314
    %v331 = vadd.f32 %v231, %v315
    %v332 = vadd.f32 %v232, %v316
    %v333 = vadd.f32 %v233, %v317
    %v334 = vadd.f32 %v234, %v318
    %v335 = vadd.f32 %v235, %v319
    %v336 = vadd.f32 %v236, %v320
    %v337 = vadd.f32 %v237, %v321
    %v338 = vadd.f32 %v238, %v322
    %v339 = vadd.f32 %v239, %v323
    %v340 = vadd.f32 %v240, %v324
    %v341 = vadd.f32 %v241, %v325
    %v342 = vadd.f32 %v242, %v326
    %v343 = vadd.f32 %v243, %v327
    %v344 = vadd.f32 %v244, %v328
    %345 = vset.pattern.permute.xlu0 2
    %346 = vperm.xlu0 %345, %v143
    %v347 = vpop.permute.xlu0 %346
    %v349 = vlaneseq
    %v350 = vshrl.u32 %v349, 7
    %v351 = vsub.s32 2, %v350
    %v352 = vrot.slane %v144, %v351
    %v353 = vlaneseq
    %v354 = vshrl.u32 %v353, 7
    %v355 = vsub.s32 2, %v354
    %v356 = vrot.slane %v145, %v355
    %v357 = vlaneseq
    %v358 = vshrl.u32 %v357, 7
    %v359 = vsub.s32 2, %v358
    %v360 = vrot.slane %v146, %v359
    %v361 = vlaneseq
    %v362 = vshrl.u32 %v361, 7
    %v363 = vsub.s32 2, %v362
    %v364 = vrot.slane %v147, %v363
    %v365 = vlaneseq
    %v366 = vshrl.u32 %v365, 7
    %v367 = vsub.s32 2, %v366
    %v368 = vrot.slane %v148, %v367
    %v369 = vlaneseq
    %v370 = vshrl.u32 %v369, 7
    %v371 = vsub.s32 2, %v370
    %v372 = vrot.slane %v149, %v371
    %v373 = vlaneseq
    %v374 = vshrl.u32 %v373, 7
    %v375 = vsub.s32 2, %v374
    %v376 = vrot.slane %v150, %v375
    %v377 = vlaneseq
    %v378 = vshrl.u32 %v377, 7
    %v379 = vsub.s32 2, %v378
    %v380 = vrot.slane %v151, %v379
    %v381 = vlaneseq
    %v382 = vshrl.u32 %v381, 7
    %v383 = vsub.s32 2, %v382
    %v384 = vrot.slane %v152, %v383
    %v385 = vlaneseq
    %v386 = vshrl.u32 %v385, 7
    %v387 = vsub.s32 2, %v386
    %v388 = vrot.slane %v153, %v387
    %v389 = vlaneseq
    %v390 = vshrl.u32 %v389, 7
    %v391 = vsub.s32 2, %v390
    %v392 = vrot.slane %v154, %v391
    %v393 = vlaneseq
    %v394 = vshrl.u32 %v393, 7
    %v395 = vsub.s32 2, %v394
    %v396 = vrot.slane %v155, %v395
    %v397 = vlaneseq
    %v398 = vshrl.u32 %v397, 7
    %v399 = vsub.s32 2, %v398
    %v400 = vrot.slane %v156, %v399
    %v401 = vlaneseq
    %v402 = vshrl.u32 %v401, 7
    %v403 = vsub.s32 2, %v402
    %v404 = vrot.slane %v157, %v403
    %v405 = vlaneseq
    %v406 = vshrl.u32 %v405, 7
    %v407 = vsub.s32 2, %v406
    %v408 = vrot.slane %v158, %v407
    %v409 = vlaneseq
    %v410 = vshrl.u32 %v409, 7
    %v411 = vsub.s32 2, %v410
    %v412 = vrot.slane %v159, %v411
    %v413 = vmul.f32 %v347, %v352
    %v414 = vmul.f32 %v347, %v356
    %v415 = vmul.f32 %v347, %v360
    %v416 = vmul.f32 %v347, %v364
    %v417 = vmul.f32 %v347, %v368
    %v418 = vmul.f32 %v347, %v372
    %v419 = vmul.f32 %v347, %v376
    %v420 = vmul.f32 %v347, %v380
    %v421 = vmul.f32 %v347, %v384
    %v422 = vmul.f32 %v347, %v388
    %v423 = vmul.f32 %v347, %v392
    %v424 = vmul.f32 %v347, %v396
    %v425 = vmul.f32 %v347, %v400
    %v426 = vmul.f32 %v347, %v404
    %v427 = vmul.f32 %v347, %v408
    %v428 = vmul.f32 %v347, %v412
    %v429 = vadd.f32 %v329, %v413
    %v430 = vadd.f32 %v330, %v414
    %v431 = vadd.f32 %v331, %v415
    %v432 = vadd.f32 %v332, %v416
    %v433 = vadd.f32 %v333, %v417
    %v434 = vadd.f32 %v334, %v418
    %v435 = vadd.f32 %v335, %v419
    %v436 = vadd.f32 %v336, %v420
    %v437 = vadd.f32 %v337, %v421
    %v438 = vadd.f32 %v338, %v422
    %v439 = vadd.f32 %v339, %v423
    %v440 = vadd.f32 %v340, %v424
    %v441 = vadd.f32 %v341, %v425
    %v442 = vadd.f32 %v342, %v426
    %v443 = vadd.f32 %v343, %v427
    %v444 = vadd.f32 %v344, %v428
    %445 = vset.pattern.permute.xlu0 3
    %446 = vperm.xlu0 %445, %v143
    %v447 = vpop.permute.xlu0 %446
    %v449 = vlaneseq
    %v450 = vshrl.u32 %v449, 7
    %v451 = vsub.s32 3, %v450
    %v452 = vrot.slane %v144, %v451
    %v453 = vlaneseq
    %v454 = vshrl.u32 %v453, 7
    %v455 = vsub.s32 3, %v454
    %v456 = vrot.slane %v145, %v455
    %v457 = vlaneseq
    %v458 = vshrl.u32 %v457, 7
    %v459 = vsub.s32 3, %v458
    %v460 = vrot.slane %v146, %v459
    %v461 = vlaneseq
    %v462 = vshrl.u32 %v461, 7
    %v463 = vsub.s32 3, %v462
    %v464 = vrot.slane %v147, %v463
    %v465 = vlaneseq
    %v466 = vshrl.u32 %v465, 7
    %v467 = vsub.s32 3, %v466
    %v468 = vrot.slane %v148, %v467
    %v469 = vlaneseq
    %v470 = vshrl.u32 %v469, 7
    %v471 = vsub.s32 3, %v470
    %v472 = vrot.slane %v149, %v471
    %v473 = vlaneseq
    %v474 = vshrl.u32 %v473, 7
    %v475 = vsub.s32 3, %v474
    %v476 = vrot.slane %v150, %v475
    %v477 = vlaneseq
    %v478 = vshrl.u32 %v477, 7
    %v479 = vsub.s32 3, %v478
    %v480 = vrot.slane %v151, %v479
    %v481 = vlaneseq
    %v482 = vshrl.u32 %v481, 7
    %v483 = vsub.s32 3, %v482
    %v484 = vrot.slane %v152, %v483
    %v485 = vlaneseq
    %v486 = vshrl.u32 %v485, 7
    %v487 = vsub.s32 3, %v486
    %v488 = vrot.slane %v153, %v487
    %v489 = vlaneseq
    %v490 = vshrl.u32 %v489, 7
    %v491 = vsub.s32 3, %v490
    %v492 = vrot.slane %v154, %v491
    %v493 = vlaneseq
    %v494 = vshrl.u32 %v493, 7
    %v495 = vsub.s32 3, %v494
    %v496 = vrot.slane %v155, %v495
    %v497 = vlaneseq
    %v498 = vshrl.u32 %v497, 7
    %v499 = vsub.s32 3, %v498
    %v500 = vrot.slane %v156, %v499
    %v501 = vlaneseq
    %v502 = vshrl.u32 %v501, 7
    %v503 = vsub.s32 3, %v502
    %v504 = vrot.slane %v157, %v503
    %v505 = vlaneseq
    %v506 = vshrl.u32 %v505, 7
    %v507 = vsub.s32 3, %v506
    %v508 = vrot.slane %v158, %v507
    %v509 = vlaneseq
    %v510 = vshrl.u32 %v509, 7
    %v511 = vsub.s32 3, %v510
    %v512 = vrot.slane %v159, %v511
    %v513 = vmul.f32 %v447, %v452
    %v514 = vmul.f32 %v447, %v456
    %v515 = vmul.f32 %v447, %v460
    %v516 = vmul.f32 %v447, %v464
    %v517 = vmul.f32 %v447, %v468
    %v518 = vmul.f32 %v447, %v472
    %v519 = vmul.f32 %v447, %v476
    %v520 = vmul.f32 %v447, %v480
    %v521 = vmul.f32 %v447, %v484
    %v522 = vmul.f32 %v447, %v488
    %v523 = vmul.f32 %v447, %v492
    %v524 = vmul.f32 %v447, %v496
    %v525 = vmul.f32 %v447, %v500
    %v526 = vmul.f32 %v447, %v504
    %v527 = vmul.f32 %v447, %v508
    %v528 = vmul.f32 %v447, %v512
    %v529 = vadd.f32 %v429, %v513
    %v530 = vadd.f32 %v430, %v514
    %v531 = vadd.f32 %v431, %v515
    %v532 = vadd.f32 %v432, %v516
    %v533 = vadd.f32 %v433, %v517
    %v534 = vadd.f32 %v434, %v518
    %v535 = vadd.f32 %v435, %v519
    %v536 = vadd.f32 %v436, %v520
    %v537 = vadd.f32 %v437, %v521
    %v538 = vadd.f32 %v438, %v522
    %v539 = vadd.f32 %v439, %v523
    %v540 = vadd.f32 %v440, %v524
    %v541 = vadd.f32 %v441, %v525
    %v542 = vadd.f32 %v442, %v526
    %v543 = vadd.f32 %v443, %v527
    %v544 = vadd.f32 %v444, %v528
    %545 = vset.pattern.permute.xlu0 4
    %546 = vperm.xlu0 %545, %v143
    %v547 = vpop.permute.xlu0 %546
    %v549 = vlaneseq
    %v550 = vshrl.u32 %v549, 7
    %v551 = vsub.s32 4, %v550
    %v552 = vrot.slane %v144, %v551
    %v553 = vlaneseq
    %v554 = vshrl.u32 %v553, 7
    %v555 = vsub.s32 4, %v554
    %v556 = vrot.slane %v145, %v555
    %v557 = vlaneseq
    %v558 = vshrl.u32 %v557, 7
    %v559 = vsub.s32 4, %v558
    %v560 = vrot.slane %v146, %v559
    %v561 = vlaneseq
    %v562 = vshrl.u32 %v561, 7
    %v563 = vsub.s32 4, %v562
    %v564 = vrot.slane %v147, %v563
    %v565 = vlaneseq
    %v566 = vshrl.u32 %v565, 7
    %v567 = vsub.s32 4, %v566
    %v568 = vrot.slane %v148, %v567
    %v569 = vlaneseq
    %v570 = vshrl.u32 %v569, 7
    %v571 = vsub.s32 4, %v570
    %v572 = vrot.slane %v149, %v571
    %v573 = vlaneseq
    %v574 = vshrl.u32 %v573, 7
    %v575 = vsub.s32 4, %v574
    %v576 = vrot.slane %v150, %v575
    %v577 = vlaneseq
    %v578 = vshrl.u32 %v577, 7
    %v579 = vsub.s32 4, %v578
    %v580 = vrot.slane %v151, %v579
    %v581 = vlaneseq
    %v582 = vshrl.u32 %v581, 7
    %v583 = vsub.s32 4, %v582
    %v584 = vrot.slane %v152, %v583
    %v585 = vlaneseq
    %v586 = vshrl.u32 %v585, 7
    %v587 = vsub.s32 4, %v586
    %v588 = vrot.slane %v153, %v587
    %v589 = vlaneseq
    %v590 = vshrl.u32 %v589, 7
    %v591 = vsub.s32 4, %v590
    %v592 = vrot.slane %v154, %v591
    %v593 = vlaneseq
    %v594 = vshrl.u32 %v593, 7
    %v595 = vsub.s32 4, %v594
    %v596 = vrot.slane %v155, %v595
    %v597 = vlaneseq
    %v598 = vshrl.u32 %v597, 7
    %v599 = vsub.s32 4, %v598
    %v600 = vrot.slane %v156, %v599
    %v601 = vlaneseq
    %v602 = vshrl.u32 %v601, 7
    %v603 = vsub.s32 4, %v602
    %v604 = vrot.slane %v157, %v603
    %v605 = vlaneseq
    %v606 = vshrl.u32 %v605, 7
    %v607 = vsub.s32 4, %v606
    %v608 = vrot.slane %v158, %v607
    %v609 = vlaneseq
    %v610 = vshrl.u32 %v609, 7
    %v611 = vsub.s32 4, %v610
    %v612 = vrot.slane %v159, %v611
    %v613 = vmul.f32 %v547, %v552
    %v614 = vmul.f32 %v547, %v556
    %v615 = vmul.f32 %v547, %v560
    %v616 = vmul.f32 %v547, %v564
    %v617 = vmul.f32 %v547, %v568
    %v618 = vmul.f32 %v547, %v572
    %v619 = vmul.f32 %v547, %v576
    %v620 = vmul.f32 %v547, %v580
    %v621 = vmul.f32 %v547, %v584
    %v622 = vmul.f32 %v547, %v588
    %v623 = vmul.f32 %v547, %v592
    %v624 = vmul.f32 %v547, %v596
    %v625 = vmul.f32 %v547, %v600
    %v626 = vmul.f32 %v547, %v604
    %v627 = vmul.f32 %v547, %v608
    %v628 = vmul.f32 %v547, %v612
    %v629 = vadd.f32 %v529, %v613
    %v630 = vadd.f32 %v530, %v614
    %v631 = vadd.f32 %v531, %v615
    %v632 = vadd.f32 %v532, %v616
    %v633 = vadd.f32 %v533, %v617
    %v634 = vadd.f32 %v534, %v618
    %v635 = vadd.f32 %v535, %v619
    %v636 = vadd.f32 %v536, %v620
    %v637 = vadd.f32 %v537, %v621
    %v638 = vadd.f32 %v538, %v622
    %v639 = vadd.f32 %v539, %v623
    %v640 = vadd.f32 %v540, %v624
    %v641 = vadd.f32 %v541, %v625
    %v642 = vadd.f32 %v542, %v626
    %v643 = vadd.f32 %v543, %v627
    %v644 = vadd.f32 %v544, %v628
    %v645 = vld [vmem:[#allocation7] sm:$0xff]
    %v646 = vld [vmem:[#allocation7 + $0x8] sm:$0xff]
    %v649 = vlaneseq
    %v650 = vshrl.u32 %v649, 7
    %v651 = vsub.s32 0, %v650
    %v652 = vrot.slane %v645, %v651
    %v653 = vlaneseq
    %v654 = vshrl.u32 %v653, 7
    %v655 = vsub.s32 1, %v654
    %v656 = vrot.slane %v645, %v655
    %v657 = vlaneseq
    %v658 = vshrl.u32 %v657, 7
    %v659 = vsub.s32 2, %v658
    %v660 = vrot.slane %v645, %v659
    %v661 = vlaneseq
    %v662 = vshrl.u32 %v661, 7
    %v663 = vsub.s32 3, %v662
    %v664 = vrot.slane %v645, %v663
    %v665 = vlaneseq
    %v666 = vshrl.u32 %v665, 7
    %v667 = vsub.s32 4, %v666
    %v668 = vrot.slane %v645, %v667
    %v669 = vlaneseq
    %v670 = vshrl.u32 %v669, 7
    %v671 = vsub.s32 5, %v670
    %v672 = vrot.slane %v645, %v671
    %v673 = vlaneseq
    %v674 = vshrl.u32 %v673, 7
    %v675 = vsub.s32 6, %v674
    %v676 = vrot.slane %v645, %v675
    %v677 = vlaneseq
    %v678 = vshrl.u32 %v677, 7
    %v679 = vsub.s32 7, %v678
    %v680 = vrot.slane %v645, %v679
    %v681 = vlaneseq
    %v682 = vshrl.u32 %v681, 7
    %v683 = vsub.s32 0, %v682
    %v684 = vrot.slane %v646, %v683
    %v685 = vlaneseq
    %v686 = vshrl.u32 %v685, 7
    %v687 = vsub.s32 1, %v686
    %v688 = vrot.slane %v646, %v687
    %v689 = vlaneseq
    %v690 = vshrl.u32 %v689, 7
    %v691 = vsub.s32 2, %v690
    %v692 = vrot.slane %v646, %v691
    %v693 = vlaneseq
    %v694 = vshrl.u32 %v693, 7
    %v695 = vsub.s32 3, %v694
    %v696 = vrot.slane %v646, %v695
    %v697 = vlaneseq
    %v698 = vshrl.u32 %v697, 7
    %v699 = vsub.s32 4, %v698
    %v700 = vrot.slane %v646, %v699
    %v701 = vlaneseq
    %v702 = vshrl.u32 %v701, 7
    %v703 = vsub.s32 5, %v702
    %v704 = vrot.slane %v646, %v703
    %v705 = vlaneseq
    %v706 = vshrl.u32 %v705, 7
    %v707 = vsub.s32 6, %v706
    %v708 = vrot.slane %v646, %v707
    %v709 = vlaneseq
    %v710 = vshrl.u32 %v709, 7
    %v711 = vsub.s32 7, %v710
    %v712 = vrot.slane %v646, %v711
    %v729 = vadd.f32 %v629, %v652
    %v730 = vadd.f32 %v630, %v656
    %v731 = vadd.f32 %v631, %v660
    %v732 = vadd.f32 %v632, %v664
    %v733 = vadd.f32 %v633, %v668
    %v734 = vadd.f32 %v634, %v672
    %v735 = vadd.f32 %v635, %v676
    %v736 = vadd.f32 %v636, %v680
    %v737 = vadd.f32 %v637, %v684
    %v738 = vadd.f32 %v638, %v688
    %v739 = vadd.f32 %v639, %v692
    %v740 = vadd.f32 %v640, %v696
    %v741 = vadd.f32 %v641, %v700
    %v742 = vadd.f32 %v642, %v704
    %v743 = vadd.f32 %v643, %v708
    %v744 = vadd.f32 %v644, %v712
    %v745 = vmax.f32 %v729, 0.0
    %v746 = vmax.f32 %v730, 0.0
    %v747 = vmax.f32 %v731, 0.0
    %v748 = vmax.f32 %v732, 0.0
    %v749 = vmax.f32 %v733, 0.0
    %v750 = vmax.f32 %v734, 0.0
    %v751 = vmax.f32 %v735, 0.0
    %v752 = vmax.f32 %v736, 0.0
    %v753 = vmax.f32 %v737, 0.0
    %v754 = vmax.f32 %v738, 0.0
    %v755 = vmax.f32 %v739, 0.0
    %v756 = vmax.f32 %v740, 0.0
    %v757 = vmax.f32 %v741, 0.0
    %v758 = vmax.f32 %v742, 0.0
    %v759 = vmax.f32 %v743, 0.0
    %v760 = vmax.f32 %v744, 0.0
    %v761 = vpack.c.bf16 %v745, %v745
    %v762 = vpack.c.bf16 %v746, %v746
    %v763 = vpack.c.bf16 %v747, %v747
    %v764 = vpack.c.bf16 %v748, %v748
    %v765 = vpack.c.bf16 %v749, %v749
    %v766 = vpack.c.bf16 %v750, %v750
    %v767 = vpack.c.bf16 %v751, %v751
    %v768 = vpack.c.bf16 %v752, %v752
    %v769 = vpack.c.bf16 %v753, %v753
    %v770 = vpack.c.bf16 %v754, %v754
    %v771 = vpack.c.bf16 %v755, %v755
    %v772 = vpack.c.bf16 %v756, %v756
    %v773 = vpack.c.bf16 %v757, %v757
    %v774 = vpack.c.bf16 %v758, %v758
    %v775 = vpack.c.bf16 %v759, %v759
    %v776 = vpack.c.bf16 %v760, %v760
    %v777 = vld [vmem:[#allocation8] sm:$0xff]
    %v778 = vld [vmem:[#allocation8 + $0x8] sm:$0xff]
    %v779 = vld [vmem:[#allocation8 + $0x10] sm:$0xff]
    %v780 = vld [vmem:[#allocation8 + $0x18] sm:$0xff]
    %v781 = vld [vmem:[#allocation8 + $0x20] sm:$0xff]
    %v782 = vld [vmem:[#allocation8 + $0x28] sm:$0xff]
    %v783 = vld [vmem:[#allocation8 + $0x30] sm:$0xff]
    %v784 = vld [vmem:[#allocation8 + $0x38] sm:$0xff]
    %v785 = vld [vmem:[#allocation8 + $0x40] sm:$0xff]
    %v786 = vld [vmem:[#allocation8 + $0x48] sm:$0xff]
    %v787 = vld [vmem:[#allocation8 + $0x50] sm:$0xff]
    %v788 = vld [vmem:[#allocation8 + $0x58] sm:$0xff]
    %v789 = vld [vmem:[#allocation8 + $0x60] sm:$0xff]
    %v790 = vld [vmem:[#allocation8 + $0x68] sm:$0xff]
    %v791 = vld [vmem:[#allocation8 + $0x70] sm:$0xff]
    %v792 = vld [vmem:[#allocation8 + $0x78] sm:$0xff]
    %v793 = vld [vmem:[#allocation8 + $0x80] sm:$0xff]
    %v794 = vld [vmem:[#allocation8 + $0x88] sm:$0xff]
    %v795 = vld [vmem:[#allocation8 + $0x90] sm:$0xff]
    %v796 = vld [vmem:[#allocation8 + $0x98] sm:$0xff]
    %v797 = vld [vmem:[#allocation8 + $0xa0] sm:$0xff]
    %v798 = vld [vmem:[#allocation8 + $0xa8] sm:$0xff]
    %v799 = vld [vmem:[#allocation8 + $0xb0] sm:$0xff]
    %v800 = vld [vmem:[#allocation8 + $0xb8] sm:$0xff]
    %v801 = vld [vmem:[#allocation8 + $0xc0] sm:$0xff]
    %v802 = vld [vmem:[#allocation8 + $0xc8] sm:$0xff]
    %v803 = vld [vmem:[#allocation8 + $0xd0] sm:$0xff]
    %v804 = vld [vmem:[#allocation8 + $0xd8] sm:$0xff]
    %v805 = vld [vmem:[#allocation8 + $0xe0] sm:$0xff]
    %v806 = vld [vmem:[#allocation8 + $0xe8] sm:$0xff]
    %v807 = vld [vmem:[#allocation8 + $0xf0] sm:$0xff]
    %v808 = vld [vmem:[#allocation8 + $0xf8] sm:$0xff]
    %v809 = vld [vmem:[#allocation8 + $0x100] sm:$0xff]
    %v810 = vld [vmem:[#allocation8 + $0x108] sm:$0xff]
    %v811 = vld [vmem:[#allocation8 + $0x110] sm:$0xff]
    %v812 = vld [vmem:[#allocation8 + $0x118] sm:$0xff]
    %v813 = vld [vmem:[#allocation8 + $0x120] sm:$0xff]
    %v814 = vld [vmem:[#allocation8 + $0x128] sm:$0xff]
    %v815 = vld [vmem:[#allocation8 + $0x130] sm:$0xff]
    %v816 = vld [vmem:[#allocation8 + $0x138] sm:$0xff]
    %v817 = vld [vmem:[#allocation8 + $0x140] sm:$0xff]
    %v818 = vld [vmem:[#allocation8 + $0x148] sm:$0xff]
    %v819 = vld [vmem:[#allocation8 + $0x150] sm:$0xff]
    %v820 = vld [vmem:[#allocation8 + $0x158] sm:$0xff]
    %v821 = vld [vmem:[#allocation8 + $0x160] sm:$0xff]
    %v822 = vld [vmem:[#allocation8 + $0x168] sm:$0xff]
    %v823 = vld [vmem:[#allocation8 + $0x170] sm:$0xff]
    %v824 = vld [vmem:[#allocation8 + $0x178] sm:$0xff]
    %v825 = vld [vmem:[#allocation8 + $0x180] sm:$0xff]
    %v826 = vld [vmem:[#allocation8 + $0x188] sm:$0xff]
    %v827 = vld [vmem:[#allocation8 + $0x190] sm:$0xff]
    %v828 = vld [vmem:[#allocation8 + $0x198] sm:$0xff]
    %v829 = vld [vmem:[#allocation8 + $0x1a0] sm:$0xff]
    %v830 = vld [vmem:[#allocation8 + $0x1a8] sm:$0xff]
    %v831 = vld [vmem:[#allocation8 + $0x1b0] sm:$0xff]
    %v832 = vld [vmem:[#allocation8 + $0x1b8] sm:$0xff]
    %v833 = vld [vmem:[#allocation8 + $0x1c0] sm:$0xff]
    %v834 = vld [vmem:[#allocation8 + $0x1c8] sm:$0xff]
    %v835 = vld [vmem:[#allocation8 + $0x1d0] sm:$0xff]
    %v836 = vld [vmem:[#allocation8 + $0x1d8] sm:$0xff]
    %v837 = vld [vmem:[#allocation8 + $0x1e0] sm:$0xff]
    %v838 = vld [vmem:[#allocation8 + $0x1e8] sm:$0xff]
    %v839 = vld [vmem:[#allocation8 + $0x1f0] sm:$0xff]
    %v840 = vld [vmem:[#allocation8 + $0x1f8] sm:$0xff]
    %v841 = vld [vmem:[#allocation8 + $0x200] sm:$0xff]
    %v842 = vld [vmem:[#allocation8 + $0x208] sm:$0xff]
    %v843 = vld [vmem:[#allocation8 + $0x210] sm:$0xff]
    %v844 = vld [vmem:[#allocation8 + $0x218] sm:$0xff]
    %v845 = vld [vmem:[#allocation8 + $0x220] sm:$0xff]
    %v846 = vld [vmem:[#allocation8 + $0x228] sm:$0xff]
    %v847 = vld [vmem:[#allocation8 + $0x230] sm:$0xff]
    %v848 = vld [vmem:[#allocation8 + $0x238] sm:$0xff]
    %v849 = vld [vmem:[#allocation8 + $0x240] sm:$0xff]
    %v850 = vld [vmem:[#allocation8 + $0x248] sm:$0xff]
    %v851 = vld [vmem:[#allocation8 + $0x250] sm:$0xff]
    %v852 = vld [vmem:[#allocation8 + $0x258] sm:$0xff]
    %v853 = vld [vmem:[#allocation8 + $0x260] sm:$0xff]
    %v854 = vld [vmem:[#allocation8 + $0x268] sm:$0xff]
    %v855 = vld [vmem:[#allocation8 + $0x270] sm:$0xff]
    %v856 = vld [vmem:[#allocation8 + $0x278] sm:$0xff]
    %v857 = vld [vmem:[#allocation8 + $0x280] sm:$0xff]
    %v858 = vld [vmem:[#allocation8 + $0x288] sm:$0xff]
    %v859 = vld [vmem:[#allocation8 + $0x290] sm:$0xff]
    %v860 = vld [vmem:[#allocation8 + $0x298] sm:$0xff]
    %v861 = vld [vmem:[#allocation8 + $0x2a0] sm:$0xff]
    %v862 = vld [vmem:[#allocation8 + $0x2a8] sm:$0xff]
    %v863 = vld [vmem:[#allocation8 + $0x2b0] sm:$0xff]
    %v864 = vld [vmem:[#allocation8 + $0x2b8] sm:$0xff]
    %v865 = vld [vmem:[#allocation8 + $0x2c0] sm:$0xff]
    %v866 = vld [vmem:[#allocation8 + $0x2c8] sm:$0xff]
    %v867 = vld [vmem:[#allocation8 + $0x2d0] sm:$0xff]
    %v868 = vld [vmem:[#allocation8 + $0x2d8] sm:$0xff]
    %v869 = vld [vmem:[#allocation8 + $0x2e0] sm:$0xff]
    %v870 = vld [vmem:[#allocation8 + $0x2e8] sm:$0xff]
    %v871 = vld [vmem:[#allocation8 + $0x2f0] sm:$0xff]
    %v872 = vld [vmem:[#allocation8 + $0x2f8] sm:$0xff]
    %v873 = vld [vmem:[#allocation8 + $0x300] sm:$0xff]
    %v874 = vld [vmem:[#allocation8 + $0x308] sm:$0xff]
    %v875 = vld [vmem:[#allocation8 + $0x310] sm:$0xff]
    %v876 = vld [vmem:[#allocation8 + $0x318] sm:$0xff]
    %v877 = vld [vmem:[#allocation8 + $0x320] sm:$0xff]
    %v878 = vld [vmem:[#allocation8 + $0x328] sm:$0xff]
    %v879 = vld [vmem:[#allocation8 + $0x330] sm:$0xff]
    %v880 = vld [vmem:[#allocation8 + $0x338] sm:$0xff]
    %v881 = vld [vmem:[#allocation8 + $0x340] sm:$0xff]
    %v882 = vld [vmem:[#allocation8 + $0x348] sm:$0xff]
    %v883 = vld [vmem:[#allocation8 + $0x350] sm:$0xff]
    %v884 = vld [vmem:[#allocation8 + $0x358] sm:$0xff]
    %v885 = vld [vmem:[#allocation8 + $0x360] sm:$0xff]
    %v886 = vld [vmem:[#allocation8 + $0x368] sm:$0xff]
    %v887 = vld [vmem:[#allocation8 + $0x370] sm:$0xff]
    %v888 = vld [vmem:[#allocation8 + $0x378] sm:$0xff]
    %v889 = vld [vmem:[#allocation8 + $0x380] sm:$0xff]
    %v890 = vld [vmem:[#allocation8 + $0x388] sm:$0xff]
    %v891 = vld [vmem:[#allocation8 + $0x390] sm:$0xff]
    %v892 = vld [vmem:[#allocation8 + $0x398] sm:$0xff]
    %v893 = vld [vmem:[#allocation8 + $0x3a0] sm:$0xff]
    %v894 = vld [vmem:[#allocation8 + $0x3a8] sm:$0xff]
    %v895 = vld [vmem:[#allocation8 + $0x3b0] sm:$0xff]
    %v896 = vld [vmem:[#allocation8 + $0x3b8] sm:$0xff]
    %v897 = vld [vmem:[#allocation8 + $0x3c0] sm:$0xff]
    %v898 = vld [vmem:[#allocation8 + $0x3c8] sm:$0xff]
    %v899 = vld [vmem:[#allocation8 + $0x3d0] sm:$0xff]
    %v900 = vld [vmem:[#allocation8 + $0x3d8] sm:$0xff]
    %v901 = vld [vmem:[#allocation8 + $0x3e0] sm:$0xff]
    %v902 = vld [vmem:[#allocation8 + $0x3e8] sm:$0xff]
    %v903 = vld [vmem:[#allocation8 + $0x3f0] sm:$0xff]
    %v904 = vld [vmem:[#allocation8 + $0x3f8] sm:$0xff]
    %v905 = vld [vmem:[#allocation8 + $0x400] sm:$0xff]
    %v906 = vld [vmem:[#allocation8 + $0x408] sm:$0xff]
    %v907 = vld [vmem:[#allocation8 + $0x410] sm:$0xff]
    %v908 = vld [vmem:[#allocation8 + $0x418] sm:$0xff]
    %v909 = vld [vmem:[#allocation8 + $0x420] sm:$0xff]
    %v910 = vld [vmem:[#allocation8 + $0x428] sm:$0xff]
    %v911 = vld [vmem:[#allocation8 + $0x430] sm:$0xff]
    %v912 = vld [vmem:[#allocation8 + $0x438] sm:$0xff]
    %v913 = vld [vmem:[#allocation8 + $0x440] sm:$0xff]
    %v914 = vld [vmem:[#allocation8 + $0x448] sm:$0xff]
    %v915 = vld [vmem:[#allocation8 + $0x450] sm:$0xff]
    %v916 = vld [vmem:[#allocation8 + $0x458] sm:$0xff]
    %v917 = vld [vmem:[#allocation8 + $0x460] sm:$0xff]
    %v918 = vld [vmem:[#allocation8 + $0x468] sm:$0xff]
    %v919 = vld [vmem:[#allocation8 + $0x470] sm:$0xff]
    %v920 = vld [vmem:[#allocation8 + $0x478] sm:$0xff]
    %v921 = vld [vmem:[#allocation8 + $0x480] sm:$0xff]
    %v922 = vld [vmem:[#allocation8 + $0x488] sm:$0xff]
    %v923 = vld [vmem:[#allocation8 + $0x490] sm:$0xff]
    %v924 = vld [vmem:[#allocation8 + $0x498] sm:$0xff]
    %v925 = vld [vmem:[#allocation8 + $0x4a0] sm:$0xff]
    %v926 = vld [vmem:[#allocation8 + $0x4a8] sm:$0xff]
    %v927 = vld [vmem:[#allocation8 + $0x4b0] sm:$0xff]
    %v928 = vld [vmem:[#allocation8 + $0x4b8] sm:$0xff]
    %v929 = vld [vmem:[#allocation8 + $0x4c0] sm:$0xff]
    %v930 = vld [vmem:[#allocation8 + $0x4c8] sm:$0xff]
    %v931 = vld [vmem:[#allocation8 + $0x4d0] sm:$0xff]
    %v932 = vld [vmem:[#allocation8 + $0x4d8] sm:$0xff]
    %v933 = vld [vmem:[#allocation8 + $0x4e0] sm:$0xff]
    %v934 = vld [vmem:[#allocation8 + $0x4e8] sm:$0xff]
    %v935 = vld [vmem:[#allocation8 + $0x4f0] sm:$0xff]
    %v936 = vld [vmem:[#allocation8 + $0x4f8] sm:$0xff]
    %v937 = vld [vmem:[#allocation8 + $0x500] sm:$0xff]
    %v938 = vld [vmem:[#allocation8 + $0x508] sm:$0xff]
    %v939 = vld [vmem:[#allocation8 + $0x510] sm:$0xff]
    %v940 = vld [vmem:[#allocation8 + $0x518] sm:$0xff]
    %v941 = vld [vmem:[#allocation8 + $0x520] sm:$0xff]
    %v942 = vld [vmem:[#allocation8 + $0x528] sm:$0xff]
    %v943 = vld [vmem:[#allocation8 + $0x530] sm:$0xff]
    %v944 = vld [vmem:[#allocation8 + $0x538] sm:$0xff]
    %v945 = vld [vmem:[#allocation8 + $0x540] sm:$0xff]
    %v946 = vld [vmem:[#allocation8 + $0x548] sm:$0xff]
    %v947 = vld [vmem:[#allocation8 + $0x550] sm:$0xff]
    %v948 = vld [vmem:[#allocation8 + $0x558] sm:$0xff]
    %v949 = vld [vmem:[#allocation8 + $0x560] sm:$0xff]
    %v950 = vld [vmem:[#allocation8 + $0x568] sm:$0xff]
    %v951 = vld [vmem:[#allocation8 + $0x570] sm:$0xff]
    %v952 = vld [vmem:[#allocation8 + $0x578] sm:$0xff]
    %v953 = vld [vmem:[#allocation8 + $0x580] sm:$0xff]
    %v954 = vld [vmem:[#allocation8 + $0x588] sm:$0xff]
    %v955 = vld [vmem:[#allocation8 + $0x590] sm:$0xff]
    %v956 = vld [vmem:[#allocation8 + $0x598] sm:$0xff]
    %v957 = vld [vmem:[#allocation8 + $0x5a0] sm:$0xff]
    %v958 = vld [vmem:[#allocation8 + $0x5a8] sm:$0xff]
    %v959 = vld [vmem:[#allocation8 + $0x5b0] sm:$0xff]
    %v960 = vld [vmem:[#allocation8 + $0x5b8] sm:$0xff]
    %v961 = vld [vmem:[#allocation8 + $0x5c0] sm:$0xff]
    %v962 = vld [vmem:[#allocation8 + $0x5c8] sm:$0xff]
    %v963 = vld [vmem:[#allocation8 + $0x5d0] sm:$0xff]
    %v964 = vld [vmem:[#allocation8 + $0x5d8] sm:$0xff]
    %v965 = vld [vmem:[#allocation8 + $0x5e0] sm:$0xff]
    %v966 = vld [vmem:[#allocation8 + $0x5e8] sm:$0xff]
    %v967 = vld [vmem:[#allocation8 + $0x5f0] sm:$0xff]
    %v968 = vld [vmem:[#allocation8 + $0x5f8] sm:$0xff]
    %v969 = vld [vmem:[#allocation8 + $0x600] sm:$0xff]
    %v970 = vld [vmem:[#allocation8 + $0x608] sm:$0xff]
    %v971 = vld [vmem:[#allocation8 + $0x610] sm:$0xff]
    %v972 = vld [vmem:[#allocation8 + $0x618] sm:$0xff]
    %v973 = vld [vmem:[#allocation8 + $0x620] sm:$0xff]
    %v974 = vld [vmem:[#allocation8 + $0x628] sm:$0xff]
    %v975 = vld [vmem:[#allocation8 + $0x630] sm:$0xff]
    %v976 = vld [vmem:[#allocation8 + $0x638] sm:$0xff]
    %v977 = vld [vmem:[#allocation8 + $0x640] sm:$0xff]
    %v978 = vld [vmem:[#allocation8 + $0x648] sm:$0xff]
    %v979 = vld [vmem:[#allocation8 + $0x650] sm:$0xff]
    %v980 = vld [vmem:[#allocation8 + $0x658] sm:$0xff]
    %v981 = vld [vmem:[#allocation8 + $0x660] sm:$0xff]
    %v982 = vld [vmem:[#allocation8 + $0x668] sm:$0xff]
    %v983 = vld [vmem:[#allocation8 + $0x670] sm:$0xff]
    %v984 = vld [vmem:[#allocation8 + $0x678] sm:$0xff]
    %v985 = vld [vmem:[#allocation8 + $0x680] sm:$0xff]
    %v986 = vld [vmem:[#allocation8 + $0x688] sm:$0xff]
    %v987 = vld [vmem:[#allocation8 + $0x690] sm:$0xff]
    %v988 = vld [vmem:[#allocation8 + $0x698] sm:$0xff]
    %v989 = vld [vmem:[#allocation8 + $0x6a0] sm:$0xff]
    %v990 = vld [vmem:[#allocation8 + $0x6a8] sm:$0xff]
    %v991 = vld [vmem:[#allocation8 + $0x6b0] sm:$0xff]
    %v992 = vld [vmem:[#allocation8 + $0x6b8] sm:$0xff]
    %v993 = vld [vmem:[#allocation8 + $0x6c0] sm:$0xff]
    %v994 = vld [vmem:[#allocation8 + $0x6c8] sm:$0xff]
    %v995 = vld [vmem:[#allocation8 + $0x6d0] sm:$0xff]
    %v996 = vld [vmem:[#allocation8 + $0x6d8] sm:$0xff]
    %v997 = vld [vmem:[#allocation8 + $0x6e0] sm:$0xff]
    %v998 = vld [vmem:[#allocation8 + $0x6e8] sm:$0xff]
    %v999 = vld [vmem:[#allocation8 + $0x6f0] sm:$0xff]
    %v1000 = vld [vmem:[#allocation8 + $0x6f8] sm:$0xff]
    %v1001 = vld [vmem:[#allocation8 + $0x700] sm:$0xff]
    %v1002 = vld [vmem:[#allocation8 + $0x708] sm:$0xff]
    %v1003 = vld [vmem:[#allocation8 + $0x710] sm:$0xff]
    %v1004 = vld [vmem:[#allocation8 + $0x718] sm:$0xff]
    %v1005 = vld [vmem:[#allocation8 + $0x720] sm:$0xff]
    %v1006 = vld [vmem:[#allocation8 + $0x728] sm:$0xff]
    %v1007 = vld [vmem:[#allocation8 + $0x730] sm:$0xff]
    %v1008 = vld [vmem:[#allocation8 + $0x738] sm:$0xff]
    %v1009 = vld [vmem:[#allocation8 + $0x740] sm:$0xff]
    %v1010 = vld [vmem:[#allocation8 + $0x748] sm:$0xff]
    %v1011 = vld [vmem:[#allocation8 + $0x750] sm:$0xff]
    %v1012 = vld [vmem:[#allocation8 + $0x758] sm:$0xff]
    %v1013 = vld [vmem:[#allocation8 + $0x760] sm:$0xff]
    %v1014 = vld [vmem:[#allocation8 + $0x768] sm:$0xff]
    %v1015 = vld [vmem:[#allocation8 + $0x770] sm:$0xff]
    %v1016 = vld [vmem:[#allocation8 + $0x778] sm:$0xff]
    %v1017 = vld [vmem:[#allocation8 + $0x780] sm:$0xff]
    %v1018 = vld [vmem:[#allocation8 + $0x788] sm:$0xff]
    %v1019 = vld [vmem:[#allocation8 + $0x790] sm:$0xff]
    %v1020 = vld [vmem:[#allocation8 + $0x798] sm:$0xff]
    %v1021 = vld [vmem:[#allocation8 + $0x7a0] sm:$0xff]
    %v1022 = vld [vmem:[#allocation8 + $0x7a8] sm:$0xff]
    %v1023 = vld [vmem:[#allocation8 + $0x7b0] sm:$0xff]
    %v1024 = vld [vmem:[#allocation8 + $0x7b8] sm:$0xff]
    %v1025 = vld [vmem:[#allocation8 + $0x7c0] sm:$0xff]
    %v1026 = vld [vmem:[#allocation8 + $0x7c8] sm:$0xff]
    %v1027 = vld [vmem:[#allocation8 + $0x7d0] sm:$0xff]
    %v1028 = vld [vmem:[#allocation8 + $0x7d8] sm:$0xff]
    %v1029 = vld [vmem:[#allocation8 + $0x7e0] sm:$0xff]
    %v1030 = vld [vmem:[#allocation8 + $0x7e8] sm:$0xff]
    %v1031 = vld [vmem:[#allocation8 + $0x7f0] sm:$0xff]
    %v1032 = vld [vmem:[#allocation8 + $0x7f8] sm:$0xff]
    %v1033 = vld [vmem:[#allocation8 + $0x800] sm:$0xff]
    %v1034 = vld [vmem:[#allocation8 + $0x808] sm:$0xff]
    %v1035 = vld [vmem:[#allocation8 + $0x810] sm:$0xff]
    %v1036 = vld [vmem:[#allocation8 + $0x818] sm:$0xff]
    %v1037 = vld [vmem:[#allocation8 + $0x820] sm:$0xff]
    %v1038 = vld [vmem:[#allocation8 + $0x828] sm:$0xff]
    %v1039 = vld [vmem:[#allocation8 + $0x830] sm:$0xff]
    %v1040 = vld [vmem:[#allocation8 + $0x838] sm:$0xff]
    %v1041 = vld [vmem:[#allocation8 + $0x840] sm:$0xff]
    %v1042 = vld [vmem:[#allocation8 + $0x848] sm:$0xff]
    %v1043 = vld [vmem:[#allocation8 + $0x850] sm:$0xff]
    %v1044 = vld [vmem:[#allocation8 + $0x858] sm:$0xff]
    %v1045 = vld [vmem:[#allocation8 + $0x860] sm:$0xff]
    %v1046 = vld [vmem:[#allocation8 + $0x868] sm:$0xff]
    %v1047 = vld [vmem:[#allocation8 + $0x870] sm:$0xff]
    %v1048 = vld [vmem:[#allocation8 + $0x878] sm:$0xff]
    %v1049 = vld [vmem:[#allocation8 + $0x880] sm:$0xff]
    %v1050 = vld [vmem:[#allocation8 + $0x888] sm:$0xff]
    %v1051 = vld [vmem:[#allocation8 + $0x890] sm:$0xff]
    %v1052 = vld [vmem:[#allocation8 + $0x898] sm:$0xff]
    %v1053 = vld [vmem:[#allocation8 + $0x8a0] sm:$0xff]
    %v1054 = vld [vmem:[#allocation8 + $0x8a8] sm:$0xff]
    %v1055 = vld [vmem:[#allocation8 + $0x8b0] sm:$0xff]
    %v1056 = vld [vmem:[#allocation8 + $0x8b8] sm:$0xff]
    %v1057 = vld [vmem:[#allocation8 + $0x8c0] sm:$0xff]
    %v1058 = vld [vmem:[#allocation8 + $0x8c8] sm:$0xff]
    %v1059 = vld [vmem:[#allocation8 + $0x8d0] sm:$0xff]
    %v1060 = vld [vmem:[#allocation8 + $0x8d8] sm:$0xff]
    %v1061 = vld [vmem:[#allocation8 + $0x8e0] sm:$0xff]
    %v1062 = vld [vmem:[#allocation8 + $0x8e8] sm:$0xff]
    %v1063 = vld [vmem:[#allocation8 + $0x8f0] sm:$0xff]
    %v1064 = vld [vmem:[#allocation8 + $0x8f8] sm:$0xff]
    %v1065 = vld [vmem:[#allocation8 + $0x900] sm:$0xff]
    %v1066 = vld [vmem:[#allocation8 + $0x908] sm:$0xff]
    %v1067 = vld [vmem:[#allocation8 + $0x910] sm:$0xff]
    %v1068 = vld [vmem:[#allocation8 + $0x918] sm:$0xff]
    %v1069 = vld [vmem:[#allocation8 + $0x920] sm:$0xff]
    %v1070 = vld [vmem:[#allocation8 + $0x928] sm:$0xff]
    %v1071 = vld [vmem:[#allocation8 + $0x930] sm:$0xff]
    %v1072 = vld [vmem:[#allocation8 + $0x938] sm:$0xff]
    %v1073 = vld [vmem:[#allocation8 + $0x940] sm:$0xff]
    %v1074 = vld [vmem:[#allocation8 + $0x948] sm:$0xff]
    %v1075 = vld [vmem:[#allocation8 + $0x950] sm:$0xff]
    %v1076 = vld [vmem:[#allocation8 + $0x958] sm:$0xff]
    %v1077 = vld [vmem:[#allocation8 + $0x960] sm:$0xff]
    %v1078 = vld [vmem:[#allocation8 + $0x968] sm:$0xff]
    %v1079 = vld [vmem:[#allocation8 + $0x970] sm:$0xff]
    %v1080 = vld [vmem:[#allocation8 + $0x978] sm:$0xff]
    %v1081 = vld [vmem:[#allocation8 + $0x980] sm:$0xff]
    %v1082 = vld [vmem:[#allocation8 + $0x988] sm:$0xff]
    %v1083 = vld [vmem:[#allocation8 + $0x990] sm:$0xff]
    %v1084 = vld [vmem:[#allocation8 + $0x998] sm:$0xff]
    %v1085 = vld [vmem:[#allocation8 + $0x9a0] sm:$0xff]
    %v1086 = vld [vmem:[#allocation8 + $0x9a8] sm:$0xff]
    %v1087 = vld [vmem:[#allocation8 + $0x9b0] sm:$0xff]
    %v1088 = vld [vmem:[#allocation8 + $0x9b8] sm:$0xff]
    %v1089 = vld [vmem:[#allocation8 + $0x9c0] sm:$0xff]
    %v1090 = vld [vmem:[#allocation8 + $0x9c8] sm:$0xff]
    %v1091 = vld [vmem:[#allocation8 + $0x9d0] sm:$0xff]
    %v1092 = vld [vmem:[#allocation8 + $0x9d8] sm:$0xff]
    %v1093 = vld [vmem:[#allocation8 + $0x9e0] sm:$0xff]
    %v1094 = vld [vmem:[#allocation8 + $0x9e8] sm:$0xff]
    %v1095 = vld [vmem:[#allocation8 + $0x9f0] sm:$0xff]
    %v1096 = vld [vmem:[#allocation8 + $0x9f8] sm:$0xff]
    %v1097 = vld [vmem:[#allocation8 + $0xa00] sm:$0xff]
    %v1098 = vld [vmem:[#allocation8 + $0xa08] sm:$0xff]
    %v1099 = vld [vmem:[#allocation8 + $0xa10] sm:$0xff]
    %v1100 = vld [vmem:[#allocation8 + $0xa18] sm:$0xff]
    %v1101 = vld [vmem:[#allocation8 + $0xa20] sm:$0xff]
    %v1102 = vld [vmem:[#allocation8 + $0xa28] sm:$0xff]
    %v1103 = vld [vmem:[#allocation8 + $0xa30] sm:$0xff]
    %v1104 = vld [vmem:[#allocation8 + $0xa38] sm:$0xff]
    %v1105 = vld [vmem:[#allocation8 + $0xa40] sm:$0xff]
    %v1106 = vld [vmem:[#allocation8 + $0xa48] sm:$0xff]
    %v1107 = vld [vmem:[#allocation8 + $0xa50] sm:$0xff]
    %v1108 = vld [vmem:[#allocation8 + $0xa58] sm:$0xff]
    %v1109 = vld [vmem:[#allocation8 + $0xa60] sm:$0xff]
    %v1110 = vld [vmem:[#allocation8 + $0xa68] sm:$0xff]
    %v1111 = vld [vmem:[#allocation8 + $0xa70] sm:$0xff]
    %v1112 = vld [vmem:[#allocation8 + $0xa78] sm:$0xff]
    %v1113 = vld [vmem:[#allocation8 + $0xa80] sm:$0xff]
    %v1114 = vld [vmem:[#allocation8 + $0xa88] sm:$0xff]
    %v1115 = vld [vmem:[#allocation8 + $0xa90] sm:$0xff]
    %v1116 = vld [vmem:[#allocation8 + $0xa98] sm:$0xff]
    %v1117 = vld [vmem:[#allocation8 + $0xaa0] sm:$0xff]
    %v1118 = vld [vmem:[#allocation8 + $0xaa8] sm:$0xff]
    %v1119 = vld [vmem:[#allocation8 + $0xab0] sm:$0xff]
    %v1120 = vld [vmem:[#allocation8 + $0xab8] sm:$0xff]
    %v1121 = vld [vmem:[#allocation8 + $0xac0] sm:$0xff]
    %v1122 = vld [vmem:[#allocation8 + $0xac8] sm:$0xff]
    %v1123 = vld [vmem:[#allocation8 + $0xad0] sm:$0xff]
    %v1124 = vld [vmem:[#allocation8 + $0xad8] sm:$0xff]
    %v1125 = vld [vmem:[#allocation8 + $0xae0] sm:$0xff]
    %v1126 = vld [vmem:[#allocation8 + $0xae8] sm:$0xff]
    %v1127 = vld [vmem:[#allocation8 + $0xaf0] sm:$0xff]
    %v1128 = vld [vmem:[#allocation8 + $0xaf8] sm:$0xff]
    %v1129 = vld [vmem:[#allocation8 + $0xb00] sm:$0xff]
    %v1130 = vld [vmem:[#allocation8 + $0xb08] sm:$0xff]
    %v1131 = vld [vmem:[#allocation8 + $0xb10] sm:$0xff]
    %v1132 = vld [vmem:[#allocation8 + $0xb18] sm:$0xff]
    %v1133 = vld [vmem:[#allocation8 + $0xb20] sm:$0xff]
    %v1134 = vld [vmem:[#allocation8 + $0xb28] sm:$0xff]
    %v1135 = vld [vmem:[#allocation8 + $0xb30] sm:$0xff]
    %v1136 = vld [vmem:[#allocation8 + $0xb38] sm:$0xff]
    %v1137 = vld [vmem:[#allocation8 + $0xb40] sm:$0xff]
    %v1138 = vld [vmem:[#allocation8 + $0xb48] sm:$0xff]
    %v1139 = vld [vmem:[#allocation8 + $0xb50] sm:$0xff]
    %v1140 = vld [vmem:[#allocation8 + $0xb58] sm:$0xff]
    %v1141 = vld [vmem:[#allocation8 + $0xb60] sm:$0xff]
    %v1142 = vld [vmem:[#allocation8 + $0xb68] sm:$0xff]
    %v1143 = vld [vmem:[#allocation8 + $0xb70] sm:$0xff]
    %v1144 = vld [vmem:[#allocation8 + $0xb78] sm:$0xff]
    %v1145 = vld [vmem:[#allocation8 + $0xb80] sm:$0xff]
    %v1146 = vld [vmem:[#allocation8 + $0xb88] sm:$0xff]
    %v1147 = vld [vmem:[#allocation8 + $0xb90] sm:$0xff]
    %v1148 = vld [vmem:[#allocation8 + $0xb98] sm:$0xff]
    %v1149 = vld [vmem:[#allocation8 + $0xba0] sm:$0xff]
    %v1150 = vld [vmem:[#allocation8 + $0xba8] sm:$0xff]
    %v1151 = vld [vmem:[#allocation8 + $0xbb0] sm:$0xff]
    %v1152 = vld [vmem:[#allocation8 + $0xbb8] sm:$0xff]
    %v1153 = vld [vmem:[#allocation8 + $0xbc0] sm:$0xff]
    %v1154 = vld [vmem:[#allocation8 + $0xbc8] sm:$0xff]
    %v1155 = vld [vmem:[#allocation8 + $0xbd0] sm:$0xff]
    %v1156 = vld [vmem:[#allocation8 + $0xbd8] sm:$0xff]
    %v1157 = vld [vmem:[#allocation8 + $0xbe0] sm:$0xff]
    %v1158 = vld [vmem:[#allocation8 + $0xbe8] sm:$0xff]
    %v1159 = vld [vmem:[#allocation8 + $0xbf0] sm:$0xff]
    %v1160 = vld [vmem:[#allocation8 + $0xbf8] sm:$0xff]
    %v1161 = vld [vmem:[#allocation8 + $0xc00] sm:$0xff]
    %v1162 = vld [vmem:[#allocation8 + $0xc08] sm:$0xff]
    %v1163 = vld [vmem:[#allocation8 + $0xc10] sm:$0xff]
    %v1164 = vld [vmem:[#allocation8 + $0xc18] sm:$0xff]
    %v1165 = vld [vmem:[#allocation8 + $0xc20] sm:$0xff]
    %v1166 = vld [vmem:[#allocation8 + $0xc28] sm:$0xff]
    %v1167 = vld [vmem:[#allocation8 + $0xc30] sm:$0xff]
    %v1168 = vld [vmem:[#allocation8 + $0xc38] sm:$0xff]
    %v1169 = vld [vmem:[#allocation8 + $0xc40] sm:$0xff]
    %v1170 = vld [vmem:[#allocation8 + $0xc48] sm:$0xff]
    %v1171 = vld [vmem:[#allocation8 + $0xc50] sm:$0xff]
    %v1172 = vld [vmem:[#allocation8 + $0xc58] sm:$0xff]
    %v1173 = vld [vmem:[#allocation8 + $0xc60] sm:$0xff]
    %v1174 = vld [vmem:[#allocation8 + $0xc68] sm:$0xff]
    %v1175 = vld [vmem:[#allocation8 + $0xc70] sm:$0xff]
    %v1176 = vld [vmem:[#allocation8 + $0xc78] sm:$0xff]
    %v1177 = vld [vmem:[#allocation8 + $0xc80] sm:$0xff]
    %v1178 = vld [vmem:[#allocation8 + $0xc88] sm:$0xff]
    %v1179 = vld [vmem:[#allocation8 + $0xc90] sm:$0xff]
    %v1180 = vld [vmem:[#allocation8 + $0xc98] sm:$0xff]
    %v1181 = vld [vmem:[#allocation8 + $0xca0] sm:$0xff]
    %v1182 = vld [vmem:[#allocation8 + $0xca8] sm:$0xff]
    %v1183 = vld [vmem:[#allocation8 + $0xcb0] sm:$0xff]
    %v1184 = vld [vmem:[#allocation8 + $0xcb8] sm:$0xff]
    %v1185 = vld [vmem:[#allocation8 + $0xcc0] sm:$0xff]
    %v1186 = vld [vmem:[#allocation8 + $0xcc8] sm:$0xff]
    %v1187 = vld [vmem:[#allocation8 + $0xcd0] sm:$0xff]
    %v1188 = vld [vmem:[#allocation8 + $0xcd8] sm:$0xff]
    %v1189 = vld [vmem:[#allocation8 + $0xce0] sm:$0xff]
    %v1190 = vld [vmem:[#allocation8 + $0xce8] sm:$0xff]
    %v1191 = vld [vmem:[#allocation8 + $0xcf0] sm:$0xff]
    %v1192 = vld [vmem:[#allocation8 + $0xcf8] sm:$0xff]
    %v1193 = vld [vmem:[#allocation8 + $0xd00] sm:$0xff]
    %v1194 = vld [vmem:[#allocation8 + $0xd08] sm:$0xff]
    %v1195 = vld [vmem:[#allocation8 + $0xd10] sm:$0xff]
    %v1196 = vld [vmem:[#allocation8 + $0xd18] sm:$0xff]
    %v1197 = vld [vmem:[#allocation8 + $0xd20] sm:$0xff]
    %v1198 = vld [vmem:[#allocation8 + $0xd28] sm:$0xff]
    %v1199 = vld [vmem:[#allocation8 + $0xd30] sm:$0xff]
    %v1200 = vld [vmem:[#allocation8 + $0xd38] sm:$0xff]
    %v1201 = vld [vmem:[#allocation8 + $0xd40] sm:$0xff]
    %v1202 = vld [vmem:[#allocation8 + $0xd48] sm:$0xff]
    %v1203 = vld [vmem:[#allocation8 + $0xd50] sm:$0xff]
    %v1204 = vld [vmem:[#allocation8 + $0xd58] sm:$0xff]
    %v1205 = vld [vmem:[#allocation8 + $0xd60] sm:$0xff]
    %v1206 = vld [vmem:[#allocation8 + $0xd68] sm:$0xff]
    %v1207 = vld [vmem:[#allocation8 + $0xd70] sm:$0xff]
    %v1208 = vld [vmem:[#allocation8 + $0xd78] sm:$0xff]
    %v1209 = vld [vmem:[#allocation8 + $0xd80] sm:$0xff]
    %v1210 = vld [vmem:[#allocation8 + $0xd88] sm:$0xff]
    %v1211 = vld [vmem:[#allocation8 + $0xd90] sm:$0xff]
    %v1212 = vld [vmem:[#allocation8 + $0xd98] sm:$0xff]
    %v1213 = vld [vmem:[#allocation8 + $0xda0] sm:$0xff]
    %v1214 = vld [vmem:[#allocation8 + $0xda8] sm:$0xff]
    %v1215 = vld [vmem:[#allocation8 + $0xdb0] sm:$0xff]
    %v1216 = vld [vmem:[#allocation8 + $0xdb8] sm:$0xff]
    %v1217 = vld [vmem:[#allocation8 + $0xdc0] sm:$0xff]
    %v1218 = vld [vmem:[#allocation8 + $0xdc8] sm:$0xff]
    %v1219 = vld [vmem:[#allocation8 + $0xdd0] sm:$0xff]
    %v1220 = vld [vmem:[#allocation8 + $0xdd8] sm:$0xff]
    %v1221 = vld [vmem:[#allocation8 + $0xde0] sm:$0xff]
    %v1222 = vld [vmem:[#allocation8 + $0xde8] sm:$0xff]
    %v1223 = vld [vmem:[#allocation8 + $0xdf0] sm:$0xff]
    %v1224 = vld [vmem:[#allocation8 + $0xdf8] sm:$0xff]
    %v1225 = vld [vmem:[#allocation8 + $0xe00] sm:$0xff]
    %v1226 = vld [vmem:[#allocation8 + $0xe08] sm:$0xff]
    %v1227 = vld [vmem:[#allocation8 + $0xe10] sm:$0xff]
    %v1228 = vld [vmem:[#allocation8 + $0xe18] sm:$0xff]
    %v1229 = vld [vmem:[#allocation8 + $0xe20] sm:$0xff]
    %v1230 = vld [vmem:[#allocation8 + $0xe28] sm:$0xff]
    %v1231 = vld [vmem:[#allocation8 + $0xe30] sm:$0xff]
    %v1232 = vld [vmem:[#allocation8 + $0xe38] sm:$0xff]
    %v1233 = vld [vmem:[#allocation8 + $0xe40] sm:$0xff]
    %v1234 = vld [vmem:[#allocation8 + $0xe48] sm:$0xff]
    %v1235 = vld [vmem:[#allocation8 + $0xe50] sm:$0xff]
    %v1236 = vld [vmem:[#allocation8 + $0xe58] sm:$0xff]
    %v1237 = vld [vmem:[#allocation8 + $0xe60] sm:$0xff]
    %v1238 = vld [vmem:[#allocation8 + $0xe68] sm:$0xff]
    %v1239 = vld [vmem:[#allocation8 + $0xe70] sm:$0xff]
    %v1240 = vld [vmem:[#allocation8 + $0xe78] sm:$0xff]
    %v1241 = vld [vmem:[#allocation8 + $0xe80] sm:$0xff]
    %v1242 = vld [vmem:[#allocation8 + $0xe88] sm:$0xff]
    %v1243 = vld [vmem:[#allocation8 + $0xe90] sm:$0xff]
    %v1244 = vld [vmem:[#allocation8 + $0xe98] sm:$0xff]
    %v1245 = vld [vmem:[#allocation8 + $0xea0] sm:$0xff]
    %v1246 = vld [vmem:[#allocation8 + $0xea8] sm:$0xff]
    %v1247 = vld [vmem:[#allocation8 + $0xeb0] sm:$0xff]
    %v1248 = vld [vmem:[#allocation8 + $0xeb8] sm:$0xff]
    %v1249 = vld [vmem:[#allocation8 + $0xec0] sm:$0xff]
    %v1250 = vld [vmem:[#allocation8 + $0xec8] sm:$0xff]
    %v1251 = vld [vmem:[#allocation8 + $0xed0] sm:$0xff]
    %v1252 = vld [vmem:[#allocation8 + $0xed8] sm:$0xff]
    %v1253 = vld [vmem:[#allocation8 + $0xee0] sm:$0xff]
    %v1254 = vld [vmem:[#allocation8 + $0xee8] sm:$0xff]
    %v1255 = vld [vmem:[#allocation8 + $0xef0] sm:$0xff]
    %v1256 = vld [vmem:[#allocation8 + $0xef8] sm:$0xff]
    %v1257 = vld [vmem:[#allocation8 + $0xf00] sm:$0xff]
    %v1258 = vld [vmem:[#allocation8 + $0xf08] sm:$0xff]
    %v1259 = vld [vmem:[#allocation8 + $0xf10] sm:$0xff]
    %v1260 = vld [vmem:[#allocation8 + $0xf18] sm:$0xff]
    %v1261 = vld [vmem:[#allocation8 + $0xf20] sm:$0xff]
    %v1262 = vld [vmem:[#allocation8 + $0xf28] sm:$0xff]
    %v1263 = vld [vmem:[#allocation8 + $0xf30] sm:$0xff]
    %v1264 = vld [vmem:[#allocation8 + $0xf38] sm:$0xff]
    %v1265 = vld [vmem:[#allocation8 + $0xf40] sm:$0xff]
    %v1266 = vld [vmem:[#allocation8 + $0xf48] sm:$0xff]
    %v1267 = vld [vmem:[#allocation8 + $0xf50] sm:$0xff]
    %v1268 = vld [vmem:[#allocation8 + $0xf58] sm:$0xff]
    %v1269 = vld [vmem:[#allocation8 + $0xf60] sm:$0xff]
    %v1270 = vld [vmem:[#allocation8 + $0xf68] sm:$0xff]
    %v1271 = vld [vmem:[#allocation8 + $0xf70] sm:$0xff]
    %v1272 = vld [vmem:[#allocation8 + $0xf78] sm:$0xff]
    %v1273 = vld [vmem:[#allocation8 + $0xf80] sm:$0xff]
    %v1274 = vld [vmem:[#allocation8 + $0xf88] sm:$0xff]
    %v1275 = vld [vmem:[#allocation8 + $0xf90] sm:$0xff]
    %v1276 = vld [vmem:[#allocation8 + $0xf98] sm:$0xff]
    %v1277 = vld [vmem:[#allocation8 + $0xfa0] sm:$0xff]
    %v1278 = vld [vmem:[#allocation8 + $0xfa8] sm:$0xff]
    %v1279 = vld [vmem:[#allocation8 + $0xfb0] sm:$0xff]
    %v1280 = vld [vmem:[#allocation8 + $0xfb8] sm:$0xff]
    %v1281 = vld [vmem:[#allocation8 + $0xfc0] sm:$0xff]
    %v1282 = vld [vmem:[#allocation8 + $0xfc8] sm:$0xff]
    %v1283 = vld [vmem:[#allocation8 + $0xfd0] sm:$0xff]
    %v1284 = vld [vmem:[#allocation8 + $0xfd8] sm:$0xff]
    %v1285 = vld [vmem:[#allocation8 + $0xfe0] sm:$0xff]
    %v1286 = vld [vmem:[#allocation8 + $0xfe8] sm:$0xff]
    %v1287 = vld [vmem:[#allocation8 + $0xff0] sm:$0xff]
    %v1288 = vld [vmem:[#allocation8 + $0xff8] sm:$0xff]
    %v1289 = vld [vmem:[#allocation10] sm:$0xf]
    %v1291 = vlaneseq
    %v1292 = vshrl.u32 %v1291, 7
    %v1293 = vsub.s32 0, %v1292
    %v1294 = vrot.slane %v1289, %v1293
    %v1295 = vlaneseq
    %v1296 = vshrl.u32 %v1295, 7
    %v1297 = vsub.s32 1, %v1296
    %v1298 = vrot.slane %v1289, %v1297
    %v1299 = vlaneseq
    %v1300 = vshrl.u32 %v1299, 7
    %v1301 = vsub.s32 2, %v1300
    %v1302 = vrot.slane %v1289, %v1301
    %v1303 = vlaneseq
    %v1304 = vshrl.u32 %v1303, 7
    %v1305 = vsub.s32 3, %v1304
    %v1306 = vrot.slane %v1289, %v1305
    %v1823 = vunpack.c.l.b16 %v777
    %v1824 = vunpack.c.h.b16 %v777
    %v1825 = vunpack.c.l.b16 %v778
    %v1826 = vunpack.c.h.b16 %v778
    %v1827 = vunpack.c.l.b16 %v779
    %v1828 = vunpack.c.h.b16 %v779
    %v1829 = vunpack.c.l.b16 %v780
    %v1830 = vunpack.c.h.b16 %v780
    %v1831 = vunpack.c.l.b16 %v781
    %v1832 = vunpack.c.h.b16 %v781
    %v1833 = vunpack.c.l.b16 %v782
    %v1834 = vunpack.c.h.b16 %v782
    %v1835 = vunpack.c.l.b16 %v783
    %v1836 = vunpack.c.h.b16 %v783
    %v1837 = vunpack.c.l.b16 %v784
    %v1838 = vunpack.c.h.b16 %v784
    %v1839 = vunpack.c.l.b16 %v785
    %v1840 = vunpack.c.h.b16 %v785
    %v1841 = vunpack.c.l.b16 %v786
    %v1842 = vunpack.c.h.b16 %v786
    %v1843 = vunpack.c.l.b16 %v787
    %v1844 = vunpack.c.h.b16 %v787
    %v1845 = vunpack.c.l.b16 %v788
    %v1846 = vunpack.c.h.b16 %v788
    %v1847 = vunpack.c.l.b16 %v789
    %v1848 = vunpack.c.h.b16 %v789
    %v1849 = vunpack.c.l.b16 %v790
    %v1850 = vunpack.c.h.b16 %v790
    %v1851 = vunpack.c.l.b16 %v791
    %v1852 = vunpack.c.h.b16 %v791
    %v1853 = vunpack.c.l.b16 %v792
    %v1854 = vunpack.c.h.b16 %v792
    %v1855 = vunpack.c.l.b16 %v793
    %v1856 = vunpack.c.h.b16 %v793
    %v1857 = vunpack.c.l.b16 %v794
    %v1858 = vunpack.c.h.b16 %v794
    %v1859 = vunpack.c.l.b16 %v795
    %v1860 = vunpack.c.h.b16 %v795
    %v1861 = vunpack.c.l.b16 %v796
    %v1862 = vunpack.c.h.b16 %v796
    %v1863 = vunpack.c.l.b16 %v797
    %v1864 = vunpack.c.h.b16 %v797
    %v1865 = vunpack.c.l.b16 %v798
    %v1866 = vunpack.c.h.b16 %v798
    %v1867 = vunpack.c.l.b16 %v799
    %v1868 = vunpack.c.h.b16 %v799
    %v1869 = vunpack.c.l.b16 %v800
    %v1870 = vunpack.c.h.b16 %v800
    %v1871 = vunpack.c.l.b16 %v801
    %v1872 = vunpack.c.h.b16 %v801
    %v1873 = vunpack.c.l.b16 %v802
    %v1874 = vunpack.c.h.b16 %v802
    %v1875 = vunpack.c.l.b16 %v803
    %v1876 = vunpack.c.h.b16 %v803
    %v1877 = vunpack.c.l.b16 %v804
    %v1878 = vunpack.c.h.b16 %v804
    %v1879 = vunpack.c.l.b16 %v805
    %v1880 = vunpack.c.h.b16 %v805
    %v1881 = vunpack.c.l.b16 %v806
    %v1882 = vunpack.c.h.b16 %v806
    %v1883 = vunpack.c.l.b16 %v807
    %v1884 = vunpack.c.h.b16 %v807
    %v1885 = vunpack.c.l.b16 %v808
    %v1886 = vunpack.c.h.b16 %v808
    %v1887 = vunpack.c.l.b16 %v809
    %v1888 = vunpack.c.h.b16 %v809
    %v1889 = vunpack.c.l.b16 %v810
    %v1890 = vunpack.c.h.b16 %v810
    %v1891 = vunpack.c.l.b16 %v811
    %v1892 = vunpack.c.h.b16 %v811
    %v1893 = vunpack.c.l.b16 %v812
    %v1894 = vunpack.c.h.b16 %v812
    %v1895 = vunpack.c.l.b16 %v813
    %v1896 = vunpack.c.h.b16 %v813
    %v1897 = vunpack.c.l.b16 %v814
    %v1898 = vunpack.c.h.b16 %v814
    %v1899 = vunpack.c.l.b16 %v815
    %v1900 = vunpack.c.h.b16 %v815
    %v1901 = vunpack.c.l.b16 %v816
    %v1902 = vunpack.c.h.b16 %v816
    %v1903 = vunpack.c.l.b16 %v817
    %v1904 = vunpack.c.h.b16 %v817
    %v1905 = vunpack.c.l.b16 %v818
    %v1906 = vunpack.c.h.b16 %v818
    %v1907 = vunpack.c.l.b16 %v819
    %v1908 = vunpack.c.h.b16 %v819
    %v1909 = vunpack.c.l.b16 %v820
    %v1910 = vunpack.c.h.b16 %v820
    %v1911 = vunpack.c.l.b16 %v821
    %v1912 = vunpack.c.h.b16 %v821
    %v1913 = vunpack.c.l.b16 %v822
    %v1914 = vunpack.c.h.b16 %v822
    %v1915 = vunpack.c.l.b16 %v823
    %v1916 = vunpack.c.h.b16 %v823
    %v1917 = vunpack.c.l.b16 %v824
    %v1918 = vunpack.c.h.b16 %v824
    %v1919 = vunpack.c.l.b16 %v825
    %v1920 = vunpack.c.h.b16 %v825
    %v1921 = vunpack.c.l.b16 %v826
    %v1922 = vunpack.c.h.b16 %v826
    %v1923 = vunpack.c.l.b16 %v827
    %v1924 = vunpack.c.h.b16 %v827
    %v1925 = vunpack.c.l.b16 %v828
    %v1926 = vunpack.c.h.b16 %v828
    %v1927 = vunpack.c.l.b16 %v829
    %v1928 = vunpack.c.h.b16 %v829
    %v1929 = vunpack.c.l.b16 %v830
    %v1930 = vunpack.c.h.b16 %v830
    %v1931 = vunpack.c.l.b16 %v831
    %v1932 = vunpack.c.h.b16 %v831
    %v1933 = vunpack.c.l.b16 %v832
    %v1934 = vunpack.c.h.b16 %v832
    %v1935 = vunpack.c.l.b16 %v833
    %v1936 = vunpack.c.h.b16 %v833
    %v1937 = vunpack.c.l.b16 %v834
    %v1938 = vunpack.c.h.b16 %v834
    %v1939 = vunpack.c.l.b16 %v835
    %v1940 = vunpack.c.h.b16 %v835
    %v1941 = vunpack.c.l.b16 %v836
    %v1942 = vunpack.c.h.b16 %v836
    %v1943 = vunpack.c.l.b16 %v837
    %v1944 = vunpack.c.h.b16 %v837
    %v1945 = vunpack.c.l.b16 %v838
    %v1946 = vunpack.c.h.b16 %v838
    %v1947 = vunpack.c.l.b16 %v839
    %v1948 = vunpack.c.h.b16 %v839
    %v1949 = vunpack.c.l.b16 %v840
    %v1950 = vunpack.c.h.b16 %v840
    %v1951 = vunpack.c.l.b16 %v841
    %v1952 = vunpack.c.h.b16 %v841
    %v1953 = vunpack.c.l.b16 %v842
    %v1954 = vunpack.c.h.b16 %v842
    %v1955 = vunpack.c.l.b16 %v843
    %v1956 = vunpack.c.h.b16 %v843
    %v1957 = vunpack.c.l.b16 %v844
    %v1958 = vunpack.c.h.b16 %v844
    %v1959 = vunpack.c.l.b16 %v845
    %v1960 = vunpack.c.h.b16 %v845
    %v1961 = vunpack.c.l.b16 %v846
    %v1962 = vunpack.c.h.b16 %v846
    %v1963 = vunpack.c.l.b16 %v847
    %v1964 = vunpack.c.h.b16 %v847
    %v1965 = vunpack.c.l.b16 %v848
    %v1966 = vunpack.c.h.b16 %v848
    %v1967 = vunpack.c.l.b16 %v849
    %v1968 = vunpack.c.h.b16 %v849
    %v1969 = vunpack.c.l.b16 %v850
    %v1970 = vunpack.c.h.b16 %v850
    %v1971 = vunpack.c.l.b16 %v851
    %v1972 = vunpack.c.h.b16 %v851
    %v1973 = vunpack.c.l.b16 %v852
    %v1974 = vunpack.c.h.b16 %v852
    %v1975 = vunpack.c.l.b16 %v853
    %v1976 = vunpack.c.h.b16 %v853
    %v1977 = vunpack.c.l.b16 %v854
    %v1978 = vunpack.c.h.b16 %v854
    %v1979 = vunpack.c.l.b16 %v855
    %v1980 = vunpack.c.h.b16 %v855
    %v1981 = vunpack.c.l.b16 %v856
    %v1982 = vunpack.c.h.b16 %v856
    %v1983 = vunpack.c.l.b16 %v857
    %v1984 = vunpack.c.h.b16 %v857
    %v1985 = vunpack.c.l.b16 %v858
    %v1986 = vunpack.c.h.b16 %v858
    %v1987 = vunpack.c.l.b16 %v859
    %v1988 = vunpack.c.h.b16 %v859
    %v1989 = vunpack.c.l.b16 %v860
    %v1990 = vunpack.c.h.b16 %v860
    %v1991 = vunpack.c.l.b16 %v861
    %v1992 = vunpack.c.h.b16 %v861
    %v1993 = vunpack.c.l.b16 %v862
    %v1994 = vunpack.c.h.b16 %v862
    %v1995 = vunpack.c.l.b16 %v863
    %v1996 = vunpack.c.h.b16 %v863
    %v1997 = vunpack.c.l.b16 %v864
    %v1998 = vunpack.c.h.b16 %v864
    %v1999 = vunpack.c.l.b16 %v865
    %v2000 = vunpack.c.h.b16 %v865
    %v2001 = vunpack.c.l.b16 %v866
    %v2002 = vunpack.c.h.b16 %v866
    %v2003 = vunpack.c.l.b16 %v867
    %v2004 = vunpack.c.h.b16 %v867
    %v2005 = vunpack.c.l.b16 %v868
    %v2006 = vunpack.c.h.b16 %v868
    %v2007 = vunpack.c.l.b16 %v869
    %v2008 = vunpack.c.h.b16 %v869
    %v2009 = vunpack.c.l.b16 %v870
    %v2010 = vunpack.c.h.b16 %v870
    %v2011 = vunpack.c.l.b16 %v871
    %v2012 = vunpack.c.h.b16 %v871
    %v2013 = vunpack.c.l.b16 %v872
    %v2014 = vunpack.c.h.b16 %v872
    %v2015 = vunpack.c.l.b16 %v873
    %v2016 = vunpack.c.h.b16 %v873
    %v2017 = vunpack.c.l.b16 %v874
    %v2018 = vunpack.c.h.b16 %v874
    %v2019 = vunpack.c.l.b16 %v875
    %v2020 = vunpack.c.h.b16 %v875
    %v2021 = vunpack.c.l.b16 %v876
    %v2022 = vunpack.c.h.b16 %v876
    %v2023 = vunpack.c.l.b16 %v877
    %v2024 = vunpack.c.h.b16 %v877
    %v2025 = vunpack.c.l.b16 %v878
    %v2026 = vunpack.c.h.b16 %v878
    %v2027 = vunpack.c.l.b16 %v879
    %v2028 = vunpack.c.h.b16 %v879
    %v2029 = vunpack.c.l.b16 %v880
    %v2030 = vunpack.c.h.b16 %v880
    %v2031 = vunpack.c.l.b16 %v881
    %v2032 = vunpack.c.h.b16 %v881
    %v2033 = vunpack.c.l.b16 %v882
    %v2034 = vunpack.c.h.b16 %v882
    %v2035 = vunpack.c.l.b16 %v883
    %v2036 = vunpack.c.h.b16 %v883
    %v2037 = vunpack.c.l.b16 %v884
    %v2038 = vunpack.c.h.b16 %v884
    %v2039 = vunpack.c.l.b16 %v885
    %v2040 = vunpack.c.h.b16 %v885
    %v2041 = vunpack.c.l.b16 %v886
    %v2042 = vunpack.c.h.b16 %v886
    %v2043 = vunpack.c.l.b16 %v887
    %v2044 = vunpack.c.h.b16 %v887
    %v2045 = vunpack.c.l.b16 %v888
    %v2046 = vunpack.c.h.b16 %v888
    %v2047 = vunpack.c.l.b16 %v889
    %v2048 = vunpack.c.h.b16 %v889
    %v2049 = vunpack.c.l.b16 %v890
    %v2050 = vunpack.c.h.b16 %v890
    %v2051 = vunpack.c.l.b16 %v891
    %v2052 = vunpack.c.h.b16 %v891
    %v2053 = vunpack.c.l.b16 %v892
    %v2054 = vunpack.c.h.b16 %v892
    %v2055 = vunpack.c.l.b16 %v893
    %v2056 = vunpack.c.h.b16 %v893
    %v2057 = vunpack.c.l.b16 %v894
    %v2058 = vunpack.c.h.b16 %v894
    %v2059 = vunpack.c.l.b16 %v895
    %v2060 = vunpack.c.h.b16 %v895
    %v2061 = vunpack.c.l.b16 %v896
    %v2062 = vunpack.c.h.b16 %v896
    %v2063 = vunpack.c.l.b16 %v897
    %v2064 = vunpack.c.h.b16 %v897
    %v2065 = vunpack.c.l.b16 %v898
    %v2066 = vunpack.c.h.b16 %v898
    %v2067 = vunpack.c.l.b16 %v899
    %v2068 = vunpack.c.h.b16 %v899
    %v2069 = vunpack.c.l.b16 %v900
    %v2070 = vunpack.c.h.b16 %v900
    %v2071 = vunpack.c.l.b16 %v901
    %v2072 = vunpack.c.h.b16 %v901
    %v2073 = vunpack.c.l.b16 %v902
    %v2074 = vunpack.c.h.b16 %v902
    %v2075 = vunpack.c.l.b16 %v903
    %v2076 = vunpack.c.h.b16 %v903
    %v2077 = vunpack.c.l.b16 %v904
    %v2078 = vunpack.c.h.b16 %v904
    %v2079 = vunpack.c.l.b16 %v905
    %v2080 = vunpack.c.h.b16 %v905
    %v2081 = vunpack.c.l.b16 %v906
    %v2082 = vunpack.c.h.b16 %v906
    %v2083 = vunpack.c.l.b16 %v907
    %v2084 = vunpack.c.h.b16 %v907
    %v2085 = vunpack.c.l.b16 %v908
    %v2086 = vunpack.c.h.b16 %v908
    %v2087 = vunpack.c.l.b16 %v909
    %v2088 = vunpack.c.h.b16 %v909
    %v2089 = vunpack.c.l.b16 %v910
    %v2090 = vunpack.c.h.b16 %v910
    %v2091 = vunpack.c.l.b16 %v911
    %v2092 = vunpack.c.h.b16 %v911
    %v2093 = vunpack.c.l.b16 %v912
    %v2094 = vunpack.c.h.b16 %v912
    %v2095 = vunpack.c.l.b16 %v913
    %v2096 = vunpack.c.h.b16 %v913
    %v2097 = vunpack.c.l.b16 %v914
    %v2098 = vunpack.c.h.b16 %v914
    %v2099 = vunpack.c.l.b16 %v915
    %v2100 = vunpack.c.h.b16 %v915
    %v2101 = vunpack.c.l.b16 %v916
    %v2102 = vunpack.c.h.b16 %v916
    %v2103 = vunpack.c.l.b16 %v917
    %v2104 = vunpack.c.h.b16 %v917
    %v2105 = vunpack.c.l.b16 %v918
    %v2106 = vunpack.c.h.b16 %v918
    %v2107 = vunpack.c.l.b16 %v919
    %v2108 = vunpack.c.h.b16 %v919
    %v2109 = vunpack.c.l.b16 %v920
    %v2110 = vunpack.c.h.b16 %v920
    %v2111 = vunpack.c.l.b16 %v921
    %v2112 = vunpack.c.h.b16 %v921
    %v2113 = vunpack.c.l.b16 %v922
    %v2114 = vunpack.c.h.b16 %v922
    %v2115 = vunpack.c.l.b16 %v923
    %v2116 = vunpack.c.h.b16 %v923
    %v2117 = vunpack.c.l.b16 %v924
    %v2118 = vunpack.c.h.b16 %v924
    %v2119 = vunpack.c.l.b16 %v925
    %v2120 = vunpack.c.h.b16 %v925
    %v2121 = vunpack.c.l.b16 %v926
    %v2122 = vunpack.c.h.b16 %v926
    %v2123 = vunpack.c.l.b16 %v927
    %v2124 = vunpack.c.h.b16 %v927
    %v2125 = vunpack.c.l.b16 %v928
    %v2126 = vunpack.c.h.b16 %v928
    %v2127 = vunpack.c.l.b16 %v929
    %v2128 = vunpack.c.h.b16 %v929
    %v2129 = vunpack.c.l.b16 %v930
    %v2130 = vunpack.c.h.b16 %v930
    %v2131 = vunpack.c.l.b16 %v931
    %v2132 = vunpack.c.h.b16 %v931
    %v2133 = vunpack.c.l.b16 %v932
    %v2134 = vunpack.c.h.b16 %v932
    %v2135 = vunpack.c.l.b16 %v933
    %v2136 = vunpack.c.h.b16 %v933
    %v2137 = vunpack.c.l.b16 %v934
    %v2138 = vunpack.c.h.b16 %v934
    %v2139 = vunpack.c.l.b16 %v935
    %v2140 = vunpack.c.h.b16 %v935
    %v2141 = vunpack.c.l.b16 %v936
    %v2142 = vunpack.c.h.b16 %v936
    %v2143 = vunpack.c.l.b16 %v937
    %v2144 = vunpack.c.h.b16 %v937
    %v2145 = vunpack.c.l.b16 %v938
    %v2146 = vunpack.c.h.b16 %v938
    %v2147 = vunpack.c.l.b16 %v939
    %v2148 = vunpack.c.h.b16 %v939
    %v2149 = vunpack.c.l.b16 %v940
    %v2150 = vunpack.c.h.b16 %v940
    %v2151 = vunpack.c.l.b16 %v941
    %v2152 = vunpack.c.h.b16 %v941
    %v2153 = vunpack.c.l.b16 %v942
    %v2154 = vunpack.c.h.b16 %v942
    %v2155 = vunpack.c.l.b16 %v943
    %v2156 = vunpack.c.h.b16 %v943
    %v2157 = vunpack.c.l.b16 %v944
    %v2158 = vunpack.c.h.b16 %v944
    %v2159 = vunpack.c.l.b16 %v945
    %v2160 = vunpack.c.h.b16 %v945
    %v2161 = vunpack.c.l.b16 %v946
    %v2162 = vunpack.c.h.b16 %v946
    %v2163 = vunpack.c.l.b16 %v947
    %v2164 = vunpack.c.h.b16 %v947
    %v2165 = vunpack.c.l.b16 %v948
    %v2166 = vunpack.c.h.b16 %v948
    %v2167 = vunpack.c.l.b16 %v949
    %v2168 = vunpack.c.h.b16 %v949
    %v2169 = vunpack.c.l.b16 %v950
    %v2170 = vunpack.c.h.b16 %v950
    %v2171 = vunpack.c.l.b16 %v951
    %v2172 = vunpack.c.h.b16 %v951
    %v2173 = vunpack.c.l.b16 %v952
    %v2174 = vunpack.c.h.b16 %v952
    %v2175 = vunpack.c.l.b16 %v953
    %v2176 = vunpack.c.h.b16 %v953
    %v2177 = vunpack.c.l.b16 %v954
    %v2178 = vunpack.c.h.b16 %v954
    %v2179 = vunpack.c.l.b16 %v955
    %v2180 = vunpack.c.h.b16 %v955
    %v2181 = vunpack.c.l.b16 %v956
    %v2182 = vunpack.c.h.b16 %v956
    %v2183 = vunpack.c.l.b16 %v957
    %v2184 = vunpack.c.h.b16 %v957
    %v2185 = vunpack.c.l.b16 %v958
    %v2186 = vunpack.c.h.b16 %v958
    %v2187 = vunpack.c.l.b16 %v959
    %v2188 = vunpack.c.h.b16 %v959
    %v2189 = vunpack.c.l.b16 %v960
    %v2190 = vunpack.c.h.b16 %v960
    %v2191 = vunpack.c.l.b16 %v961
    %v2192 = vunpack.c.h.b16 %v961
    %v2193 = vunpack.c.l.b16 %v962
    %v2194 = vunpack.c.h.b16 %v962
    %v2195 = vunpack.c.l.b16 %v963
    %v2196 = vunpack.c.h.b16 %v963
    %v2197 = vunpack.c.l.b16 %v964
    %v2198 = vunpack.c.h.b16 %v964
    %v2199 = vunpack.c.l.b16 %v965
    %v2200 = vunpack.c.h.b16 %v965
    %v2201 = vunpack.c.l.b16 %v966
    %v2202 = vunpack.c.h.b16 %v966
    %v2203 = vunpack.c.l.b16 %v967
    %v2204 = vunpack.c.h.b16 %v967
    %v2205 = vunpack.c.l.b16 %v968
    %v2206 = vunpack.c.h.b16 %v968
    %v2207 = vunpack.c.l.b16 %v969
    %v2208 = vunpack.c.h.b16 %v969
    %v2209 = vunpack.c.l.b16 %v970
    %v2210 = vunpack.c.h.b16 %v970
    %v2211 = vunpack.c.l.b16 %v971
    %v2212 = vunpack.c.h.b16 %v971
    %v2213 = vunpack.c.l.b16 %v972
    %v2214 = vunpack.c.h.b16 %v972
    %v2215 = vunpack.c.l.b16 %v973
    %v2216 = vunpack.c.h.b16 %v973
    %v2217 = vunpack.c.l.b16 %v974
    %v2218 = vunpack.c.h.b16 %v974
    %v2219 = vunpack.c.l.b16 %v975
    %v2220 = vunpack.c.h.b16 %v975
    %v2221 = vunpack.c.l.b16 %v976
    %v2222 = vunpack.c.h.b16 %v976
    %v2223 = vunpack.c.l.b16 %v977
    %v2224 = vunpack.c.h.b16 %v977
    %v2225 = vunpack.c.l.b16 %v978
    %v2226 = vunpack.c.h.b16 %v978
    %v2227 = vunpack.c.l.b16 %v979
    %v2228 = vunpack.c.h.b16 %v979
    %v2229 = vunpack.c.l.b16 %v980
    %v2230 = vunpack.c.h.b16 %v980
    %v2231 = vunpack.c.l.b16 %v981
    %v2232 = vunpack.c.h.b16 %v981
    %v2233 = vunpack.c.l.b16 %v982
    %v2234 = vunpack.c.h.b16 %v982
    %v2235 = vunpack.c.l.b16 %v983
    %v2236 = vunpack.c.h.b16 %v983
    %v2237 = vunpack.c.l.b16 %v984
    %v2238 = vunpack.c.h.b16 %v984
    %v2239 = vunpack.c.l.b16 %v985
    %v2240 = vunpack.c.h.b16 %v985
    %v2241 = vunpack.c.l.b16 %v986
    %v2242 = vunpack.c.h.b16 %v986
    %v2243 = vunpack.c.l.b16 %v987
    %v2244 = vunpack.c.h.b16 %v987
    %v2245 = vunpack.c.l.b16 %v988
    %v2246 = vunpack.c.h.b16 %v988
    %v2247 = vunpack.c.l.b16 %v989
    %v2248 = vunpack.c.h.b16 %v989
    %v2249 = vunpack.c.l.b16 %v990
    %v2250 = vunpack.c.h.b16 %v990
    %v2251 = vunpack.c.l.b16 %v991
    %v2252 = vunpack.c.h.b16 %v991
    %v2253 = vunpack.c.l.b16 %v992
    %v2254 = vunpack.c.h.b16 %v992
    %v2255 = vunpack.c.l.b16 %v993
    %v2256 = vunpack.c.h.b16 %v993
    %v2257 = vunpack.c.l.b16 %v994
    %v2258 = vunpack.c.h.b16 %v994
    %v2259 = vunpack.c.l.b16 %v995
    %v2260 = vunpack.c.h.b16 %v995
    %v2261 = vunpack.c.l.b16 %v996
    %v2262 = vunpack.c.h.b16 %v996
    %v2263 = vunpack.c.l.b16 %v997
    %v2264 = vunpack.c.h.b16 %v997
    %v2265 = vunpack.c.l.b16 %v998
    %v2266 = vunpack.c.h.b16 %v998
    %v2267 = vunpack.c.l.b16 %v999
    %v2268 = vunpack.c.h.b16 %v999
    %v2269 = vunpack.c.l.b16 %v1000
    %v2270 = vunpack.c.h.b16 %v1000
    %v2271 = vunpack.c.l.b16 %v1001
    %v2272 = vunpack.c.h.b16 %v1001
    %v2273 = vunpack.c.l.b16 %v1002
    %v2274 = vunpack.c.h.b16 %v1002
    %v2275 = vunpack.c.l.b16 %v1003
    %v2276 = vunpack.c.h.b16 %v1003
    %v2277 = vunpack.c.l.b16 %v1004
    %v2278 = vunpack.c.h.b16 %v1004
    %v2279 = vunpack.c.l.b16 %v1005
    %v2280 = vunpack.c.h.b16 %v1005
    %v2281 = vunpack.c.l.b16 %v1006
    %v2282 = vunpack.c.h.b16 %v1006
    %v2283 = vunpack.c.l.b16 %v1007
    %v2284 = vunpack.c.h.b16 %v1007
    %v2285 = vunpack.c.l.b16 %v1008
    %v2286 = vunpack.c.h.b16 %v1008
    %v2287 = vunpack.c.l.b16 %v1009
    %v2288 = vunpack.c.h.b16 %v1009
    %v2289 = vunpack.c.l.b16 %v1010
    %v2290 = vunpack.c.h.b16 %v1010
    %v2291 = vunpack.c.l.b16 %v1011
    %v2292 = vunpack.c.h.b16 %v1011
    %v2293 = vunpack.c.l.b16 %v1012
    %v2294 = vunpack.c.h.b16 %v1012
    %v2295 = vunpack.c.l.b16 %v1013
    %v2296 = vunpack.c.h.b16 %v1013
    %v2297 = vunpack.c.l.b16 %v1014
    %v2298 = vunpack.c.h.b16 %v1014
    %v2299 = vunpack.c.l.b16 %v1015
    %v2300 = vunpack.c.h.b16 %v1015
    %v2301 = vunpack.c.l.b16 %v1016
    %v2302 = vunpack.c.h.b16 %v1016
    %v2303 = vunpack.c.l.b16 %v1017
    %v2304 = vunpack.c.h.b16 %v1017
    %v2305 = vunpack.c.l.b16 %v1018
    %v2306 = vunpack.c.h.b16 %v1018
    %v2307 = vunpack.c.l.b16 %v1019
    %v2308 = vunpack.c.h.b16 %v1019
    %v2309 = vunpack.c.l.b16 %v1020
    %v2310 = vunpack.c.h.b16 %v1020
    %v2311 = vunpack.c.l.b16 %v1021
    %v2312 = vunpack.c.h.b16 %v1021
    %v2313 = vunpack.c.l.b16 %v1022
    %v2314 = vunpack.c.h.b16 %v1022
    %v2315 = vunpack.c.l.b16 %v1023
    %v2316 = vunpack.c.h.b16 %v1023
    %v2317 = vunpack.c.l.b16 %v1024
    %v2318 = vunpack.c.h.b16 %v1024
    %v2319 = vunpack.c.l.b16 %v1025
    %v2320 = vunpack.c.h.b16 %v1025
    %v2321 = vunpack.c.l.b16 %v1026
    %v2322 = vunpack.c.h.b16 %v1026
    %v2323 = vunpack.c.l.b16 %v1027
    %v2324 = vunpack.c.h.b16 %v1027
    %v2325 = vunpack.c.l.b16 %v1028
    %v2326 = vunpack.c.h.b16 %v1028
    %v2327 = vunpack.c.l.b16 %v1029
    %v2328 = vunpack.c.h.b16 %v1029
    %v2329 = vunpack.c.l.b16 %v1030
    %v2330 = vunpack.c.h.b16 %v1030
    %v2331 = vunpack.c.l.b16 %v1031
    %v2332 = vunpack.c.h.b16 %v1031
    %v2333 = vunpack.c.l.b16 %v1032
    %v2334 = vunpack.c.h.b16 %v1032
    %v2335 = vunpack.c.l.b16 %v1033
    %v2336 = vunpack.c.h.b16 %v1033
    %v2337 = vunpack.c.l.b16 %v1034
    %v2338 = vunpack.c.h.b16 %v1034
    %v2339 = vunpack.c.l.b16 %v1035
    %v2340 = vunpack.c.h.b16 %v1035
    %v2341 = vunpack.c.l.b16 %v1036
    %v2342 = vunpack.c.h.b16 %v1036
    %v2343 = vunpack.c.l.b16 %v1037
    %v2344 = vunpack.c.h.b16 %v1037
    %v2345 = vunpack.c.l.b16 %v1038
    %v2346 = vunpack.c.h.b16 %v1038
    %v2347 = vunpack.c.l.b16 %v1039
    %v2348 = vunpack.c.h.b16 %v1039
    %v2349 = vunpack.c.l.b16 %v1040
    %v2350 = vunpack.c.h.b16 %v1040
    %v2351 = vunpack.c.l.b16 %v1041
    %v2352 = vunpack.c.h.b16 %v1041
    %v2353 = vunpack.c.l.b16 %v1042
    %v2354 = vunpack.c.h.b16 %v1042
    %v2355 = vunpack.c.l.b16 %v1043
    %v2356 = vunpack.c.h.b16 %v1043
    %v2357 = vunpack.c.l.b16 %v1044
    %v2358 = vunpack.c.h.b16 %v1044
    %v2359 = vunpack.c.l.b16 %v1045
    %v2360 = vunpack.c.h.b16 %v1045
    %v2361 = vunpack.c.l.b16 %v1046
    %v2362 = vunpack.c.h.b16 %v1046
    %v2363 = vunpack.c.l.b16 %v1047
    %v2364 = vunpack.c.h.b16 %v1047
    %v2365 = vunpack.c.l.b16 %v1048
    %v2366 = vunpack.c.h.b16 %v1048
    %v2367 = vunpack.c.l.b16 %v1049
    %v2368 = vunpack.c.h.b16 %v1049
    %v2369 = vunpack.c.l.b16 %v1050
    %v2370 = vunpack.c.h.b16 %v1050
    %v2371 = vunpack.c.l.b16 %v1051
    %v2372 = vunpack.c.h.b16 %v1051
    %v2373 = vunpack.c.l.b16 %v1052
    %v2374 = vunpack.c.h.b16 %v1052
    %v2375 = vunpack.c.l.b16 %v1053
    %v2376 = vunpack.c.h.b16 %v1053
    %v2377 = vunpack.c.l.b16 %v1054
    %v2378 = vunpack.c.h.b16 %v1054
    %v2379 = vunpack.c.l.b16 %v1055
    %v2380 = vunpack.c.h.b16 %v1055
    %v2381 = vunpack.c.l.b16 %v1056
    %v2382 = vunpack.c.h.b16 %v1056
    %v2383 = vunpack.c.l.b16 %v1057
    %v2384 = vunpack.c.h.b16 %v1057
    %v2385 = vunpack.c.l.b16 %v1058
    %v2386 = vunpack.c.h.b16 %v1058
    %v2387 = vunpack.c.l.b16 %v1059
    %v2388 = vunpack.c.h.b16 %v1059
    %v2389 = vunpack.c.l.b16 %v1060
    %v2390 = vunpack.c.h.b16 %v1060
    %v2391 = vunpack.c.l.b16 %v1061
    %v2392 = vunpack.c.h.b16 %v1061
    %v2393 = vunpack.c.l.b16 %v1062
    %v2394 = vunpack.c.h.b16 %v1062
    %v2395 = vunpack.c.l.b16 %v1063
    %v2396 = vunpack.c.h.b16 %v1063
    %v2397 = vunpack.c.l.b16 %v1064
    %v2398 = vunpack.c.h.b16 %v1064
    %v2399 = vunpack.c.l.b16 %v1065
    %v2400 = vunpack.c.h.b16 %v1065
    %v2401 = vunpack.c.l.b16 %v1066
    %v2402 = vunpack.c.h.b16 %v1066
    %v2403 = vunpack.c.l.b16 %v1067
    %v2404 = vunpack.c.h.b16 %v1067
    %v2405 = vunpack.c.l.b16 %v1068
    %v2406 = vunpack.c.h.b16 %v1068
    %v2407 = vunpack.c.l.b16 %v1069
    %v2408 = vunpack.c.h.b16 %v1069
    %v2409 = vunpack.c.l.b16 %v1070
    %v2410 = vunpack.c.h.b16 %v1070
    %v2411 = vunpack.c.l.b16 %v1071
    %v2412 = vunpack.c.h.b16 %v1071
    %v2413 = vunpack.c.l.b16 %v1072
    %v2414 = vunpack.c.h.b16 %v1072
    %v2415 = vunpack.c.l.b16 %v1073
    %v2416 = vunpack.c.h.b16 %v1073
    %v2417 = vunpack.c.l.b16 %v1074
    %v2418 = vunpack.c.h.b16 %v1074
    %v2419 = vunpack.c.l.b16 %v1075
    %v2420 = vunpack.c.h.b16 %v1075
    %v2421 = vunpack.c.l.b16 %v1076
    %v2422 = vunpack.c.h.b16 %v1076
    %v2423 = vunpack.c.l.b16 %v1077
    %v2424 = vunpack.c.h.b16 %v1077
    %v2425 = vunpack.c.l.b16 %v1078
    %v2426 = vunpack.c.h.b16 %v1078
    %v2427 = vunpack.c.l.b16 %v1079
    %v2428 = vunpack.c.h.b16 %v1079
    %v2429 = vunpack.c.l.b16 %v1080
    %v2430 = vunpack.c.h.b16 %v1080
    %v2431 = vunpack.c.l.b16 %v1081
    %v2432 = vunpack.c.h.b16 %v1081
    %v2433 = vunpack.c.l.b16 %v1082
    %v2434 = vunpack.c.h.b16 %v1082
    %v2435 = vunpack.c.l.b16 %v1083
    %v2436 = vunpack.c.h.b16 %v1083
    %v2437 = vunpack.c.l.b16 %v1084
    %v2438 = vunpack.c.h.b16 %v1084
    %v2439 = vunpack.c.l.b16 %v1085
    %v2440 = vunpack.c.h.b16 %v1085
    %v2441 = vunpack.c.l.b16 %v1086
    %v2442 = vunpack.c.h.b16 %v1086
    %v2443 = vunpack.c.l.b16 %v1087
    %v2444 = vunpack.c.h.b16 %v1087
    %v2445 = vunpack.c.l.b16 %v1088
    %v2446 = vunpack.c.h.b16 %v1088
    %v2447 = vunpack.c.l.b16 %v1089
    %v2448 = vunpack.c.h.b16 %v1089
    %v2449 = vunpack.c.l.b16 %v1090
    %v2450 = vunpack.c.h.b16 %v1090
    %v2451 = vunpack.c.l.b16 %v1091
    %v2452 = vunpack.c.h.b16 %v1091
    %v2453 = vunpack.c.l.b16 %v1092
    %v2454 = vunpack.c.h.b16 %v1092
    %v2455 = vunpack.c.l.b16 %v1093
    %v2456 = vunpack.c.h.b16 %v1093
    %v2457 = vunpack.c.l.b16 %v1094
    %v2458 = vunpack.c.h.b16 %v1094
    %v2459 = vunpack.c.l.b16 %v1095
    %v2460 = vunpack.c.h.b16 %v1095
    %v2461 = vunpack.c.l.b16 %v1096
    %v2462 = vunpack.c.h.b16 %v1096
    %v2463 = vunpack.c.l.b16 %v1097
    %v2464 = vunpack.c.h.b16 %v1097
    %v2465 = vunpack.c.l.b16 %v1098
    %v2466 = vunpack.c.h.b16 %v1098
    %v2467 = vunpack.c.l.b16 %v1099
    %v2468 = vunpack.c.h.b16 %v1099
    %v2469 = vunpack.c.l.b16 %v1100
    %v2470 = vunpack.c.h.b16 %v1100
    %v2471 = vunpack.c.l.b16 %v1101
    %v2472 = vunpack.c.h.b16 %v1101
    %v2473 = vunpack.c.l.b16 %v1102
    %v2474 = vunpack.c.h.b16 %v1102
    %v2475 = vunpack.c.l.b16 %v1103
    %v2476 = vunpack.c.h.b16 %v1103
    %v2477 = vunpack.c.l.b16 %v1104
    %v2478 = vunpack.c.h.b16 %v1104
    %v2479 = vunpack.c.l.b16 %v1105
    %v2480 = vunpack.c.h.b16 %v1105
    %v2481 = vunpack.c.l.b16 %v1106
    %v2482 = vunpack.c.h.b16 %v1106
    %v2483 = vunpack.c.l.b16 %v1107
    %v2484 = vunpack.c.h.b16 %v1107
    %v2485 = vunpack.c.l.b16 %v1108
    %v2486 = vunpack.c.h.b16 %v1108
    %v2487 = vunpack.c.l.b16 %v1109
    %v2488 = vunpack.c.h.b16 %v1109
    %v2489 = vunpack.c.l.b16 %v1110
    %v2490 = vunpack.c.h.b16 %v1110
    %v2491 = vunpack.c.l.b16 %v1111
    %v2492 = vunpack.c.h.b16 %v1111
    %v2493 = vunpack.c.l.b16 %v1112
    %v2494 = vunpack.c.h.b16 %v1112
    %v2495 = vunpack.c.l.b16 %v1113
    %v2496 = vunpack.c.h.b16 %v1113
    %v2497 = vunpack.c.l.b16 %v1114
    %v2498 = vunpack.c.h.b16 %v1114
    %v2499 = vunpack.c.l.b16 %v1115
    %v2500 = vunpack.c.h.b16 %v1115
    %v2501 = vunpack.c.l.b16 %v1116
    %v2502 = vunpack.c.h.b16 %v1116
    %v2503 = vunpack.c.l.b16 %v1117
    %v2504 = vunpack.c.h.b16 %v1117
    %v2505 = vunpack.c.l.b16 %v1118
    %v2506 = vunpack.c.h.b16 %v1118
    %v2507 = vunpack.c.l.b16 %v1119
    %v2508 = vunpack.c.h.b16 %v1119
    %v2509 = vunpack.c.l.b16 %v1120
    %v2510 = vunpack.c.h.b16 %v1120
    %v2511 = vunpack.c.l.b16 %v1121
    %v2512 = vunpack.c.h.b16 %v1121
    %v2513 = vunpack.c.l.b16 %v1122
    %v2514 = vunpack.c.h.b16 %v1122
    %v2515 = vunpack.c.l.b16 %v1123
    %v2516 = vunpack.c.h.b16 %v1123
    %v2517 = vunpack.c.l.b16 %v1124
    %v2518 = vunpack.c.h.b16 %v1124
    %v2519 = vunpack.c.l.b16 %v1125
    %v2520 = vunpack.c.h.b16 %v1125
    %v2521 = vunpack.c.l.b16 %v1126
    %v2522 = vunpack.c.h.b16 %v1126
    %v2523 = vunpack.c.l.b16 %v1127
    %v2524 = vunpack.c.h.b16 %v1127
    %v2525 = vunpack.c.l.b16 %v1128
    %v2526 = vunpack.c.h.b16 %v1128
    %v2527 = vunpack.c.l.b16 %v1129
    %v2528 = vunpack.c.h.b16 %v1129
    %v2529 = vunpack.c.l.b16 %v1130
    %v2530 = vunpack.c.h.b16 %v1130
    %v2531 = vunpack.c.l.b16 %v1131
    %v2532 = vunpack.c.h.b16 %v1131
    %v2533 = vunpack.c.l.b16 %v1132
    %v2534 = vunpack.c.h.b16 %v1132
    %v2535 = vunpack.c.l.b16 %v1133
    %v2536 = vunpack.c.h.b16 %v1133
    %v2537 = vunpack.c.l.b16 %v1134
    %v2538 = vunpack.c.h.b16 %v1134
    %v2539 = vunpack.c.l.b16 %v1135
    %v2540 = vunpack.c.h.b16 %v1135
    %v2541 = vunpack.c.l.b16 %v1136
    %v2542 = vunpack.c.h.b16 %v1136
    %v2543 = vunpack.c.l.b16 %v1137
    %v2544 = vunpack.c.h.b16 %v1137
    %v2545 = vunpack.c.l.b16 %v1138
    %v2546 = vunpack.c.h.b16 %v1138
    %v2547 = vunpack.c.l.b16 %v1139
    %v2548 = vunpack.c.h.b16 %v1139
    %v2549 = vunpack.c.l.b16 %v1140
    %v2550 = vunpack.c.h.b16 %v1140
    %v2551 = vunpack.c.l.b16 %v1141
    %v2552 = vunpack.c.h.b16 %v1141
    %v2553 = vunpack.c.l.b16 %v1142
    %v2554 = vunpack.c.h.b16 %v1142
    %v2555 = vunpack.c.l.b16 %v1143
    %v2556 = vunpack.c.h.b16 %v1143
    %v2557 = vunpack.c.l.b16 %v1144
    %v2558 = vunpack.c.h.b16 %v1144
    %v2559 = vunpack.c.l.b16 %v1145
    %v2560 = vunpack.c.h.b16 %v1145
    %v2561 = vunpack.c.l.b16 %v1146
    %v2562 = vunpack.c.h.b16 %v1146
    %v2563 = vunpack.c.l.b16 %v1147
    %v2564 = vunpack.c.h.b16 %v1147
    %v2565 = vunpack.c.l.b16 %v1148
    %v2566 = vunpack.c.h.b16 %v1148
    %v2567 = vunpack.c.l.b16 %v1149
    %v2568 = vunpack.c.h.b16 %v1149
    %v2569 = vunpack.c.l.b16 %v1150
    %v2570 = vunpack.c.h.b16 %v1150
    %v2571 = vunpack.c.l.b16 %v1151
    %v2572 = vunpack.c.h.b16 %v1151
    %v2573 = vunpack.c.l.b16 %v1152
    %v2574 = vunpack.c.h.b16 %v1152
    %v2575 = vunpack.c.l.b16 %v1153
    %v2576 = vunpack.c.h.b16 %v1153
    %v2577 = vunpack.c.l.b16 %v1154
    %v2578 = vunpack.c.h.b16 %v1154
    %v2579 = vunpack.c.l.b16 %v1155
    %v2580 = vunpack.c.h.b16 %v1155
    %v2581 = vunpack.c.l.b16 %v1156
    %v2582 = vunpack.c.h.b16 %v1156
    %v2583 = vunpack.c.l.b16 %v1157
    %v2584 = vunpack.c.h.b16 %v1157
    %v2585 = vunpack.c.l.b16 %v1158
    %v2586 = vunpack.c.h.b16 %v1158
    %v2587 = vunpack.c.l.b16 %v1159
    %v2588 = vunpack.c.h.b16 %v1159
    %v2589 = vunpack.c.l.b16 %v1160
    %v2590 = vunpack.c.h.b16 %v1160
    %v2591 = vunpack.c.l.b16 %v1161
    %v2592 = vunpack.c.h.b16 %v1161
    %v2593 = vunpack.c.l.b16 %v1162
    %v2594 = vunpack.c.h.b16 %v1162
    %v2595 = vunpack.c.l.b16 %v1163
    %v2596 = vunpack.c.h.b16 %v1163
    %v2597 = vunpack.c.l.b16 %v1164
    %v2598 = vunpack.c.h.b16 %v1164
    %v2599 = vunpack.c.l.b16 %v1165
    %v2600 = vunpack.c.h.b16 %v1165
    %v2601 = vunpack.c.l.b16 %v1166
    %v2602 = vunpack.c.h.b16 %v1166
    %v2603 = vunpack.c.l.b16 %v1167
    %v2604 = vunpack.c.h.b16 %v1167
    %v2605 = vunpack.c.l.b16 %v1168
    %v2606 = vunpack.c.h.b16 %v1168
    %v2607 = vunpack.c.l.b16 %v1169
    %v2608 = vunpack.c.h.b16 %v1169
    %v2609 = vunpack.c.l.b16 %v1170
    %v2610 = vunpack.c.h.b16 %v1170
    %v2611 = vunpack.c.l.b16 %v1171
    %v2612 = vunpack.c.h.b16 %v1171
    %v2613 = vunpack.c.l.b16 %v1172
    %v2614 = vunpack.c.h.b16 %v1172
    %v2615 = vunpack.c.l.b16 %v1173
    %v2616 = vunpack.c.h.b16 %v1173
    %v2617 = vunpack.c.l.b16 %v1174
    %v2618 = vunpack.c.h.b16 %v1174
    %v2619 = vunpack.c.l.b16 %v1175
    %v2620 = vunpack.c.h.b16 %v1175
    %v2621 = vunpack.c.l.b16 %v1176
    %v2622 = vunpack.c.h.b16 %v1176
    %v2623 = vunpack.c.l.b16 %v1177
    %v2624 = vunpack.c.h.b16 %v1177
    %v2625 = vunpack.c.l.b16 %v1178
    %v2626 = vunpack.c.h.b16 %v1178
    %v2627 = vunpack.c.l.b16 %v1179
    %v2628 = vunpack.c.h.b16 %v1179
    %v2629 = vunpack.c.l.b16 %v1180
    %v2630 = vunpack.c.h.b16 %v1180
    %v2631 = vunpack.c.l.b16 %v1181
    %v2632 = vunpack.c.h.b16 %v1181
    %v2633 = vunpack.c.l.b16 %v1182
    %v2634 = vunpack.c.h.b16 %v1182
    %v2635 = vunpack.c.l.b16 %v1183
    %v2636 = vunpack.c.h.b16 %v1183
    %v2637 = vunpack.c.l.b16 %v1184
    %v2638 = vunpack.c.h.b16 %v1184
    %v2639 = vunpack.c.l.b16 %v1185
    %v2640 = vunpack.c.h.b16 %v1185
    %v2641 = vunpack.c.l.b16 %v1186
    %v2642 = vunpack.c.h.b16 %v1186
    %v2643 = vunpack.c.l.b16 %v1187
    %v2644 = vunpack.c.h.b16 %v1187
    %v2645 = vunpack.c.l.b16 %v1188
    %v2646 = vunpack.c.h.b16 %v1188
    %v2647 = vunpack.c.l.b16 %v1189
    %v2648 = vunpack.c.h.b16 %v1189
    %v2649 = vunpack.c.l.b16 %v1190
    %v2650 = vunpack.c.h.b16 %v1190
    %v2651 = vunpack.c.l.b16 %v1191
    %v2652 = vunpack.c.h.b16 %v1191
    %v2653 = vunpack.c.l.b16 %v1192
    %v2654 = vunpack.c.h.b16 %v1192
    %v2655 = vunpack.c.l.b16 %v1193
    %v2656 = vunpack.c.h.b16 %v1193
    %v2657 = vunpack.c.l.b16 %v1194
    %v2658 = vunpack.c.h.b16 %v1194
    %v2659 = vunpack.c.l.b16 %v1195
    %v2660 = vunpack.c.h.b16 %v1195
    %v2661 = vunpack.c.l.b16 %v1196
    %v2662 = vunpack.c.h.b16 %v1196
    %v2663 = vunpack.c.l.b16 %v1197
    %v2664 = vunpack.c.h.b16 %v1197
    %v2665 = vunpack.c.l.b16 %v1198
    %v2666 = vunpack.c.h.b16 %v1198
    %v2667 = vunpack.c.l.b16 %v1199
    %v2668 = vunpack.c.h.b16 %v1199
    %v2669 = vunpack.c.l.b16 %v1200
    %v2670 = vunpack.c.h.b16 %v1200
    %v2671 = vunpack.c.l.b16 %v1201
    %v2672 = vunpack.c.h.b16 %v1201
    %v2673 = vunpack.c.l.b16 %v1202
    %v2674 = vunpack.c.h.b16 %v1202
    %v2675 = vunpack.c.l.b16 %v1203
    %v2676 = vunpack.c.h.b16 %v1203
    %v2677 = vunpack.c.l.b16 %v1204
    %v2678 = vunpack.c.h.b16 %v1204
    %v2679 = vunpack.c.l.b16 %v1205
    %v2680 = vunpack.c.h.b16 %v1205
    %v2681 = vunpack.c.l.b16 %v1206
    %v2682 = vunpack.c.h.b16 %v1206
    %v2683 = vunpack.c.l.b16 %v1207
    %v2684 = vunpack.c.h.b16 %v1207
    %v2685 = vunpack.c.l.b16 %v1208
    %v2686 = vunpack.c.h.b16 %v1208
    %v2687 = vunpack.c.l.b16 %v1209
    %v2688 = vunpack.c.h.b16 %v1209
    %v2689 = vunpack.c.l.b16 %v1210
    %v2690 = vunpack.c.h.b16 %v1210
    %v2691 = vunpack.c.l.b16 %v1211
    %v2692 = vunpack.c.h.b16 %v1211
    %v2693 = vunpack.c.l.b16 %v1212
    %v2694 = vunpack.c.h.b16 %v1212
    %v2695 = vunpack.c.l.b16 %v1213
    %v2696 = vunpack.c.h.b16 %v1213
    %v2697 = vunpack.c.l.b16 %v1214
    %v2698 = vunpack.c.h.b16 %v1214
    %v2699 = vunpack.c.l.b16 %v1215
    %v2700 = vunpack.c.h.b16 %v1215
    %v2701 = vunpack.c.l.b16 %v1216
    %v2702 = vunpack.c.h.b16 %v1216
    %v2703 = vunpack.c.l.b16 %v1217
    %v2704 = vunpack.c.h.b16 %v1217
    %v2705 = vunpack.c.l.b16 %v1218
    %v2706 = vunpack.c.h.b16 %v1218
    %v2707 = vunpack.c.l.b16 %v1219
    %v2708 = vunpack.c.h.b16 %v1219
    %v2709 = vunpack.c.l.b16 %v1220
    %v2710 = vunpack.c.h.b16 %v1220
    %v2711 = vunpack.c.l.b16 %v1221
    %v2712 = vunpack.c.h.b16 %v1221
    %v2713 = vunpack.c.l.b16 %v1222
    %v2714 = vunpack.c.h.b16 %v1222
    %v2715 = vunpack.c.l.b16 %v1223
    %v2716 = vunpack.c.h.b16 %v1223
    %v2717 = vunpack.c.l.b16 %v1224
    %v2718 = vunpack.c.h.b16 %v1224
    %v2719 = vunpack.c.l.b16 %v1225
    %v2720 = vunpack.c.h.b16 %v1225
    %v2721 = vunpack.c.l.b16 %v1226
    %v2722 = vunpack.c.h.b16 %v1226
    %v2723 = vunpack.c.l.b16 %v1227
    %v2724 = vunpack.c.h.b16 %v1227
    %v2725 = vunpack.c.l.b16 %v1228
    %v2726 = vunpack.c.h.b16 %v1228
    %v2727 = vunpack.c.l.b16 %v1229
    %v2728 = vunpack.c.h.b16 %v1229
    %v2729 = vunpack.c.l.b16 %v1230
    %v2730 = vunpack.c.h.b16 %v1230
    %v2731 = vunpack.c.l.b16 %v1231
    %v2732 = vunpack.c.h.b16 %v1231
    %v2733 = vunpack.c.l.b16 %v1232
    %v2734 = vunpack.c.h.b16 %v1232
    %v2735 = vunpack.c.l.b16 %v1233
    %v2736 = vunpack.c.h.b16 %v1233
    %v2737 = vunpack.c.l.b16 %v1234
    %v2738 = vunpack.c.h.b16 %v1234
    %v2739 = vunpack.c.l.b16 %v1235
    %v2740 = vunpack.c.h.b16 %v1235
    %v2741 = vunpack.c.l.b16 %v1236
    %v2742 = vunpack.c.h.b16 %v1236
    %v2743 = vunpack.c.l.b16 %v1237
    %v2744 = vunpack.c.h.b16 %v1237
    %v2745 = vunpack.c.l.b16 %v1238
    %v2746 = vunpack.c.h.b16 %v1238
    %v2747 = vunpack.c.l.b16 %v1239
    %v2748 = vunpack.c.h.b16 %v1239
    %v2749 = vunpack.c.l.b16 %v1240
    %v2750 = vunpack.c.h.b16 %v1240
    %v2751 = vunpack.c.l.b16 %v1241
    %v2752 = vunpack.c.h.b16 %v1241
    %v2753 = vunpack.c.l.b16 %v1242
    %v2754 = vunpack.c.h.b16 %v1242
    %v2755 = vunpack.c.l.b16 %v1243
    %v2756 = vunpack.c.h.b16 %v1243
    %v2757 = vunpack.c.l.b16 %v1244
    %v2758 = vunpack.c.h.b16 %v1244
    %v2759 = vunpack.c.l.b16 %v1245
    %v2760 = vunpack.c.h.b16 %v1245
    %v2761 = vunpack.c.l.b16 %v1246
    %v2762 = vunpack.c.h.b16 %v1246
    %v2763 = vunpack.c.l.b16 %v1247
    %v2764 = vunpack.c.h.b16 %v1247
    %v2765 = vunpack.c.l.b16 %v1248
    %v2766 = vunpack.c.h.b16 %v1248
    %v2767 = vunpack.c.l.b16 %v1249
    %v2768 = vunpack.c.h.b16 %v1249
    %v2769 = vunpack.c.l.b16 %v1250
    %v2770 = vunpack.c.h.b16 %v1250
    %v2771 = vunpack.c.l.b16 %v1251
    %v2772 = vunpack.c.h.b16 %v1251
    %v2773 = vunpack.c.l.b16 %v1252
    %v2774 = vunpack.c.h.b16 %v1252
    %v2775 = vunpack.c.l.b16 %v1253
    %v2776 = vunpack.c.h.b16 %v1253
    %v2777 = vunpack.c.l.b16 %v1254
    %v2778 = vunpack.c.h.b16 %v1254
    %v2779 = vunpack.c.l.b16 %v1255
    %v2780 = vunpack.c.h.b16 %v1255
    %v2781 = vunpack.c.l.b16 %v1256
    %v2782 = vunpack.c.h.b16 %v1256
    %v2783 = vunpack.c.l.b16 %v1257
    %v2784 = vunpack.c.h.b16 %v1257
    %v2785 = vunpack.c.l.b16 %v1258
    %v2786 = vunpack.c.h.b16 %v1258
    %v2787 = vunpack.c.l.b16 %v1259
    %v2788 = vunpack.c.h.b16 %v1259
    %v2789 = vunpack.c.l.b16 %v1260
    %v2790 = vunpack.c.h.b16 %v1260
    %v2791 = vunpack.c.l.b16 %v1261
    %v2792 = vunpack.c.h.b16 %v1261
    %v2793 = vunpack.c.l.b16 %v1262
    %v2794 = vunpack.c.h.b16 %v1262
    %v2795 = vunpack.c.l.b16 %v1263
    %v2796 = vunpack.c.h.b16 %v1263
    %v2797 = vunpack.c.l.b16 %v1264
    %v2798 = vunpack.c.h.b16 %v1264
    %v2799 = vunpack.c.l.b16 %v1265
    %v2800 = vunpack.c.h.b16 %v1265
    %v2801 = vunpack.c.l.b16 %v1266
    %v2802 = vunpack.c.h.b16 %v1266
    %v2803 = vunpack.c.l.b16 %v1267
    %v2804 = vunpack.c.h.b16 %v1267
    %v2805 = vunpack.c.l.b16 %v1268
    %v2806 = vunpack.c.h.b16 %v1268
    %v2807 = vunpack.c.l.b16 %v1269
    %v2808 = vunpack.c.h.b16 %v1269
    %v2809 = vunpack.c.l.b16 %v1270
    %v2810 = vunpack.c.h.b16 %v1270
    %v2811 = vunpack.c.l.b16 %v1271
    %v2812 = vunpack.c.h.b16 %v1271
    %v2813 = vunpack.c.l.b16 %v1272
    %v2814 = vunpack.c.h.b16 %v1272
    %v2815 = vunpack.c.l.b16 %v1273
    %v2816 = vunpack.c.h.b16 %v1273
    %v2817 = vunpack.c.l.b16 %v1274
    %v2818 = vunpack.c.h.b16 %v1274
    %v2819 = vunpack.c.l.b16 %v1275
    %v2820 = vunpack.c.h.b16 %v1275
    %v2821 = vunpack.c.l.b16 %v1276
    %v2822 = vunpack.c.h.b16 %v1276
    %v2823 = vunpack.c.l.b16 %v1277
    %v2824 = vunpack.c.h.b16 %v1277
    %v2825 = vunpack.c.l.b16 %v1278
    %v2826 = vunpack.c.h.b16 %v1278
    %v2827 = vunpack.c.l.b16 %v1279
    %v2828 = vunpack.c.h.b16 %v1279
    %v2829 = vunpack.c.l.b16 %v1280
    %v2830 = vunpack.c.h.b16 %v1280
    %v2831 = vunpack.c.l.b16 %v1281
    %v2832 = vunpack.c.h.b16 %v1281
    %v2833 = vunpack.c.l.b16 %v1282
    %v2834 = vunpack.c.h.b16 %v1282
    %v2835 = vunpack.c.l.b16 %v1283
    %v2836 = vunpack.c.h.b16 %v1283
    %v2837 = vunpack.c.l.b16 %v1284
    %v2838 = vunpack.c.h.b16 %v1284
    %v2839 = vunpack.c.l.b16 %v1285
    %v2840 = vunpack.c.h.b16 %v1285
    %v2841 = vunpack.c.l.b16 %v1286
    %v2842 = vunpack.c.h.b16 %v1286
    %v2843 = vunpack.c.l.b16 %v1287
    %v2844 = vunpack.c.h.b16 %v1287
    %v2845 = vunpack.c.l.b16 %v1288
    %v2846 = vunpack.c.h.b16 %v1288
    %v2847 = vpack.c.b16 %v1827, %v1823
    %v2848 = vpack.c.b16 %v1828, %v1824
    %v2849 = vpack.c.b16 %v1829, %v1825
    %v2850 = vpack.c.b16 %v1830, %v1826
    %v2851 = vpack.c.b16 %v1835, %v1831
    %v2852 = vpack.c.b16 %v1836, %v1832
    %v2853 = vpack.c.b16 %v1837, %v1833
    %v2854 = vpack.c.b16 %v1838, %v1834
    %v2855 = vpack.c.b16 %v1843, %v1839
    %v2856 = vpack.c.b16 %v1844, %v1840
    %v2857 = vpack.c.b16 %v1845, %v1841
    %v2858 = vpack.c.b16 %v1846, %v1842
    %v2859 = vpack.c.b16 %v1851, %v1847
    %v2860 = vpack.c.b16 %v1852, %v1848
    %v2861 = vpack.c.b16 %v1853, %v1849
    %v2862 = vpack.c.b16 %v1854, %v1850
    %v2863 = vpack.c.b16 %v1859, %v1855
    %v2864 = vpack.c.b16 %v1860, %v1856
    %v2865 = vpack.c.b16 %v1861, %v1857
    %v2866 = vpack.c.b16 %v1862, %v1858
    %v2867 = vpack.c.b16 %v1867, %v1863
    %v2868 = vpack.c.b16 %v1868, %v1864
    %v2869 = vpack.c.b16 %v1869, %v1865
    %v2870 = vpack.c.b16 %v1870, %v1866
    %v2871 = vpack.c.b16 %v1875, %v1871
    %v2872 = vpack.c.b16 %v1876, %v1872
    %v2873 = vpack.c.b16 %v1877, %v1873
    %v2874 = vpack.c.b16 %v1878, %v1874
    %v2875 = vpack.c.b16 %v1883, %v1879
    %v2876 = vpack.c.b16 %v1884, %v1880
    %v2877 = vpack.c.b16 %v1885, %v1881
    %v2878 = vpack.c.b16 %v1886, %v1882
    %v2879 = vpack.c.b16 %v1891, %v1887
    %v2880 = vpack.c.b16 %v1892, %v1888
    %v2881 = vpack.c.b16 %v1893, %v1889
    %v2882 = vpack.c.b16 %v1894, %v1890
    %v2883 = vpack.c.b16 %v1899, %v1895
    %v2884 = vpack.c.b16 %v1900, %v1896
    %v2885 = vpack.c.b16 %v1901, %v1897
    %v2886 = vpack.c.b16 %v1902, %v1898
    %v2887 = vpack.c.b16 %v1907, %v1903
    %v2888 = vpack.c.b16 %v1908, %v1904
    %v2889 = vpack.c.b16 %v1909, %v1905
    %v2890 = vpack.c.b16 %v1910, %v1906
    %v2891 = vpack.c.b16 %v1915, %v1911
    %v2892 = vpack.c.b16 %v1916, %v1912
    %v2893 = vpack.c.b16 %v1917, %v1913
    %v2894 = vpack.c.b16 %v1918, %v1914
    %v2895 = vpack.c.b16 %v1923, %v1919
    %v2896 = vpack.c.b16 %v1924, %v1920
    %v2897 = vpack.c.b16 %v1925, %v1921
    %v2898 = vpack.c.b16 %v1926, %v1922
    %v2899 = vpack.c.b16 %v1931, %v1927
    %v2900 = vpack.c.b16 %v1932, %v1928
    %v2901 = vpack.c.b16 %v1933, %v1929
    %v2902 = vpack.c.b16 %v1934, %v1930
    %v2903 = vpack.c.b16 %v1939, %v1935
    %v2904 = vpack.c.b16 %v1940, %v1936
    %v2905 = vpack.c.b16 %v1941, %v1937
    %v2906 = vpack.c.b16 %v1942, %v1938
    %v2907 = vpack.c.b16 %v1947, %v1943
    %v2908 = vpack.c.b16 %v1948, %v1944
    %v2909 = vpack.c.b16 %v1949, %v1945
    %v2910 = vpack.c.b16 %v1950, %v1946
    %v2911 = vpack.c.b16 %v1955, %v1951
    %v2912 = vpack.c.b16 %v1956, %v1952
    %v2913 = vpack.c.b16 %v1957, %v1953
    %v2914 = vpack.c.b16 %v1958, %v1954
    %v2915 = vpack.c.b16 %v1963, %v1959
    %v2916 = vpack.c.b16 %v1964, %v1960
    %v2917 = vpack.c.b16 %v1965, %v1961
    %v2918 = vpack.c.b16 %v1966, %v1962
    %v2919 = vpack.c.b16 %v1971, %v1967
    %v2920 = vpack.c.b16 %v1972, %v1968
    %v2921 = vpack.c.b16 %v1973, %v1969
    %v2922 = vpack.c.b16 %v1974, %v1970
    %v2923 = vpack.c.b16 %v1979, %v1975
    %v2924 = vpack.c.b16 %v1980, %v1976
    %v2925 = vpack.c.b16 %v1981, %v1977
    %v2926 = vpack.c.b16 %v1982, %v1978
    %v2927 = vpack.c.b16 %v1987, %v1983
    %v2928 = vpack.c.b16 %v1988, %v1984
    %v2929 = vpack.c.b16 %v1989, %v1985
    %v2930 = vpack.c.b16 %v1990, %v1986
    %v2931 = vpack.c.b16 %v1995, %v1991
    %v2932 = vpack.c.b16 %v1996, %v1992
    %v2933 = vpack.c.b16 %v1997, %v1993
    %v2934 = vpack.c.b16 %v1998, %v1994
    %v2935 = vpack.c.b16 %v2003, %v1999
    %v2936 = vpack.c.b16 %v2004, %v2000
    %v2937 = vpack.c.b16 %v2005, %v2001
    %v2938 = vpack.c.b16 %v2006, %v2002
    %v2939 = vpack.c.b16 %v2011, %v2007
    %v2940 = vpack.c.b16 %v2012, %v2008
    %v2941 = vpack.c.b16 %v2013, %v2009
    %v2942 = vpack.c.b16 %v2014, %v2010
    %v2943 = vpack.c.b16 %v2019, %v2015
    %v2944 = vpack.c.b16 %v2020, %v2016
    %v2945 = vpack.c.b16 %v2021, %v2017
    %v2946 = vpack.c.b16 %v2022, %v2018
    %v2947 = vpack.c.b16 %v2027, %v2023
    %v2948 = vpack.c.b16 %v2028, %v2024
    %v2949 = vpack.c.b16 %v2029, %v2025
    %v2950 = vpack.c.b16 %v2030, %v2026
    %v2951 = vpack.c.b16 %v2035, %v2031
    %v2952 = vpack.c.b16 %v2036, %v2032
    %v2953 = vpack.c.b16 %v2037, %v2033
    %v2954 = vpack.c.b16 %v2038, %v2034
    %v2955 = vpack.c.b16 %v2043, %v2039
    %v2956 = vpack.c.b16 %v2044, %v2040
    %v2957 = vpack.c.b16 %v2045, %v2041
    %v2958 = vpack.c.b16 %v2046, %v2042
    %v2959 = vpack.c.b16 %v2051, %v2047
    %v2960 = vpack.c.b16 %v2052, %v2048
    %v2961 = vpack.c.b16 %v2053, %v2049
    %v2962 = vpack.c.b16 %v2054, %v2050
    %v2963 = vpack.c.b16 %v2059, %v2055
    %v2964 = vpack.c.b16 %v2060, %v2056
    %v2965 = vpack.c.b16 %v2061, %v2057
    %v2966 = vpack.c.b16 %v2062, %v2058
    %v2967 = vpack.c.b16 %v2067, %v2063
    %v2968 = vpack.c.b16 %v2068, %v2064
    %v2969 = vpack.c.b16 %v2069, %v2065
    %v2970 = vpack.c.b16 %v2070, %v2066
    %v2971 = vpack.c.b16 %v2075, %v2071
    %v2972 = vpack.c.b16 %v2076, %v2072
    %v2973 = vpack.c.b16 %v2077, %v2073
    %v2974 = vpack.c.b16 %v2078, %v2074
    %v2975 = vpack.c.b16 %v2083, %v2079
    %v2976 = vpack.c.b16 %v2084, %v2080
    %v2977 = vpack.c.b16 %v2085, %v2081
    %v2978 = vpack.c.b16 %v2086, %v2082
    %v2979 = vpack.c.b16 %v2091, %v2087
    %v2980 = vpack.c.b16 %v2092, %v2088
    %v2981 = vpack.c.b16 %v2093, %v2089
    %v2982 = vpack.c.b16 %v2094, %v2090
    %v2983 = vpack.c.b16 %v2099, %v2095
    %v2984 = vpack.c.b16 %v2100, %v2096
    %v2985 = vpack.c.b16 %v2101, %v2097
    %v2986 = vpack.c.b16 %v2102, %v2098
    %v2987 = vpack.c.b16 %v2107, %v2103
    %v2988 = vpack.c.b16 %v2108, %v2104
    %v2989 = vpack.c.b16 %v2109, %v2105
    %v2990 = vpack.c.b16 %v2110, %v2106
    %v2991 = vpack.c.b16 %v2115, %v2111
    %v2992 = vpack.c.b16 %v2116, %v2112
    %v2993 = vpack.c.b16 %v2117, %v2113
    %v2994 = vpack.c.b16 %v2118, %v2114
    %v2995 = vpack.c.b16 %v2123, %v2119
    %v2996 = vpack.c.b16 %v2124, %v2120
    %v2997 = vpack.c.b16 %v2125, %v2121
    %v2998 = vpack.c.b16 %v2126, %v2122
    %v2999 = vpack.c.b16 %v2131, %v2127
    %v3000 = vpack.c.b16 %v2132, %v2128
    %v3001 = vpack.c.b16 %v2133, %v2129
    %v3002 = vpack.c.b16 %v2134, %v2130
    %v3003 = vpack.c.b16 %v2139, %v2135
    %v3004 = vpack.c.b16 %v2140, %v2136
    %v3005 = vpack.c.b16 %v2141, %v2137
    %v3006 = vpack.c.b16 %v2142, %v2138
    %v3007 = vpack.c.b16 %v2147, %v2143
    %v3008 = vpack.c.b16 %v2148, %v2144
    %v3009 = vpack.c.b16 %v2149, %v2145
    %v3010 = vpack.c.b16 %v2150, %v2146
    %v3011 = vpack.c.b16 %v2155, %v2151
    %v3012 = vpack.c.b16 %v2156, %v2152
    %v3013 = vpack.c.b16 %v2157, %v2153
    %v3014 = vpack.c.b16 %v2158, %v2154
    %v3015 = vpack.c.b16 %v2163, %v2159
    %v3016 = vpack.c.b16 %v2164, %v2160
    %v3017 = vpack.c.b16 %v2165, %v2161
    %v3018 = vpack.c.b16 %v2166, %v2162
    %v3019 = vpack.c.b16 %v2171, %v2167
    %v3020 = vpack.c.b16 %v2172, %v2168
    %v3021 = vpack.c.b16 %v2173, %v2169
    %v3022 = vpack.c.b16 %v2174, %v2170
    %v3023 = vpack.c.b16 %v2179, %v2175
    %v3024 = vpack.c.b16 %v2180, %v2176
    %v3025 = vpack.c.b16 %v2181, %v2177
    %v3026 = vpack.c.b16 %v2182, %v2178
    %v3027 = vpack.c.b16 %v2187, %v2183
    %v3028 = vpack.c.b16 %v2188, %v2184
    %v3029 = vpack.c.b16 %v2189, %v2185
    %v3030 = vpack.c.b16 %v2190, %v2186
    %v3031 = vpack.c.b16 %v2195, %v2191
    %v3032 = vpack.c.b16 %v2196, %v2192
    %v3033 = vpack.c.b16 %v2197, %v2193
    %v3034 = vpack.c.b16 %v2198, %v2194
    %v3035 = vpack.c.b16 %v2203, %v2199
    %v3036 = vpack.c.b16 %v2204, %v2200
    %v3037 = vpack.c.b16 %v2205, %v2201
    %v3038 = vpack.c.b16 %v2206, %v2202
    %v3039 = vpack.c.b16 %v2211, %v2207
    %v3040 = vpack.c.b16 %v2212, %v2208
    %v3041 = vpack.c.b16 %v2213, %v2209
    %v3042 = vpack.c.b16 %v2214, %v2210
    %v3043 = vpack.c.b16 %v2219, %v2215
    %v3044 = vpack.c.b16 %v2220, %v2216
    %v3045 = vpack.c.b16 %v2221, %v2217
    %v3046 = vpack.c.b16 %v2222, %v2218
    %v3047 = vpack.c.b16 %v2227, %v2223
    %v3048 = vpack.c.b16 %v2228, %v2224
    %v3049 = vpack.c.b16 %v2229, %v2225
    %v3050 = vpack.c.b16 %v2230, %v2226
    %v3051 = vpack.c.b16 %v2235, %v2231
    %v3052 = vpack.c.b16 %v2236, %v2232
    %v3053 = vpack.c.b16 %v2237, %v2233
    %v3054 = vpack.c.b16 %v2238, %v2234
    %v3055 = vpack.c.b16 %v2243, %v2239
    %v3056 = vpack.c.b16 %v2244, %v2240
    %v3057 = vpack.c.b16 %v2245, %v2241
    %v3058 = vpack.c.b16 %v2246, %v2242
    %v3059 = vpack.c.b16 %v2251, %v2247
    %v3060 = vpack.c.b16 %v2252, %v2248
    %v3061 = vpack.c.b16 %v2253, %v2249
    %v3062 = vpack.c.b16 %v2254, %v2250
    %v3063 = vpack.c.b16 %v2259, %v2255
    %v3064 = vpack.c.b16 %v2260, %v2256
    %v3065 = vpack.c.b16 %v2261, %v2257
    %v3066 = vpack.c.b16 %v2262, %v2258
    %v3067 = vpack.c.b16 %v2267, %v2263
    %v3068 = vpack.c.b16 %v2268, %v2264
    %v3069 = vpack.c.b16 %v2269, %v2265
    %v3070 = vpack.c.b16 %v2270, %v2266
    %v3071 = vpack.c.b16 %v2275, %v2271
    %v3072 = vpack.c.b16 %v2276, %v2272
    %v3073 = vpack.c.b16 %v2277, %v2273
    %v3074 = vpack.c.b16 %v2278, %v2274
    %v3075 = vpack.c.b16 %v2283, %v2279
    %v3076 = vpack.c.b16 %v2284, %v2280
    %v3077 = vpack.c.b16 %v2285, %v2281
    %v3078 = vpack.c.b16 %v2286, %v2282
    %v3079 = vpack.c.b16 %v2291, %v2287
    %v3080 = vpack.c.b16 %v2292, %v2288
    %v3081 = vpack.c.b16 %v2293, %v2289
    %v3082 = vpack.c.b16 %v2294, %v2290
    %v3083 = vpack.c.b16 %v2299, %v2295
    %v3084 = vpack.c.b16 %v2300, %v2296
    %v3085 = vpack.c.b16 %v2301, %v2297
    %v3086 = vpack.c.b16 %v2302, %v2298
    %v3087 = vpack.c.b16 %v2307, %v2303
    %v3088 = vpack.c.b16 %v2308, %v2304
    %v3089 = vpack.c.b16 %v2309, %v2305
    %v3090 = vpack.c.b16 %v2310, %v2306
    %v3091 = vpack.c.b16 %v2315, %v2311
    %v3092 = vpack.c.b16 %v2316, %v2312
    %v3093 = vpack.c.b16 %v2317, %v2313
    %v3094 = vpack.c.b16 %v2318, %v2314
    %v3095 = vpack.c.b16 %v2323, %v2319
    %v3096 = vpack.c.b16 %v2324, %v2320
    %v3097 = vpack.c.b16 %v2325, %v2321
    %v3098 = vpack.c.b16 %v2326, %v2322
    %v3099 = vpack.c.b16 %v2331, %v2327
    %v3100 = vpack.c.b16 %v2332, %v2328
    %v3101 = vpack.c.b16 %v2333, %v2329
    %v3102 = vpack.c.b16 %v2334, %v2330
    %v3103 = vpack.c.b16 %v2339, %v2335
    %v3104 = vpack.c.b16 %v2340, %v2336
    %v3105 = vpack.c.b16 %v2341, %v2337
    %v3106 = vpack.c.b16 %v2342, %v2338
    %v3107 = vpack.c.b16 %v2347, %v2343
    %v3108 = vpack.c.b16 %v2348, %v2344
    %v3109 = vpack.c.b16 %v2349, %v2345
    %v3110 = vpack.c.b16 %v2350, %v2346
    %v3111 = vpack.c.b16 %v2355, %v2351
    %v3112 = vpack.c.b16 %v2356, %v2352
    %v3113 = vpack.c.b16 %v2357, %v2353
    %v3114 = vpack.c.b16 %v2358, %v2354
    %v3115 = vpack.c.b16 %v2363, %v2359
    %v3116 = vpack.c.b16 %v2364, %v2360
    %v3117 = vpack.c.b16 %v2365, %v2361
    %v3118 = vpack.c.b16 %v2366, %v2362
    %v3119 = vpack.c.b16 %v2371, %v2367
    %v3120 = vpack.c.b16 %v2372, %v2368
    %v3121 = vpack.c.b16 %v2373, %v2369
    %v3122 = vpack.c.b16 %v2374, %v2370
    %v3123 = vpack.c.b16 %v2379, %v2375
    %v3124 = vpack.c.b16 %v2380, %v2376
    %v3125 = vpack.c.b16 %v2381, %v2377
    %v3126 = vpack.c.b16 %v2382, %v2378
    %v3127 = vpack.c.b16 %v2387, %v2383
    %v3128 = vpack.c.b16 %v2388, %v2384
    %v3129 = vpack.c.b16 %v2389, %v2385
    %v3130 = vpack.c.b16 %v2390, %v2386
    %v3131 = vpack.c.b16 %v2395, %v2391
    %v3132 = vpack.c.b16 %v2396, %v2392
    %v3133 = vpack.c.b16 %v2397, %v2393
    %v3134 = vpack.c.b16 %v2398, %v2394
    %v3135 = vpack.c.b16 %v2403, %v2399
    %v3136 = vpack.c.b16 %v2404, %v2400
    %v3137 = vpack.c.b16 %v2405, %v2401
    %v3138 = vpack.c.b16 %v2406, %v2402
    %v3139 = vpack.c.b16 %v2411, %v2407
    %v3140 = vpack.c.b16 %v2412, %v2408
    %v3141 = vpack.c.b16 %v2413, %v2409
    %v3142 = vpack.c.b16 %v2414, %v2410
    %v3143 = vpack.c.b16 %v2419, %v2415
    %v3144 = vpack.c.b16 %v2420, %v2416
    %v3145 = vpack.c.b16 %v2421, %v2417
    %v3146 = vpack.c.b16 %v2422, %v2418
    %v3147 = vpack.c.b16 %v2427, %v2423
    %v3148 = vpack.c.b16 %v2428, %v2424
    %v3149 = vpack.c.b16 %v2429, %v2425
    %v3150 = vpack.c.b16 %v2430, %v2426
    %v3151 = vpack.c.b16 %v2435, %v2431
    %v3152 = vpack.c.b16 %v2436, %v2432
    %v3153 = vpack.c.b16 %v2437, %v2433
    %v3154 = vpack.c.b16 %v2438, %v2434
    %v3155 = vpack.c.b16 %v2443, %v2439
    %v3156 = vpack.c.b16 %v2444, %v2440
    %v3157 = vpack.c.b16 %v2445, %v2441
    %v3158 = vpack.c.b16 %v2446, %v2442
    %v3159 = vpack.c.b16 %v2451, %v2447
    %v3160 = vpack.c.b16 %v2452, %v2448
    %v3161 = vpack.c.b16 %v2453, %v2449
    %v3162 = vpack.c.b16 %v2454, %v2450
    %v3163 = vpack.c.b16 %v2459, %v2455
    %v3164 = vpack.c.b16 %v2460, %v2456
    %v3165 = vpack.c.b16 %v2461, %v2457
    %v3166 = vpack.c.b16 %v2462, %v2458
    %v3167 = vpack.c.b16 %v2467, %v2463
    %v3168 = vpack.c.b16 %v2468, %v2464
    %v3169 = vpack.c.b16 %v2469, %v2465
    %v3170 = vpack.c.b16 %v2470, %v2466
    %v3171 = vpack.c.b16 %v2475, %v2471
    %v3172 = vpack.c.b16 %v2476, %v2472
    %v3173 = vpack.c.b16 %v2477, %v2473
    %v3174 = vpack.c.b16 %v2478, %v2474
    %v3175 = vpack.c.b16 %v2483, %v2479
    %v3176 = vpack.c.b16 %v2484, %v2480
    %v3177 = vpack.c.b16 %v2485, %v2481
    %v3178 = vpack.c.b16 %v2486, %v2482
    %v3179 = vpack.c.b16 %v2491, %v2487
    %v3180 = vpack.c.b16 %v2492, %v2488
    %v3181 = vpack.c.b16 %v2493, %v2489
    %v3182 = vpack.c.b16 %v2494, %v2490
    %v3183 = vpack.c.b16 %v2499, %v2495
    %v3184 = vpack.c.b16 %v2500, %v2496
    %v3185 = vpack.c.b16 %v2501, %v2497
    %v3186 = vpack.c.b16 %v2502, %v2498
    %v3187 = vpack.c.b16 %v2507, %v2503
    %v3188 = vpack.c.b16 %v2508, %v2504
    %v3189 = vpack.c.b16 %v2509, %v2505
    %v3190 = vpack.c.b16 %v2510, %v2506
    %v3191 = vpack.c.b16 %v2515, %v2511
    %v3192 = vpack.c.b16 %v2516, %v2512
    %v3193 = vpack.c.b16 %v2517, %v2513
    %v3194 = vpack.c.b16 %v2518, %v2514
    %v3195 = vpack.c.b16 %v2523, %v2519
    %v3196 = vpack.c.b16 %v2524, %v2520
    %v3197 = vpack.c.b16 %v2525, %v2521
    %v3198 = vpack.c.b16 %v2526, %v2522
    %v3199 = vpack.c.b16 %v2531, %v2527
    %v3200 = vpack.c.b16 %v2532, %v2528
    %v3201 = vpack.c.b16 %v2533, %v2529
    %v3202 = vpack.c.b16 %v2534, %v2530
    %v3203 = vpack.c.b16 %v2539, %v2535
    %v3204 = vpack.c.b16 %v2540, %v2536
    %v3205 = vpack.c.b16 %v2541, %v2537
    %v3206 = vpack.c.b16 %v2542, %v2538
    %v3207 = vpack.c.b16 %v2547, %v2543
    %v3208 = vpack.c.b16 %v2548, %v2544
    %v3209 = vpack.c.b16 %v2549, %v2545
    %v3210 = vpack.c.b16 %v2550, %v2546
    %v3211 = vpack.c.b16 %v2555, %v2551
    %v3212 = vpack.c.b16 %v2556, %v2552
    %v3213 = vpack.c.b16 %v2557, %v2553
    %v3214 = vpack.c.b16 %v2558, %v2554
    %v3215 = vpack.c.b16 %v2563, %v2559
    %v3216 = vpack.c.b16 %v2564, %v2560
    %v3217 = vpack.c.b16 %v2565, %v2561
    %v3218 = vpack.c.b16 %v2566, %v2562
    %v3219 = vpack.c.b16 %v2571, %v2567
    %v3220 = vpack.c.b16 %v2572, %v2568
    %v3221 = vpack.c.b16 %v2573, %v2569
    %v3222 = vpack.c.b16 %v2574, %v2570
    %v3223 = vpack.c.b16 %v2579, %v2575
    %v3224 = vpack.c.b16 %v2580, %v2576
    %v3225 = vpack.c.b16 %v2581, %v2577
    %v3226 = vpack.c.b16 %v2582, %v2578
    %v3227 = vpack.c.b16 %v2587, %v2583
    %v3228 = vpack.c.b16 %v2588, %v2584
    %v3229 = vpack.c.b16 %v2589, %v2585
    %v3230 = vpack.c.b16 %v2590, %v2586
    %v3231 = vpack.c.b16 %v2595, %v2591
    %v3232 = vpack.c.b16 %v2596, %v2592
    %v3233 = vpack.c.b16 %v2597, %v2593
    %v3234 = vpack.c.b16 %v2598, %v2594
    %v3235 = vpack.c.b16 %v2603, %v2599
    %v3236 = vpack.c.b16 %v2604, %v2600
    %v3237 = vpack.c.b16 %v2605, %v2601
    %v3238 = vpack.c.b16 %v2606, %v2602
    %v3239 = vpack.c.b16 %v2611, %v2607
    %v3240 = vpack.c.b16 %v2612, %v2608
    %v3241 = vpack.c.b16 %v2613, %v2609
    %v3242 = vpack.c.b16 %v2614, %v2610
    %v3243 = vpack.c.b16 %v2619, %v2615
    %v3244 = vpack.c.b16 %v2620, %v2616
    %v3245 = vpack.c.b16 %v2621, %v2617
    %v3246 = vpack.c.b16 %v2622, %v2618
    %v3247 = vpack.c.b16 %v2627, %v2623
    %v3248 = vpack.c.b16 %v2628, %v2624
    %v3249 = vpack.c.b16 %v2629, %v2625
    %v3250 = vpack.c.b16 %v2630, %v2626
    %v3251 = vpack.c.b16 %v2635, %v2631
    %v3252 = vpack.c.b16 %v2636, %v2632
    %v3253 = vpack.c.b16 %v2637, %v2633
    %v3254 = vpack.c.b16 %v2638, %v2634
    %v3255 = vpack.c.b16 %v2643, %v2639
    %v3256 = vpack.c.b16 %v2644, %v2640
    %v3257 = vpack.c.b16 %v2645, %v2641
    %v3258 = vpack.c.b16 %v2646, %v2642
    %v3259 = vpack.c.b16 %v2651, %v2647
    %v3260 = vpack.c.b16 %v2652, %v2648
    %v3261 = vpack.c.b16 %v2653, %v2649
    %v3262 = vpack.c.b16 %v2654, %v2650
    %v3263 = vpack.c.b16 %v2659, %v2655
    %v3264 = vpack.c.b16 %v2660, %v2656
    %v3265 = vpack.c.b16 %v2661, %v2657
    %v3266 = vpack.c.b16 %v2662, %v2658
    %v3267 = vpack.c.b16 %v2667, %v2663
    %v3268 = vpack.c.b16 %v2668, %v2664
    %v3269 = vpack.c.b16 %v2669, %v2665
    %v3270 = vpack.c.b16 %v2670, %v2666
    %v3271 = vpack.c.b16 %v2675, %v2671
    %v3272 = vpack.c.b16 %v2676, %v2672
    %v3273 = vpack.c.b16 %v2677, %v2673
    %v3274 = vpack.c.b16 %v2678, %v2674
    %v3275 = vpack.c.b16 %v2683, %v2679
    %v3276 = vpack.c.b16 %v2684, %v2680
    %v3277 = vpack.c.b16 %v2685, %v2681
    %v3278 = vpack.c.b16 %v2686, %v2682
    %v3279 = vpack.c.b16 %v2691, %v2687
    %v3280 = vpack.c.b16 %v2692, %v2688
    %v3281 = vpack.c.b16 %v2693, %v2689
    %v3282 = vpack.c.b16 %v2694, %v2690
    %v3283 = vpack.c.b16 %v2699, %v2695
    %v3284 = vpack.c.b16 %v2700, %v2696
    %v3285 = vpack.c.b16 %v2701, %v2697
    %v3286 = vpack.c.b16 %v2702, %v2698
    %v3287 = vpack.c.b16 %v2707, %v2703
    %v3288 = vpack.c.b16 %v2708, %v2704
    %v3289 = vpack.c.b16 %v2709, %v2705
    %v3290 = vpack.c.b16 %v2710, %v2706
    %v3291 = vpack.c.b16 %v2715, %v2711
    %v3292 = vpack.c.b16 %v2716, %v2712
    %v3293 = vpack.c.b16 %v2717, %v2713
    %v3294 = vpack.c.b16 %v2718, %v2714
    %v3295 = vpack.c.b16 %v2723, %v2719
    %v3296 = vpack.c.b16 %v2724, %v2720
    %v3297 = vpack.c.b16 %v2725, %v2721
    %v3298 = vpack.c.b16 %v2726, %v2722
    %v3299 = vpack.c.b16 %v2731, %v2727
    %v3300 = vpack.c.b16 %v2732, %v2728
    %v3301 = vpack.c.b16 %v2733, %v2729
    %v3302 = vpack.c.b16 %v2734, %v2730
    %v3303 = vpack.c.b16 %v2739, %v2735
    %v3304 = vpack.c.b16 %v2740, %v2736
    %v3305 = vpack.c.b16 %v2741, %v2737
    %v3306 = vpack.c.b16 %v2742, %v2738
    %v3307 = vpack.c.b16 %v2747, %v2743
    %v3308 = vpack.c.b16 %v2748, %v2744
    %v3309 = vpack.c.b16 %v2749, %v2745
    %v3310 = vpack.c.b16 %v2750, %v2746
    %v3311 = vpack.c.b16 %v2755, %v2751
    %v3312 = vpack.c.b16 %v2756, %v2752
    %v3313 = vpack.c.b16 %v2757, %v2753
    %v3314 = vpack.c.b16 %v2758, %v2754
    %v3315 = vpack.c.b16 %v2763, %v2759
    %v3316 = vpack.c.b16 %v2764, %v2760
    %v3317 = vpack.c.b16 %v2765, %v2761
    %v3318 = vpack.c.b16 %v2766, %v2762
    %v3319 = vpack.c.b16 %v2771, %v2767
    %v3320 = vpack.c.b16 %v2772, %v2768
    %v3321 = vpack.c.b16 %v2773, %v2769
    %v3322 = vpack.c.b16 %v2774, %v2770
    %v3323 = vpack.c.b16 %v2779, %v2775
    %v3324 = vpack.c.b16 %v2780, %v2776
    %v3325 = vpack.c.b16 %v2781, %v2777
    %v3326 = vpack.c.b16 %v2782, %v2778
    %v3327 = vpack.c.b16 %v2787, %v2783
    %v3328 = vpack.c.b16 %v2788, %v2784
    %v3329 = vpack.c.b16 %v2789, %v2785
    %v3330 = vpack.c.b16 %v2790, %v2786
    %v3331 = vpack.c.b16 %v2795, %v2791
    %v3332 = vpack.c.b16 %v2796, %v2792
    %v3333 = vpack.c.b16 %v2797, %v2793
    %v3334 = vpack.c.b16 %v2798, %v2794
    %v3335 = vpack.c.b16 %v2803, %v2799
    %v3336 = vpack.c.b16 %v2804, %v2800
    %v3337 = vpack.c.b16 %v2805, %v2801
    %v3338 = vpack.c.b16 %v2806, %v2802
    %v3339 = vpack.c.b16 %v2811, %v2807
    %v3340 = vpack.c.b16 %v2812, %v2808
    %v3341 = vpack.c.b16 %v2813, %v2809
    %v3342 = vpack.c.b16 %v2814, %v2810
    %v3343 = vpack.c.b16 %v2819, %v2815
    %v3344 = vpack.c.b16 %v2820, %v2816
    %v3345 = vpack.c.b16 %v2821, %v2817
    %v3346 = vpack.c.b16 %v2822, %v2818
    %v3347 = vpack.c.b16 %v2827, %v2823
    %v3348 = vpack.c.b16 %v2828, %v2824
    %v3349 = vpack.c.b16 %v2829, %v2825
    %v3350 = vpack.c.b16 %v2830, %v2826
    %v3351 = vpack.c.b16 %v2835, %v2831
    %v3352 = vpack.c.b16 %v2836, %v2832
    %v3353 = vpack.c.b16 %v2837, %v2833
    %v3354 = vpack.c.b16 %v2838, %v2834
    %v3355 = vpack.c.b16 %v2843, %v2839
    %v3356 = vpack.c.b16 %v2844, %v2840
    %v3357 = vpack.c.b16 %v2845, %v2841
    %v3358 = vpack.c.b16 %v2846, %v2842
    %3871 = vmatprep.subr.bf16.mxu0 %v2848
    %3872 = vmatpush1.bf16.msra.mxu0 %v2847
    %3873 = vmatprep.subr.bf16.mxu0 %v2852
    %3874 = vmatpush1.bf16.msra.mxu0 %v2851
    %3875 = vmatprep.subr.bf16.mxu0 %v2856
    %3876 = vmatpush1.bf16.msra.mxu0 %v2855
    %3877 = vmatprep.subr.bf16.mxu0 %v2860
    %3878 = vmatpush1.bf16.msra.mxu0 %v2859
    %3879 = vmatprep.subr.bf16.mxu0 %v2864
    %3880 = vmatpush1.bf16.msra.mxu0 %v2863
    %3881 = vmatprep.subr.bf16.mxu0 %v2868
    %3882 = vmatpush1.bf16.msra.mxu0 %v2867
    %3883 = vmatprep.subr.bf16.mxu0 %v2872
    %3884 = vmatpush1.bf16.msra.mxu0 %v2871
    %3885 = vmatprep.subr.bf16.mxu0 %v2876
    %3886 = vmatpush1.bf16.msra.mxu0 %v2875
    %3887 = vmatprep.subr.bf16.mxu0 %v2880
    %3888 = vmatpush1.bf16.msra.mxu0 %v2879
    %3889 = vmatprep.subr.bf16.mxu0 %v2884
    %3890 = vmatpush1.bf16.msra.mxu0 %v2883
    %3891 = vmatprep.subr.bf16.mxu0 %v2888
    %3892 = vmatpush1.bf16.msra.mxu0 %v2887
    %3893 = vmatprep.subr.bf16.mxu0 %v2892
    %3894 = vmatpush1.bf16.msra.mxu0 %v2891
    %3895 = vmatprep.subr.bf16.mxu0 %v2896
    %3896 = vmatpush1.bf16.msra.mxu0 %v2895
    %3897 = vmatprep.subr.bf16.mxu0 %v2900
    %3898 = vmatpush1.bf16.msra.mxu0 %v2899
    %3899 = vmatprep.subr.bf16.mxu0 %v2904
    %3900 = vmatpush1.bf16.msra.mxu0 %v2903
    %3901 = vmatprep.subr.bf16.mxu0 %v2908
    %3902 = vmatpush1.bf16.msra.mxu0 %v2907
    %3903 = vmatprep.mubr.bf16.mxu0 %v762
    %3904 = vmatmul.mubr.bf16.gmra.mrb[0].mxu0 %v761
    %v3905 = vpop.f32.mrb[0].mxu0
    %v3906 = vadd.f32 %v1294, %v3905
    %v3907 = vpop.f32.mrb[0].mxu0
    %v3908 = vadd.f32 %v1298, %v3907
    %v3909 = vpop.f32.mrb[0].mxu0
    %v3910 = vpop.f32.mrb[0].mxu0
    %3911 = vdwg.mxu0
    %3912 = vmatprep.subr.bf16.mxu0 %v2912
    %3913 = vmatpush1.bf16.msra.mxu0 %v2911
    %3914 = vmatprep.subr.bf16.mxu0 %v2916
    %3915 = vmatpush1.bf16.msra.mxu0 %v2915
    %3916 = vmatprep.subr.bf16.mxu0 %v2920
    %3917 = vmatpush1.bf16.msra.mxu0 %v2919
    %3918 = vmatprep.subr.bf16.mxu0 %v2924
    %3919 = vmatpush1.bf16.msra.mxu0 %v2923
    %3920 = vmatprep.subr.bf16.mxu0 %v2928
    %3921 = vmatpush1.bf16.msra.mxu0 %v2927
    %3922 = vmatprep.subr.bf16.mxu0 %v2932
    %3923 = vmatpush1.bf16.msra.mxu0 %v2931
    %3924 = vmatprep.subr.bf16.mxu0 %v2936
    %3925 = vmatpush1.bf16.msra.mxu0 %v2935
    %3926 = vmatprep.subr.bf16.mxu0 %v2940
    %3927 = vmatpush1.bf16.msra.mxu0 %v2939
    %3928 = vmatprep.subr.bf16.mxu0 %v2944
    %3929 = vmatpush1.bf16.msra.mxu0 %v2943
    %3930 = vmatprep.subr.bf16.mxu0 %v2948
    %3931 = vmatpush1.bf16.msra.mxu0 %v2947
    %3932 = vmatprep.subr.bf16.mxu0 %v2952
    %3933 = vmatpush1.bf16.msra.mxu0 %v2951
    %3934 = vmatprep.subr.bf16.mxu0 %v2956
    %3935 = vmatpush1.bf16.msra.mxu0 %v2955
    %3936 = vmatprep.subr.bf16.mxu0 %v2960
    %3937 = vmatpush1.bf16.msra.mxu0 %v2959
    %3938 = vmatprep.subr.bf16.mxu0 %v2964
    %3939 = vmatpush1.bf16.msra.mxu0 %v2963
    %3940 = vmatprep.subr.bf16.mxu0 %v2968
    %3941 = vmatpush1.bf16.msra.mxu0 %v2967
    %3942 = vmatprep.subr.bf16.mxu0 %v2972
    %3943 = vmatpush1.bf16.msra.mxu0 %v2971
    %3944 = vmatprep.mubr.bf16.mxu0 %v764
    %3945 = vmatmul.mubr.bf16.gmra.mrb[0].mxu0 %v763
    %v3946 = vpop.f32.mrb[0].mxu0
    %v3947 = vadd.f32 %v3906, %v3946
    %v3948 = vpop.f32.mrb[0].mxu0
    %v3949 = vadd.f32 %v3908, %v3948
    %v3950 = vpop.f32.mrb[0].mxu0
    %v3951 = vpop.f32.mrb[0].mxu0
    %3952 = vdwg.mxu0
    %3953 = vmatprep.subr.bf16.mxu0 %v2976
    %3954 = vmatpush1.bf16.msra.mxu0 %v2975
    %3955 = vmatprep.subr.bf16.mxu0 %v2980
    %3956 = vmatpush1.bf16.msra.mxu0 %v2979
    %3957 = vmatprep.subr.bf16.mxu0 %v2984
    %3958 = vmatpush1.bf16.msra.mxu0 %v2983
    %3959 = vmatprep.subr.bf16.mxu0 %v2988
    %3960 = vmatpush1.bf16.msra.mxu0 %v2987
    %3961 = vmatprep.subr.bf16.mxu0 %v2992
    %3962 = vmatpush1.bf16.msra.mxu0 %v2991
    %3963 = vmatprep.subr.bf16.mxu0 %v2996
    %3964 = vmatpush1.bf16.msra.mxu0 %v2995
    %3965 = vmatprep.subr.bf16.mxu0 %v3000
    %3966 = vmatpush1.bf16.msra.mxu0 %v2999
    %3967 = vmatprep.subr.bf16.mxu0 %v3004
    %3968 = vmatpush1.bf16.msra.mxu0 %v3003
    %3969 = vmatprep.subr.bf16.mxu0 %v3008
    %3970 = vmatpush1.bf16.msra.mxu0 %v3007
    %3971 = vmatprep.subr.bf16.mxu0 %v3012
    %3972 = vmatpush1.bf16.msra.mxu0 %v3011
    %3973 = vmatprep.subr.bf16.mxu0 %v3016
    %3974 = vmatpush1.bf16.msra.mxu0 %v3015
    %3975 = vmatprep.subr.bf16.mxu0 %v3020
    %3976 = vmatpush1.bf16.msra.mxu0 %v3019
    %3977 = vmatprep.subr.bf16.mxu0 %v3024
    %3978 = vmatpush1.bf16.msra.mxu0 %v3023
    %3979 = vmatprep.subr.bf16.mxu0 %v3028
    %3980 = vmatpush1.bf16.msra.mxu0 %v3027
    %3981 = vmatprep.subr.bf16.mxu0 %v3032
    %3982 = vmatpush1.bf16.msra.mxu0 %v3031
    %3983 = vmatprep.subr.bf16.mxu0 %v3036
    %3984 = vmatpush1.bf16.msra.mxu0 %v3035
    %3985 = vmatprep.mubr.bf16.mxu0 %v766
    %3986 = vmatmul.mubr.bf16.gmra.mrb[0].mxu0 %v765
    %v3987 = vpop.f32.mrb[0].mxu0
    %v3988 = vadd.f32 %v3947, %v3987
    %v3989 = vpop.f32.mrb[0].mxu0
    %v3990 = vadd.f32 %v3949, %v3989
    %v3991 = vpop.f32.mrb[0].mxu0
    %v3992 = vpop.f32.mrb[0].mxu0
    %3993 = vdwg.mxu0
    %3994 = vmatprep.subr.bf16.mxu0 %v3040
    %3995 = vmatpush1.bf16.msra.mxu0 %v3039
    %3996 = vmatprep.subr.bf16.mxu0 %v3044
    %3997 = vmatpush1.bf16.msra.mxu0 %v3043
    %3998 = vmatprep.subr.bf16.mxu0 %v3048
    %3999 = vmatpush1.bf16.msra.mxu0 %v3047
    %4000 = vmatprep.subr.bf16.mxu0 %v3052
    %4001 = vmatpush1.bf16.msra.mxu0 %v3051
    %4002 = vmatprep.subr.bf16.mxu0 %v3056
    %4003 = vmatpush1.bf16.msra.mxu0 %v3055
    %4004 = vmatprep.subr.bf16.mxu0 %v3060
    %4005 = vmatpush1.bf16.msra.mxu0 %v3059
    %4006 = vmatprep.subr.bf16.mxu0 %v3064
    %4007 = vmatpush1.bf16.msra.mxu0 %v3063
    %4008 = vmatprep.subr.bf16.mxu0 %v3068
    %4009 = vmatpush1.bf16.msra.mxu0 %v3067
    %4010 = vmatprep.subr.bf16.mxu0 %v3072
    %4011 = vmatpush1.bf16.msra.mxu0 %v3071
    %4012 = vmatprep.subr.bf16.mxu0 %v3076
    %4013 = vmatpush1.bf16.msra.mxu0 %v3075
    %4014 = vmatprep.subr.bf16.mxu0 %v3080
    %4015 = vmatpush1.bf16.msra.mxu0 %v3079
    %4016 = vmatprep.subr.bf16.mxu0 %v3084
    %4017 = vmatpush1.bf16.msra.mxu0 %v3083
    %4018 = vmatprep.subr.bf16.mxu0 %v3088
    %4019 = vmatpush1.bf16.msra.mxu0 %v3087
    %4020 = vmatprep.subr.bf16.mxu0 %v3092
    %4021 = vmatpush1.bf16.msra.mxu0 %v3091
    %4022 = vmatprep.subr.bf16.mxu0 %v3096
    %4023 = vmatpush1.bf16.msra.mxu0 %v3095
    %4024 = vmatprep.subr.bf16.mxu0 %v3100
    %4025 = vmatpush1.bf16.msra.mxu0 %v3099
    %4026 = vmatprep.mubr.bf16.mxu0 %v768
    %4027 = vmatmul.mubr.bf16.gmra.mrb[0].mxu0 %v767
    %v4028 = vpop.f32.mrb[0].mxu0
    %v4029 = vadd.f32 %v3988, %v4028
    %v4030 = vpop.f32.mrb[0].mxu0
    %v4031 = vadd.f32 %v3990, %v4030
    %v4032 = vpop.f32.mrb[0].mxu0
    %v4033 = vpop.f32.mrb[0].mxu0
    %4034 = vdwg.mxu0
    %4035 = vmatprep.subr.bf16.mxu0 %v3104
    %4036 = vmatpush1.bf16.msra.mxu0 %v3103
    %4037 = vmatprep.subr.bf16.mxu0 %v3108
    %4038 = vmatpush1.bf16.msra.mxu0 %v3107
    %4039 = vmatprep.subr.bf16.mxu0 %v3112
    %4040 = vmatpush1.bf16.msra.mxu0 %v3111
    %4041 = vmatprep.subr.bf16.mxu0 %v3116
    %4042 = vmatpush1.bf16.msra.mxu0 %v3115
    %4043 = vmatprep.subr.bf16.mxu0 %v3120
    %4044 = vmatpush1.bf16.msra.mxu0 %v3119
    %4045 = vmatprep.subr.bf16.mxu0 %v3124
    %4046 = vmatpush1.bf16.msra.mxu0 %v3123
    %4047 = vmatprep.subr.bf16.mxu0 %v3128
    %4048 = vmatpush1.bf16.msra.mxu0 %v3127
    %4049 = vmatprep.subr.bf16.mxu0 %v3132
    %4050 = vmatpush1.bf16.msra.mxu0 %v3131
    %4051 = vmatprep.subr.bf16.mxu0 %v3136
    %4052 = vmatpush1.bf16.msra.mxu0 %v3135
    %4053 = vmatprep.subr.bf16.mxu0 %v3140
    %4054 = vmatpush1.bf16.msra.mxu0 %v3139
    %4055 = vmatprep.subr.bf16.mxu0 %v3144
    %4056 = vmatpush1.bf16.msra.mxu0 %v3143
    %4057 = vmatprep.subr.bf16.mxu0 %v3148
    %4058 = vmatpush1.bf16.msra.mxu0 %v3147
    %4059 = vmatprep.subr.bf16.mxu0 %v3152
    %4060 = vmatpush1.bf16.msra.mxu0 %v3151
    %4061 = vmatprep.subr.bf16.mxu0 %v3156
    %4062 = vmatpush1.bf16.msra.mxu0 %v3155
    %4063 = vmatprep.subr.bf16.mxu0 %v3160
    %4064 = vmatpush1.bf16.msra.mxu0 %v3159
    %4065 = vmatprep.subr.bf16.mxu0 %v3164
    %4066 = vmatpush1.bf16.msra.mxu0 %v3163
    %4067 = vmatprep.mubr.bf16.mxu0 %v770
    %4068 = vmatmul.mubr.bf16.gmra.mrb[0].mxu0 %v769
    %v4069 = vpop.f32.mrb[0].mxu0
    %v4070 = vadd.f32 %v4029, %v4069
    %v4071 = vpop.f32.mrb[0].mxu0
    %v4072 = vadd.f32 %v4031, %v4071
    %v4073 = vpop.f32.mrb[0].mxu0
    %v4074 = vpop.f32.mrb[0].mxu0
    %4075 = vdwg.mxu0
    %4076 = vmatprep.subr.bf16.mxu0 %v3168
    %4077 = vmatpush1.bf16.msra.mxu0 %v3167
    %4078 = vmatprep.subr.bf16.mxu0 %v3172
    %4079 = vmatpush1.bf16.msra.mxu0 %v3171
    %4080 = vmatprep.subr.bf16.mxu0 %v3176
    %4081 = vmatpush1.bf16.msra.mxu0 %v3175
    %4082 = vmatprep.subr.bf16.mxu0 %v3180
    %4083 = vmatpush1.bf16.msra.mxu0 %v3179
    %4084 = vmatprep.subr.bf16.mxu0 %v3184
    %4085 = vmatpush1.bf16.msra.mxu0 %v3183
    %4086 = vmatprep.subr.bf16.mxu0 %v3188
    %4087 = vmatpush1.bf16.msra.mxu0 %v3187
    %4088 = vmatprep.subr.bf16.mxu0 %v3192
    %4089 = vmatpush1.bf16.msra.mxu0 %v3191
    %4090 = vmatprep.subr.bf16.mxu0 %v3196
    %4091 = vmatpush1.bf16.msra.mxu0 %v3195
    %4092 = vmatprep.subr.bf16.mxu0 %v3200
    %4093 = vmatpush1.bf16.msra.mxu0 %v3199
    %4094 = vmatprep.subr.bf16.mxu0 %v3204
    %4095 = vmatpush1.bf16.msra.mxu0 %v3203
    %4096 = vmatprep.subr.bf16.mxu0 %v3208
    %4097 = vmatpush1.bf16.msra.mxu0 %v3207
    %4098 = vmatprep.subr.bf16.mxu0 %v3212
    %4099 = vmatpush1.bf16.msra.mxu0 %v3211
    %4100 = vmatprep.subr.bf16.mxu0 %v3216
    %4101 = vmatpush1.bf16.msra.mxu0 %v3215
    %4102 = vmatprep.subr.bf16.mxu0 %v3220
    %4103 = vmatpush1.bf16.msra.mxu0 %v3219
    %4104 = vmatprep.subr.bf16.mxu0 %v3224
    %4105 = vmatpush1.bf16.msra.mxu0 %v3223
    %4106 = vmatprep.subr.bf16.mxu0 %v3228
    %4107 = vmatpush1.bf16.msra.mxu0 %v3227
    %4108 = vmatprep.mubr.bf16.mxu0 %v772
    %4109 = vmatmul.mubr.bf16.gmra.mrb[0].mxu0 %v771
    %v4110 = vpop.f32.mrb[0].mxu0
    %v4111 = vadd.f32 %v4070, %v4110
    %v4112 = vpop.f32.mrb[0].mxu0
    %v4113 = vadd.f32 %v4072, %v4112
    %v4114 = vpop.f32.mrb[0].mxu0
    %v4115 = vpop.f32.mrb[0].mxu0
    %4116 = vdwg.mxu0
    %4117 = vmatprep.subr.bf16.mxu0 %v3232
    %4118 = vmatpush1.bf16.msra.mxu0 %v3231
    %4119 = vmatprep.subr.bf16.mxu0 %v3236
    %4120 = vmatpush1.bf16.msra.mxu0 %v3235
    %4121 = vmatprep.subr.bf16.mxu0 %v3240
    %4122 = vmatpush1.bf16.msra.mxu0 %v3239
    %4123 = vmatprep.subr.bf16.mxu0 %v3244
    %4124 = vmatpush1.bf16.msra.mxu0 %v3243
    %4125 = vmatprep.subr.bf16.mxu0 %v3248
    %4126 = vmatpush1.bf16.msra.mxu0 %v3247
    %4127 = vmatprep.subr.bf16.mxu0 %v3252
    %4128 = vmatpush1.bf16.msra.mxu0 %v3251
    %4129 = vmatprep.subr.bf16.mxu0 %v3256
    %4130 = vmatpush1.bf16.msra.mxu0 %v3255
    %4131 = vmatprep.subr.bf16.mxu0 %v3260
    %4132 = vmatpush1.bf16.msra.mxu0 %v3259
    %4133 = vmatprep.subr.bf16.mxu0 %v3264
    %4134 = vmatpush1.bf16.msra.mxu0 %v3263
    %4135 = vmatprep.subr.bf16.mxu0 %v3268
    %4136 = vmatpush1.bf16.msra.mxu0 %v3267
    %4137 = vmatprep.subr.bf16.mxu0 %v3272
    %4138 = vmatpush1.bf16.msra.mxu0 %v3271
    %4139 = vmatprep.subr.bf16.mxu0 %v3276
    %4140 = vmatpush1.bf16.msra.mxu0 %v3275
    %4141 = vmatprep.subr.bf16.mxu0 %v3280
    %4142 = vmatpush1.bf16.msra.mxu0 %v3279
    %4143 = vmatprep.subr.bf16.mxu0 %v3284
    %4144 = vmatpush1.bf16.msra.mxu0 %v3283
    %4145 = vmatprep.subr.bf16.mxu0 %v3288
    %4146 = vmatpush1.bf16.msra.mxu0 %v3287
    %4147 = vmatprep.subr.bf16.mxu0 %v3292
    %4148 = vmatpush1.bf16.msra.mxu0 %v3291
    %4149 = vmatprep.mubr.bf16.mxu0 %v774
    %4150 = vmatmul.mubr.bf16.gmra.mrb[0].mxu0 %v773
    %v4151 = vpop.f32.mrb[0].mxu0
    %v4152 = vadd.f32 %v4111, %v4151
    %v4153 = vpop.f32.mrb[0].mxu0
    %v4154 = vadd.f32 %v4113, %v4153
    %v4155 = vpop.f32.mrb[0].mxu0
    %v4156 = vpop.f32.mrb[0].mxu0
    %4157 = vdwg.mxu0
    %4158 = vmatprep.subr.bf16.mxu0 %v3296
    %4159 = vmatpush1.bf16.msra.mxu0 %v3295
    %4160 = vmatprep.subr.bf16.mxu0 %v3300
    %4161 = vmatpush1.bf16.msra.mxu0 %v3299
    %4162 = vmatprep.subr.bf16.mxu0 %v3304
    %4163 = vmatpush1.bf16.msra.mxu0 %v3303
    %4164 = vmatprep.subr.bf16.mxu0 %v3308
    %4165 = vmatpush1.bf16.msra.mxu0 %v3307
    %4166 = vmatprep.subr.bf16.mxu0 %v3312
    %4167 = vmatpush1.bf16.msra.mxu0 %v3311
    %4168 = vmatprep.subr.bf16.mxu0 %v3316
    %4169 = vmatpush1.bf16.msra.mxu0 %v3315
    %4170 = vmatprep.subr.bf16.mxu0 %v3320
    %4171 = vmatpush1.bf16.msra.mxu0 %v3319
    %4172 = vmatprep.subr.bf16.mxu0 %v3324
    %4173 = vmatpush1.bf16.msra.mxu0 %v3323
    %4174 = vmatprep.subr.bf16.mxu0 %v3328
    %4175 = vmatpush1.bf16.msra.mxu0 %v3327
    %4176 = vmatprep.subr.bf16.mxu0 %v3332
    %4177 = vmatpush1.bf16.msra.mxu0 %v3331
    %4178 = vmatprep.subr.bf16.mxu0 %v3336
    %4179 = vmatpush1.bf16.msra.mxu0 %v3335
    %4180 = vmatprep.subr.bf16.mxu0 %v3340
    %4181 = vmatpush1.bf16.msra.mxu0 %v3339
    %4182 = vmatprep.subr.bf16.mxu0 %v3344
    %4183 = vmatpush1.bf16.msra.mxu0 %v3343
    %4184 = vmatprep.subr.bf16.mxu0 %v3348
    %4185 = vmatpush1.bf16.msra.mxu0 %v3347
    %4186 = vmatprep.subr.bf16.mxu0 %v3352
    %4187 = vmatpush1.bf16.msra.mxu0 %v3351
    %4188 = vmatprep.subr.bf16.mxu0 %v3356
    %4189 = vmatpush1.bf16.msra.mxu0 %v3355
    %4190 = vmatprep.mubr.bf16.mxu0 %v776
    %4191 = vmatmul.mubr.bf16.gmra.mrb[0].mxu0 %v775
    %v4192 = vpop.f32.mrb[0].mxu0
    %v4193 = vadd.f32 %v4152, %v4192
    %v4194 = vpop.f32.mrb[0].mxu0
    %v4195 = vadd.f32 %v4154, %v4194
    %v4196 = vpop.f32.mrb[0].mxu0
    %v4197 = vpop.f32.mrb[0].mxu0
    %4198 = vdwg.mxu0
    %4199 = vmatprep.subr.bf16.mxu0 %v2850
    %4200 = vmatpush1.bf16.msra.mxu0 %v2849
    %4201 = vmatprep.subr.bf16.mxu0 %v2854
    %4202 = vmatpush1.bf16.msra.mxu0 %v2853
    %4203 = vmatprep.subr.bf16.mxu0 %v2858
    %4204 = vmatpush1.bf16.msra.mxu0 %v2857
    %4205 = vmatprep.subr.bf16.mxu0 %v2862
    %4206 = vmatpush1.bf16.msra.mxu0 %v2861
    %4207 = vmatprep.subr.bf16.mxu0 %v2866
    %4208 = vmatpush1.bf16.msra.mxu0 %v2865
    %4209 = vmatprep.subr.bf16.mxu0 %v2870
    %4210 = vmatpush1.bf16.msra.mxu0 %v2869
    %4211 = vmatprep.subr.bf16.mxu0 %v2874
    %4212 = vmatpush1.bf16.msra.mxu0 %v2873
    %4213 = vmatprep.subr.bf16.mxu0 %v2878
    %4214 = vmatpush1.bf16.msra.mxu0 %v2877
    %4215 = vmatprep.subr.bf16.mxu0 %v2882
    %4216 = vmatpush1.bf16.msra.mxu0 %v2881
    %4217 = vmatprep.subr.bf16.mxu0 %v2886
    %4218 = vmatpush1.bf16.msra.mxu0 %v2885
    %4219 = vmatprep.subr.bf16.mxu0 %v2890
    %4220 = vmatpush1.bf16.msra.mxu0 %v2889
    %4221 = vmatprep.subr.bf16.mxu0 %v2894
    %4222 = vmatpush1.bf16.msra.mxu0 %v2893
    %4223 = vmatprep.subr.bf16.mxu0 %v2898
    %4224 = vmatpush1.bf16.msra.mxu0 %v2897
    %4225 = vmatprep.subr.bf16.mxu0 %v2902
    %4226 = vmatpush1.bf16.msra.mxu0 %v2901
    %4227 = vmatprep.subr.bf16.mxu0 %v2906
    %4228 = vmatpush1.bf16.msra.mxu0 %v2905
    %4229 = vmatprep.subr.bf16.mxu0 %v2910
    %4230 = vmatpush1.bf16.msra.mxu0 %v2909
    %4231 = vmatprep.mubr.bf16.mxu0 %v762
    %4232 = vmatmul.mubr.bf16.gmra.mrb[0].mxu0 %v761
    %v4233 = vpop.f32.mrb[0].mxu0
    %v4234 = vadd.f32 %v1302, %v4233
    %v4235 = vpop.f32.mrb[0].mxu0
    %v4236 = vadd.f32 %v1306, %v4235
    %v4237 = vpop.f32.mrb[0].mxu0
    %v4238 = vpop.f32.mrb[0].mxu0
    %4239 = vdwg.mxu0
    %4240 = vmatprep.subr.bf16.mxu0 %v2914
    %4241 = vmatpush1.bf16.msra.mxu0 %v2913
    %4242 = vmatprep.subr.bf16.mxu0 %v2918
    %4243 = vmatpush1.bf16.msra.mxu0 %v2917
    %4244 = vmatprep.subr.bf16.mxu0 %v2922
    %4245 = vmatpush1.bf16.msra.mxu0 %v2921
    %4246 = vmatprep.subr.bf16.mxu0 %v2926
    %4247 = vmatpush1.bf16.msra.mxu0 %v2925
    %4248 = vmatprep.subr.bf16.mxu0 %v2930
    %4249 = vmatpush1.bf16.msra.mxu0 %v2929
    %4250 = vmatprep.subr.bf16.mxu0 %v2934
    %4251 = vmatpush1.bf16.msra.mxu0 %v2933
    %4252 = vmatprep.subr.bf16.mxu0 %v2938
    %4253 = vmatpush1.bf16.msra.mxu0 %v2937
    %4254 = vmatprep.subr.bf16.mxu0 %v2942
    %4255 = vmatpush1.bf16.msra.mxu0 %v2941
    %4256 = vmatprep.subr.bf16.mxu0 %v2946
    %4257 = vmatpush1.bf16.msra.mxu0 %v2945
    %4258 = vmatprep.subr.bf16.mxu0 %v2950
    %4259 = vmatpush1.bf16.msra.mxu0 %v2949
    %4260 = vmatprep.subr.bf16.mxu0 %v2954
    %4261 = vmatpush1.bf16.msra.mxu0 %v2953
    %4262 = vmatprep.subr.bf16.mxu0 %v2958
    %4263 = vmatpush1.bf16.msra.mxu0 %v2957
    %4264 = vmatprep.subr.bf16.mxu0 %v2962
    %4265 = vmatpush1.bf16.msra.mxu0 %v2961
    %4266 = vmatprep.subr.bf16.mxu0 %v2966
    %4267 = vmatpush1.bf16.msra.mxu0 %v2965
    %4268 = vmatprep.subr.bf16.mxu0 %v2970
    %4269 = vmatpush1.bf16.msra.mxu0 %v2969
    %4270 = vmatprep.subr.bf16.mxu0 %v2974
    %4271 = vmatpush1.bf16.msra.mxu0 %v2973
    %4272 = vmatprep.mubr.bf16.mxu0 %v764
    %4273 = vmatmul.mubr.bf16.gmra.mrb[0].mxu0 %v763
    %v4274 = vpop.f32.mrb[0].mxu0
    %v4275 = vadd.f32 %v4234, %v4274
    %v4276 = vpop.f32.mrb[0].mxu0
    %v4277 = vadd.f32 %v4236, %v4276
    %v4278 = vpop.f32.mrb[0].mxu0
    %v4279 = vpop.f32.mrb[0].mxu0
    %4280 = vdwg.mxu0
    %4281 = vmatprep.subr.bf16.mxu0 %v2978
    %4282 = vmatpush1.bf16.msra.mxu0 %v2977
    %4283 = vmatprep.subr.bf16.mxu0 %v2982
    %4284 = vmatpush1.bf16.msra.mxu0 %v2981
    %4285 = vmatprep.subr.bf16.mxu0 %v2986
    %4286 = vmatpush1.bf16.msra.mxu0 %v2985
    %4287 = vmatprep.subr.bf16.mxu0 %v2990
    %4288 = vmatpush1.bf16.msra.mxu0 %v2989
    %4289 = vmatprep.subr.bf16.mxu0 %v2994
    %4290 = vmatpush1.bf16.msra.mxu0 %v2993
    %4291 = vmatprep.subr.bf16.mxu0 %v2998
    %4292 = vmatpush1.bf16.msra.mxu0 %v2997
    %4293 = vmatprep.subr.bf16.mxu0 %v3002
    %4294 = vmatpush1.bf16.msra.mxu0 %v3001
    %4295 = vmatprep.subr.bf16.mxu0 %v3006
    %4296 = vmatpush1.bf16.msra.mxu0 %v3005
    %4297 = vmatprep.subr.bf16.mxu0 %v3010
    %4298 = vmatpush1.bf16.msra.mxu0 %v3009
    %4299 = vmatprep.subr.bf16.mxu0 %v3014
    %4300 = vmatpush1.bf16.msra.mxu0 %v3013
    %4301 = vmatprep.subr.bf16.mxu0 %v3018
    %4302 = vmatpush1.bf16.msra.mxu0 %v3017
    %4303 = vmatprep.subr.bf16.mxu0 %v3022
    %4304 = vmatpush1.bf16.msra.mxu0 %v3021
    %4305 = vmatprep.subr.bf16.mxu0 %v3026
    %4306 = vmatpush1.bf16.msra.mxu0 %v3025
    %4307 = vmatprep.subr.bf16.mxu0 %v3030
    %4308 = vmatpush1.bf16.msra.mxu0 %v3029
    %4309 = vmatprep.subr.bf16.mxu0 %v3034
    %4310 = vmatpush1.bf16.msra.mxu0 %v3033
    %4311 = vmatprep.subr.bf16.mxu0 %v3038
    %4312 = vmatpush1.bf16.msra.mxu0 %v3037
    %4313 = vmatprep.mubr.bf16.mxu0 %v766
    %4314 = vmatmul.mubr.bf16.gmra.mrb[0].mxu0 %v765
    %v4315 = vpop.f32.mrb[0].mxu0
    %v4316 = vadd.f32 %v4275, %v4315
    %v4317 = vpop.f32.mrb[0].mxu0
    %v4318 = vadd.f32 %v4277, %v4317
    %v4319 = vpop.f32.mrb[0].mxu0
    %v4320 = vpop.f32.mrb[0].mxu0
    %4321 = vdwg.mxu0
    %4322 = vmatprep.subr.bf16.mxu0 %v3042
    %4323 = vmatpush1.bf16.msra.mxu0 %v3041
    %4324 = vmatprep.subr.bf16.mxu0 %v3046
    %4325 = vmatpush1.bf16.msra.mxu0 %v3045
    %4326 = vmatprep.subr.bf16.mxu0 %v3050
    %4327 = vmatpush1.bf16.msra.mxu0 %v3049
    %4328 = vmatprep.subr.bf16.mxu0 %v3054
    %4329 = vmatpush1.bf16.msra.mxu0 %v3053
    %4330 = vmatprep.subr.bf16.mxu0 %v3058
    %4331 = vmatpush1.bf16.msra.mxu0 %v3057
    %4332 = vmatprep.subr.bf16.mxu0 %v3062
    %4333 = vmatpush1.bf16.msra.mxu0 %v3061
    %4334 = vmatprep.subr.bf16.mxu0 %v3066
    %4335 = vmatpush1.bf16.msra.mxu0 %v3065
    %4336 = vmatprep.subr.bf16.mxu0 %v3070
    %4337 = vmatpush1.bf16.msra.mxu0 %v3069
    %4338 = vmatprep.subr.bf16.mxu0 %v3074
    %4339 = vmatpush1.bf16.msra.mxu0 %v3073
    %4340 = vmatprep.subr.bf16.mxu0 %v3078
    %4341 = vmatpush1.bf16.msra.mxu0 %v3077
    %4342 = vmatprep.subr.bf16.mxu0 %v3082
    %4343 = vmatpush1.bf16.msra.mxu0 %v3081
    %4344 = vmatprep.subr.bf16.mxu0 %v3086
    %4345 = vmatpush1.bf16.msra.mxu0 %v3085
    %4346 = vmatprep.subr.bf16.mxu0 %v3090
    %4347 = vmatpush1.bf16.msra.mxu0 %v3089
    %4348 = vmatprep.subr.bf16.mxu0 %v3094
    %4349 = vmatpush1.bf16.msra.mxu0 %v3093
    %4350 = vmatprep.subr.bf16.mxu0 %v3098
    %4351 = vmatpush1.bf16.msra.mxu0 %v3097
    %4352 = vmatprep.subr.bf16.mxu0 %v3102
    %4353 = vmatpush1.bf16.msra.mxu0 %v3101
    %4354 = vmatprep.mubr.bf16.mxu0 %v768
    %4355 = vmatmul.mubr.bf16.gmra.mrb[0].mxu0 %v767
    %v4356 = vpop.f32.mrb[0].mxu0
    %v4357 = vadd.f32 %v4316, %v4356
    %v4358 = vpop.f32.mrb[0].mxu0
    %v4359 = vadd.f32 %v4318, %v4358
    %v4360 = vpop.f32.mrb[0].mxu0
    %v4361 = vpop.f32.mrb[0].mxu0
    %4362 = vdwg.mxu0
    %4363 = vmatprep.subr.bf16.mxu0 %v3106
    %4364 = vmatpush1.bf16.msra.mxu0 %v3105
    %4365 = vmatprep.subr.bf16.mxu0 %v3110
    %4366 = vmatpush1.bf16.msra.mxu0 %v3109
    %4367 = vmatprep.subr.bf16.mxu0 %v3114
    %4368 = vmatpush1.bf16.msra.mxu0 %v3113
    %4369 = vmatprep.subr.bf16.mxu0 %v3118
    %4370 = vmatpush1.bf16.msra.mxu0 %v3117
    %4371 = vmatprep.subr.bf16.mxu0 %v3122
    %4372 = vmatpush1.bf16.msra.mxu0 %v3121
    %4373 = vmatprep.subr.bf16.mxu0 %v3126
    %4374 = vmatpush1.bf16.msra.mxu0 %v3125
    %4375 = vmatprep.subr.bf16.mxu0 %v3130
    %4376 = vmatpush1.bf16.msra.mxu0 %v3129
    %4377 = vmatprep.subr.bf16.mxu0 %v3134
    %4378 = vmatpush1.bf16.msra.mxu0 %v3133
    %4379 = vmatprep.subr.bf16.mxu0 %v3138
    %4380 = vmatpush1.bf16.msra.mxu0 %v3137
    %4381 = vmatprep.subr.bf16.mxu0 %v3142
    %4382 = vmatpush1.bf16.msra.mxu0 %v3141
    %4383 = vmatprep.subr.bf16.mxu0 %v3146
    %4384 = vmatpush1.bf16.msra.mxu0 %v3145
    %4385 = vmatprep.subr.bf16.mxu0 %v3150
    %4386 = vmatpush1.bf16.msra.mxu0 %v3149
    %4387 = vmatprep.subr.bf16.mxu0 %v3154
    %4388 = vmatpush1.bf16.msra.mxu0 %v3153
    %4389 = vmatprep.subr.bf16.mxu0 %v3158
    %4390 = vmatpush1.bf16.msra.mxu0 %v3157
    %4391 = vmatprep.subr.bf16.mxu0 %v3162
    %4392 = vmatpush1.bf16.msra.mxu0 %v3161
    %4393 = vmatprep.subr.bf16.mxu0 %v3166
    %4394 = vmatpush1.bf16.msra.mxu0 %v3165
    %4395 = vmatprep.mubr.bf16.mxu0 %v770
    %4396 = vmatmul.mubr.bf16.gmra.mrb[0].mxu0 %v769
    %v4397 = vpop.f32.mrb[0].mxu0
    %v4398 = vadd.f32 %v4357, %v4397
    %v4399 = vpop.f32.mrb[0].mxu0
    %v4400 = vadd.f32 %v4359, %v4399
    %v4401 = vpop.f32.mrb[0].mxu0
    %v4402 = vpop.f32.mrb[0].mxu0
    %4403 = vdwg.mxu0
    %4404 = vmatprep.subr.bf16.mxu0 %v3170
    %4405 = vmatpush1.bf16.msra.mxu0 %v3169
    %4406 = vmatprep.subr.bf16.mxu0 %v3174
    %4407 = vmatpush1.bf16.msra.mxu0 %v3173
    %4408 = vmatprep.subr.bf16.mxu0 %v3178
    %4409 = vmatpush1.bf16.msra.mxu0 %v3177
    %4410 = vmatprep.subr.bf16.mxu0 %v3182
    %4411 = vmatpush1.bf16.msra.mxu0 %v3181
    %4412 = vmatprep.subr.bf16.mxu0 %v3186
    %4413 = vmatpush1.bf16.msra.mxu0 %v3185
    %4414 = vmatprep.subr.bf16.mxu0 %v3190
    %4415 = vmatpush1.bf16.msra.mxu0 %v3189
    %4416 = vmatprep.subr.bf16.mxu0 %v3194
    %4417 = vmatpush1.bf16.msra.mxu0 %v3193
    %4418 = vmatprep.subr.bf16.mxu0 %v3198
    %4419 = vmatpush1.bf16.msra.mxu0 %v3197
    %4420 = vmatprep.subr.bf16.mxu0 %v3202
    %4421 = vmatpush1.bf16.msra.mxu0 %v3201
    %4422 = vmatprep.subr.bf16.mxu0 %v3206
    %4423 = vmatpush1.bf16.msra.mxu0 %v3205
    %4424 = vmatprep.subr.bf16.mxu0 %v3210
    %4425 = vmatpush1.bf16.msra.mxu0 %v3209
    %4426 = vmatprep.subr.bf16.mxu0 %v3214
    %4427 = vmatpush1.bf16.msra.mxu0 %v3213
    %4428 = vmatprep.subr.bf16.mxu0 %v3218
    %4429 = vmatpush1.bf16.msra.mxu0 %v3217
    %4430 = vmatprep.subr.bf16.mxu0 %v3222
    %4431 = vmatpush1.bf16.msra.mxu0 %v3221
    %4432 = vmatprep.subr.bf16.mxu0 %v3226
    %4433 = vmatpush1.bf16.msra.mxu0 %v3225
    %4434 = vmatprep.subr.bf16.mxu0 %v3230
    %4435 = vmatpush1.bf16.msra.mxu0 %v3229
    %4436 = vmatprep.mubr.bf16.mxu0 %v772
    %4437 = vmatmul.mubr.bf16.gmra.mrb[0].mxu0 %v771
    %v4438 = vpop.f32.mrb[0].mxu0
    %v4439 = vadd.f32 %v4398, %v4438
    %v4440 = vpop.f32.mrb[0].mxu0
    %v4441 = vadd.f32 %v4400, %v4440
    %v4442 = vpop.f32.mrb[0].mxu0
    %v4443 = vpop.f32.mrb[0].mxu0
    %4444 = vdwg.mxu0
    %4445 = vmatprep.subr.bf16.mxu0 %v3234
    %4446 = vmatpush1.bf16.msra.mxu0 %v3233
    %4447 = vmatprep.subr.bf16.mxu0 %v3238
    %4448 = vmatpush1.bf16.msra.mxu0 %v3237
    %4449 = vmatprep.subr.bf16.mxu0 %v3242
    %4450 = vmatpush1.bf16.msra.mxu0 %v3241
    %4451 = vmatprep.subr.bf16.mxu0 %v3246
    %4452 = vmatpush1.bf16.msra.mxu0 %v3245
    %4453 = vmatprep.subr.bf16.mxu0 %v3250
    %4454 = vmatpush1.bf16.msra.mxu0 %v3249
    %4455 = vmatprep.subr.bf16.mxu0 %v3254
    %4456 = vmatpush1.bf16.msra.mxu0 %v3253
    %4457 = vmatprep.subr.bf16.mxu0 %v3258
    %4458 = vmatpush1.bf16.msra.mxu0 %v3257
    %4459 = vmatprep.subr.bf16.mxu0 %v3262
    %4460 = vmatpush1.bf16.msra.mxu0 %v3261
    %4461 = vmatprep.subr.bf16.mxu0 %v3266
    %4462 = vmatpush1.bf16.msra.mxu0 %v3265
    %4463 = vmatprep.subr.bf16.mxu0 %v3270
    %4464 = vmatpush1.bf16.msra.mxu0 %v3269
    %4465 = vmatprep.subr.bf16.mxu0 %v3274
    %4466 = vmatpush1.bf16.msra.mxu0 %v3273
    %4467 = vmatprep.subr.bf16.mxu0 %v3278
    %4468 = vmatpush1.bf16.msra.mxu0 %v3277
    %4469 = vmatprep.subr.bf16.mxu0 %v3282
    %4470 = vmatpush1.bf16.msra.mxu0 %v3281
    %4471 = vmatprep.subr.bf16.mxu0 %v3286
    %4472 = vmatpush1.bf16.msra.mxu0 %v3285
    %4473 = vmatprep.subr.bf16.mxu0 %v3290
    %4474 = vmatpush1.bf16.msra.mxu0 %v3289
    %4475 = vmatprep.subr.bf16.mxu0 %v3294
    %4476 = vmatpush1.bf16.msra.mxu0 %v3293
    %4477 = vmatprep.mubr.bf16.mxu0 %v774
    %4478 = vmatmul.mubr.bf16.gmra.mrb[0].mxu0 %v773
    %v4479 = vpop.f32.mrb[0].mxu0
    %v4480 = vadd.f32 %v4439, %v4479
    %v4481 = vpop.f32.mrb[0].mxu0
    %v4482 = vadd.f32 %v4441, %v4481
    %v4483 = vpop.f32.mrb[0].mxu0
    %v4484 = vpop.f32.mrb[0].mxu0
    %4485 = vdwg.mxu0
    %4486 = vmatprep.subr.bf16.mxu0 %v3298
    %4487 = vmatpush1.bf16.msra.mxu0 %v3297
    %4488 = vmatprep.subr.bf16.mxu0 %v3302
    %4489 = vmatpush1.bf16.msra.mxu0 %v3301
    %4490 = vmatprep.subr.bf16.mxu0 %v3306
    %4491 = vmatpush1.bf16.msra.mxu0 %v3305
    %4492 = vmatprep.subr.bf16.mxu0 %v3310
    %4493 = vmatpush1.bf16.msra.mxu0 %v3309
    %4494 = vmatprep.subr.bf16.mxu0 %v3314
    %4495 = vmatpush1.bf16.msra.mxu0 %v3313
    %4496 = vmatprep.subr.bf16.mxu0 %v3318
    %4497 = vmatpush1.bf16.msra.mxu0 %v3317
    %4498 = vmatprep.subr.bf16.mxu0 %v3322
    %4499 = vmatpush1.bf16.msra.mxu0 %v3321
    %4500 = vmatprep.subr.bf16.mxu0 %v3326
    %4501 = vmatpush1.bf16.msra.mxu0 %v3325
    %4502 = vmatprep.subr.bf16.mxu0 %v3330
    %4503 = vmatpush1.bf16.msra.mxu0 %v3329
    %4504 = vmatprep.subr.bf16.mxu0 %v3334
    %4505 = vmatpush1.bf16.msra.mxu0 %v3333
    %4506 = vmatprep.subr.bf16.mxu0 %v3338
    %4507 = vmatpush1.bf16.msra.mxu0 %v3337
    %4508 = vmatprep.subr.bf16.mxu0 %v3342
    %4509 = vmatpush1.bf16.msra.mxu0 %v3341
    %4510 = vmatprep.subr.bf16.mxu0 %v3346
    %4511 = vmatpush1.bf16.msra.mxu0 %v3345
    %4512 = vmatprep.subr.bf16.mxu0 %v3350
    %4513 = vmatpush1.bf16.msra.mxu0 %v3349
    %4514 = vmatprep.subr.bf16.mxu0 %v3354
    %4515 = vmatpush1.bf16.msra.mxu0 %v3353
    %4516 = vmatprep.subr.bf16.mxu0 %v3358
    %4517 = vmatpush1.bf16.msra.mxu0 %v3357
    %4518 = vmatprep.mubr.bf16.mxu0 %v776
    %4519 = vmatmul.mubr.bf16.gmra.mrb[0].mxu0 %v775
    %v4520 = vpop.f32.mrb[0].mxu0
    %v4521 = vadd.f32 %v4480, %v4520
    %v4522 = vpop.f32.mrb[0].mxu0
    %v4523 = vadd.f32 %v4482, %v4522
    %v4524 = vpop.f32.mrb[0].mxu0
    %v4525 = vpop.f32.mrb[0].mxu0
    %4526 = vdwg.mxu0
    %v4527 = vmax.f32 %v4193, 0.0
    %v4528 = vmax.f32 %v4195, 0.0
    %v4529 = vmax.f32 %v4521, 0.0
    %v4530 = vmax.f32 %v4523, 0.0
    %v4531 = vpack.c.bf16 %v4527, %v4527
    %v4532 = vpack.c.bf16 %v4528, %v4528
    %v4533 = vpack.c.bf16 %v4529, %v4529
    %v4534 = vpack.c.bf16 %v4530, %v4530
    %v4535 = vld [vmem:[#allocation11] sm:$0xff]
    %v4536 = vld [vmem:[#allocation11 + $0x8] sm:$0xff]
    %v4537 = vld [vmem:[#allocation11 + $0x10] sm:$0xff]
    %v4538 = vld [vmem:[#allocation11 + $0x18] sm:$0xff]
    %v4539 = vld [vmem:[#allocation11 + $0x20] sm:$0xff]
    %v4540 = vld [vmem:[#allocation11 + $0x28] sm:$0xff]
    %v4541 = vld [vmem:[#allocation11 + $0x30] sm:$0xff]
    %v4542 = vld [vmem:[#allocation11 + $0x38] sm:$0xff]
    %v4543 = vld [vmem:[#allocation11 + $0x40] sm:$0xff]
    %v4544 = vld [vmem:[#allocation11 + $0x48] sm:$0xff]
    %v4545 = vld [vmem:[#allocation11 + $0x50] sm:$0xff]
    %v4546 = vld [vmem:[#allocation11 + $0x58] sm:$0xff]
    %v4547 = vld [vmem:[#allocation11 + $0x60] sm:$0xff]
    %v4548 = vld [vmem:[#allocation11 + $0x68] sm:$0xff]
    %v4549 = vld [vmem:[#allocation11 + $0x70] sm:$0xff]
    %v4550 = vld [vmem:[#allocation11 + $0x78] sm:$0xff]
    %v4551 = vld [vmem:[#allocation11 + $0x80] sm:$0xff]
    %v4552 = vld [vmem:[#allocation11 + $0x88] sm:$0xff]
    %v4553 = vld [vmem:[#allocation11 + $0x90] sm:$0xff]
    %v4554 = vld [vmem:[#allocation11 + $0x98] sm:$0xff]
    %v4555 = vld [vmem:[#allocation11 + $0xa0] sm:$0xff]
    %v4556 = vld [vmem:[#allocation11 + $0xa8] sm:$0xff]
    %v4557 = vld [vmem:[#allocation11 + $0xb0] sm:$0xff]
    %v4558 = vld [vmem:[#allocation11 + $0xb8] sm:$0xff]
    %v4559 = vld [vmem:[#allocation11 + $0xc0] sm:$0xff]
    %v4560 = vld [vmem:[#allocation11 + $0xc8] sm:$0xff]
    %v4561 = vld [vmem:[#allocation11 + $0xd0] sm:$0xff]
    %v4562 = vld [vmem:[#allocation11 + $0xd8] sm:$0xff]
    %v4563 = vld [vmem:[#allocation11 + $0xe0] sm:$0xff]
    %v4564 = vld [vmem:[#allocation11 + $0xe8] sm:$0xff]
    %v4565 = vld [vmem:[#allocation11 + $0xf0] sm:$0xff]
    %v4566 = vld [vmem:[#allocation11 + $0xf8] sm:$0xff]
    %v4567 = vld [vmem:[#allocation11 + $0x100] sm:$0xff]
    %v4568 = vld [vmem:[#allocation11 + $0x108] sm:$0xff]
    %v4569 = vld [vmem:[#allocation11 + $0x110] sm:$0xff]
    %v4570 = vld [vmem:[#allocation11 + $0x118] sm:$0xff]
    %v4571 = vld [vmem:[#allocation11 + $0x120] sm:$0xff]
    %v4572 = vld [vmem:[#allocation11 + $0x128] sm:$0xff]
    %v4573 = vld [vmem:[#allocation11 + $0x130] sm:$0xff]
    %v4574 = vld [vmem:[#allocation11 + $0x138] sm:$0xff]
    %v4575 = vld [vmem:[#allocation11 + $0x140] sm:$0xff]
    %v4576 = vld [vmem:[#allocation11 + $0x148] sm:$0xff]
    %v4577 = vld [vmem:[#allocation11 + $0x150] sm:$0xff]
    %v4578 = vld [vmem:[#allocation11 + $0x158] sm:$0xff]
    %v4579 = vld [vmem:[#allocation11 + $0x160] sm:$0xff]
    %v4580 = vld [vmem:[#allocation11 + $0x168] sm:$0xff]
    %v4581 = vld [vmem:[#allocation11 + $0x170] sm:$0xff]
    %v4582 = vld [vmem:[#allocation11 + $0x178] sm:$0xff]
    %v4583 = vld [vmem:[#allocation11 + $0x180] sm:$0xff]
    %v4584 = vld [vmem:[#allocation11 + $0x188] sm:$0xff]
    %v4585 = vld [vmem:[#allocation11 + $0x190] sm:$0xff]
    %v4586 = vld [vmem:[#allocation11 + $0x198] sm:$0xff]
    %v4587 = vld [vmem:[#allocation11 + $0x1a0] sm:$0xff]
    %v4588 = vld [vmem:[#allocation11 + $0x1a8] sm:$0xff]
    %v4589 = vld [vmem:[#allocation11 + $0x1b0] sm:$0xff]
    %v4590 = vld [vmem:[#allocation11 + $0x1b8] sm:$0xff]
    %v4591 = vld [vmem:[#allocation11 + $0x1c0] sm:$0xff]
    %v4592 = vld [vmem:[#allocation11 + $0x1c8] sm:$0xff]
    %v4593 = vld [vmem:[#allocation11 + $0x1d0] sm:$0xff]
    %v4594 = vld [vmem:[#allocation11 + $0x1d8] sm:$0xff]
    %v4595 = vld [vmem:[#allocation11 + $0x1e0] sm:$0xff]
    %v4596 = vld [vmem:[#allocation11 + $0x1e8] sm:$0xff]
    %v4597 = vld [vmem:[#allocation11 + $0x1f0] sm:$0xff]
    %v4598 = vld [vmem:[#allocation11 + $0x1f8] sm:$0xff]
    %v4599 = vld [vmem:[#allocation11 + $0x200] sm:$0xff]
    %v4600 = vld [vmem:[#allocation11 + $0x208] sm:$0xff]
    %v4601 = vld [vmem:[#allocation11 + $0x210] sm:$0xff]
    %v4602 = vld [vmem:[#allocation11 + $0x218] sm:$0xff]
    %v4603 = vld [vmem:[#allocation11 + $0x220] sm:$0xff]
    %v4604 = vld [vmem:[#allocation11 + $0x228] sm:$0xff]
    %v4605 = vld [vmem:[#allocation11 + $0x230] sm:$0xff]
    %v4606 = vld [vmem:[#allocation11 + $0x238] sm:$0xff]
    %v4607 = vld [vmem:[#allocation11 + $0x240] sm:$0xff]
    %v4608 = vld [vmem:[#allocation11 + $0x248] sm:$0xff]
    %v4609 = vld [vmem:[#allocation11 + $0x250] sm:$0xff]
    %v4610 = vld [vmem:[#allocation11 + $0x258] sm:$0xff]
    %v4611 = vld [vmem:[#allocation11 + $0x260] sm:$0xff]
    %v4612 = vld [vmem:[#allocation11 + $0x268] sm:$0xff]
    %v4613 = vld [vmem:[#allocation11 + $0x270] sm:$0xff]
    %v4614 = vld [vmem:[#allocation11 + $0x278] sm:$0xff]
    %v4615 = vld [vmem:[#allocation11 + $0x280] sm:$0xff]
    %v4616 = vld [vmem:[#allocation11 + $0x288] sm:$0xff]
    %v4617 = vld [vmem:[#allocation11 + $0x290] sm:$0xff]
    %v4618 = vld [vmem:[#allocation11 + $0x298] sm:$0xff]
    %v4619 = vld [vmem:[#allocation11 + $0x2a0] sm:$0xff]
    %v4620 = vld [vmem:[#allocation11 + $0x2a8] sm:$0xff]
    %v4621 = vld [vmem:[#allocation11 + $0x2b0] sm:$0xff]
    %v4622 = vld [vmem:[#allocation11 + $0x2b8] sm:$0xff]
    %v4623 = vld [vmem:[#allocation11 + $0x2c0] sm:$0xff]
    %v4624 = vld [vmem:[#allocation11 + $0x2c8] sm:$0xff]
    %v4625 = vld [vmem:[#allocation11 + $0x2d0] sm:$0xff]
    %v4626 = vld [vmem:[#allocation11 + $0x2d8] sm:$0xff]
    %v4627 = vld [vmem:[#allocation11 + $0x2e0] sm:$0xff]
    %v4628 = vld [vmem:[#allocation11 + $0x2e8] sm:$0xff]
    %v4629 = vld [vmem:[#allocation11 + $0x2f0] sm:$0xff]
    %v4630 = vld [vmem:[#allocation11 + $0x2f8] sm:$0xff]
    %v4631 = vld [vmem:[#allocation11 + $0x300] sm:$0xff]
    %v4632 = vld [vmem:[#allocation11 + $0x308] sm:$0xff]
    %v4633 = vld [vmem:[#allocation11 + $0x310] sm:$0xff]
    %v4634 = vld [vmem:[#allocation11 + $0x318] sm:$0xff]
    %v4635 = vld [vmem:[#allocation11 + $0x320] sm:$0xff]
    %v4636 = vld [vmem:[#allocation11 + $0x328] sm:$0xff]
    %v4637 = vld [vmem:[#allocation11 + $0x330] sm:$0xff]
    %v4638 = vld [vmem:[#allocation11 + $0x338] sm:$0xff]
    %v4639 = vld [vmem:[#allocation11 + $0x340] sm:$0xff]
    %v4640 = vld [vmem:[#allocation11 + $0x348] sm:$0xff]
    %v4641 = vld [vmem:[#allocation11 + $0x350] sm:$0xff]
    %v4642 = vld [vmem:[#allocation11 + $0x358] sm:$0xff]
    %v4643 = vld [vmem:[#allocation11 + $0x360] sm:$0xff]
    %v4644 = vld [vmem:[#allocation11 + $0x368] sm:$0xff]
    %v4645 = vld [vmem:[#allocation11 + $0x370] sm:$0xff]
    %v4646 = vld [vmem:[#allocation11 + $0x378] sm:$0xff]
    %v4647 = vld [vmem:[#allocation11 + $0x380] sm:$0xff]
    %v4648 = vld [vmem:[#allocation11 + $0x388] sm:$0xff]
    %v4649 = vld [vmem:[#allocation11 + $0x390] sm:$0xff]
    %v4650 = vld [vmem:[#allocation11 + $0x398] sm:$0xff]
    %v4651 = vld [vmem:[#allocation11 + $0x3a0] sm:$0xff]
    %v4652 = vld [vmem:[#allocation11 + $0x3a8] sm:$0xff]
    %v4653 = vld [vmem:[#allocation11 + $0x3b0] sm:$0xff]
    %v4654 = vld [vmem:[#allocation11 + $0x3b8] sm:$0xff]
    %v4655 = vld [vmem:[#allocation11 + $0x3c0] sm:$0xff]
    %v4656 = vld [vmem:[#allocation11 + $0x3c8] sm:$0xff]
    %v4657 = vld [vmem:[#allocation11 + $0x3d0] sm:$0xff]
    %v4658 = vld [vmem:[#allocation11 + $0x3d8] sm:$0xff]
    %v4659 = vld [vmem:[#allocation11 + $0x3e0] sm:$0xff]
    %v4660 = vld [vmem:[#allocation11 + $0x3e8] sm:$0xff]
    %v4661 = vld [vmem:[#allocation11 + $0x3f0] sm:$0xff]
    %v4662 = vld [vmem:[#allocation11 + $0x3f8] sm:$0xff]
    %v4663 = vld [vmem:[#allocation13] sm:$0xf]
    %v4665 = vlaneseq
    %v4666 = vshrl.u32 %v4665, 7
    %v4667 = vsub.s32 0, %v4666
    %v4668 = vrot.slane %v4663, %v4667
    %v4669 = vlaneseq
    %v4670 = vshrl.u32 %v4669, 7
    %v4671 = vsub.s32 1, %v4670
    %v4672 = vrot.slane %v4663, %v4671
    %v4673 = vlaneseq
    %v4674 = vshrl.u32 %v4673, 7
    %v4675 = vsub.s32 2, %v4674
    %v4676 = vrot.slane %v4663, %v4675
    %v4677 = vlaneseq
    %v4678 = vshrl.u32 %v4677, 7
    %v4679 = vsub.s32 3, %v4678
    %v4680 = vrot.slane %v4663, %v4679
    %v4813 = vunpack.c.l.b16 %v4535
    %v4814 = vunpack.c.h.b16 %v4535
    %v4815 = vunpack.c.l.b16 %v4536
    %v4816 = vunpack.c.h.b16 %v4536
    %v4817 = vunpack.c.l.b16 %v4537
    %v4818 = vunpack.c.h.b16 %v4537
    %v4819 = vunpack.c.l.b16 %v4538
    %v4820 = vunpack.c.h.b16 %v4538
    %v4821 = vunpack.c.l.b16 %v4539
    %v4822 = vunpack.c.h.b16 %v4539
    %v4823 = vunpack.c.l.b16 %v4540
    %v4824 = vunpack.c.h.b16 %v4540
    %v4825 = vunpack.c.l.b16 %v4541
    %v4826 = vunpack.c.h.b16 %v4541
    %v4827 = vunpack.c.l.b16 %v4542
    %v4828 = vunpack.c.h.b16 %v4542
    %v4829 = vunpack.c.l.b16 %v4543
    %v4830 = vunpack.c.h.b16 %v4543
    %v4831 = vunpack.c.l.b16 %v4544
    %v4832 = vunpack.c.h.b16 %v4544
    %v4833 = vunpack.c.l.b16 %v4545
    %v4834 = vunpack.c.h.b16 %v4545
    %v4835 = vunpack.c.l.b16 %v4546
    %v4836 = vunpack.c.h.b16 %v4546
    %v4837 = vunpack.c.l.b16 %v4547
    %v4838 = vunpack.c.h.b16 %v4547
    %v4839 = vunpack.c.l.b16 %v4548
    %v4840 = vunpack.c.h.b16 %v4548
    %v4841 = vunpack.c.l.b16 %v4549
    %v4842 = vunpack.c.h.b16 %v4549
    %v4843 = vunpack.c.l.b16 %v4550
    %v4844 = vunpack.c.h.b16 %v4550
    %v4845 = vunpack.c.l.b16 %v4551
    %v4846 = vunpack.c.h.b16 %v4551
    %v4847 = vunpack.c.l.b16 %v4552
    %v4848 = vunpack.c.h.b16 %v4552
    %v4849 = vunpack.c.l.b16 %v4553
    %v4850 = vunpack.c.h.b16 %v4553
    %v4851 = vunpack.c.l.b16 %v4554
    %v4852 = vunpack.c.h.b16 %v4554
    %v4853 = vunpack.c.l.b16 %v4555
    %v4854 = vunpack.c.h.b16 %v4555
    %v4855 = vunpack.c.l.b16 %v4556
    %v4856 = vunpack.c.h.b16 %v4556
    %v4857 = vunpack.c.l.b16 %v4557
    %v4858 = vunpack.c.h.b16 %v4557
    %v4859 = vunpack.c.l.b16 %v4558
    %v4860 = vunpack.c.h.b16 %v4558
    %v4861 = vunpack.c.l.b16 %v4559
    %v4862 = vunpack.c.h.b16 %v4559
    %v4863 = vunpack.c.l.b16 %v4560
    %v4864 = vunpack.c.h.b16 %v4560
    %v4865 = vunpack.c.l.b16 %v4561
    %v4866 = vunpack.c.h.b16 %v4561
    %v4867 = vunpack.c.l.b16 %v4562
    %v4868 = vunpack.c.h.b16 %v4562
    %v4869 = vunpack.c.l.b16 %v4563
    %v4870 = vunpack.c.h.b16 %v4563
    %v4871 = vunpack.c.l.b16 %v4564
    %v4872 = vunpack.c.h.b16 %v4564
    %v4873 = vunpack.c.l.b16 %v4565
    %v4874 = vunpack.c.h.b16 %v4565
    %v4875 = vunpack.c.l.b16 %v4566
    %v4876 = vunpack.c.h.b16 %v4566
    %v4877 = vunpack.c.l.b16 %v4567
    %v4878 = vunpack.c.h.b16 %v4567
    %v4879 = vunpack.c.l.b16 %v4568
    %v4880 = vunpack.c.h.b16 %v4568
    %v4881 = vunpack.c.l.b16 %v4569
    %v4882 = vunpack.c.h.b16 %v4569
    %v4883 = vunpack.c.l.b16 %v4570
    %v4884 = vunpack.c.h.b16 %v4570
    %v4885 = vunpack.c.l.b16 %v4571
    %v4886 = vunpack.c.h.b16 %v4571
    %v4887 = vunpack.c.l.b16 %v4572
    %v4888 = vunpack.c.h.b16 %v4572
    %v4889 = vunpack.c.l.b16 %v4573
    %v4890 = vunpack.c.h.b16 %v4573
    %v4891 = vunpack.c.l.b16 %v4574
    %v4892 = vunpack.c.h.b16 %v4574
    %v4893 = vunpack.c.l.b16 %v4575
    %v4894 = vunpack.c.h.b16 %v4575
    %v4895 = vunpack.c.l.b16 %v4576
    %v4896 = vunpack.c.h.b16 %v4576
    %v4897 = vunpack.c.l.b16 %v4577
    %v4898 = vunpack.c.h.b16 %v4577
    %v4899 = vunpack.c.l.b16 %v4578
    %v4900 = vunpack.c.h.b16 %v4578
    %v4901 = vunpack.c.l.b16 %v4579
    %v4902 = vunpack.c.h.b16 %v4579
    %v4903 = vunpack.c.l.b16 %v4580
    %v4904 = vunpack.c.h.b16 %v4580
    %v4905 = vunpack.c.l.b16 %v4581
    %v4906 = vunpack.c.h.b16 %v4581
    %v4907 = vunpack.c.l.b16 %v4582
    %v4908 = vunpack.c.h.b16 %v4582
    %v4909 = vunpack.c.l.b16 %v4583
    %v4910 = vunpack.c.h.b16 %v4583
    %v4911 = vunpack.c.l.b16 %v4584
    %v4912 = vunpack.c.h.b16 %v4584
    %v4913 = vunpack.c.l.b16 %v4585
    %v4914 = vunpack.c.h.b16 %v4585
    %v4915 = vunpack.c.l.b16 %v4586
    %v4916 = vunpack.c.h.b16 %v4586
    %v4917 = vunpack.c.l.b16 %v4587
    %v4918 = vunpack.c.h.b16 %v4587
    %v4919 = vunpack.c.l.b16 %v4588
    %v4920 = vunpack.c.h.b16 %v4588
    %v4921 = vunpack.c.l.b16 %v4589
    %v4922 = vunpack.c.h.b16 %v4589
    %v4923 = vunpack.c.l.b16 %v4590
    %v4924 = vunpack.c.h.b16 %v4590
    %v4925 = vunpack.c.l.b16 %v4591
    %v4926 = vunpack.c.h.b16 %v4591
    %v4927 = vunpack.c.l.b16 %v4592
    %v4928 = vunpack.c.h.b16 %v4592
    %v4929 = vunpack.c.l.b16 %v4593
    %v4930 = vunpack.c.h.b16 %v4593
    %v4931 = vunpack.c.l.b16 %v4594
    %v4932 = vunpack.c.h.b16 %v4594
    %v4933 = vunpack.c.l.b16 %v4595
    %v4934 = vunpack.c.h.b16 %v4595
    %v4935 = vunpack.c.l.b16 %v4596
    %v4936 = vunpack.c.h.b16 %v4596
    %v4937 = vunpack.c.l.b16 %v4597
    %v4938 = vunpack.c.h.b16 %v4597
    %v4939 = vunpack.c.l.b16 %v4598
    %v4940 = vunpack.c.h.b16 %v4598
    %v4941 = vunpack.c.l.b16 %v4599
    %v4942 = vunpack.c.h.b16 %v4599
    %v4943 = vunpack.c.l.b16 %v4600
    %v4944 = vunpack.c.h.b16 %v4600
    %v4945 = vunpack.c.l.b16 %v4601
    %v4946 = vunpack.c.h.b16 %v4601
    %v4947 = vunpack.c.l.b16 %v4602
    %v4948 = vunpack.c.h.b16 %v4602
    %v4949 = vunpack.c.l.b16 %v4603
    %v4950 = vunpack.c.h.b16 %v4603
    %v4951 = vunpack.c.l.b16 %v4604
    %v4952 = vunpack.c.h.b16 %v4604
    %v4953 = vunpack.c.l.b16 %v4605
    %v4954 = vunpack.c.h.b16 %v4605
    %v4955 = vunpack.c.l.b16 %v4606
    %v4956 = vunpack.c.h.b16 %v4606
    %v4957 = vunpack.c.l.b16 %v4607
    %v4958 = vunpack.c.h.b16 %v4607
    %v4959 = vunpack.c.l.b16 %v4608
    %v4960 = vunpack.c.h.b16 %v4608
    %v4961 = vunpack.c.l.b16 %v4609
    %v4962 = vunpack.c.h.b16 %v4609
    %v4963 = vunpack.c.l.b16 %v4610
    %v4964 = vunpack.c.h.b16 %v4610
    %v4965 = vunpack.c.l.b16 %v4611
    %v4966 = vunpack.c.h.b16 %v4611
    %v4967 = vunpack.c.l.b16 %v4612
    %v4968 = vunpack.c.h.b16 %v4612
    %v4969 = vunpack.c.l.b16 %v4613
    %v4970 = vunpack.c.h.b16 %v4613
    %v4971 = vunpack.c.l.b16 %v4614
    %v4972 = vunpack.c.h.b16 %v4614
    %v4973 = vunpack.c.l.b16 %v4615
    %v4974 = vunpack.c.h.b16 %v4615
    %v4975 = vunpack.c.l.b16 %v4616
    %v4976 = vunpack.c.h.b16 %v4616
    %v4977 = vunpack.c.l.b16 %v4617
    %v4978 = vunpack.c.h.b16 %v4617
    %v4979 = vunpack.c.l.b16 %v4618
    %v4980 = vunpack.c.h.b16 %v4618
    %v4981 = vunpack.c.l.b16 %v4619
    %v4982 = vunpack.c.h.b16 %v4619
    %v4983 = vunpack.c.l.b16 %v4620
    %v4984 = vunpack.c.h.b16 %v4620
    %v4985 = vunpack.c.l.b16 %v4621
    %v4986 = vunpack.c.h.b16 %v4621
    %v4987 = vunpack.c.l.b16 %v4622
    %v4988 = vunpack.c.h.b16 %v4622
    %v4989 = vunpack.c.l.b16 %v4623
    %v4990 = vunpack.c.h.b16 %v4623
    %v4991 = vunpack.c.l.b16 %v4624
    %v4992 = vunpack.c.h.b16 %v4624
    %v4993 = vunpack.c.l.b16 %v4625
    %v4994 = vunpack.c.h.b16 %v4625
    %v4995 = vunpack.c.l.b16 %v4626
    %v4996 = vunpack.c.h.b16 %v4626
    %v4997 = vunpack.c.l.b16 %v4627
    %v4998 = vunpack.c.h.b16 %v4627
    %v4999 = vunpack.c.l.b16 %v4628
    %v5000 = vunpack.c.h.b16 %v4628
    %v5001 = vunpack.c.l.b16 %v4629
    %v5002 = vunpack.c.h.b16 %v4629
    %v5003 = vunpack.c.l.b16 %v4630
    %v5004 = vunpack.c.h.b16 %v4630
    %v5005 = vunpack.c.l.b16 %v4631
    %v5006 = vunpack.c.h.b16 %v4631
    %v5007 = vunpack.c.l.b16 %v4632
    %v5008 = vunpack.c.h.b16 %v4632
    %v5009 = vunpack.c.l.b16 %v4633
    %v5010 = vunpack.c.h.b16 %v4633
    %v5011 = vunpack.c.l.b16 %v4634
    %v5012 = vunpack.c.h.b16 %v4634
    %v5013 = vunpack.c.l.b16 %v4635
    %v5014 = vunpack.c.h.b16 %v4635
    %v5015 = vunpack.c.l.b16 %v4636
    %v5016 = vunpack.c.h.b16 %v4636
    %v5017 = vunpack.c.l.b16 %v4637
    %v5018 = vunpack.c.h.b16 %v4637
    %v5019 = vunpack.c.l.b16 %v4638
    %v5020 = vunpack.c.h.b16 %v4638
    %v5021 = vunpack.c.l.b16 %v4639
    %v5022 = vunpack.c.h.b16 %v4639
    %v5023 = vunpack.c.l.b16 %v4640
    %v5024 = vunpack.c.h.b16 %v4640
    %v5025 = vunpack.c.l.b16 %v4641
    %v5026 = vunpack.c.h.b16 %v4641
    %v5027 = vunpack.c.l.b16 %v4642
    %v5028 = vunpack.c.h.b16 %v4642
    %v5029 = vunpack.c.l.b16 %v4643
    %v5030 = vunpack.c.h.b16 %v4643
    %v5031 = vunpack.c.l.b16 %v4644
    %v5032 = vunpack.c.h.b16 %v4644
    %v5033 = vunpack.c.l.b16 %v4645
    %v5034 = vunpack.c.h.b16 %v4645
    %v5035 = vunpack.c.l.b16 %v4646
    %v5036 = vunpack.c.h.b16 %v4646
    %v5037 = vunpack.c.l.b16 %v4647
    %v5038 = vunpack.c.h.b16 %v4647
    %v5039 = vunpack.c.l.b16 %v4648
    %v5040 = vunpack.c.h.b16 %v4648
    %v5041 = vunpack.c.l.b16 %v4649
    %v5042 = vunpack.c.h.b16 %v4649
    %v5043 = vunpack.c.l.b16 %v4650
    %v5044 = vunpack.c.h.b16 %v4650
    %v5045 = vunpack.c.l.b16 %v4651
    %v5046 = vunpack.c.h.b16 %v4651
    %v5047 = vunpack.c.l.b16 %v4652
    %v5048 = vunpack.c.h.b16 %v4652
    %v5049 = vunpack.c.l.b16 %v4653
    %v5050 = vunpack.c.h.b16 %v4653
    %v5051 = vunpack.c.l.b16 %v4654
    %v5052 = vunpack.c.h.b16 %v4654
    %v5053 = vunpack.c.l.b16 %v4655
    %v5054 = vunpack.c.h.b16 %v4655
    %v5055 = vunpack.c.l.b16 %v4656
    %v5056 = vunpack.c.h.b16 %v4656
    %v5057 = vunpack.c.l.b16 %v4657
    %v5058 = vunpack.c.h.b16 %v4657
    %v5059 = vunpack.c.l.b16 %v4658
    %v5060 = vunpack.c.h.b16 %v4658
    %v5061 = vunpack.c.l.b16 %v4659
    %v5062 = vunpack.c.h.b16 %v4659
    %v5063 = vunpack.c.l.b16 %v4660
    %v5064 = vunpack.c.h.b16 %v4660
    %v5065 = vunpack.c.l.b16 %v4661
    %v5066 = vunpack.c.h.b16 %v4661
    %v5067 = vunpack.c.l.b16 %v4662
    %v5068 = vunpack.c.h.b16 %v4662
    %v5069 = vpack.c.b16 %v4817, %v4813
    %v5070 = vpack.c.b16 %v4818, %v4814
    %v5071 = vpack.c.b16 %v4819, %v4815
    %v5072 = vpack.c.b16 %v4820, %v4816
    %v5073 = vpack.c.b16 %v4825, %v4821
    %v5074 = vpack.c.b16 %v4826, %v4822
    %v5075 = vpack.c.b16 %v4827, %v4823
    %v5076 = vpack.c.b16 %v4828, %v4824
    %v5077 = vpack.c.b16 %v4833, %v4829
    %v5078 = vpack.c.b16 %v4834, %v4830
    %v5079 = vpack.c.b16 %v4835, %v4831
    %v5080 = vpack.c.b16 %v4836, %v4832
    %v5081 = vpack.c.b16 %v4841, %v4837
    %v5082 = vpack.c.b16 %v4842, %v4838
    %v5083 = vpack.c.b16 %v4843, %v4839
    %v5084 = vpack.c.b16 %v4844, %v4840
    %v5085 = vpack.c.b16 %v4849, %v4845
    %v5086 = vpack.c.b16 %v4850, %v4846
    %v5087 = vpack.c.b16 %v4851, %v4847
    %v5088 = vpack.c.b16 %v4852, %v4848
    %v5089 = vpack.c.b16 %v4857, %v4853
    %v5090 = vpack.c.b16 %v4858, %v4854
    %v5091 = vpack.c.b16 %v4859, %v4855
    %v5092 = vpack.c.b16 %v4860, %v4856
    %v5093 = vpack.c.b16 %v4865, %v4861
    %v5094 = vpack.c.b16 %v4866, %v4862
    %v5095 = vpack.c.b16 %v4867, %v4863
    %v5096 = vpack.c.b16 %v4868, %v4864
    %v5097 = vpack.c.b16 %v4873, %v4869
    %v5098 = vpack.c.b16 %v4874, %v4870
    %v5099 = vpack.c.b16 %v4875, %v4871
    %v5100 = vpack.c.b16 %v4876, %v4872
    %v5101 = vpack.c.b16 %v4881, %v4877
    %v5102 = vpack.c.b16 %v4882, %v4878
    %v5103 = vpack.c.b16 %v4883, %v4879
    %v5104 = vpack.c.b16 %v4884, %v4880
    %v5105 = vpack.c.b16 %v4889, %v4885
    %v5106 = vpack.c.b16 %v4890, %v4886
    %v5107 = vpack.c.b16 %v4891, %v4887
    %v5108 = vpack.c.b16 %v4892, %v4888
    %v5109 = vpack.c.b16 %v4897, %v4893
    %v5110 = vpack.c.b16 %v4898, %v4894
    %v5111 = vpack.c.b16 %v4899, %v4895
    %v5112 = vpack.c.b16 %v4900, %v4896
    %v5113 = vpack.c.b16 %v4905, %v4901
    %v5114 = vpack.c.b16 %v4906, %v4902
    %v5115 = vpack.c.b16 %v4907, %v4903
    %v5116 = vpack.c.b16 %v4908, %v4904
    %v5117 = vpack.c.b16 %v4913, %v4909
    %v5118 = vpack.c.b16 %v4914, %v4910
    %v5119 = vpack.c.b16 %v4915, %v4911
    %v5120 = vpack.c.b16 %v4916, %v4912
    %v5121 = vpack.c.b16 %v4921, %v4917
    %v5122 = vpack.c.b16 %v4922, %v4918
    %v5123 = vpack.c.b16 %v4923, %v4919
    %v5124 = vpack.c.b16 %v4924, %v4920
    %v5125 = vpack.c.b16 %v4929, %v4925
    %v5126 = vpack.c.b16 %v4930, %v4926
    %v5127 = vpack.c.b16 %v4931, %v4927
    %v5128 = vpack.c.b16 %v4932, %v4928
    %v5129 = vpack.c.b16 %v4937, %v4933
    %v5130 = vpack.c.b16 %v4938, %v4934
    %v5131 = vpack.c.b16 %v4939, %v4935
    %v5132 = vpack.c.b16 %v4940, %v4936
    %v5133 = vpack.c.b16 %v4945, %v4941
    %v5134 = vpack.c.b16 %v4946, %v4942
    %v5135 = vpack.c.b16 %v4947, %v4943
    %v5136 = vpack.c.b16 %v4948, %v4944
    %v5137 = vpack.c.b16 %v4953, %v4949
    %v5138 = vpack.c.b16 %v4954, %v4950
    %v5139 = vpack.c.b16 %v4955, %v4951
    %v5140 = vpack.c.b16 %v4956, %v4952
    %v5141 = vpack.c.b16 %v4961, %v4957
    %v5142 = vpack.c.b16 %v4962, %v4958
    %v5143 = vpack.c.b16 %v4963, %v4959
    %v5144 = vpack.c.b16 %v4964, %v4960
    %v5145 = vpack.c.b16 %v4969, %v4965
    %v5146 = vpack.c.b16 %v4970, %v4966
    %v5147 = vpack.c.b16 %v4971, %v4967
    %v5148 = vpack.c.b16 %v4972, %v4968
    %v5149 = vpack.c.b16 %v4977, %v4973
    %v5150 = vpack.c.b16 %v4978, %v4974
    %v5151 = vpack.c.b16 %v4979, %v4975
    %v5152 = vpack.c.b16 %v4980, %v4976
    %v5153 = vpack.c.b16 %v4985, %v4981
    %v5154 = vpack.c.b16 %v4986, %v4982
    %v5155 = vpack.c.b16 %v4987, %v4983
    %v5156 = vpack.c.b16 %v4988, %v4984
    %v5157 = vpack.c.b16 %v4993, %v4989
    %v5158 = vpack.c.b16 %v4994, %v4990
    %v5159 = vpack.c.b16 %v4995, %v4991
    %v5160 = vpack.c.b16 %v4996, %v4992
    %v5161 = vpack.c.b16 %v5001, %v4997
    %v5162 = vpack.c.b16 %v5002, %v4998
    %v5163 = vpack.c.b16 %v5003, %v4999
    %v5164 = vpack.c.b16 %v5004, %v5000
    %v5165 = vpack.c.b16 %v5009, %v5005
    %v5166 = vpack.c.b16 %v5010, %v5006
    %v5167 = vpack.c.b16 %v5011, %v5007
    %v5168 = vpack.c.b16 %v5012, %v5008
    %v5169 = vpack.c.b16 %v5017, %v5013
    %v5170 = vpack.c.b16 %v5018, %v5014
    %v5171 = vpack.c.b16 %v5019, %v5015
    %v5172 = vpack.c.b16 %v5020, %v5016
    %v5173 = vpack.c.b16 %v5025, %v5021
    %v5174 = vpack.c.b16 %v5026, %v5022
    %v5175 = vpack.c.b16 %v5027, %v5023
    %v5176 = vpack.c.b16 %v5028, %v5024
    %v5177 = vpack.c.b16 %v5033, %v5029
    %v5178 = vpack.c.b16 %v5034, %v5030
    %v5179 = vpack.c.b16 %v5035, %v5031
    %v5180 = vpack.c.b16 %v5036, %v5032
    %v5181 = vpack.c.b16 %v5041, %v5037
    %v5182 = vpack.c.b16 %v5042, %v5038
    %v5183 = vpack.c.b16 %v5043, %v5039
    %v5184 = vpack.c.b16 %v5044, %v5040
    %v5185 = vpack.c.b16 %v5049, %v5045
    %v5186 = vpack.c.b16 %v5050, %v5046
    %v5187 = vpack.c.b16 %v5051, %v5047
    %v5188 = vpack.c.b16 %v5052, %v5048
    %v5189 = vpack.c.b16 %v5057, %v5053
    %v5190 = vpack.c.b16 %v5058, %v5054
    %v5191 = vpack.c.b16 %v5059, %v5055
    %v5192 = vpack.c.b16 %v5060, %v5056
    %v5193 = vpack.c.b16 %v5065, %v5061
    %v5194 = vpack.c.b16 %v5066, %v5062
    %v5195 = vpack.c.b16 %v5067, %v5063
    %v5196 = vpack.c.b16 %v5068, %v5064
    %5325 = vmatprep.subr.bf16.mxu0 %v5070
    %5326 = vmatpush1.bf16.msra.mxu0 %v5069
    %5327 = vmatprep.subr.bf16.mxu0 %v5074
    %5328 = vmatpush1.bf16.msra.mxu0 %v5073
    %5329 = vmatprep.subr.bf16.mxu0 %v5078
    %5330 = vmatpush1.bf16.msra.mxu0 %v5077
    %5331 = vmatprep.subr.bf16.mxu0 %v5082
    %5332 = vmatpush1.bf16.msra.mxu0 %v5081
    %5333 = vmatprep.subr.bf16.mxu0 %v5086
    %5334 = vmatpush1.bf16.msra.mxu0 %v5085
    %5335 = vmatprep.subr.bf16.mxu0 %v5090
    %5336 = vmatpush1.bf16.msra.mxu0 %v5089
    %5337 = vmatprep.subr.bf16.mxu0 %v5094
    %5338 = vmatpush1.bf16.msra.mxu0 %v5093
    %5339 = vmatprep.subr.bf16.mxu0 %v5098
    %5340 = vmatpush1.bf16.msra.mxu0 %v5097
    %5341 = vmatprep.subr.bf16.mxu0 %v5102
    %5342 = vmatpush1.bf16.msra.mxu0 %v5101
    %5343 = vmatprep.subr.bf16.mxu0 %v5106
    %5344 = vmatpush1.bf16.msra.mxu0 %v5105
    %5345 = vmatprep.subr.bf16.mxu0 %v5110
    %5346 = vmatpush1.bf16.msra.mxu0 %v5109
    %5347 = vmatprep.subr.bf16.mxu0 %v5114
    %5348 = vmatpush1.bf16.msra.mxu0 %v5113
    %5349 = vmatprep.subr.bf16.mxu0 %v5118
    %5350 = vmatpush1.bf16.msra.mxu0 %v5117
    %5351 = vmatprep.subr.bf16.mxu0 %v5122
    %5352 = vmatpush1.bf16.msra.mxu0 %v5121
    %5353 = vmatprep.subr.bf16.mxu0 %v5126
    %5354 = vmatpush1.bf16.msra.mxu0 %v5125
    %5355 = vmatprep.subr.bf16.mxu0 %v5130
    %5356 = vmatpush1.bf16.msra.mxu0 %v5129
    %5357 = vmatprep.mubr.bf16.mxu0 %v4532
    %5358 = vmatmul.mubr.bf16.gmra.mrb[0].mxu0 %v4531
    %v5359 = vpop.f32.mrb[0].mxu0
    %v5360 = vadd.f32 %v4668, %v5359
    %v5361 = vpop.f32.mrb[0].mxu0
    %v5362 = vadd.f32 %v4672, %v5361
    %v5363 = vpop.f32.mrb[0].mxu0
    %v5364 = vpop.f32.mrb[0].mxu0
    %5365 = vdwg.mxu0
    %5366 = vmatprep.subr.bf16.mxu0 %v5134
    %5367 = vmatpush1.bf16.msra.mxu0 %v5133
    %5368 = vmatprep.subr.bf16.mxu0 %v5138
    %5369 = vmatpush1.bf16.msra.mxu0 %v5137
    %5370 = vmatprep.subr.bf16.mxu0 %v5142
    %5371 = vmatpush1.bf16.msra.mxu0 %v5141
    %5372 = vmatprep.subr.bf16.mxu0 %v5146
    %5373 = vmatpush1.bf16.msra.mxu0 %v5145
    %5374 = vmatprep.subr.bf16.mxu0 %v5150
    %5375 = vmatpush1.bf16.msra.mxu0 %v5149
    %5376 = vmatprep.subr.bf16.mxu0 %v5154
    %5377 = vmatpush1.bf16.msra.mxu0 %v5153
    %5378 = vmatprep.subr.bf16.mxu0 %v5158
    %5379 = vmatpush1.bf16.msra.mxu0 %v5157
    %5380 = vmatprep.subr.bf16.mxu0 %v5162
    %5381 = vmatpush1.bf16.msra.mxu0 %v5161
    %5382 = vmatprep.subr.bf16.mxu0 %v5166
    %5383 = vmatpush1.bf16.msra.mxu0 %v5165
    %5384 = vmatprep.subr.bf16.mxu0 %v5170
    %5385 = vmatpush1.bf16.msra.mxu0 %v5169
    %5386 = vmatprep.subr.bf16.mxu0 %v5174
    %5387 = vmatpush1.bf16.msra.mxu0 %v5173
    %5388 = vmatprep.subr.bf16.mxu0 %v5178
    %5389 = vmatpush1.bf16.msra.mxu0 %v5177
    %5390 = vmatprep.subr.bf16.mxu0 %v5182
    %5391 = vmatpush1.bf16.msra.mxu0 %v5181
    %5392 = vmatprep.subr.bf16.mxu0 %v5186
    %5393 = vmatpush1.bf16.msra.mxu0 %v5185
    %5394 = vmatprep.subr.bf16.mxu0 %v5190
    %5395 = vmatpush1.bf16.msra.mxu0 %v5189
    %5396 = vmatprep.subr.bf16.mxu0 %v5194
    %5397 = vmatpush1.bf16.msra.mxu0 %v5193
    %5398 = vmatprep.mubr.bf16.mxu0 %v4534
    %5399 = vmatmul.mubr.bf16.gmra.mrb[0].mxu0 %v4533
    %v5400 = vpop.f32.mrb[0].mxu0
    %v5401 = vadd.f32 %v5360, %v5400
    %v5402 = vpop.f32.mrb[0].mxu0
    %v5403 = vadd.f32 %v5362, %v5402
    %v5404 = vpop.f32.mrb[0].mxu0
    %v5405 = vpop.f32.mrb[0].mxu0
    %5406 = vdwg.mxu0
    %5407 = vmatprep.subr.bf16.mxu0 %v5072
    %5408 = vmatpush1.bf16.msra.mxu0 %v5071
    %5409 = vmatprep.subr.bf16.mxu0 %v5076
    %5410 = vmatpush1.bf16.msra.mxu0 %v5075
    %5411 = vmatprep.subr.bf16.mxu0 %v5080
    %5412 = vmatpush1.bf16.msra.mxu0 %v5079
    %5413 = vmatprep.subr.bf16.mxu0 %v5084
    %5414 = vmatpush1.bf16.msra.mxu0 %v5083
    %5415 = vmatprep.subr.bf16.mxu0 %v5088
    %5416 = vmatpush1.bf16.msra.mxu0 %v5087
    %5417 = vmatprep.subr.bf16.mxu0 %v5092
    %5418 = vmatpush1.bf16.msra.mxu0 %v5091
    %5419 = vmatprep.subr.bf16.mxu0 %v5096
    %5420 = vmatpush1.bf16.msra.mxu0 %v5095
    %5421 = vmatprep.subr.bf16.mxu0 %v5100
    %5422 = vmatpush1.bf16.msra.mxu0 %v5099
    %5423 = vmatprep.subr.bf16.mxu0 %v5104
    %5424 = vmatpush1.bf16.msra.mxu0 %v5103
    %5425 = vmatprep.subr.bf16.mxu0 %v5108
    %5426 = vmatpush1.bf16.msra.mxu0 %v5107
    %5427 = vmatprep.subr.bf16.mxu0 %v5112
    %5428 = vmatpush1.bf16.msra.mxu0 %v5111
    %5429 = vmatprep.subr.bf16.mxu0 %v5116
    %5430 = vmatpush1.bf16.msra.mxu0 %v5115
    %5431 = vmatprep.subr.bf16.mxu0 %v5120
    %5432 = vmatpush1.bf16.msra.mxu0 %v5119
    %5433 = vmatprep.subr.bf16.mxu0 %v5124
    %5434 = vmatpush1.bf16.msra.mxu0 %v5123
    %5435 = vmatprep.subr.bf16.mxu0 %v5128
    %5436 = vmatpush1.bf16.msra.mxu0 %v5127
    %5437 = vmatprep.subr.bf16.mxu0 %v5132
    %5438 = vmatpush1.bf16.msra.mxu0 %v5131
    %5439 = vmatprep.mubr.bf16.mxu0 %v4532
    %5440 = vmatmul.mubr.bf16.gmra.mrb[0].mxu0 %v4531
    %v5441 = vpop.f32.mrb[0].mxu0
    %v5442 = vadd.f32 %v4676, %v5441
    %v5443 = vpop.f32.mrb[0].mxu0
    %v5444 = vadd.f32 %v4680, %v5443
    %v5445 = vpop.f32.mrb[0].mxu0
    %v5446 = vpop.f32.mrb[0].mxu0
    %5447 = vdwg.mxu0
    %5448 = vmatprep.subr.bf16.mxu0 %v5136
    %5449 = vmatpush1.bf16.msra.mxu0 %v5135
    %5450 = vmatprep.subr.bf16.mxu0 %v5140
    %5451 = vmatpush1.bf16.msra.mxu0 %v5139
    %5452 = vmatprep.subr.bf16.mxu0 %v5144
    %5453 = vmatpush1.bf16.msra.mxu0 %v5143
    %5454 = vmatprep.subr.bf16.mxu0 %v5148
    %5455 = vmatpush1.bf16.msra.mxu0 %v5147
    %5456 = vmatprep.subr.bf16.mxu0 %v5152
    %5457 = vmatpush1.bf16.msra.mxu0 %v5151
    %5458 = vmatprep.subr.bf16.mxu0 %v5156
    %5459 = vmatpush1.bf16.msra.mxu0 %v5155
    %5460 = vmatprep.subr.bf16.mxu0 %v5160
    %5461 = vmatpush1.bf16.msra.mxu0 %v5159
    %5462 = vmatprep.subr.bf16.mxu0 %v5164
    %5463 = vmatpush1.bf16.msra.mxu0 %v5163
    %5464 = vmatprep.subr.bf16.mxu0 %v5168
    %5465 = vmatpush1.bf16.msra.mxu0 %v5167
    %5466 = vmatprep.subr.bf16.mxu0 %v5172
    %5467 = vmatpush1.bf16.msra.mxu0 %v5171
    %5468 = vmatprep.subr.bf16.mxu0 %v5176
    %5469 = vmatpush1.bf16.msra.mxu0 %v5175
    %5470 = vmatprep.subr.bf16.mxu0 %v5180
    %5471 = vmatpush1.bf16.msra.mxu0 %v5179
    %5472 = vmatprep.subr.bf16.mxu0 %v5184
    %5473 = vmatpush1.bf16.msra.mxu0 %v5183
    %5474 = vmatprep.subr.bf16.mxu0 %v5188
    %5475 = vmatpush1.bf16.msra.mxu0 %v5187
    %5476 = vmatprep.subr.bf16.mxu0 %v5192
    %5477 = vmatpush1.bf16.msra.mxu0 %v5191
    %5478 = vmatprep.subr.bf16.mxu0 %v5196
    %5479 = vmatpush1.bf16.msra.mxu0 %v5195
    %5480 = vmatprep.mubr.bf16.mxu0 %v4534
    %5481 = vmatmul.mubr.bf16.gmra.mrb[0].mxu0 %v4533
    %v5482 = vpop.f32.mrb[0].mxu0
    %v5483 = vadd.f32 %v5442, %v5482
    %v5484 = vpop.f32.mrb[0].mxu0
    %v5485 = vadd.f32 %v5444, %v5484
    %v5486 = vpop.f32.mrb[0].mxu0
    %v5487 = vpop.f32.mrb[0].mxu0
    %5488 = vdwg.mxu0
    %v5489 = vmax.f32 %v5401, 0.0
    %v5490 = vmax.f32 %v5403, 0.0
    %v5491 = vmax.f32 %v5483, 0.0
    %v5492 = vmax.f32 %v5485, 0.0
    %v5493 = vpack.c.bf16 %v5489, %v5489
    %v5494 = vpack.c.bf16 %v5490, %v5490
    %v5495 = vpack.c.bf16 %v5491, %v5491
    %v5496 = vpack.c.bf16 %v5492, %v5492
    %v5497 = vld [vmem:[#allocation14] sm:$0xff]
    %v5498 = vld [vmem:[#allocation14 + $0x8] sm:$0xff]
    %v5499 = vld [vmem:[#allocation14 + $0x10] sm:$0xff]
    %v5500 = vld [vmem:[#allocation14 + $0x18] sm:$0xff]
    %v5501 = vld [vmem:[#allocation14 + $0x20] sm:$0xff]
    %v5502 = vld [vmem:[#allocation14 + $0x28] sm:$0xff]
    %v5503 = vld [vmem:[#allocation14 + $0x30] sm:$0xff]
    %v5504 = vld [vmem:[#allocation14 + $0x38] sm:$0xff]
    %v5505 = vld [vmem:[#allocation14 + $0x40] sm:$0xff]
    %v5506 = vld [vmem:[#allocation14 + $0x48] sm:$0xff]
    %v5507 = vld [vmem:[#allocation14 + $0x50] sm:$0xff]
    %v5508 = vld [vmem:[#allocation14 + $0x58] sm:$0xff]
    %v5509 = vld [vmem:[#allocation14 + $0x60] sm:$0xff]
    %v5510 = vld [vmem:[#allocation14 + $0x68] sm:$0xff]
    %v5511 = vld [vmem:[#allocation14 + $0x70] sm:$0xff]
    %v5512 = vld [vmem:[#allocation14 + $0x78] sm:$0xff]
    %v5513 = vld [vmem:[#allocation14 + $0x80] sm:$0xff]
    %v5514 = vld [vmem:[#allocation14 + $0x88] sm:$0xff]
    %v5515 = vld [vmem:[#allocation14 + $0x90] sm:$0xff]
    %v5516 = vld [vmem:[#allocation14 + $0x98] sm:$0xff]
    %v5517 = vld [vmem:[#allocation14 + $0xa0] sm:$0xff]
    %v5518 = vld [vmem:[#allocation14 + $0xa8] sm:$0xff]
    %v5519 = vld [vmem:[#allocation14 + $0xb0] sm:$0xff]
    %v5520 = vld [vmem:[#allocation14 + $0xb8] sm:$0xff]
    %v5521 = vld [vmem:[#allocation14 + $0xc0] sm:$0xff]
    %v5522 = vld [vmem:[#allocation14 + $0xc8] sm:$0xff]
    %v5523 = vld [vmem:[#allocation14 + $0xd0] sm:$0xff]
    %v5524 = vld [vmem:[#allocation14 + $0xd8] sm:$0xff]
    %v5525 = vld [vmem:[#allocation14 + $0xe0] sm:$0xff]
    %v5526 = vld [vmem:[#allocation14 + $0xe8] sm:$0xff]
    %v5527 = vld [vmem:[#allocation14 + $0xf0] sm:$0xff]
    %v5528 = vld [vmem:[#allocation14 + $0xf8] sm:$0xff]
    %v5529 = vld [vmem:[#allocation14 + $0x100] sm:$0xff]
    %v5530 = vld [vmem:[#allocation14 + $0x108] sm:$0xff]
    %v5531 = vld [vmem:[#allocation14 + $0x110] sm:$0xff]
    %v5532 = vld [vmem:[#allocation14 + $0x118] sm:$0xff]
    %v5533 = vld [vmem:[#allocation14 + $0x120] sm:$0xff]
    %v5534 = vld [vmem:[#allocation14 + $0x128] sm:$0xff]
    %v5535 = vld [vmem:[#allocation14 + $0x130] sm:$0xff]
    %v5536 = vld [vmem:[#allocation14 + $0x138] sm:$0xff]
    %v5537 = vld [vmem:[#allocation14 + $0x140] sm:$0xff]
    %v5538 = vld [vmem:[#allocation14 + $0x148] sm:$0xff]
    %v5539 = vld [vmem:[#allocation14 + $0x150] sm:$0xff]
    %v5540 = vld [vmem:[#allocation14 + $0x158] sm:$0xff]
    %v5541 = vld [vmem:[#allocation14 + $0x160] sm:$0xff]
    %v5542 = vld [vmem:[#allocation14 + $0x168] sm:$0xff]
    %v5543 = vld [vmem:[#allocation14 + $0x170] sm:$0xff]
    %v5544 = vld [vmem:[#allocation14 + $0x178] sm:$0xff]
    %v5545 = vld [vmem:[#allocation14 + $0x180] sm:$0xff]
    %v5546 = vld [vmem:[#allocation14 + $0x188] sm:$0xff]
    %v5547 = vld [vmem:[#allocation14 + $0x190] sm:$0xff]
    %v5548 = vld [vmem:[#allocation14 + $0x198] sm:$0xff]
    %v5549 = vld [vmem:[#allocation14 + $0x1a0] sm:$0xff]
    %v5550 = vld [vmem:[#allocation14 + $0x1a8] sm:$0xff]
    %v5551 = vld [vmem:[#allocation14 + $0x1b0] sm:$0xff]
    %v5552 = vld [vmem:[#allocation14 + $0x1b8] sm:$0xff]
    %v5553 = vld [vmem:[#allocation14 + $0x1c0] sm:$0xff]
    %v5554 = vld [vmem:[#allocation14 + $0x1c8] sm:$0xff]
    %v5555 = vld [vmem:[#allocation14 + $0x1d0] sm:$0xff]
    %v5556 = vld [vmem:[#allocation14 + $0x1d8] sm:$0xff]
    %v5557 = vld [vmem:[#allocation14 + $0x1e0] sm:$0xff]
    %v5558 = vld [vmem:[#allocation14 + $0x1e8] sm:$0xff]
    %v5559 = vld [vmem:[#allocation14 + $0x1f0] sm:$0xff]
    %v5560 = vld [vmem:[#allocation14 + $0x1f8] sm:$0xff]
    %v5561 = vld [vmem:[#allocation14 + $0x200] sm:$0xff]
    %v5562 = vld [vmem:[#allocation14 + $0x208] sm:$0xff]
    %v5563 = vld [vmem:[#allocation14 + $0x210] sm:$0xff]
    %v5564 = vld [vmem:[#allocation14 + $0x218] sm:$0xff]
    %v5565 = vld [vmem:[#allocation14 + $0x220] sm:$0xff]
    %v5566 = vld [vmem:[#allocation14 + $0x228] sm:$0xff]
    %v5567 = vld [vmem:[#allocation14 + $0x230] sm:$0xff]
    %v5568 = vld [vmem:[#allocation14 + $0x238] sm:$0xff]
    %v5569 = vld [vmem:[#allocation14 + $0x240] sm:$0xff]
    %v5570 = vld [vmem:[#allocation14 + $0x248] sm:$0xff]
    %v5571 = vld [vmem:[#allocation14 + $0x250] sm:$0xff]
    %v5572 = vld [vmem:[#allocation14 + $0x258] sm:$0xff]
    %v5573 = vld [vmem:[#allocation14 + $0x260] sm:$0xff]
    %v5574 = vld [vmem:[#allocation14 + $0x268] sm:$0xff]
    %v5575 = vld [vmem:[#allocation14 + $0x270] sm:$0xff]
    %v5576 = vld [vmem:[#allocation14 + $0x278] sm:$0xff]
    %v5577 = vld [vmem:[#allocation14 + $0x280] sm:$0xff]
    %v5578 = vld [vmem:[#allocation14 + $0x288] sm:$0xff]
    %v5579 = vld [vmem:[#allocation14 + $0x290] sm:$0xff]
    %v5580 = vld [vmem:[#allocation14 + $0x298] sm:$0xff]
    %v5581 = vld [vmem:[#allocation14 + $0x2a0] sm:$0xff]
    %v5582 = vld [vmem:[#allocation14 + $0x2a8] sm:$0xff]
    %v5583 = vld [vmem:[#allocation14 + $0x2b0] sm:$0xff]
    %v5584 = vld [vmem:[#allocation14 + $0x2b8] sm:$0xff]
    %v5585 = vld [vmem:[#allocation14 + $0x2c0] sm:$0xff]
    %v5586 = vld [vmem:[#allocation14 + $0x2c8] sm:$0xff]
    %v5587 = vld [vmem:[#allocation14 + $0x2d0] sm:$0xff]
    %v5588 = vld [vmem:[#allocation14 + $0x2d8] sm:$0xff]
    %v5589 = vld [vmem:[#allocation14 + $0x2e0] sm:$0xff]
    %v5590 = vld [vmem:[#allocation14 + $0x2e8] sm:$0xff]
    %v5591 = vld [vmem:[#allocation14 + $0x2f0] sm:$0xff]
    %v5592 = vld [vmem:[#allocation14 + $0x2f8] sm:$0xff]
    %v5593 = vld [vmem:[#allocation14 + $0x300] sm:$0xff]
    %v5594 = vld [vmem:[#allocation14 + $0x308] sm:$0xff]
    %v5595 = vld [vmem:[#allocation14 + $0x310] sm:$0xff]
    %v5596 = vld [vmem:[#allocation14 + $0x318] sm:$0xff]
    %v5597 = vld [vmem:[#allocation14 + $0x320] sm:$0xff]
    %v5598 = vld [vmem:[#allocation14 + $0x328] sm:$0xff]
    %v5599 = vld [vmem:[#allocation14 + $0x330] sm:$0xff]
    %v5600 = vld [vmem:[#allocation14 + $0x338] sm:$0xff]
    %v5601 = vld [vmem:[#allocation14 + $0x340] sm:$0xff]
    %v5602 = vld [vmem:[#allocation14 + $0x348] sm:$0xff]
    %v5603 = vld [vmem:[#allocation14 + $0x350] sm:$0xff]
    %v5604 = vld [vmem:[#allocation14 + $0x358] sm:$0xff]
    %v5605 = vld [vmem:[#allocation14 + $0x360] sm:$0xff]
    %v5606 = vld [vmem:[#allocation14 + $0x368] sm:$0xff]
    %v5607 = vld [vmem:[#allocation14 + $0x370] sm:$0xff]
    %v5608 = vld [vmem:[#allocation14 + $0x378] sm:$0xff]
    %v5609 = vld [vmem:[#allocation14 + $0x380] sm:$0xff]
    %v5610 = vld [vmem:[#allocation14 + $0x388] sm:$0xff]
    %v5611 = vld [vmem:[#allocation14 + $0x390] sm:$0xff]
    %v5612 = vld [vmem:[#allocation14 + $0x398] sm:$0xff]
    %v5613 = vld [vmem:[#allocation14 + $0x3a0] sm:$0xff]
    %v5614 = vld [vmem:[#allocation14 + $0x3a8] sm:$0xff]
    %v5615 = vld [vmem:[#allocation14 + $0x3b0] sm:$0xff]
    %v5616 = vld [vmem:[#allocation14 + $0x3b8] sm:$0xff]
    %v5617 = vld [vmem:[#allocation14 + $0x3c0] sm:$0xff]
    %v5618 = vld [vmem:[#allocation14 + $0x3c8] sm:$0xff]
    %v5619 = vld [vmem:[#allocation14 + $0x3d0] sm:$0xff]
    %v5620 = vld [vmem:[#allocation14 + $0x3d8] sm:$0xff]
    %v5621 = vld [vmem:[#allocation14 + $0x3e0] sm:$0xff]
    %v5622 = vld [vmem:[#allocation14 + $0x3e8] sm:$0xff]
    %v5623 = vld [vmem:[#allocation14 + $0x3f0] sm:$0xff]
    %v5624 = vld [vmem:[#allocation14 + $0x3f8] sm:$0xff]
    %v5625 = vld [vmem:[#allocation14 + $0x400] sm:$0xff]
    %v5626 = vld [vmem:[#allocation14 + $0x408] sm:$0xff]
    %v5627 = vld [vmem:[#allocation14 + $0x410] sm:$0xff]
    %v5628 = vld [vmem:[#allocation14 + $0x418] sm:$0xff]
    %v5629 = vld [vmem:[#allocation14 + $0x420] sm:$0xff]
    %v5630 = vld [vmem:[#allocation14 + $0x428] sm:$0xff]
    %v5631 = vld [vmem:[#allocation14 + $0x430] sm:$0xff]
    %v5632 = vld [vmem:[#allocation14 + $0x438] sm:$0xff]
    %v5633 = vld [vmem:[#allocation14 + $0x440] sm:$0xff]
    %v5634 = vld [vmem:[#allocation14 + $0x448] sm:$0xff]
    %v5635 = vld [vmem:[#allocation14 + $0x450] sm:$0xff]
    %v5636 = vld [vmem:[#allocation14 + $0x458] sm:$0xff]
    %v5637 = vld [vmem:[#allocation14 + $0x460] sm:$0xff]
    %v5638 = vld [vmem:[#allocation14 + $0x468] sm:$0xff]
    %v5639 = vld [vmem:[#allocation14 + $0x470] sm:$0xff]
    %v5640 = vld [vmem:[#allocation14 + $0x478] sm:$0xff]
    %v5641 = vld [vmem:[#allocation14 + $0x480] sm:$0xff]
    %v5642 = vld [vmem:[#allocation14 + $0x488] sm:$0xff]
    %v5643 = vld [vmem:[#allocation14 + $0x490] sm:$0xff]
    %v5644 = vld [vmem:[#allocation14 + $0x498] sm:$0xff]
    %v5645 = vld [vmem:[#allocation14 + $0x4a0] sm:$0xff]
    %v5646 = vld [vmem:[#allocation14 + $0x4a8] sm:$0xff]
    %v5647 = vld [vmem:[#allocation14 + $0x4b0] sm:$0xff]
    %v5648 = vld [vmem:[#allocation14 + $0x4b8] sm:$0xff]
    %v5649 = vld [vmem:[#allocation14 + $0x4c0] sm:$0xff]
    %v5650 = vld [vmem:[#allocation14 + $0x4c8] sm:$0xff]
    %v5651 = vld [vmem:[#allocation14 + $0x4d0] sm:$0xff]
    %v5652 = vld [vmem:[#allocation14 + $0x4d8] sm:$0xff]
    %v5653 = vld [vmem:[#allocation14 + $0x4e0] sm:$0xff]
    %v5654 = vld [vmem:[#allocation14 + $0x4e8] sm:$0xff]
    %v5655 = vld [vmem:[#allocation14 + $0x4f0] sm:$0xff]
    %v5656 = vld [vmem:[#allocation14 + $0x4f8] sm:$0xff]
    %v5657 = vld [vmem:[#allocation14 + $0x500] sm:$0xff]
    %v5658 = vld [vmem:[#allocation14 + $0x508] sm:$0xff]
    %v5659 = vld [vmem:[#allocation14 + $0x510] sm:$0xff]
    %v5660 = vld [vmem:[#allocation14 + $0x518] sm:$0xff]
    %v5661 = vld [vmem:[#allocation14 + $0x520] sm:$0xff]
    %v5662 = vld [vmem:[#allocation14 + $0x528] sm:$0xff]
    %v5663 = vld [vmem:[#allocation14 + $0x530] sm:$0xff]
    %v5664 = vld [vmem:[#allocation14 + $0x538] sm:$0xff]
    %v5665 = vld [vmem:[#allocation14 + $0x540] sm:$0xff]
    %v5666 = vld [vmem:[#allocation14 + $0x548] sm:$0xff]
    %v5667 = vld [vmem:[#allocation14 + $0x550] sm:$0xff]
    %v5668 = vld [vmem:[#allocation14 + $0x558] sm:$0xff]
    %v5669 = vld [vmem:[#allocation14 + $0x560] sm:$0xff]
    %v5670 = vld [vmem:[#allocation14 + $0x568] sm:$0xff]
    %v5671 = vld [vmem:[#allocation14 + $0x570] sm:$0xff]
    %v5672 = vld [vmem:[#allocation14 + $0x578] sm:$0xff]
    %v5673 = vld [vmem:[#allocation14 + $0x580] sm:$0xff]
    %v5674 = vld [vmem:[#allocation14 + $0x588] sm:$0xff]
    %v5675 = vld [vmem:[#allocation14 + $0x590] sm:$0xff]
    %v5676 = vld [vmem:[#allocation14 + $0x598] sm:$0xff]
    %v5677 = vld [vmem:[#allocation14 + $0x5a0] sm:$0xff]
    %v5678 = vld [vmem:[#allocation14 + $0x5a8] sm:$0xff]
    %v5679 = vld [vmem:[#allocation14 + $0x5b0] sm:$0xff]
    %v5680 = vld [vmem:[#allocation14 + $0x5b8] sm:$0xff]
    %v5681 = vld [vmem:[#allocation14 + $0x5c0] sm:$0xff]
    %v5682 = vld [vmem:[#allocation14 + $0x5c8] sm:$0xff]
    %v5683 = vld [vmem:[#allocation14 + $0x5d0] sm:$0xff]
    %v5684 = vld [vmem:[#allocation14 + $0x5d8] sm:$0xff]
    %v5685 = vld [vmem:[#allocation14 + $0x5e0] sm:$0xff]
    %v5686 = vld [vmem:[#allocation14 + $0x5e8] sm:$0xff]
    %v5687 = vld [vmem:[#allocation14 + $0x5f0] sm:$0xff]
    %v5688 = vld [vmem:[#allocation14 + $0x5f8] sm:$0xff]
    %v5689 = vld [vmem:[#allocation14 + $0x600] sm:$0xff]
    %v5690 = vld [vmem:[#allocation14 + $0x608] sm:$0xff]
    %v5691 = vld [vmem:[#allocation14 + $0x610] sm:$0xff]
    %v5692 = vld [vmem:[#allocation14 + $0x618] sm:$0xff]
    %v5693 = vld [vmem:[#allocation14 + $0x620] sm:$0xff]
    %v5694 = vld [vmem:[#allocation14 + $0x628] sm:$0xff]
    %v5695 = vld [vmem:[#allocation14 + $0x630] sm:$0xff]
    %v5696 = vld [vmem:[#allocation14 + $0x638] sm:$0xff]
    %v5697 = vld [vmem:[#allocation14 + $0x640] sm:$0xff]
    %v5698 = vld [vmem:[#allocation14 + $0x648] sm:$0xff]
    %v5699 = vld [vmem:[#allocation14 + $0x650] sm:$0xff]
    %v5700 = vld [vmem:[#allocation14 + $0x658] sm:$0xff]
    %v5701 = vld [vmem:[#allocation14 + $0x660] sm:$0xff]
    %v5702 = vld [vmem:[#allocation14 + $0x668] sm:$0xff]
    %v5703 = vld [vmem:[#allocation14 + $0x670] sm:$0xff]
    %v5704 = vld [vmem:[#allocation14 + $0x678] sm:$0xff]
    %v5705 = vld [vmem:[#allocation14 + $0x680] sm:$0xff]
    %v5706 = vld [vmem:[#allocation14 + $0x688] sm:$0xff]
    %v5707 = vld [vmem:[#allocation14 + $0x690] sm:$0xff]
    %v5708 = vld [vmem:[#allocation14 + $0x698] sm:$0xff]
    %v5709 = vld [vmem:[#allocation14 + $0x6a0] sm:$0xff]
    %v5710 = vld [vmem:[#allocation14 + $0x6a8] sm:$0xff]
    %v5711 = vld [vmem:[#allocation14 + $0x6b0] sm:$0xff]
    %v5712 = vld [vmem:[#allocation14 + $0x6b8] sm:$0xff]
    %v5713 = vld [vmem:[#allocation14 + $0x6c0] sm:$0xff]
    %v5714 = vld [vmem:[#allocation14 + $0x6c8] sm:$0xff]
    %v5715 = vld [vmem:[#allocation14 + $0x6d0] sm:$0xff]
    %v5716 = vld [vmem:[#allocation14 + $0x6d8] sm:$0xff]
    %v5717 = vld [vmem:[#allocation14 + $0x6e0] sm:$0xff]
    %v5718 = vld [vmem:[#allocation14 + $0x6e8] sm:$0xff]
    %v5719 = vld [vmem:[#allocation14 + $0x6f0] sm:$0xff]
    %v5720 = vld [vmem:[#allocation14 + $0x6f8] sm:$0xff]
    %v5721 = vld [vmem:[#allocation14 + $0x700] sm:$0xff]
    %v5722 = vld [vmem:[#allocation14 + $0x708] sm:$0xff]
    %v5723 = vld [vmem:[#allocation14 + $0x710] sm:$0xff]
    %v5724 = vld [vmem:[#allocation14 + $0x718] sm:$0xff]
    %v5725 = vld [vmem:[#allocation14 + $0x720] sm:$0xff]
    %v5726 = vld [vmem:[#allocation14 + $0x728] sm:$0xff]
    %v5727 = vld [vmem:[#allocation14 + $0x730] sm:$0xff]
    %v5728 = vld [vmem:[#allocation14 + $0x738] sm:$0xff]
    %v5729 = vld [vmem:[#allocation14 + $0x740] sm:$0xff]
    %v5730 = vld [vmem:[#allocation14 + $0x748] sm:$0xff]
    %v5731 = vld [vmem:[#allocation14 + $0x750] sm:$0xff]
    %v5732 = vld [vmem:[#allocation14 + $0x758] sm:$0xff]
    %v5733 = vld [vmem:[#allocation14 + $0x760] sm:$0xff]
    %v5734 = vld [vmem:[#allocation14 + $0x768] sm:$0xff]
    %v5735 = vld [vmem:[#allocation14 + $0x770] sm:$0xff]
    %v5736 = vld [vmem:[#allocation14 + $0x778] sm:$0xff]
    %v5737 = vld [vmem:[#allocation14 + $0x780] sm:$0xff]
    %v5738 = vld [vmem:[#allocation14 + $0x788] sm:$0xff]
    %v5739 = vld [vmem:[#allocation14 + $0x790] sm:$0xff]
    %v5740 = vld [vmem:[#allocation14 + $0x798] sm:$0xff]
    %v5741 = vld [vmem:[#allocation14 + $0x7a0] sm:$0xff]
    %v5742 = vld [vmem:[#allocation14 + $0x7a8] sm:$0xff]
    %v5743 = vld [vmem:[#allocation14 + $0x7b0] sm:$0xff]
    %v5744 = vld [vmem:[#allocation14 + $0x7b8] sm:$0xff]
    %v5745 = vld [vmem:[#allocation14 + $0x7c0] sm:$0xff]
    %v5746 = vld [vmem:[#allocation14 + $0x7c8] sm:$0xff]
    %v5747 = vld [vmem:[#allocation14 + $0x7d0] sm:$0xff]
    %v5748 = vld [vmem:[#allocation14 + $0x7d8] sm:$0xff]
    %v5749 = vld [vmem:[#allocation14 + $0x7e0] sm:$0xff]
    %v5750 = vld [vmem:[#allocation14 + $0x7e8] sm:$0xff]
    %v5751 = vld [vmem:[#allocation14 + $0x7f0] sm:$0xff]
    %v5752 = vld [vmem:[#allocation14 + $0x7f8] sm:$0xff]
    %v5753 = vld [vmem:[#allocation14 + $0x800] sm:$0xff]
    %v5754 = vld [vmem:[#allocation14 + $0x808] sm:$0xff]
    %v5755 = vld [vmem:[#allocation14 + $0x810] sm:$0xff]
    %v5756 = vld [vmem:[#allocation14 + $0x818] sm:$0xff]
    %v5757 = vld [vmem:[#allocation14 + $0x820] sm:$0xff]
    %v5758 = vld [vmem:[#allocation14 + $0x828] sm:$0xff]
    %v5759 = vld [vmem:[#allocation14 + $0x830] sm:$0xff]
    %v5760 = vld [vmem:[#allocation14 + $0x838] sm:$0xff]
    %v5761 = vld [vmem:[#allocation14 + $0x840] sm:$0xff]
    %v5762 = vld [vmem:[#allocation14 + $0x848] sm:$0xff]
    %v5763 = vld [vmem:[#allocation14 + $0x850] sm:$0xff]
    %v5764 = vld [vmem:[#allocation14 + $0x858] sm:$0xff]
    %v5765 = vld [vmem:[#allocation14 + $0x860] sm:$0xff]
    %v5766 = vld [vmem:[#allocation14 + $0x868] sm:$0xff]
    %v5767 = vld [vmem:[#allocation14 + $0x870] sm:$0xff]
    %v5768 = vld [vmem:[#allocation14 + $0x878] sm:$0xff]
    %v5769 = vld [vmem:[#allocation14 + $0x880] sm:$0xff]
    %v5770 = vld [vmem:[#allocation14 + $0x888] sm:$0xff]
    %v5771 = vld [vmem:[#allocation14 + $0x890] sm:$0xff]
    %v5772 = vld [vmem:[#allocation14 + $0x898] sm:$0xff]
    %v5773 = vld [vmem:[#allocation14 + $0x8a0] sm:$0xff]
    %v5774 = vld [vmem:[#allocation14 + $0x8a8] sm:$0xff]
    %v5775 = vld [vmem:[#allocation14 + $0x8b0] sm:$0xff]
    %v5776 = vld [vmem:[#allocation14 + $0x8b8] sm:$0xff]
    %v5777 = vld [vmem:[#allocation14 + $0x8c0] sm:$0xff]
    %v5778 = vld [vmem:[#allocation14 + $0x8c8] sm:$0xff]
    %v5779 = vld [vmem:[#allocation14 + $0x8d0] sm:$0xff]
    %v5780 = vld [vmem:[#allocation14 + $0x8d8] sm:$0xff]
    %v5781 = vld [vmem:[#allocation14 + $0x8e0] sm:$0xff]
    %v5782 = vld [vmem:[#allocation14 + $0x8e8] sm:$0xff]
    %v5783 = vld [vmem:[#allocation14 + $0x8f0] sm:$0xff]
    %v5784 = vld [vmem:[#allocation14 + $0x8f8] sm:$0xff]
    %v5785 = vld [vmem:[#allocation14 + $0x900] sm:$0xff]
    %v5786 = vld [vmem:[#allocation14 + $0x908] sm:$0xff]
    %v5787 = vld [vmem:[#allocation14 + $0x910] sm:$0xff]
    %v5788 = vld [vmem:[#allocation14 + $0x918] sm:$0xff]
    %v5789 = vld [vmem:[#allocation14 + $0x920] sm:$0xff]
    %v5790 = vld [vmem:[#allocation14 + $0x928] sm:$0xff]
    %v5791 = vld [vmem:[#allocation14 + $0x930] sm:$0xff]
    %v5792 = vld [vmem:[#allocation14 + $0x938] sm:$0xff]
    %v5793 = vld [vmem:[#allocation14 + $0x940] sm:$0xff]
    %v5794 = vld [vmem:[#allocation14 + $0x948] sm:$0xff]
    %v5795 = vld [vmem:[#allocation14 + $0x950] sm:$0xff]
    %v5796 = vld [vmem:[#allocation14 + $0x958] sm:$0xff]
    %v5797 = vld [vmem:[#allocation14 + $0x960] sm:$0xff]
    %v5798 = vld [vmem:[#allocation14 + $0x968] sm:$0xff]
    %v5799 = vld [vmem:[#allocation14 + $0x970] sm:$0xff]
    %v5800 = vld [vmem:[#allocation14 + $0x978] sm:$0xff]
    %v5801 = vld [vmem:[#allocation14 + $0x980] sm:$0xff]
    %v5802 = vld [vmem:[#allocation14 + $0x988] sm:$0xff]
    %v5803 = vld [vmem:[#allocation14 + $0x990] sm:$0xff]
    %v5804 = vld [vmem:[#allocation14 + $0x998] sm:$0xff]
    %v5805 = vld [vmem:[#allocation14 + $0x9a0] sm:$0xff]
    %v5806 = vld [vmem:[#allocation14 + $0x9a8] sm:$0xff]
    %v5807 = vld [vmem:[#allocation14 + $0x9b0] sm:$0xff]
    %v5808 = vld [vmem:[#allocation14 + $0x9b8] sm:$0xff]
    %v5809 = vld [vmem:[#allocation14 + $0x9c0] sm:$0xff]
    %v5810 = vld [vmem:[#allocation14 + $0x9c8] sm:$0xff]
    %v5811 = vld [vmem:[#allocation14 + $0x9d0] sm:$0xff]
    %v5812 = vld [vmem:[#allocation14 + $0x9d8] sm:$0xff]
    %v5813 = vld [vmem:[#allocation14 + $0x9e0] sm:$0xff]
    %v5814 = vld [vmem:[#allocation14 + $0x9e8] sm:$0xff]
    %v5815 = vld [vmem:[#allocation14 + $0x9f0] sm:$0xff]
    %v5816 = vld [vmem:[#allocation14 + $0x9f8] sm:$0xff]
    %v5817 = vld [vmem:[#allocation14 + $0xa00] sm:$0xff]
    %v5818 = vld [vmem:[#allocation14 + $0xa08] sm:$0xff]
    %v5819 = vld [vmem:[#allocation14 + $0xa10] sm:$0xff]
    %v5820 = vld [vmem:[#allocation14 + $0xa18] sm:$0xff]
    %v5821 = vld [vmem:[#allocation14 + $0xa20] sm:$0xff]
    %v5822 = vld [vmem:[#allocation14 + $0xa28] sm:$0xff]
    %v5823 = vld [vmem:[#allocation14 + $0xa30] sm:$0xff]
    %v5824 = vld [vmem:[#allocation14 + $0xa38] sm:$0xff]
    %v5825 = vld [vmem:[#allocation14 + $0xa40] sm:$0xff]
    %v5826 = vld [vmem:[#allocation14 + $0xa48] sm:$0xff]
    %v5827 = vld [vmem:[#allocation14 + $0xa50] sm:$0xff]
    %v5828 = vld [vmem:[#allocation14 + $0xa58] sm:$0xff]
    %v5829 = vld [vmem:[#allocation14 + $0xa60] sm:$0xff]
    %v5830 = vld [vmem:[#allocation14 + $0xa68] sm:$0xff]
    %v5831 = vld [vmem:[#allocation14 + $0xa70] sm:$0xff]
    %v5832 = vld [vmem:[#allocation14 + $0xa78] sm:$0xff]
    %v5833 = vld [vmem:[#allocation14 + $0xa80] sm:$0xff]
    %v5834 = vld [vmem:[#allocation14 + $0xa88] sm:$0xff]
    %v5835 = vld [vmem:[#allocation14 + $0xa90] sm:$0xff]
    %v5836 = vld [vmem:[#allocation14 + $0xa98] sm:$0xff]
    %v5837 = vld [vmem:[#allocation14 + $0xaa0] sm:$0xff]
    %v5838 = vld [vmem:[#allocation14 + $0xaa8] sm:$0xff]
    %v5839 = vld [vmem:[#allocation14 + $0xab0] sm:$0xff]
    %v5840 = vld [vmem:[#allocation14 + $0xab8] sm:$0xff]
    %v5841 = vld [vmem:[#allocation14 + $0xac0] sm:$0xff]
    %v5842 = vld [vmem:[#allocation14 + $0xac8] sm:$0xff]
    %v5843 = vld [vmem:[#allocation14 + $0xad0] sm:$0xff]
    %v5844 = vld [vmem:[#allocation14 + $0xad8] sm:$0xff]
    %v5845 = vld [vmem:[#allocation14 + $0xae0] sm:$0xff]
    %v5846 = vld [vmem:[#allocation14 + $0xae8] sm:$0xff]
    %v5847 = vld [vmem:[#allocation14 + $0xaf0] sm:$0xff]
    %v5848 = vld [vmem:[#allocation14 + $0xaf8] sm:$0xff]
    %v5849 = vld [vmem:[#allocation14 + $0xb00] sm:$0xff]
    %v5850 = vld [vmem:[#allocation14 + $0xb08] sm:$0xff]
    %v5851 = vld [vmem:[#allocation14 + $0xb10] sm:$0xff]
    %v5852 = vld [vmem:[#allocation14 + $0xb18] sm:$0xff]
    %v5853 = vld [vmem:[#allocation14 + $0xb20] sm:$0xff]
    %v5854 = vld [vmem:[#allocation14 + $0xb28] sm:$0xff]
    %v5855 = vld [vmem:[#allocation14 + $0xb30] sm:$0xff]
    %v5856 = vld [vmem:[#allocation14 + $0xb38] sm:$0xff]
    %v5857 = vld [vmem:[#allocation14 + $0xb40] sm:$0xff]
    %v5858 = vld [vmem:[#allocation14 + $0xb48] sm:$0xff]
    %v5859 = vld [vmem:[#allocation14 + $0xb50] sm:$0xff]
    %v5860 = vld [vmem:[#allocation14 + $0xb58] sm:$0xff]
    %v5861 = vld [vmem:[#allocation14 + $0xb60] sm:$0xff]
    %v5862 = vld [vmem:[#allocation14 + $0xb68] sm:$0xff]
    %v5863 = vld [vmem:[#allocation14 + $0xb70] sm:$0xff]
    %v5864 = vld [vmem:[#allocation14 + $0xb78] sm:$0xff]
    %v5865 = vld [vmem:[#allocation14 + $0xb80] sm:$0xff]
    %v5866 = vld [vmem:[#allocation14 + $0xb88] sm:$0xff]
    %v5867 = vld [vmem:[#allocation14 + $0xb90] sm:$0xff]
    %v5868 = vld [vmem:[#allocation14 + $0xb98] sm:$0xff]
    %v5869 = vld [vmem:[#allocation14 + $0xba0] sm:$0xff]
    %v5870 = vld [vmem:[#allocation14 + $0xba8] sm:$0xff]
    %v5871 = vld [vmem:[#allocation14 + $0xbb0] sm:$0xff]
    %v5872 = vld [vmem:[#allocation14 + $0xbb8] sm:$0xff]
    %v5873 = vld [vmem:[#allocation14 + $0xbc0] sm:$0xff]
    %v5874 = vld [vmem:[#allocation14 + $0xbc8] sm:$0xff]
    %v5875 = vld [vmem:[#allocation14 + $0xbd0] sm:$0xff]
    %v5876 = vld [vmem:[#allocation14 + $0xbd8] sm:$0xff]
    %v5877 = vld [vmem:[#allocation14 + $0xbe0] sm:$0xff]
    %v5878 = vld [vmem:[#allocation14 + $0xbe8] sm:$0xff]
    %v5879 = vld [vmem:[#allocation14 + $0xbf0] sm:$0xff]
    %v5880 = vld [vmem:[#allocation14 + $0xbf8] sm:$0xff]
    %v5881 = vld [vmem:[#allocation14 + $0xc00] sm:$0xff]
    %v5882 = vld [vmem:[#allocation14 + $0xc08] sm:$0xff]
    %v5883 = vld [vmem:[#allocation14 + $0xc10] sm:$0xff]
    %v5884 = vld [vmem:[#allocation14 + $0xc18] sm:$0xff]
    %v5885 = vld [vmem:[#allocation14 + $0xc20] sm:$0xff]
    %v5886 = vld [vmem:[#allocation14 + $0xc28] sm:$0xff]
    %v5887 = vld [vmem:[#allocation14 + $0xc30] sm:$0xff]
    %v5888 = vld [vmem:[#allocation14 + $0xc38] sm:$0xff]
    %v5889 = vld [vmem:[#allocation14 + $0xc40] sm:$0xff]
    %v5890 = vld [vmem:[#allocation14 + $0xc48] sm:$0xff]
    %v5891 = vld [vmem:[#allocation14 + $0xc50] sm:$0xff]
    %v5892 = vld [vmem:[#allocation14 + $0xc58] sm:$0xff]
    %v5893 = vld [vmem:[#allocation14 + $0xc60] sm:$0xff]
    %v5894 = vld [vmem:[#allocation14 + $0xc68] sm:$0xff]
    %v5895 = vld [vmem:[#allocation14 + $0xc70] sm:$0xff]
    %v5896 = vld [vmem:[#allocation14 + $0xc78] sm:$0xff]
    %v5897 = vld [vmem:[#allocation14 + $0xc80] sm:$0xff]
    %v5898 = vld [vmem:[#allocation14 + $0xc88] sm:$0xff]
    %v5899 = vld [vmem:[#allocation14 + $0xc90] sm:$0xff]
    %v5900 = vld [vmem:[#allocation14 + $0xc98] sm:$0xff]
    %v5901 = vld [vmem:[#allocation14 + $0xca0] sm:$0xff]
    %v5902 = vld [vmem:[#allocation14 + $0xca8] sm:$0xff]
    %v5903 = vld [vmem:[#allocation14 + $0xcb0] sm:$0xff]
    %v5904 = vld [vmem:[#allocation14 + $0xcb8] sm:$0xff]
    %v5905 = vld [vmem:[#allocation14 + $0xcc0] sm:$0xff]
    %v5906 = vld [vmem:[#allocation14 + $0xcc8] sm:$0xff]
    %v5907 = vld [vmem:[#allocation14 + $0xcd0] sm:$0xff]
    %v5908 = vld [vmem:[#allocation14 + $0xcd8] sm:$0xff]
    %v5909 = vld [vmem:[#allocation14 + $0xce0] sm:$0xff]
    %v5910 = vld [vmem:[#allocation14 + $0xce8] sm:$0xff]
    %v5911 = vld [vmem:[#allocation14 + $0xcf0] sm:$0xff]
    %v5912 = vld [vmem:[#allocation14 + $0xcf8] sm:$0xff]
    %v5913 = vld [vmem:[#allocation14 + $0xd00] sm:$0xff]
    %v5914 = vld [vmem:[#allocation14 + $0xd08] sm:$0xff]
    %v5915 = vld [vmem:[#allocation14 + $0xd10] sm:$0xff]
    %v5916 = vld [vmem:[#allocation14 + $0xd18] sm:$0xff]
    %v5917 = vld [vmem:[#allocation14 + $0xd20] sm:$0xff]
    %v5918 = vld [vmem:[#allocation14 + $0xd28] sm:$0xff]
    %v5919 = vld [vmem:[#allocation14 + $0xd30] sm:$0xff]
    %v5920 = vld [vmem:[#allocation14 + $0xd38] sm:$0xff]
    %v5921 = vld [vmem:[#allocation14 + $0xd40] sm:$0xff]
    %v5922 = vld [vmem:[#allocation14 + $0xd48] sm:$0xff]
    %v5923 = vld [vmem:[#allocation14 + $0xd50] sm:$0xff]
    %v5924 = vld [vmem:[#allocation14 + $0xd58] sm:$0xff]
    %v5925 = vld [vmem:[#allocation14 + $0xd60] sm:$0xff]
    %v5926 = vld [vmem:[#allocation14 + $0xd68] sm:$0xff]
    %v5927 = vld [vmem:[#allocation14 + $0xd70] sm:$0xff]
    %v5928 = vld [vmem:[#allocation14 + $0xd78] sm:$0xff]
    %v5929 = vld [vmem:[#allocation14 + $0xd80] sm:$0xff]
    %v5930 = vld [vmem:[#allocation14 + $0xd88] sm:$0xff]
    %v5931 = vld [vmem:[#allocation14 + $0xd90] sm:$0xff]
    %v5932 = vld [vmem:[#allocation14 + $0xd98] sm:$0xff]
    %v5933 = vld [vmem:[#allocation14 + $0xda0] sm:$0xff]
    %v5934 = vld [vmem:[#allocation14 + $0xda8] sm:$0xff]
    %v5935 = vld [vmem:[#allocation14 + $0xdb0] sm:$0xff]
    %v5936 = vld [vmem:[#allocation14 + $0xdb8] sm:$0xff]
    %v5937 = vld [vmem:[#allocation14 + $0xdc0] sm:$0xff]
    %v5938 = vld [vmem:[#allocation14 + $0xdc8] sm:$0xff]
    %v5939 = vld [vmem:[#allocation14 + $0xdd0] sm:$0xff]
    %v5940 = vld [vmem:[#allocation14 + $0xdd8] sm:$0xff]
    %v5941 = vld [vmem:[#allocation14 + $0xde0] sm:$0xff]
    %v5942 = vld [vmem:[#allocation14 + $0xde8] sm:$0xff]
    %v5943 = vld [vmem:[#allocation14 + $0xdf0] sm:$0xff]
    %v5944 = vld [vmem:[#allocation14 + $0xdf8] sm:$0xff]
    %v5945 = vld [vmem:[#allocation14 + $0xe00] sm:$0xff]
    %v5946 = vld [vmem:[#allocation14 + $0xe08] sm:$0xff]
    %v5947 = vld [vmem:[#allocation14 + $0xe10] sm:$0xff]
    %v5948 = vld [vmem:[#allocation14 + $0xe18] sm:$0xff]
    %v5949 = vld [vmem:[#allocation14 + $0xe20] sm:$0xff]
    %v5950 = vld [vmem:[#allocation14 + $0xe28] sm:$0xff]
    %v5951 = vld [vmem:[#allocation14 + $0xe30] sm:$0xff]
    %v5952 = vld [vmem:[#allocation14 + $0xe38] sm:$0xff]
    %v5953 = vld [vmem:[#allocation14 + $0xe40] sm:$0xff]
    %v5954 = vld [vmem:[#allocation14 + $0xe48] sm:$0xff]
    %v5955 = vld [vmem:[#allocation14 + $0xe50] sm:$0xff]
    %v5956 = vld [vmem:[#allocation14 + $0xe58] sm:$0xff]
    %v5957 = vld [vmem:[#allocation14 + $0xe60] sm:$0xff]
    %v5958 = vld [vmem:[#allocation14 + $0xe68] sm:$0xff]
    %v5959 = vld [vmem:[#allocation14 + $0xe70] sm:$0xff]
    %v5960 = vld [vmem:[#allocation14 + $0xe78] sm:$0xff]
    %v5961 = vld [vmem:[#allocation14 + $0xe80] sm:$0xff]
    %v5962 = vld [vmem:[#allocation14 + $0xe88] sm:$0xff]
    %v5963 = vld [vmem:[#allocation14 + $0xe90] sm:$0xff]
    %v5964 = vld [vmem:[#allocation14 + $0xe98] sm:$0xff]
    %v5965 = vld [vmem:[#allocation14 + $0xea0] sm:$0xff]
    %v5966 = vld [vmem:[#allocation14 + $0xea8] sm:$0xff]
    %v5967 = vld [vmem:[#allocation14 + $0xeb0] sm:$0xff]
    %v5968 = vld [vmem:[#allocation14 + $0xeb8] sm:$0xff]
    %v5969 = vld [vmem:[#allocation14 + $0xec0] sm:$0xff]
    %v5970 = vld [vmem:[#allocation14 + $0xec8] sm:$0xff]
    %v5971 = vld [vmem:[#allocation14 + $0xed0] sm:$0xff]
    %v5972 = vld [vmem:[#allocation14 + $0xed8] sm:$0xff]
    %v5973 = vld [vmem:[#allocation14 + $0xee0] sm:$0xff]
    %v5974 = vld [vmem:[#allocation14 + $0xee8] sm:$0xff]
    %v5975 = vld [vmem:[#allocation14 + $0xef0] sm:$0xff]
    %v5976 = vld [vmem:[#allocation14 + $0xef8] sm:$0xff]
    %v5977 = vld [vmem:[#allocation14 + $0xf00] sm:$0xff]
    %v5978 = vld [vmem:[#allocation14 + $0xf08] sm:$0xff]
    %v5979 = vld [vmem:[#allocation14 + $0xf10] sm:$0xff]
    %v5980 = vld [vmem:[#allocation14 + $0xf18] sm:$0xff]
    %v5981 = vld [vmem:[#allocation14 + $0xf20] sm:$0xff]
    %v5982 = vld [vmem:[#allocation14 + $0xf28] sm:$0xff]
    %v5983 = vld [vmem:[#allocation14 + $0xf30] sm:$0xff]
    %v5984 = vld [vmem:[#allocation14 + $0xf38] sm:$0xff]
    %v5985 = vld [vmem:[#allocation14 + $0xf40] sm:$0xff]
    %v5986 = vld [vmem:[#allocation14 + $0xf48] sm:$0xff]
    %v5987 = vld [vmem:[#allocation14 + $0xf50] sm:$0xff]
    %v5988 = vld [vmem:[#allocation14 + $0xf58] sm:$0xff]
    %v5989 = vld [vmem:[#allocation14 + $0xf60] sm:$0xff]
    %v5990 = vld [vmem:[#allocation14 + $0xf68] sm:$0xff]
    %v5991 = vld [vmem:[#allocation14 + $0xf70] sm:$0xff]
    %v5992 = vld [vmem:[#allocation14 + $0xf78] sm:$0xff]
    %v5993 = vld [vmem:[#allocation14 + $0xf80] sm:$0xff]
    %v5994 = vld [vmem:[#allocation14 + $0xf88] sm:$0xff]
    %v5995 = vld [vmem:[#allocation14 + $0xf90] sm:$0xff]
    %v5996 = vld [vmem:[#allocation14 + $0xf98] sm:$0xff]
    %v5997 = vld [vmem:[#allocation14 + $0xfa0] sm:$0xff]
    %v5998 = vld [vmem:[#allocation14 + $0xfa8] sm:$0xff]
    %v5999 = vld [vmem:[#allocation14 + $0xfb0] sm:$0xff]
    %v6000 = vld [vmem:[#allocation14 + $0xfb8] sm:$0xff]
    %v6001 = vld [vmem:[#allocation14 + $0xfc0] sm:$0xff]
    %v6002 = vld [vmem:[#allocation14 + $0xfc8] sm:$0xff]
    %v6003 = vld [vmem:[#allocation14 + $0xfd0] sm:$0xff]
    %v6004 = vld [vmem:[#allocation14 + $0xfd8] sm:$0xff]
    %v6005 = vld [vmem:[#allocation14 + $0xfe0] sm:$0xff]
    %v6006 = vld [vmem:[#allocation14 + $0xfe8] sm:$0xff]
    %v6007 = vld [vmem:[#allocation14 + $0xff0] sm:$0xff]
    %v6008 = vld [vmem:[#allocation14 + $0xff8] sm:$0xff]
    %v6009 = vld [vmem:[#allocation16] sm:$0xff]
    %v6010 = vld [vmem:[#allocation16 + $0x8] sm:$0xff]
    %v6013 = vlaneseq
    %v6014 = vshrl.u32 %v6013, 7
    %v6015 = vsub.s32 0, %v6014
    %v6016 = vrot.slane %v6009, %v6015
    %v6017 = vlaneseq
    %v6018 = vshrl.u32 %v6017, 7
    %v6019 = vsub.s32 1, %v6018
    %v6020 = vrot.slane %v6009, %v6019
    %v6021 = vlaneseq
    %v6022 = vshrl.u32 %v6021, 7
    %v6023 = vsub.s32 2, %v6022
    %v6024 = vrot.slane %v6009, %v6023
    %v6025 = vlaneseq
    %v6026 = vshrl.u32 %v6025, 7
    %v6027 = vsub.s32 3, %v6026
    %v6028 = vrot.slane %v6009, %v6027
    %v6029 = vlaneseq
    %v6030 = vshrl.u32 %v6029, 7
    %v6031 = vsub.s32 4, %v6030
    %v6032 = vrot.slane %v6009, %v6031
    %v6033 = vlaneseq
    %v6034 = vshrl.u32 %v6033, 7
    %v6035 = vsub.s32 5, %v6034
    %v6036 = vrot.slane %v6009, %v6035
    %v6037 = vlaneseq
    %v6038 = vshrl.u32 %v6037, 7
    %v6039 = vsub.s32 6, %v6038
    %v6040 = vrot.slane %v6009, %v6039
    %v6041 = vlaneseq
    %v6042 = vshrl.u32 %v6041, 7
    %v6043 = vsub.s32 7, %v6042
    %v6044 = vrot.slane %v6009, %v6043
    %v6045 = vlaneseq
    %v6046 = vshrl.u32 %v6045, 7
    %v6047 = vsub.s32 0, %v6046
    %v6048 = vrot.slane %v6010, %v6047
    %v6049 = vlaneseq
    %v6050 = vshrl.u32 %v6049, 7
    %v6051 = vsub.s32 1, %v6050
    %v6052 = vrot.slane %v6010, %v6051
    %v6053 = vlaneseq
    %v6054 = vshrl.u32 %v6053, 7
    %v6055 = vsub.s32 2, %v6054
    %v6056 = vrot.slane %v6010, %v6055
    %v6057 = vlaneseq
    %v6058 = vshrl.u32 %v6057, 7
    %v6059 = vsub.s32 3, %v6058
    %v6060 = vrot.slane %v6010, %v6059
    %v6061 = vlaneseq
    %v6062 = vshrl.u32 %v6061, 7
    %v6063 = vsub.s32 4, %v6062
    %v6064 = vrot.slane %v6010, %v6063
    %v6065 = vlaneseq
    %v6066 = vshrl.u32 %v6065, 7
    %v6067 = vsub.s32 5, %v6066
    %v6068 = vrot.slane %v6010, %v6067
    %v6069 = vlaneseq
    %v6070 = vshrl.u32 %v6069, 7
    %v6071 = vsub.s32 6, %v6070
    %v6072 = vrot.slane %v6010, %v6071
    %v6073 = vlaneseq
    %v6074 = vshrl.u32 %v6073, 7
    %v6075 = vsub.s32 7, %v6074
    %v6076 = vrot.slane %v6010, %v6075
    %v6605 = vunpack.c.l.b16 %v5497
    %v6606 = vunpack.c.h.b16 %v5497
    %v6607 = vunpack.c.l.b16 %v5498
    %v6608 = vunpack.c.h.b16 %v5498
    %v6609 = vunpack.c.l.b16 %v5499
    %v6610 = vunpack.c.h.b16 %v5499
    %v6611 = vunpack.c.l.b16 %v5500
    %v6612 = vunpack.c.h.b16 %v5500
    %v6613 = vunpack.c.l.b16 %v5501
    %v6614 = vunpack.c.h.b16 %v5501
    %v6615 = vunpack.c.l.b16 %v5502
    %v6616 = vunpack.c.h.b16 %v5502
    %v6617 = vunpack.c.l.b16 %v5503
    %v6618 = vunpack.c.h.b16 %v5503
    %v6619 = vunpack.c.l.b16 %v5504
    %v6620 = vunpack.c.h.b16 %v5504
    %v6621 = vunpack.c.l.b16 %v5505
    %v6622 = vunpack.c.h.b16 %v5505
    %v6623 = vunpack.c.l.b16 %v5506
    %v6624 = vunpack.c.h.b16 %v5506
    %v6625 = vunpack.c.l.b16 %v5507
    %v6626 = vunpack.c.h.b16 %v5507
    %v6627 = vunpack.c.l.b16 %v5508
    %v6628 = vunpack.c.h.b16 %v5508
    %v6629 = vunpack.c.l.b16 %v5509
    %v6630 = vunpack.c.h.b16 %v5509
    %v6631 = vunpack.c.l.b16 %v5510
    %v6632 = vunpack.c.h.b16 %v5510
    %v6633 = vunpack.c.l.b16 %v5511
    %v6634 = vunpack.c.h.b16 %v5511
    %v6635 = vunpack.c.l.b16 %v5512
    %v6636 = vunpack.c.h.b16 %v5512
    %v6637 = vunpack.c.l.b16 %v5513
    %v6638 = vunpack.c.h.b16 %v5513
    %v6639 = vunpack.c.l.b16 %v5514
    %v6640 = vunpack.c.h.b16 %v5514
    %v6641 = vunpack.c.l.b16 %v5515
    %v6642 = vunpack.c.h.b16 %v5515
    %v6643 = vunpack.c.l.b16 %v5516
    %v6644 = vunpack.c.h.b16 %v5516
    %v6645 = vunpack.c.l.b16 %v5517
    %v6646 = vunpack.c.h.b16 %v5517
    %v6647 = vunpack.c.l.b16 %v5518
    %v6648 = vunpack.c.h.b16 %v5518
    %v6649 = vunpack.c.l.b16 %v5519
    %v6650 = vunpack.c.h.b16 %v5519
    %v6651 = vunpack.c.l.b16 %v5520
    %v6652 = vunpack.c.h.b16 %v5520
    %v6653 = vunpack.c.l.b16 %v5521
    %v6654 = vunpack.c.h.b16 %v5521
    %v6655 = vunpack.c.l.b16 %v5522
    %v6656 = vunpack.c.h.b16 %v5522
    %v6657 = vunpack.c.l.b16 %v5523
    %v6658 = vunpack.c.h.b16 %v5523
    %v6659 = vunpack.c.l.b16 %v5524
    %v6660 = vunpack.c.h.b16 %v5524
    %v6661 = vunpack.c.l.b16 %v5525
    %v6662 = vunpack.c.h.b16 %v5525
    %v6663 = vunpack.c.l.b16 %v5526
    %v6664 = vunpack.c.h.b16 %v5526
    %v6665 = vunpack.c.l.b16 %v5527
    %v6666 = vunpack.c.h.b16 %v5527
    %v6667 = vunpack.c.l.b16 %v5528
    %v6668 = vunpack.c.h.b16 %v5528
    %v6669 = vunpack.c.l.b16 %v5529
    %v6670 = vunpack.c.h.b16 %v5529
    %v6671 = vunpack.c.l.b16 %v5530
    %v6672 = vunpack.c.h.b16 %v5530
    %v6673 = vunpack.c.l.b16 %v5531
    %v6674 = vunpack.c.h.b16 %v5531
    %v6675 = vunpack.c.l.b16 %v5532
    %v6676 = vunpack.c.h.b16 %v5532
    %v6677 = vunpack.c.l.b16 %v5533
    %v6678 = vunpack.c.h.b16 %v5533
    %v6679 = vunpack.c.l.b16 %v5534
    %v6680 = vunpack.c.h.b16 %v5534
    %v6681 = vunpack.c.l.b16 %v5535
    %v6682 = vunpack.c.h.b16 %v5535
    %v6683 = vunpack.c.l.b16 %v5536
    %v6684 = vunpack.c.h.b16 %v5536
    %v6685 = vunpack.c.l.b16 %v5537
    %v6686 = vunpack.c.h.b16 %v5537
    %v6687 = vunpack.c.l.b16 %v5538
    %v6688 = vunpack.c.h.b16 %v5538
    %v6689 = vunpack.c.l.b16 %v5539
    %v6690 = vunpack.c.h.b16 %v5539
    %v6691 = vunpack.c.l.b16 %v5540
    %v6692 = vunpack.c.h.b16 %v5540
    %v6693 = vunpack.c.l.b16 %v5541
    %v6694 = vunpack.c.h.b16 %v5541
    %v6695 = vunpack.c.l.b16 %v5542
    %v6696 = vunpack.c.h.b16 %v5542
    %v6697 = vunpack.c.l.b16 %v5543
    %v6698 = vunpack.c.h.b16 %v5543
    %v6699 = vunpack.c.l.b16 %v5544
    %v6700 = vunpack.c.h.b16 %v5544
    %v6701 = vunpack.c.l.b16 %v5545
    %v6702 = vunpack.c.h.b16 %v5545
    %v6703 = vunpack.c.l.b16 %v5546
    %v6704 = vunpack.c.h.b16 %v5546
    %v6705 = vunpack.c.l.b16 %v5547
    %v6706 = vunpack.c.h.b16 %v5547
    %v6707 = vunpack.c.l.b16 %v5548
    %v6708 = vunpack.c.h.b16 %v5548
    %v6709 = vunpack.c.l.b16 %v5549
    %v6710 = vunpack.c.h.b16 %v5549
    %v6711 = vunpack.c.l.b16 %v5550
    %v6712 = vunpack.c.h.b16 %v5550
    %v6713 = vunpack.c.l.b16 %v5551
    %v6714 = vunpack.c.h.b16 %v5551
    %v6715 = vunpack.c.l.b16 %v5552
    %v6716 = vunpack.c.h.b16 %v5552
    %v6717 = vunpack.c.l.b16 %v5553
    %v6718 = vunpack.c.h.b16 %v5553
    %v6719 = vunpack.c.l.b16 %v5554
    %v6720 = vunpack.c.h.b16 %v5554
    %v6721 = vunpack.c.l.b16 %v5555
    %v6722 = vunpack.c.h.b16 %v5555
    %v6723 = vunpack.c.l.b16 %v5556
    %v6724 = vunpack.c.h.b16 %v5556
    %v6725 = vunpack.c.l.b16 %v5557
    %v6726 = vunpack.c.h.b16 %v5557
    %v6727 = vunpack.c.l.b16 %v5558
    %v6728 = vunpack.c.h.b16 %v5558
    %v6729 = vunpack.c.l.b16 %v5559
    %v6730 = vunpack.c.h.b16 %v5559
    %v6731 = vunpack.c.l.b16 %v5560
    %v6732 = vunpack.c.h.b16 %v5560
    %v6733 = vunpack.c.l.b16 %v5561
    %v6734 = vunpack.c.h.b16 %v5561
    %v6735 = vunpack.c.l.b16 %v5562
    %v6736 = vunpack.c.h.b16 %v5562
    %v6737 = vunpack.c.l.b16 %v5563
    %v6738 = vunpack.c.h.b16 %v5563
    %v6739 = vunpack.c.l.b16 %v5564
    %v6740 = vunpack.c.h.b16 %v5564
    %v6741 = vunpack.c.l.b16 %v5565
    %v6742 = vunpack.c.h.b16 %v5565
    %v6743 = vunpack.c.l.b16 %v5566
    %v6744 = vunpack.c.h.b16 %v5566
    %v6745 = vunpack.c.l.b16 %v5567
    %v6746 = vunpack.c.h.b16 %v5567
    %v6747 = vunpack.c.l.b16 %v5568
    %v6748 = vunpack.c.h.b16 %v5568
    %v6749 = vunpack.c.l.b16 %v5569
    %v6750 = vunpack.c.h.b16 %v5569
    %v6751 = vunpack.c.l.b16 %v5570
    %v6752 = vunpack.c.h.b16 %v5570
    %v6753 = vunpack.c.l.b16 %v5571
    %v6754 = vunpack.c.h.b16 %v5571
    %v6755 = vunpack.c.l.b16 %v5572
    %v6756 = vunpack.c.h.b16 %v5572
    %v6757 = vunpack.c.l.b16 %v5573
    %v6758 = vunpack.c.h.b16 %v5573
    %v6759 = vunpack.c.l.b16 %v5574
    %v6760 = vunpack.c.h.b16 %v5574
    %v6761 = vunpack.c.l.b16 %v5575
    %v6762 = vunpack.c.h.b16 %v5575
    %v6763 = vunpack.c.l.b16 %v5576
    %v6764 = vunpack.c.h.b16 %v5576
    %v6765 = vunpack.c.l.b16 %v5577
    %v6766 = vunpack.c.h.b16 %v5577
    %v6767 = vunpack.c.l.b16 %v5578
    %v6768 = vunpack.c.h.b16 %v5578
    %v6769 = vunpack.c.l.b16 %v5579
    %v6770 = vunpack.c.h.b16 %v5579
    %v6771 = vunpack.c.l.b16 %v5580
    %v6772 = vunpack.c.h.b16 %v5580
    %v6773 = vunpack.c.l.b16 %v5581
    %v6774 = vunpack.c.h.b16 %v5581
    %v6775 = vunpack.c.l.b16 %v5582
    %v6776 = vunpack.c.h.b16 %v5582
    %v6777 = vunpack.c.l.b16 %v5583
    %v6778 = vunpack.c.h.b16 %v5583
    %v6779 = vunpack.c.l.b16 %v5584
    %v6780 = vunpack.c.h.b16 %v5584
    %v6781 = vunpack.c.l.b16 %v5585
    %v6782 = vunpack.c.h.b16 %v5585
    %v6783 = vunpack.c.l.b16 %v5586
    %v6784 = vunpack.c.h.b16 %v5586
    %v6785 = vunpack.c.l.b16 %v5587
    %v6786 = vunpack.c.h.b16 %v5587
    %v6787 = vunpack.c.l.b16 %v5588
    %v6788 = vunpack.c.h.b16 %v5588
    %v6789 = vunpack.c.l.b16 %v5589
    %v6790 = vunpack.c.h.b16 %v5589
    %v6791 = vunpack.c.l.b16 %v5590
    %v6792 = vunpack.c.h.b16 %v5590
    %v6793 = vunpack.c.l.b16 %v5591
    %v6794 = vunpack.c.h.b16 %v5591
    %v6795 = vunpack.c.l.b16 %v5592
    %v6796 = vunpack.c.h.b16 %v5592
    %v6797 = vunpack.c.l.b16 %v5593
    %v6798 = vunpack.c.h.b16 %v5593
    %v6799 = vunpack.c.l.b16 %v5594
    %v6800 = vunpack.c.h.b16 %v5594
    %v6801 = vunpack.c.l.b16 %v5595
    %v6802 = vunpack.c.h.b16 %v5595
    %v6803 = vunpack.c.l.b16 %v5596
    %v6804 = vunpack.c.h.b16 %v5596
    %v6805 = vunpack.c.l.b16 %v5597
    %v6806 = vunpack.c.h.b16 %v5597
    %v6807 = vunpack.c.l.b16 %v5598
    %v6808 = vunpack.c.h.b16 %v5598
    %v6809 = vunpack.c.l.b16 %v5599
    %v6810 = vunpack.c.h.b16 %v5599
    %v6811 = vunpack.c.l.b16 %v5600
    %v6812 = vunpack.c.h.b16 %v5600
    %v6813 = vunpack.c.l.b16 %v5601
    %v6814 = vunpack.c.h.b16 %v5601
    %v6815 = vunpack.c.l.b16 %v5602
    %v6816 = vunpack.c.h.b16 %v5602
    %v6817 = vunpack.c.l.b16 %v5603
    %v6818 = vunpack.c.h.b16 %v5603
    %v6819 = vunpack.c.l.b16 %v5604
    %v6820 = vunpack.c.h.b16 %v5604
    %v6821 = vunpack.c.l.b16 %v5605
    %v6822 = vunpack.c.h.b16 %v5605
    %v6823 = vunpack.c.l.b16 %v5606
    %v6824 = vunpack.c.h.b16 %v5606
    %v6825 = vunpack.c.l.b16 %v5607
    %v6826 = vunpack.c.h.b16 %v5607
    %v6827 = vunpack.c.l.b16 %v5608
    %v6828 = vunpack.c.h.b16 %v5608
    %v6829 = vunpack.c.l.b16 %v5609
    %v6830 = vunpack.c.h.b16 %v5609
    %v6831 = vunpack.c.l.b16 %v5610
    %v6832 = vunpack.c.h.b16 %v5610
    %v6833 = vunpack.c.l.b16 %v5611
    %v6834 = vunpack.c.h.b16 %v5611
    %v6835 = vunpack.c.l.b16 %v5612
    %v6836 = vunpack.c.h.b16 %v5612
    %v6837 = vunpack.c.l.b16 %v5613
    %v6838 = vunpack.c.h.b16 %v5613
    %v6839 = vunpack.c.l.b16 %v5614
    %v6840 = vunpack.c.h.b16 %v5614
    %v6841 = vunpack.c.l.b16 %v5615
    %v6842 = vunpack.c.h.b16 %v5615
    %v6843 = vunpack.c.l.b16 %v5616
    %v6844 = vunpack.c.h.b16 %v5616
    %v6845 = vunpack.c.l.b16 %v5617
    %v6846 = vunpack.c.h.b16 %v5617
    %v6847 = vunpack.c.l.b16 %v5618
    %v6848 = vunpack.c.h.b16 %v5618
    %v6849 = vunpack.c.l.b16 %v5619
    %v6850 = vunpack.c.h.b16 %v5619
    %v6851 = vunpack.c.l.b16 %v5620
    %v6852 = vunpack.c.h.b16 %v5620
    %v6853 = vunpack.c.l.b16 %v5621
    %v6854 = vunpack.c.h.b16 %v5621
    %v6855 = vunpack.c.l.b16 %v5622
    %v6856 = vunpack.c.h.b16 %v5622
    %v6857 = vunpack.c.l.b16 %v5623
    %v6858 = vunpack.c.h.b16 %v5623
    %v6859 = vunpack.c.l.b16 %v5624
    %v6860 = vunpack.c.h.b16 %v5624
    %v6861 = vunpack.c.l.b16 %v5625
    %v6862 = vunpack.c.h.b16 %v5625
    %v6863 = vunpack.c.l.b16 %v5626
    %v6864 = vunpack.c.h.b16 %v5626
    %v6865 = vunpack.c.l.b16 %v5627
    %v6866 = vunpack.c.h.b16 %v5627
    %v6867 = vunpack.c.l.b16 %v5628
    %v6868 = vunpack.c.h.b16 %v5628
    %v6869 = vunpack.c.l.b16 %v5629
    %v6870 = vunpack.c.h.b16 %v5629
    %v6871 = vunpack.c.l.b16 %v5630
    %v6872 = vunpack.c.h.b16 %v5630
    %v6873 = vunpack.c.l.b16 %v5631
    %v6874 = vunpack.c.h.b16 %v5631
    %v6875 = vunpack.c.l.b16 %v5632
    %v6876 = vunpack.c.h.b16 %v5632
    %v6877 = vunpack.c.l.b16 %v5633
    %v6878 = vunpack.c.h.b16 %v5633
    %v6879 = vunpack.c.l.b16 %v5634
    %v6880 = vunpack.c.h.b16 %v5634
    %v6881 = vunpack.c.l.b16 %v5635
    %v6882 = vunpack.c.h.b16 %v5635
    %v6883 = vunpack.c.l.b16 %v5636
    %v6884 = vunpack.c.h.b16 %v5636
    %v6885 = vunpack.c.l.b16 %v5637
    %v6886 = vunpack.c.h.b16 %v5637
    %v6887 = vunpack.c.l.b16 %v5638
    %v6888 = vunpack.c.h.b16 %v5638
    %v6889 = vunpack.c.l.b16 %v5639
    %v6890 = vunpack.c.h.b16 %v5639
    %v6891 = vunpack.c.l.b16 %v5640
    %v6892 = vunpack.c.h.b16 %v5640
    %v6893 = vunpack.c.l.b16 %v5641
    %v6894 = vunpack.c.h.b16 %v5641
    %v6895 = vunpack.c.l.b16 %v5642
    %v6896 = vunpack.c.h.b16 %v5642
    %v6897 = vunpack.c.l.b16 %v5643
    %v6898 = vunpack.c.h.b16 %v5643
    %v6899 = vunpack.c.l.b16 %v5644
    %v6900 = vunpack.c.h.b16 %v5644
    %v6901 = vunpack.c.l.b16 %v5645
    %v6902 = vunpack.c.h.b16 %v5645
    %v6903 = vunpack.c.l.b16 %v5646
    %v6904 = vunpack.c.h.b16 %v5646
    %v6905 = vunpack.c.l.b16 %v5647
    %v6906 = vunpack.c.h.b16 %v5647
    %v6907 = vunpack.c.l.b16 %v5648
    %v6908 = vunpack.c.h.b16 %v5648
    %v6909 = vunpack.c.l.b16 %v5649
    %v6910 = vunpack.c.h.b16 %v5649
    %v6911 = vunpack.c.l.b16 %v5650
    %v6912 = vunpack.c.h.b16 %v5650
    %v6913 = vunpack.c.l.b16 %v5651
    %v6914 = vunpack.c.h.b16 %v5651
    %v6915 = vunpack.c.l.b16 %v5652
    %v6916 = vunpack.c.h.b16 %v5652
    %v6917 = vunpack.c.l.b16 %v5653
    %v6918 = vunpack.c.h.b16 %v5653
    %v6919 = vunpack.c.l.b16 %v5654
    %v6920 = vunpack.c.h.b16 %v5654
    %v6921 = vunpack.c.l.b16 %v5655
    %v6922 = vunpack.c.h.b16 %v5655
    %v6923 = vunpack.c.l.b16 %v5656
    %v6924 = vunpack.c.h.b16 %v5656
    %v6925 = vunpack.c.l.b16 %v5657
    %v6926 = vunpack.c.h.b16 %v5657
    %v6927 = vunpack.c.l.b16 %v5658
    %v6928 = vunpack.c.h.b16 %v5658
    %v6929 = vunpack.c.l.b16 %v5659
    %v6930 = vunpack.c.h.b16 %v5659
    %v6931 = vunpack.c.l.b16 %v5660
    %v6932 = vunpack.c.h.b16 %v5660
    %v6933 = vunpack.c.l.b16 %v5661
    %v6934 = vunpack.c.h.b16 %v5661
    %v6935 = vunpack.c.l.b16 %v5662
    %v6936 = vunpack.c.h.b16 %v5662
    %v6937 = vunpack.c.l.b16 %v5663
    %v6938 = vunpack.c.h.b16 %v5663
    %v6939 = vunpack.c.l.b16 %v5664
    %v6940 = vunpack.c.h.b16 %v5664
    %v6941 = vunpack.c.l.b16 %v5665
    %v6942 = vunpack.c.h.b16 %v5665
    %v6943 = vunpack.c.l.b16 %v5666
    %v6944 = vunpack.c.h.b16 %v5666
    %v6945 = vunpack.c.l.b16 %v5667
    %v6946 = vunpack.c.h.b16 %v5667
    %v6947 = vunpack.c.l.b16 %v5668
    %v6948 = vunpack.c.h.b16 %v5668
    %v6949 = vunpack.c.l.b16 %v5669
    %v6950 = vunpack.c.h.b16 %v5669
    %v6951 = vunpack.c.l.b16 %v5670
    %v6952 = vunpack.c.h.b16 %v5670
    %v6953 = vunpack.c.l.b16 %v5671
    %v6954 = vunpack.c.h.b16 %v5671
    %v6955 = vunpack.c.l.b16 %v5672
    %v6956 = vunpack.c.h.b16 %v5672
    %v6957 = vunpack.c.l.b16 %v5673
    %v6958 = vunpack.c.h.b16 %v5673
    %v6959 = vunpack.c.l.b16 %v5674
    %v6960 = vunpack.c.h.b16 %v5674
    %v6961 = vunpack.c.l.b16 %v5675
    %v6962 = vunpack.c.h.b16 %v5675
    %v6963 = vunpack.c.l.b16 %v5676
    %v6964 = vunpack.c.h.b16 %v5676
    %v6965 = vunpack.c.l.b16 %v5677
    %v6966 = vunpack.c.h.b16 %v5677
    %v6967 = vunpack.c.l.b16 %v5678
    %v6968 = vunpack.c.h.b16 %v5678
    %v6969 = vunpack.c.l.b16 %v5679
    %v6970 = vunpack.c.h.b16 %v5679
    %v6971 = vunpack.c.l.b16 %v5680
    %v6972 = vunpack.c.h.b16 %v5680
    %v6973 = vunpack.c.l.b16 %v5681
    %v6974 = vunpack.c.h.b16 %v5681
    %v6975 = vunpack.c.l.b16 %v5682
    %v6976 = vunpack.c.h.b16 %v5682
    %v6977 = vunpack.c.l.b16 %v5683
    %v6978 = vunpack.c.h.b16 %v5683
    %v6979 = vunpack.c.l.b16 %v5684
    %v6980 = vunpack.c.h.b16 %v5684
    %v6981 = vunpack.c.l.b16 %v5685
    %v6982 = vunpack.c.h.b16 %v5685
    %v6983 = vunpack.c.l.b16 %v5686
    %v6984 = vunpack.c.h.b16 %v5686
    %v6985 = vunpack.c.l.b16 %v5687
    %v6986 = vunpack.c.h.b16 %v5687
    %v6987 = vunpack.c.l.b16 %v5688
    %v6988 = vunpack.c.h.b16 %v5688
    %v6989 = vunpack.c.l.b16 %v5689
    %v6990 = vunpack.c.h.b16 %v5689
    %v6991 = vunpack.c.l.b16 %v5690
    %v6992 = vunpack.c.h.b16 %v5690
    %v6993 = vunpack.c.l.b16 %v5691
    %v6994 = vunpack.c.h.b16 %v5691
    %v6995 = vunpack.c.l.b16 %v5692
    %v6996 = vunpack.c.h.b16 %v5692
    %v6997 = vunpack.c.l.b16 %v5693
    %v6998 = vunpack.c.h.b16 %v5693
    %v6999 = vunpack.c.l.b16 %v5694
    %v7000 = vunpack.c.h.b16 %v5694
    %v7001 = vunpack.c.l.b16 %v5695
    %v7002 = vunpack.c.h.b16 %v5695
    %v7003 = vunpack.c.l.b16 %v5696
    %v7004 = vunpack.c.h.b16 %v5696
    %v7005 = vunpack.c.l.b16 %v5697
    %v7006 = vunpack.c.h.b16 %v5697
    %v7007 = vunpack.c.l.b16 %v5698
    %v7008 = vunpack.c.h.b16 %v5698
    %v7009 = vunpack.c.l.b16 %v5699
    %v7010 = vunpack.c.h.b16 %v5699
    %v7011 = vunpack.c.l.b16 %v5700
    %v7012 = vunpack.c.h.b16 %v5700
    %v7013 = vunpack.c.l.b16 %v5701
    %v7014 = vunpack.c.h.b16 %v5701
    %v7015 = vunpack.c.l.b16 %v5702
    %v7016 = vunpack.c.h.b16 %v5702
    %v7017 = vunpack.c.l.b16 %v5703
    %v7018 = vunpack.c.h.b16 %v5703
    %v7019 = vunpack.c.l.b16 %v5704
    %v7020 = vunpack.c.h.b16 %v5704
    %v7021 = vunpack.c.l.b16 %v5705
    %v7022 = vunpack.c.h.b16 %v5705
    %v7023 = vunpack.c.l.b16 %v5706
    %v7024 = vunpack.c.h.b16 %v5706
    %v7025 = vunpack.c.l.b16 %v5707
    %v7026 = vunpack.c.h.b16 %v5707
    %v7027 = vunpack.c.l.b16 %v5708
    %v7028 = vunpack.c.h.b16 %v5708
    %v7029 = vunpack.c.l.b16 %v5709
    %v7030 = vunpack.c.h.b16 %v5709
    %v7031 = vunpack.c.l.b16 %v5710
    %v7032 = vunpack.c.h.b16 %v5710
    %v7033 = vunpack.c.l.b16 %v5711
    %v7034 = vunpack.c.h.b16 %v5711
    %v7035 = vunpack.c.l.b16 %v5712
    %v7036 = vunpack.c.h.b16 %v5712
    %v7037 = vunpack.c.l.b16 %v5713
    %v7038 = vunpack.c.h.b16 %v5713
    %v7039 = vunpack.c.l.b16 %v5714
    %v7040 = vunpack.c.h.b16 %v5714
    %v7041 = vunpack.c.l.b16 %v5715
    %v7042 = vunpack.c.h.b16 %v5715
    %v7043 = vunpack.c.l.b16 %v5716
    %v7044 = vunpack.c.h.b16 %v5716
    %v7045 = vunpack.c.l.b16 %v5717
    %v7046 = vunpack.c.h.b16 %v5717
    %v7047 = vunpack.c.l.b16 %v5718
    %v7048 = vunpack.c.h.b16 %v5718
    %v7049 = vunpack.c.l.b16 %v5719
    %v7050 = vunpack.c.h.b16 %v5719
    %v7051 = vunpack.c.l.b16 %v5720
    %v7052 = vunpack.c.h.b16 %v5720
    %v7053 = vunpack.c.l.b16 %v5721
    %v7054 = vunpack.c.h.b16 %v5721
    %v7055 = vunpack.c.l.b16 %v5722
    %v7056 = vunpack.c.h.b16 %v5722
    %v7057 = vunpack.c.l.b16 %v5723
    %v7058 = vunpack.c.h.b16 %v5723
    %v7059 = vunpack.c.l.b16 %v5724
    %v7060 = vunpack.c.h.b16 %v5724
    %v7061 = vunpack.c.l.b16 %v5725
    %v7062 = vunpack.c.h.b16 %v5725
    %v7063 = vunpack.c.l.b16 %v5726
    %v7064 = vunpack.c.h.b16 %v5726
    %v7065 = vunpack.c.l.b16 %v5727
    %v7066 = vunpack.c.h.b16 %v5727
    %v7067 = vunpack.c.l.b16 %v5728
    %v7068 = vunpack.c.h.b16 %v5728
    %v7069 = vunpack.c.l.b16 %v5729
    %v7070 = vunpack.c.h.b16 %v5729
    %v7071 = vunpack.c.l.b16 %v5730
    %v7072 = vunpack.c.h.b16 %v5730
    %v7073 = vunpack.c.l.b16 %v5731
    %v7074 = vunpack.c.h.b16 %v5731
    %v7075 = vunpack.c.l.b16 %v5732
    %v7076 = vunpack.c.h.b16 %v5732
    %v7077 = vunpack.c.l.b16 %v5733
    %v7078 = vunpack.c.h.b16 %v5733
    %v7079 = vunpack.c.l.b16 %v5734
    %v7080 = vunpack.c.h.b16 %v5734
    %v7081 = vunpack.c.l.b16 %v5735
    %v7082 = vunpack.c.h.b16 %v5735
    %v7083 = vunpack.c.l.b16 %v5736
    %v7084 = vunpack.c.h.b16 %v5736
    %v7085 = vunpack.c.l.b16 %v5737
    %v7086 = vunpack.c.h.b16 %v5737
    %v7087 = vunpack.c.l.b16 %v5738
    %v7088 = vunpack.c.h.b16 %v5738
    %v7089 = vunpack.c.l.b16 %v5739
    %v7090 = vunpack.c.h.b16 %v5739
    %v7091 = vunpack.c.l.b16 %v5740
    %v7092 = vunpack.c.h.b16 %v5740
    %v7093 = vunpack.c.l.b16 %v5741
    %v7094 = vunpack.c.h.b16 %v5741
    %v7095 = vunpack.c.l.b16 %v5742
    %v7096 = vunpack.c.h.b16 %v5742
    %v7097 = vunpack.c.l.b16 %v5743
    %v7098 = vunpack.c.h.b16 %v5743
    %v7099 = vunpack.c.l.b16 %v5744
    %v7100 = vunpack.c.h.b16 %v5744
    %v7101 = vunpack.c.l.b16 %v5745
    %v7102 = vunpack.c.h.b16 %v5745
    %v7103 = vunpack.c.l.b16 %v5746
    %v7104 = vunpack.c.h.b16 %v5746
    %v7105 = vunpack.c.l.b16 %v5747
    %v7106 = vunpack.c.h.b16 %v5747
    %v7107 = vunpack.c.l.b16 %v5748
    %v7108 = vunpack.c.h.b16 %v5748
    %v7109 = vunpack.c.l.b16 %v5749
    %v7110 = vunpack.c.h.b16 %v5749
    %v7111 = vunpack.c.l.b16 %v5750
    %v7112 = vunpack.c.h.b16 %v5750
    %v7113 = vunpack.c.l.b16 %v5751
    %v7114 = vunpack.c.h.b16 %v5751
    %v7115 = vunpack.c.l.b16 %v5752
    %v7116 = vunpack.c.h.b16 %v5752
    %v7117 = vunpack.c.l.b16 %v5753
    %v7118 = vunpack.c.h.b16 %v5753
    %v7119 = vunpack.c.l.b16 %v5754
    %v7120 = vunpack.c.h.b16 %v5754
    %v7121 = vunpack.c.l.b16 %v5755
    %v7122 = vunpack.c.h.b16 %v5755
    %v7123 = vunpack.c.l.b16 %v5756
    %v7124 = vunpack.c.h.b16 %v5756
    %v7125 = vunpack.c.l.b16 %v5757
    %v7126 = vunpack.c.h.b16 %v5757
    %v7127 = vunpack.c.l.b16 %v5758
    %v7128 = vunpack.c.h.b16 %v5758
    %v7129 = vunpack.c.l.b16 %v5759
    %v7130 = vunpack.c.h.b16 %v5759
    %v7131 = vunpack.c.l.b16 %v5760
    %v7132 = vunpack.c.h.b16 %v5760
    %v7133 = vunpack.c.l.b16 %v5761
    %v7134 = vunpack.c.h.b16 %v5761
    %v7135 = vunpack.c.l.b16 %v5762
    %v7136 = vunpack.c.h.b16 %v5762
    %v7137 = vunpack.c.l.b16 %v5763
    %v7138 = vunpack.c.h.b16 %v5763
    %v7139 = vunpack.c.l.b16 %v5764
    %v7140 = vunpack.c.h.b16 %v5764
    %v7141 = vunpack.c.l.b16 %v5765
    %v7142 = vunpack.c.h.b16 %v5765
    %v7143 = vunpack.c.l.b16 %v5766
    %v7144 = vunpack.c.h.b16 %v5766
    %v7145 = vunpack.c.l.b16 %v5767
    %v7146 = vunpack.c.h.b16 %v5767
    %v7147 = vunpack.c.l.b16 %v5768
    %v7148 = vunpack.c.h.b16 %v5768
    %v7149 = vunpack.c.l.b16 %v5769
    %v7150 = vunpack.c.h.b16 %v5769
    %v7151 = vunpack.c.l.b16 %v5770
    %v7152 = vunpack.c.h.b16 %v5770
    %v7153 = vunpack.c.l.b16 %v5771
    %v7154 = vunpack.c.h.b16 %v5771
    %v7155 = vunpack.c.l.b16 %v5772
    %v7156 = vunpack.c.h.b16 %v5772
    %v7157 = vunpack.c.l.b16 %v5773
    %v7158 = vunpack.c.h.b16 %v5773
    %v7159 = vunpack.c.l.b16 %v5774
    %v7160 = vunpack.c.h.b16 %v5774
    %v7161 = vunpack.c.l.b16 %v5775
    %v7162 = vunpack.c.h.b16 %v5775
    %v7163 = vunpack.c.l.b16 %v5776
    %v7164 = vunpack.c.h.b16 %v5776
    %v7165 = vunpack.c.l.b16 %v5777
    %v7166 = vunpack.c.h.b16 %v5777
    %v7167 = vunpack.c.l.b16 %v5778
    %v7168 = vunpack.c.h.b16 %v5778
    %v7169 = vunpack.c.l.b16 %v5779
    %v7170 = vunpack.c.h.b16 %v5779
    %v7171 = vunpack.c.l.b16 %v5780
    %v7172 = vunpack.c.h.b16 %v5780
    %v7173 = vunpack.c.l.b16 %v5781
    %v7174 = vunpack.c.h.b16 %v5781
    %v7175 = vunpack.c.l.b16 %v5782
    %v7176 = vunpack.c.h.b16 %v5782
    %v7177 = vunpack.c.l.b16 %v5783
    %v7178 = vunpack.c.h.b16 %v5783
    %v7179 = vunpack.c.l.b16 %v5784
    %v7180 = vunpack.c.h.b16 %v5784
    %v7181 = vunpack.c.l.b16 %v5785
    %v7182 = vunpack.c.h.b16 %v5785
    %v7183 = vunpack.c.l.b16 %v5786
    %v7184 = vunpack.c.h.b16 %v5786
    %v7185 = vunpack.c.l.b16 %v5787
    %v7186 = vunpack.c.h.b16 %v5787
    %v7187 = vunpack.c.l.b16 %v5788
    %v7188 = vunpack.c.h.b16 %v5788
    %v7189 = vunpack.c.l.b16 %v5789
    %v7190 = vunpack.c.h.b16 %v5789
    %v7191 = vunpack.c.l.b16 %v5790
    %v7192 = vunpack.c.h.b16 %v5790
    %v7193 = vunpack.c.l.b16 %v5791
    %v7194 = vunpack.c.h.b16 %v5791
    %v7195 = vunpack.c.l.b16 %v5792
    %v7196 = vunpack.c.h.b16 %v5792
    %v7197 = vunpack.c.l.b16 %v5793
    %v7198 = vunpack.c.h.b16 %v5793
    %v7199 = vunpack.c.l.b16 %v5794
    %v7200 = vunpack.c.h.b16 %v5794
    %v7201 = vunpack.c.l.b16 %v5795
    %v7202 = vunpack.c.h.b16 %v5795
    %v7203 = vunpack.c.l.b16 %v5796
    %v7204 = vunpack.c.h.b16 %v5796
    %v7205 = vunpack.c.l.b16 %v5797
    %v7206 = vunpack.c.h.b16 %v5797
    %v7207 = vunpack.c.l.b16 %v5798
    %v7208 = vunpack.c.h.b16 %v5798
    %v7209 = vunpack.c.l.b16 %v5799
    %v7210 = vunpack.c.h.b16 %v5799
    %v7211 = vunpack.c.l.b16 %v5800
    %v7212 = vunpack.c.h.b16 %v5800
    %v7213 = vunpack.c.l.b16 %v5801
    %v7214 = vunpack.c.h.b16 %v5801
    %v7215 = vunpack.c.l.b16 %v5802
    %v7216 = vunpack.c.h.b16 %v5802
    %v7217 = vunpack.c.l.b16 %v5803
    %v7218 = vunpack.c.h.b16 %v5803
    %v7219 = vunpack.c.l.b16 %v5804
    %v7220 = vunpack.c.h.b16 %v5804
    %v7221 = vunpack.c.l.b16 %v5805
    %v7222 = vunpack.c.h.b16 %v5805
    %v7223 = vunpack.c.l.b16 %v5806
    %v7224 = vunpack.c.h.b16 %v5806
    %v7225 = vunpack.c.l.b16 %v5807
    %v7226 = vunpack.c.h.b16 %v5807
    %v7227 = vunpack.c.l.b16 %v5808
    %v7228 = vunpack.c.h.b16 %v5808
    %v7229 = vunpack.c.l.b16 %v5809
    %v7230 = vunpack.c.h.b16 %v5809
    %v7231 = vunpack.c.l.b16 %v5810
    %v7232 = vunpack.c.h.b16 %v5810
    %v7233 = vunpack.c.l.b16 %v5811
    %v7234 = vunpack.c.h.b16 %v5811
    %v7235 = vunpack.c.l.b16 %v5812
    %v7236 = vunpack.c.h.b16 %v5812
    %v7237 = vunpack.c.l.b16 %v5813
    %v7238 = vunpack.c.h.b16 %v5813
    %v7239 = vunpack.c.l.b16 %v5814
    %v7240 = vunpack.c.h.b16 %v5814
    %v7241 = vunpack.c.l.b16 %v5815
    %v7242 = vunpack.c.h.b16 %v5815
    %v7243 = vunpack.c.l.b16 %v5816
    %v7244 = vunpack.c.h.b16 %v5816
    %v7245 = vunpack.c.l.b16 %v5817
    %v7246 = vunpack.c.h.b16 %v5817
    %v7247 = vunpack.c.l.b16 %v5818
    %v7248 = vunpack.c.h.b16 %v5818
    %v7249 = vunpack.c.l.b16 %v5819
    %v7250 = vunpack.c.h.b16 %v5819
    %v7251 = vunpack.c.l.b16 %v5820
    %v7252 = vunpack.c.h.b16 %v5820
    %v7253 = vunpack.c.l.b16 %v5821
    %v7254 = vunpack.c.h.b16 %v5821
    %v7255 = vunpack.c.l.b16 %v5822
    %v7256 = vunpack.c.h.b16 %v5822
    %v7257 = vunpack.c.l.b16 %v5823
    %v7258 = vunpack.c.h.b16 %v5823
    %v7259 = vunpack.c.l.b16 %v5824
    %v7260 = vunpack.c.h.b16 %v5824
    %v7261 = vunpack.c.l.b16 %v5825
    %v7262 = vunpack.c.h.b16 %v5825
    %v7263 = vunpack.c.l.b16 %v5826
    %v7264 = vunpack.c.h.b16 %v5826
    %v7265 = vunpack.c.l.b16 %v5827
    %v7266 = vunpack.c.h.b16 %v5827
    %v7267 = vunpack.c.l.b16 %v5828
    %v7268 = vunpack.c.h.b16 %v5828
    %v7269 = vunpack.c.l.b16 %v5829
    %v7270 = vunpack.c.h.b16 %v5829
    %v7271 = vunpack.c.l.b16 %v5830
    %v7272 = vunpack.c.h.b16 %v5830
    %v7273 = vunpack.c.l.b16 %v5831
    %v7274 = vunpack.c.h.b16 %v5831
    %v7275 = vunpack.c.l.b16 %v5832
    %v7276 = vunpack.c.h.b16 %v5832
    %v7277 = vunpack.c.l.b16 %v5833
    %v7278 = vunpack.c.h.b16 %v5833
    %v7279 = vunpack.c.l.b16 %v5834
    %v7280 = vunpack.c.h.b16 %v5834
    %v7281 = vunpack.c.l.b16 %v5835
    %v7282 = vunpack.c.h.b16 %v5835
    %v7283 = vunpack.c.l.b16 %v5836
    %v7284 = vunpack.c.h.b16 %v5836
    %v7285 = vunpack.c.l.b16 %v5837
    %v7286 = vunpack.c.h.b16 %v5837
    %v7287 = vunpack.c.l.b16 %v5838
    %v7288 = vunpack.c.h.b16 %v5838
    %v7289 = vunpack.c.l.b16 %v5839
    %v7290 = vunpack.c.h.b16 %v5839
    %v7291 = vunpack.c.l.b16 %v5840
    %v7292 = vunpack.c.h.b16 %v5840
    %v7293 = vunpack.c.l.b16 %v5841
    %v7294 = vunpack.c.h.b16 %v5841
    %v7295 = vunpack.c.l.b16 %v5842
    %v7296 = vunpack.c.h.b16 %v5842
    %v7297 = vunpack.c.l.b16 %v5843
    %v7298 = vunpack.c.h.b16 %v5843
    %v7299 = vunpack.c.l.b16 %v5844
    %v7300 = vunpack.c.h.b16 %v5844
    %v7301 = vunpack.c.l.b16 %v5845
    %v7302 = vunpack.c.h.b16 %v5845
    %v7303 = vunpack.c.l.b16 %v5846
    %v7304 = vunpack.c.h.b16 %v5846
    %v7305 = vunpack.c.l.b16 %v5847
    %v7306 = vunpack.c.h.b16 %v5847
    %v7307 = vunpack.c.l.b16 %v5848
    %v7308 = vunpack.c.h.b16 %v5848
    %v7309 = vunpack.c.l.b16 %v5849
    %v7310 = vunpack.c.h.b16 %v5849
    %v7311 = vunpack.c.l.b16 %v5850
    %v7312 = vunpack.c.h.b16 %v5850
    %v7313 = vunpack.c.l.b16 %v5851
    %v7314 = vunpack.c.h.b16 %v5851
    %v7315 = vunpack.c.l.b16 %v5852
    %v7316 = vunpack.c.h.b16 %v5852
    %v7317 = vunpack.c.l.b16 %v5853
    %v7318 = vunpack.c.h.b16 %v5853
    %v7319 = vunpack.c.l.b16 %v5854
    %v7320 = vunpack.c.h.b16 %v5854
    %v7321 = vunpack.c.l.b16 %v5855
    %v7322 = vunpack.c.h.b16 %v5855
    %v7323 = vunpack.c.l.b16 %v5856
    %v7324 = vunpack.c.h.b16 %v5856
    %v7325 = vunpack.c.l.b16 %v5857
    %v7326 = vunpack.c.h.b16 %v5857
    %v7327 = vunpack.c.l.b16 %v5858
    %v7328 = vunpack.c.h.b16 %v5858
    %v7329 = vunpack.c.l.b16 %v5859
    %v7330 = vunpack.c.h.b16 %v5859
    %v7331 = vunpack.c.l.b16 %v5860
    %v7332 = vunpack.c.h.b16 %v5860
    %v7333 = vunpack.c.l.b16 %v5861
    %v7334 = vunpack.c.h.b16 %v5861
    %v7335 = vunpack.c.l.b16 %v5862
    %v7336 = vunpack.c.h.b16 %v5862
    %v7337 = vunpack.c.l.b16 %v5863
    %v7338 = vunpack.c.h.b16 %v5863
    %v7339 = vunpack.c.l.b16 %v5864
    %v7340 = vunpack.c.h.b16 %v5864
    %v7341 = vunpack.c.l.b16 %v5865
    %v7342 = vunpack.c.h.b16 %v5865
    %v7343 = vunpack.c.l.b16 %v5866
    %v7344 = vunpack.c.h.b16 %v5866
    %v7345 = vunpack.c.l.b16 %v5867
    %v7346 = vunpack.c.h.b16 %v5867
    %v7347 = vunpack.c.l.b16 %v5868
    %v7348 = vunpack.c.h.b16 %v5868
    %v7349 = vunpack.c.l.b16 %v5869
    %v7350 = vunpack.c.h.b16 %v5869
    %v7351 = vunpack.c.l.b16 %v5870
    %v7352 = vunpack.c.h.b16 %v5870
    %v7353 = vunpack.c.l.b16 %v5871
    %v7354 = vunpack.c.h.b16 %v5871
    %v7355 = vunpack.c.l.b16 %v5872
    %v7356 = vunpack.c.h.b16 %v5872
    %v7357 = vunpack.c.l.b16 %v5873
    %v7358 = vunpack.c.h.b16 %v5873
    %v7359 = vunpack.c.l.b16 %v5874
    %v7360 = vunpack.c.h.b16 %v5874
    %v7361 = vunpack.c.l.b16 %v5875
    %v7362 = vunpack.c.h.b16 %v5875
    %v7363 = vunpack.c.l.b16 %v5876
    %v7364 = vunpack.c.h.b16 %v5876
    %v7365 = vunpack.c.l.b16 %v5877
    %v7366 = vunpack.c.h.b16 %v5877
    %v7367 = vunpack.c.l.b16 %v5878
    %v7368 = vunpack.c.h.b16 %v5878
    %v7369 = vunpack.c.l.b16 %v5879
    %v7370 = vunpack.c.h.b16 %v5879
    %v7371 = vunpack.c.l.b16 %v5880
    %v7372 = vunpack.c.h.b16 %v5880
    %v7373 = vunpack.c.l.b16 %v5881
    %v7374 = vunpack.c.h.b16 %v5881
    %v7375 = vunpack.c.l.b16 %v5882
    %v7376 = vunpack.c.h.b16 %v5882
    %v7377 = vunpack.c.l.b16 %v5883
    %v7378 = vunpack.c.h.b16 %v5883
    %v7379 = vunpack.c.l.b16 %v5884
    %v7380 = vunpack.c.h.b16 %v5884
    %v7381 = vunpack.c.l.b16 %v5885
    %v7382 = vunpack.c.h.b16 %v5885
    %v7383 = vunpack.c.l.b16 %v5886
    %v7384 = vunpack.c.h.b16 %v5886
    %v7385 = vunpack.c.l.b16 %v5887
    %v7386 = vunpack.c.h.b16 %v5887
    %v7387 = vunpack.c.l.b16 %v5888
    %v7388 = vunpack.c.h.b16 %v5888
    %v7389 = vunpack.c.l.b16 %v5889
    %v7390 = vunpack.c.h.b16 %v5889
    %v7391 = vunpack.c.l.b16 %v5890
    %v7392 = vunpack.c.h.b16 %v5890
    %v7393 = vunpack.c.l.b16 %v5891
    %v7394 = vunpack.c.h.b16 %v5891
    %v7395 = vunpack.c.l.b16 %v5892
    %v7396 = vunpack.c.h.b16 %v5892
    %v7397 = vunpack.c.l.b16 %v5893
    %v7398 = vunpack.c.h.b16 %v5893
    %v7399 = vunpack.c.l.b16 %v5894
    %v7400 = vunpack.c.h.b16 %v5894
    %v7401 = vunpack.c.l.b16 %v5895
    %v7402 = vunpack.c.h.b16 %v5895
    %v7403 = vunpack.c.l.b16 %v5896
    %v7404 = vunpack.c.h.b16 %v5896
    %v7405 = vunpack.c.l.b16 %v5897
    %v7406 = vunpack.c.h.b16 %v5897
    %v7407 = vunpack.c.l.b16 %v5898
    %v7408 = vunpack.c.h.b16 %v5898
    %v7409 = vunpack.c.l.b16 %v5899
    %v7410 = vunpack.c.h.b16 %v5899
    %v7411 = vunpack.c.l.b16 %v5900
    %v7412 = vunpack.c.h.b16 %v5900
    %v7413 = vunpack.c.l.b16 %v5901
    %v7414 = vunpack.c.h.b16 %v5901
    %v7415 = vunpack.c.l.b16 %v5902
    %v7416 = vunpack.c.h.b16 %v5902
    %v7417 = vunpack.c.l.b16 %v5903
    %v7418 = vunpack.c.h.b16 %v5903
    %v7419 = vunpack.c.l.b16 %v5904
    %v7420 = vunpack.c.h.b16 %v5904
    %v7421 = vunpack.c.l.b16 %v5905
    %v7422 = vunpack.c.h.b16 %v5905
    %v7423 = vunpack.c.l.b16 %v5906
    %v7424 = vunpack.c.h.b16 %v5906
    %v7425 = vunpack.c.l.b16 %v5907
    %v7426 = vunpack.c.h.b16 %v5907
    %v7427 = vunpack.c.l.b16 %v5908
    %v7428 = vunpack.c.h.b16 %v5908
    %v7429 = vunpack.c.l.b16 %v5909
    %v7430 = vunpack.c.h.b16 %v5909
    %v7431 = vunpack.c.l.b16 %v5910
    %v7432 = vunpack.c.h.b16 %v5910
    %v7433 = vunpack.c.l.b16 %v5911
    %v7434 = vunpack.c.h.b16 %v5911
    %v7435 = vunpack.c.l.b16 %v5912
    %v7436 = vunpack.c.h.b16 %v5912
    %v7437 = vunpack.c.l.b16 %v5913
    %v7438 = vunpack.c.h.b16 %v5913
    %v7439 = vunpack.c.l.b16 %v5914
    %v7440 = vunpack.c.h.b16 %v5914
    %v7441 = vunpack.c.l.b16 %v5915
    %v7442 = vunpack.c.h.b16 %v5915
    %v7443 = vunpack.c.l.b16 %v5916
    %v7444 = vunpack.c.h.b16 %v5916
    %v7445 = vunpack.c.l.b16 %v5917
    %v7446 = vunpack.c.h.b16 %v5917
    %v7447 = vunpack.c.l.b16 %v5918
    %v7448 = vunpack.c.h.b16 %v5918
    %v7449 = vunpack.c.l.b16 %v5919
    %v7450 = vunpack.c.h.b16 %v5919
    %v7451 = vunpack.c.l.b16 %v5920
    %v7452 = vunpack.c.h.b16 %v5920
    %v7453 = vunpack.c.l.b16 %v5921
    %v7454 = vunpack.c.h.b16 %v5921
    %v7455 = vunpack.c.l.b16 %v5922
    %v7456 = vunpack.c.h.b16 %v5922
    %v7457 = vunpack.c.l.b16 %v5923
    %v7458 = vunpack.c.h.b16 %v5923
    %v7459 = vunpack.c.l.b16 %v5924
    %v7460 = vunpack.c.h.b16 %v5924
    %v7461 = vunpack.c.l.b16 %v5925
    %v7462 = vunpack.c.h.b16 %v5925
    %v7463 = vunpack.c.l.b16 %v5926
    %v7464 = vunpack.c.h.b16 %v5926
    %v7465 = vunpack.c.l.b16 %v5927
    %v7466 = vunpack.c.h.b16 %v5927
    %v7467 = vunpack.c.l.b16 %v5928
    %v7468 = vunpack.c.h.b16 %v5928
    %v7469 = vunpack.c.l.b16 %v5929
    %v7470 = vunpack.c.h.b16 %v5929
    %v7471 = vunpack.c.l.b16 %v5930
    %v7472 = vunpack.c.h.b16 %v5930
    %v7473 = vunpack.c.l.b16 %v5931
    %v7474 = vunpack.c.h.b16 %v5931
    %v7475 = vunpack.c.l.b16 %v5932
    %v7476 = vunpack.c.h.b16 %v5932
    %v7477 = vunpack.c.l.b16 %v5933
    %v7478 = vunpack.c.h.b16 %v5933
    %v7479 = vunpack.c.l.b16 %v5934
    %v7480 = vunpack.c.h.b16 %v5934
    %v7481 = vunpack.c.l.b16 %v5935
    %v7482 = vunpack.c.h.b16 %v5935
    %v7483 = vunpack.c.l.b16 %v5936
    %v7484 = vunpack.c.h.b16 %v5936
    %v7485 = vunpack.c.l.b16 %v5937
    %v7486 = vunpack.c.h.b16 %v5937
    %v7487 = vunpack.c.l.b16 %v5938
    %v7488 = vunpack.c.h.b16 %v5938
    %v7489 = vunpack.c.l.b16 %v5939
    %v7490 = vunpack.c.h.b16 %v5939
    %v7491 = vunpack.c.l.b16 %v5940
    %v7492 = vunpack.c.h.b16 %v5940
    %v7493 = vunpack.c.l.b16 %v5941
    %v7494 = vunpack.c.h.b16 %v5941
    %v7495 = vunpack.c.l.b16 %v5942
    %v7496 = vunpack.c.h.b16 %v5942
    %v7497 = vunpack.c.l.b16 %v5943
    %v7498 = vunpack.c.h.b16 %v5943
    %v7499 = vunpack.c.l.b16 %v5944
    %v7500 = vunpack.c.h.b16 %v5944
    %v7501 = vunpack.c.l.b16 %v5945
    %v7502 = vunpack.c.h.b16 %v5945
    %v7503 = vunpack.c.l.b16 %v5946
    %v7504 = vunpack.c.h.b16 %v5946
    %v7505 = vunpack.c.l.b16 %v5947
    %v7506 = vunpack.c.h.b16 %v5947
    %v7507 = vunpack.c.l.b16 %v5948
    %v7508 = vunpack.c.h.b16 %v5948
    %v7509 = vunpack.c.l.b16 %v5949
    %v7510 = vunpack.c.h.b16 %v5949
    %v7511 = vunpack.c.l.b16 %v5950
    %v7512 = vunpack.c.h.b16 %v5950
    %v7513 = vunpack.c.l.b16 %v5951
    %v7514 = vunpack.c.h.b16 %v5951
    %v7515 = vunpack.c.l.b16 %v5952
    %v7516 = vunpack.c.h.b16 %v5952
    %v7517 = vunpack.c.l.b16 %v5953
    %v7518 = vunpack.c.h.b16 %v5953
    %v7519 = vunpack.c.l.b16 %v5954
    %v7520 = vunpack.c.h.b16 %v5954
    %v7521 = vunpack.c.l.b16 %v5955
    %v7522 = vunpack.c.h.b16 %v5955
    %v7523 = vunpack.c.l.b16 %v5956
    %v7524 = vunpack.c.h.b16 %v5956
    %v7525 = vunpack.c.l.b16 %v5957
    %v7526 = vunpack.c.h.b16 %v5957
    %v7527 = vunpack.c.l.b16 %v5958
    %v7528 = vunpack.c.h.b16 %v5958
    %v7529 = vunpack.c.l.b16 %v5959
    %v7530 = vunpack.c.h.b16 %v5959
    %v7531 = vunpack.c.l.b16 %v5960
    %v7532 = vunpack.c.h.b16 %v5960
    %v7533 = vunpack.c.l.b16 %v5961
    %v7534 = vunpack.c.h.b16 %v5961
    %v7535 = vunpack.c.l.b16 %v5962
    %v7536 = vunpack.c.h.b16 %v5962
    %v7537 = vunpack.c.l.b16 %v5963
    %v7538 = vunpack.c.h.b16 %v5963
    %v7539 = vunpack.c.l.b16 %v5964
    %v7540 = vunpack.c.h.b16 %v5964
    %v7541 = vunpack.c.l.b16 %v5965
    %v7542 = vunpack.c.h.b16 %v5965
    %v7543 = vunpack.c.l.b16 %v5966
    %v7544 = vunpack.c.h.b16 %v5966
    %v7545 = vunpack.c.l.b16 %v5967
    %v7546 = vunpack.c.h.b16 %v5967
    %v7547 = vunpack.c.l.b16 %v5968
    %v7548 = vunpack.c.h.b16 %v5968
    %v7549 = vunpack.c.l.b16 %v5969
    %v7550 = vunpack.c.h.b16 %v5969
    %v7551 = vunpack.c.l.b16 %v5970
    %v7552 = vunpack.c.h.b16 %v5970
    %v7553 = vunpack.c.l.b16 %v5971
    %v7554 = vunpack.c.h.b16 %v5971
    %v7555 = vunpack.c.l.b16 %v5972
    %v7556 = vunpack.c.h.b16 %v5972
    %v7557 = vunpack.c.l.b16 %v5973
    %v7558 = vunpack.c.h.b16 %v5973
    %v7559 = vunpack.c.l.b16 %v5974
    %v7560 = vunpack.c.h.b16 %v5974
    %v7561 = vunpack.c.l.b16 %v5975
    %v7562 = vunpack.c.h.b16 %v5975
    %v7563 = vunpack.c.l.b16 %v5976
    %v7564 = vunpack.c.h.b16 %v5976
    %v7565 = vunpack.c.l.b16 %v5977
    %v7566 = vunpack.c.h.b16 %v5977
    %v7567 = vunpack.c.l.b16 %v5978
    %v7568 = vunpack.c.h.b16 %v5978
    %v7569 = vunpack.c.l.b16 %v5979
    %v7570 = vunpack.c.h.b16 %v5979
    %v7571 = vunpack.c.l.b16 %v5980
    %v7572 = vunpack.c.h.b16 %v5980
    %v7573 = vunpack.c.l.b16 %v5981
    %v7574 = vunpack.c.h.b16 %v5981
    %v7575 = vunpack.c.l.b16 %v5982
    %v7576 = vunpack.c.h.b16 %v5982
    %v7577 = vunpack.c.l.b16 %v5983
    %v7578 = vunpack.c.h.b16 %v5983
    %v7579 = vunpack.c.l.b16 %v5984
    %v7580 = vunpack.c.h.b16 %v5984
    %v7581 = vunpack.c.l.b16 %v5985
    %v7582 = vunpack.c.h.b16 %v5985
    %v7583 = vunpack.c.l.b16 %v5986
    %v7584 = vunpack.c.h.b16 %v5986
    %v7585 = vunpack.c.l.b16 %v5987
    %v7586 = vunpack.c.h.b16 %v5987
    %v7587 = vunpack.c.l.b16 %v5988
    %v7588 = vunpack.c.h.b16 %v5988
    %v7589 = vunpack.c.l.b16 %v5989
    %v7590 = vunpack.c.h.b16 %v5989
    %v7591 = vunpack.c.l.b16 %v5990
    %v7592 = vunpack.c.h.b16 %v5990
    %v7593 = vunpack.c.l.b16 %v5991
    %v7594 = vunpack.c.h.b16 %v5991
    %v7595 = vunpack.c.l.b16 %v5992
    %v7596 = vunpack.c.h.b16 %v5992
    %v7597 = vunpack.c.l.b16 %v5993
    %v7598 = vunpack.c.h.b16 %v5993
    %v7599 = vunpack.c.l.b16 %v5994
    %v7600 = vunpack.c.h.b16 %v5994
    %v7601 = vunpack.c.l.b16 %v5995
    %v7602 = vunpack.c.h.b16 %v5995
    %v7603 = vunpack.c.l.b16 %v5996
    %v7604 = vunpack.c.h.b16 %v5996
    %v7605 = vunpack.c.l.b16 %v5997
    %v7606 = vunpack.c.h.b16 %v5997
    %v7607 = vunpack.c.l.b16 %v5998
    %v7608 = vunpack.c.h.b16 %v5998
    %v7609 = vunpack.c.l.b16 %v5999
    %v7610 = vunpack.c.h.b16 %v5999
    %v7611 = vunpack.c.l.b16 %v6000
    %v7612 = vunpack.c.h.b16 %v6000
    %v7613 = vunpack.c.l.b16 %v6001
    %v7614 = vunpack.c.h.b16 %v6001
    %v7615 = vunpack.c.l.b16 %v6002
    %v7616 = vunpack.c.h.b16 %v6002
    %v7617 = vunpack.c.l.b16 %v6003
    %v7618 = vunpack.c.h.b16 %v6003
    %v7619 = vunpack.c.l.b16 %v6004
    %v7620 = vunpack.c.h.b16 %v6004
    %v7621 = vunpack.c.l.b16 %v6005
    %v7622 = vunpack.c.h.b16 %v6005
    %v7623 = vunpack.c.l.b16 %v6006
    %v7624 = vunpack.c.h.b16 %v6006
    %v7625 = vunpack.c.l.b16 %v6007
    %v7626 = vunpack.c.h.b16 %v6007
    %v7627 = vunpack.c.l.b16 %v6008
    %v7628 = vunpack.c.h.b16 %v6008
    %v7629 = vpack.c.b16 %v6621, %v6605
    %v7630 = vpack.c.b16 %v6622, %v6606
    %v7631 = vpack.c.b16 %v6623, %v6607
    %v7632 = vpack.c.b16 %v6624, %v6608
    %v7633 = vpack.c.b16 %v6625, %v6609
    %v7634 = vpack.c.b16 %v6626, %v6610
    %v7635 = vpack.c.b16 %v6627, %v6611
    %v7636 = vpack.c.b16 %v6628, %v6612
    %v7637 = vpack.c.b16 %v6629, %v6613
    %v7638 = vpack.c.b16 %v6630, %v6614
    %v7639 = vpack.c.b16 %v6631, %v6615
    %v7640 = vpack.c.b16 %v6632, %v6616
    %v7641 = vpack.c.b16 %v6633, %v6617
    %v7642 = vpack.c.b16 %v6634, %v6618
    %v7643 = vpack.c.b16 %v6635, %v6619
    %v7644 = vpack.c.b16 %v6636, %v6620
    %v7645 = vpack.c.b16 %v6653, %v6637
    %v7646 = vpack.c.b16 %v6654, %v6638
    %v7647 = vpack.c.b16 %v6655, %v6639
    %v7648 = vpack.c.b16 %v6656, %v6640
    %v7649 = vpack.c.b16 %v6657, %v6641
    %v7650 = vpack.c.b16 %v6658, %v6642
    %v7651 = vpack.c.b16 %v6659, %v6643
    %v7652 = vpack.c.b16 %v6660, %v6644
    %v7653 = vpack.c.b16 %v6661, %v6645
    %v7654 = vpack.c.b16 %v6662, %v6646
    %v7655 = vpack.c.b16 %v6663, %v6647
    %v7656 = vpack.c.b16 %v6664, %v6648
    %v7657 = vpack.c.b16 %v6665, %v6649
    %v7658 = vpack.c.b16 %v6666, %v6650
    %v7659 = vpack.c.b16 %v6667, %v6651
    %v7660 = vpack.c.b16 %v6668, %v6652
    %v7661 = vpack.c.b16 %v6685, %v6669
    %v7662 = vpack.c.b16 %v6686, %v6670
    %v7663 = vpack.c.b16 %v6687, %v6671
    %v7664 = vpack.c.b16 %v6688, %v6672
    %v7665 = vpack.c.b16 %v6689, %v6673
    %v7666 = vpack.c.b16 %v6690, %v6674
    %v7667 = vpack.c.b16 %v6691, %v6675
    %v7668 = vpack.c.b16 %v6692, %v6676
    %v7669 = vpack.c.b16 %v6693, %v6677
    %v7670 = vpack.c.b16 %v6694, %v6678
    %v7671 = vpack.c.b16 %v6695, %v6679
    %v7672 = vpack.c.b16 %v6696, %v6680
    %v7673 = vpack.c.b16 %v6697, %v6681
    %v7674 = vpack.c.b16 %v6698, %v6682
    %v7675 = vpack.c.b16 %v6699, %v6683
    %v7676 = vpack.c.b16 %v6700, %v6684
    %v7677 = vpack.c.b16 %v6717, %v6701
    %v7678 = vpack.c.b16 %v6718, %v6702
    %v7679 = vpack.c.b16 %v6719, %v6703
    %v7680 = vpack.c.b16 %v6720, %v6704
    %v7681 = vpack.c.b16 %v6721, %v6705
    %v7682 = vpack.c.b16 %v6722, %v6706
    %v7683 = vpack.c.b16 %v6723, %v6707
    %v7684 = vpack.c.b16 %v6724, %v6708
    %v7685 = vpack.c.b16 %v6725, %v6709
    %v7686 = vpack.c.b16 %v6726, %v6710
    %v7687 = vpack.c.b16 %v6727, %v6711
    %v7688 = vpack.c.b16 %v6728, %v6712
    %v7689 = vpack.c.b16 %v6729, %v6713
    %v7690 = vpack.c.b16 %v6730, %v6714
    %v7691 = vpack.c.b16 %v6731, %v6715
    %v7692 = vpack.c.b16 %v6732, %v6716
    %v7693 = vpack.c.b16 %v6749, %v6733
    %v7694 = vpack.c.b16 %v6750, %v6734
    %v7695 = vpack.c.b16 %v6751, %v6735
    %v7696 = vpack.c.b16 %v6752, %v6736
    %v7697 = vpack.c.b16 %v6753, %v6737
    %v7698 = vpack.c.b16 %v6754, %v6738
    %v7699 = vpack.c.b16 %v6755, %v6739
    %v7700 = vpack.c.b16 %v6756, %v6740
    %v7701 = vpack.c.b16 %v6757, %v6741
    %v7702 = vpack.c.b16 %v6758, %v6742
    %v7703 = vpack.c.b16 %v6759, %v6743
    %v7704 = vpack.c.b16 %v6760, %v6744
    %v7705 = vpack.c.b16 %v6761, %v6745
    %v7706 = vpack.c.b16 %v6762, %v6746
    %v7707 = vpack.c.b16 %v6763, %v6747
    %v7708 = vpack.c.b16 %v6764, %v6748
    %v7709 = vpack.c.b16 %v6781, %v6765
    %v7710 = vpack.c.b16 %v6782, %v6766
    %v7711 = vpack.c.b16 %v6783, %v6767
    %v7712 = vpack.c.b16 %v6784, %v6768
    %v7713 = vpack.c.b16 %v6785, %v6769
    %v7714 = vpack.c.b16 %v6786, %v6770
    %v7715 = vpack.c.b16 %v6787, %v6771
    %v7716 = vpack.c.b16 %v6788, %v6772
    %v7717 = vpack.c.b16 %v6789, %v6773
    %v7718 = vpack.c.b16 %v6790, %v6774
    %v7719 = vpack.c.b16 %v6791, %v6775
    %v7720 = vpack.c.b16 %v6792, %v6776
    %v7721 = vpack.c.b16 %v6793, %v6777
    %v7722 = vpack.c.b16 %v6794, %v6778
    %v7723 = vpack.c.b16 %v6795, %v6779
    %v7724 = vpack.c.b16 %v6796, %v6780
    %v7725 = vpack.c.b16 %v6813, %v6797
    %v7726 = vpack.c.b16 %v6814, %v6798
    %v7727 = vpack.c.b16 %v6815, %v6799
    %v7728 = vpack.c.b16 %v6816, %v6800
    %v7729 = vpack.c.b16 %v6817, %v6801
    %v7730 = vpack.c.b16 %v6818, %v6802
    %v7731 = vpack.c.b16 %v6819, %v6803
    %v7732 = vpack.c.b16 %v6820, %v6804
    %v7733 = vpack.c.b16 %v6821, %v6805
    %v7734 = vpack.c.b16 %v6822, %v6806
    %v7735 = vpack.c.b16 %v6823, %v6807
    %v7736 = vpack.c.b16 %v6824, %v6808
    %v7737 = vpack.c.b16 %v6825, %v6809
    %v7738 = vpack.c.b16 %v6826, %v6810
    %v7739 = vpack.c.b16 %v6827, %v6811
    %v7740 = vpack.c.b16 %v6828, %v6812
    %v7741 = vpack.c.b16 %v6845, %v6829
    %v7742 = vpack.c.b16 %v6846, %v6830
    %v7743 = vpack.c.b16 %v6847, %v6831
    %v7744 = vpack.c.b16 %v6848, %v6832
    %v7745 = vpack.c.b16 %v6849, %v6833
    %v7746 = vpack.c.b16 %v6850, %v6834
    %v7747 = vpack.c.b16 %v6851, %v6835
    %v7748 = vpack.c.b16 %v6852, %v6836
    %v7749 = vpack.c.b16 %v6853, %v6837
    %v7750 = vpack.c.b16 %v6854, %v6838
    %v7751 = vpack.c.b16 %v6855, %v6839
    %v7752 = vpack.c.b16 %v6856, %v6840
    %v7753 = vpack.c.b16 %v6857, %v6841
    %v7754 = vpack.c.b16 %v6858, %v6842
    %v7755 = vpack.c.b16 %v6859, %v6843
    %v7756 = vpack.c.b16 %v6860, %v6844
    %v7757 = vpack.c.b16 %v6877, %v6861
    %v7758 = vpack.c.b16 %v6878, %v6862
    %v7759 = vpack.c.b16 %v6879, %v6863
    %v7760 = vpack.c.b16 %v6880, %v6864
    %v7761 = vpack.c.b16 %v6881, %v6865
    %v7762 = vpack.c.b16 %v6882, %v6866
    %v7763 = vpack.c.b16 %v6883, %v6867
    %v7764 = vpack.c.b16 %v6884, %v6868
    %v7765 = vpack.c.b16 %v6885, %v6869
    %v7766 = vpack.c.b16 %v6886, %v6870
    %v7767 = vpack.c.b16 %v6887, %v6871
    %v7768 = vpack.c.b16 %v6888, %v6872
    %v7769 = vpack.c.b16 %v6889, %v6873
    %v7770 = vpack.c.b16 %v6890, %v6874
    %v7771 = vpack.c.b16 %v6891, %v6875
    %v7772 = vpack.c.b16 %v6892, %v6876
    %v7773 = vpack.c.b16 %v6909, %v6893
    %v7774 = vpack.c.b16 %v6910, %v6894
    %v7775 = vpack.c.b16 %v6911, %v6895
    %v7776 = vpack.c.b16 %v6912, %v6896
    %v7777 = vpack.c.b16 %v6913, %v6897
    %v7778 = vpack.c.b16 %v6914, %v6898
    %v7779 = vpack.c.b16 %v6915, %v6899
    %v7780 = vpack.c.b16 %v6916, %v6900
    %v7781 = vpack.c.b16 %v6917, %v6901
    %v7782 = vpack.c.b16 %v6918, %v6902
    %v7783 = vpack.c.b16 %v6919, %v6903
    %v7784 = vpack.c.b16 %v6920, %v6904
    %v7785 = vpack.c.b16 %v6921, %v6905
    %v7786 = vpack.c.b16 %v6922, %v6906
    %v7787 = vpack.c.b16 %v6923, %v6907
    %v7788 = vpack.c.b16 %v6924, %v6908
    %v7789 = vpack.c.b16 %v6941, %v6925
    %v7790 = vpack.c.b16 %v6942, %v6926
    %v7791 = vpack.c.b16 %v6943, %v6927
    %v7792 = vpack.c.b16 %v6944, %v6928
    %v7793 = vpack.c.b16 %v6945, %v6929
    %v7794 = vpack.c.b16 %v6946, %v6930
    %v7795 = vpack.c.b16 %v6947, %v6931
    %v7796 = vpack.c.b16 %v6948, %v6932
    %v7797 = vpack.c.b16 %v6949, %v6933
    %v7798 = vpack.c.b16 %v6950, %v6934
    %v7799 = vpack.c.b16 %v6951, %v6935
    %v7800 = vpack.c.b16 %v6952, %v6936
    %v7801 = vpack.c.b16 %v6953, %v6937
    %v7802 = vpack.c.b16 %v6954, %v6938
    %v7803 = vpack.c.b16 %v6955, %v6939
    %v7804 = vpack.c.b16 %v6956, %v6940
    %v7805 = vpack.c.b16 %v6973, %v6957
    %v7806 = vpack.c.b16 %v6974, %v6958
    %v7807 = vpack.c.b16 %v6975, %v6959
    %v7808 = vpack.c.b16 %v6976, %v6960
    %v7809 = vpack.c.b16 %v6977, %v6961
    %v7810 = vpack.c.b16 %v6978, %v6962
    %v7811 = vpack.c.b16 %v6979, %v6963
    %v7812 = vpack.c.b16 %v6980, %v6964
    %v7813 = vpack.c.b16 %v6981, %v6965
    %v7814 = vpack.c.b16 %v6982, %v6966
    %v7815 = vpack.c.b16 %v6983, %v6967
    %v7816 = vpack.c.b16 %v6984, %v6968
    %v7817 = vpack.c.b16 %v6985, %v6969
    %v7818 = vpack.c.b16 %v6986, %v6970
    %v7819 = vpack.c.b16 %v6987, %v6971
    %v7820 = vpack.c.b16 %v6988, %v6972
    %v7821 = vpack.c.b16 %v7005, %v6989
    %v7822 = vpack.c.b16 %v7006, %v6990
    %v7823 = vpack.c.b16 %v7007, %v6991
    %v7824 = vpack.c.b16 %v7008, %v6992
    %v7825 = vpack.c.b16 %v7009, %v6993
    %v7826 = vpack.c.b16 %v7010, %v6994
    %v7827 = vpack.c.b16 %v7011, %v6995
    %v7828 = vpack.c.b16 %v7012, %v6996
    %v7829 = vpack.c.b16 %v7013, %v6997
    %v7830 = vpack.c.b16 %v7014, %v6998
    %v7831 = vpack.c.b16 %v7015, %v6999
    %v7832 = vpack.c.b16 %v7016, %v7000
    %v7833 = vpack.c.b16 %v7017, %v7001
    %v7834 = vpack.c.b16 %v7018, %v7002
    %v7835 = vpack.c.b16 %v7019, %v7003
    %v7836 = vpack.c.b16 %v7020, %v7004
    %v7837 = vpack.c.b16 %v7037, %v7021
    %v7838 = vpack.c.b16 %v7038, %v7022
    %v7839 = vpack.c.b16 %v7039, %v7023
    %v7840 = vpack.c.b16 %v7040, %v7024
    %v7841 = vpack.c.b16 %v7041, %v7025
    %v7842 = vpack.c.b16 %v7042, %v7026
    %v7843 = vpack.c.b16 %v7043, %v7027
    %v7844 = vpack.c.b16 %v7044, %v7028
    %v7845 = vpack.c.b16 %v7045, %v7029
    %v7846 = vpack.c.b16 %v7046, %v7030
    %v7847 = vpack.c.b16 %v7047, %v7031
    %v7848 = vpack.c.b16 %v7048, %v7032
    %v7849 = vpack.c.b16 %v7049, %v7033
    %v7850 = vpack.c.b16 %v7050, %v7034
    %v7851 = vpack.c.b16 %v7051, %v7035
    %v7852 = vpack.c.b16 %v7052, %v7036
    %v7853 = vpack.c.b16 %v7069, %v7053
    %v7854 = vpack.c.b16 %v7070, %v7054
    %v7855 = vpack.c.b16 %v7071, %v7055
    %v7856 = vpack.c.b16 %v7072, %v7056
    %v7857 = vpack.c.b16 %v7073, %v7057
    %v7858 = vpack.c.b16 %v7074, %v7058
    %v7859 = vpack.c.b16 %v7075, %v7059
    %v7860 = vpack.c.b16 %v7076, %v7060
    %v7861 = vpack.c.b16 %v7077, %v7061
    %v7862 = vpack.c.b16 %v7078, %v7062
    %v7863 = vpack.c.b16 %v7079, %v7063
    %v7864 = vpack.c.b16 %v7080, %v7064
    %v7865 = vpack.c.b16 %v7081, %v7065
    %v7866 = vpack.c.b16 %v7082, %v7066
    %v7867 = vpack.c.b16 %v7083, %v7067
    %v7868 = vpack.c.b16 %v7084, %v7068
    %v7869 = vpack.c.b16 %v7101, %v7085
    %v7870 = vpack.c.b16 %v7102, %v7086
    %v7871 = vpack.c.b16 %v7103, %v7087
    %v7872 = vpack.c.b16 %v7104, %v7088
    %v7873 = vpack.c.b16 %v7105, %v7089
    %v7874 = vpack.c.b16 %v7106, %v7090
    %v7875 = vpack.c.b16 %v7107, %v7091
    %v7876 = vpack.c.b16 %v7108, %v7092
    %v7877 = vpack.c.b16 %v7109, %v7093
    %v7878 = vpack.c.b16 %v7110, %v7094
    %v7879 = vpack.c.b16 %v7111, %v7095
    %v7880 = vpack.c.b16 %v7112, %v7096
    %v7881 = vpack.c.b16 %v7113, %v7097
    %v7882 = vpack.c.b16 %v7114, %v7098
    %v7883 = vpack.c.b16 %v7115, %v7099
    %v7884 = vpack.c.b16 %v7116, %v7100
    %v7885 = vpack.c.b16 %v7133, %v7117
    %v7886 = vpack.c.b16 %v7134, %v7118
    %v7887 = vpack.c.b16 %v7135, %v7119
    %v7888 = vpack.c.b16 %v7136, %v7120
    %v7889 = vpack.c.b16 %v7137, %v7121
    %v7890 = vpack.c.b16 %v7138, %v7122
    %v7891 = vpack.c.b16 %v7139, %v7123
    %v7892 = vpack.c.b16 %v7140, %v7124
    %v7893 = vpack.c.b16 %v7141, %v7125
    %v7894 = vpack.c.b16 %v7142, %v7126
    %v7895 = vpack.c.b16 %v7143, %v7127
    %v7896 = vpack.c.b16 %v7144, %v7128
    %v7897 = vpack.c.b16 %v7145, %v7129
    %v7898 = vpack.c.b16 %v7146, %v7130
    %v7899 = vpack.c.b16 %v7147, %v7131
    %v7900 = vpack.c.b16 %v7148, %v7132
    %v7901 = vpack.c.b16 %v7165, %v7149
    %v7902 = vpack.c.b16 %v7166, %v7150
    %v7903 = vpack.c.b16 %v7167, %v7151
    %v7904 = vpack.c.b16 %v7168, %v7152
    %v7905 = vpack.c.b16 %v7169, %v7153
    %v7906 = vpack.c.b16 %v7170, %v7154
    %v7907 = vpack.c.b16 %v7171, %v7155
    %v7908 = vpack.c.b16 %v7172, %v7156
    %v7909 = vpack.c.b16 %v7173, %v7157
    %v7910 = vpack.c.b16 %v7174, %v7158
    %v7911 = vpack.c.b16 %v7175, %v7159
    %v7912 = vpack.c.b16 %v7176, %v7160
    %v7913 = vpack.c.b16 %v7177, %v7161
    %v7914 = vpack.c.b16 %v7178, %v7162
    %v7915 = vpack.c.b16 %v7179, %v7163
    %v7916 = vpack.c.b16 %v7180, %v7164
    %v7917 = vpack.c.b16 %v7197, %v7181
    %v7918 = vpack.c.b16 %v7198, %v7182
    %v7919 = vpack.c.b16 %v7199, %v7183
    %v7920 = vpack.c.b16 %v7200, %v7184
    %v7921 = vpack.c.b16 %v7201, %v7185
    %v7922 = vpack.c.b16 %v7202, %v7186
    %v7923 = vpack.c.b16 %v7203, %v7187
    %v7924 = vpack.c.b16 %v7204, %v7188
    %v7925 = vpack.c.b16 %v7205, %v7189
    %v7926 = vpack.c.b16 %v7206, %v7190
    %v7927 = vpack.c.b16 %v7207, %v7191
    %v7928 = vpack.c.b16 %v7208, %v7192
    %v7929 = vpack.c.b16 %v7209, %v7193
    %v7930 = vpack.c.b16 %v7210, %v7194
    %v7931 = vpack.c.b16 %v7211, %v7195
    %v7932 = vpack.c.b16 %v7212, %v7196
    %v7933 = vpack.c.b16 %v7229, %v7213
    %v7934 = vpack.c.b16 %v7230, %v7214
    %v7935 = vpack.c.b16 %v7231, %v7215
    %v7936 = vpack.c.b16 %v7232, %v7216
    %v7937 = vpack.c.b16 %v7233, %v7217
    %v7938 = vpack.c.b16 %v7234, %v7218
    %v7939 = vpack.c.b16 %v7235, %v7219
    %v7940 = vpack.c.b16 %v7236, %v7220
    %v7941 = vpack.c.b16 %v7237, %v7221
    %v7942 = vpack.c.b16 %v7238, %v7222
    %v7943 = vpack.c.b16 %v7239, %v7223
    %v7944 = vpack.c.b16 %v7240, %v7224
    %v7945 = vpack.c.b16 %v7241, %v7225
    %v7946 = vpack.c.b16 %v7242, %v7226
    %v7947 = vpack.c.b16 %v7243, %v7227
    %v7948 = vpack.c.b16 %v7244, %v7228
    %v7949 = vpack.c.b16 %v7261, %v7245
    %v7950 = vpack.c.b16 %v7262, %v7246
    %v7951 = vpack.c.b16 %v7263, %v7247
    %v7952 = vpack.c.b16 %v7264, %v7248
    %v7953 = vpack.c.b16 %v7265, %v7249
    %v7954 = vpack.c.b16 %v7266, %v7250
    %v7955 = vpack.c.b16 %v7267, %v7251
    %v7956 = vpack.c.b16 %v7268, %v7252
    %v7957 = vpack.c.b16 %v7269, %v7253
    %v7958 = vpack.c.b16 %v7270, %v7254
    %v7959 = vpack.c.b16 %v7271, %v7255
    %v7960 = vpack.c.b16 %v7272, %v7256
    %v7961 = vpack.c.b16 %v7273, %v7257
    %v7962 = vpack.c.b16 %v7274, %v7258
    %v7963 = vpack.c.b16 %v7275, %v7259
    %v7964 = vpack.c.b16 %v7276, %v7260
    %v7965 = vpack.c.b16 %v7293, %v7277
    %v7966 = vpack.c.b16 %v7294, %v7278
    %v7967 = vpack.c.b16 %v7295, %v7279
    %v7968 = vpack.c.b16 %v7296, %v7280
    %v7969 = vpack.c.b16 %v7297, %v7281
    %v7970 = vpack.c.b16 %v7298, %v7282
    %v7971 = vpack.c.b16 %v7299, %v7283
    %v7972 = vpack.c.b16 %v7300, %v7284
    %v7973 = vpack.c.b16 %v7301, %v7285
    %v7974 = vpack.c.b16 %v7302, %v7286
    %v7975 = vpack.c.b16 %v7303, %v7287
    %v7976 = vpack.c.b16 %v7304, %v7288
    %v7977 = vpack.c.b16 %v7305, %v7289
    %v7978 = vpack.c.b16 %v7306, %v7290
    %v7979 = vpack.c.b16 %v7307, %v7291
    %v7980 = vpack.c.b16 %v7308, %v7292
    %v7981 = vpack.c.b16 %v7325, %v7309
    %v7982 = vpack.c.b16 %v7326, %v7310
    %v7983 = vpack.c.b16 %v7327, %v7311
    %v7984 = vpack.c.b16 %v7328, %v7312
    %v7985 = vpack.c.b16 %v7329, %v7313
    %v7986 = vpack.c.b16 %v7330, %v7314
    %v7987 = vpack.c.b16 %v7331, %v7315
    %v7988 = vpack.c.b16 %v7332, %v7316
    %v7989 = vpack.c.b16 %v7333, %v7317
    %v7990 = vpack.c.b16 %v7334, %v7318
    %v7991 = vpack.c.b16 %v7335, %v7319
    %v7992 = vpack.c.b16 %v7336, %v7320
    %v7993 = vpack.c.b16 %v7337, %v7321
    %v7994 = vpack.c.b16 %v7338, %v7322
    %v7995 = vpack.c.b16 %v7339, %v7323
    %v7996 = vpack.c.b16 %v7340, %v7324
    %v7997 = vpack.c.b16 %v7357, %v7341
    %v7998 = vpack.c.b16 %v7358, %v7342
    %v7999 = vpack.c.b16 %v7359, %v7343
    %v8000 = vpack.c.b16 %v7360, %v7344
    %v8001 = vpack.c.b16 %v7361, %v7345
    %v8002 = vpack.c.b16 %v7362, %v7346
    %v8003 = vpack.c.b16 %v7363, %v7347
    %v8004 = vpack.c.b16 %v7364, %v7348
    %v8005 = vpack.c.b16 %v7365, %v7349
    %v8006 = vpack.c.b16 %v7366, %v7350
    %v8007 = vpack.c.b16 %v7367, %v7351
    %v8008 = vpack.c.b16 %v7368, %v7352
    %v8009 = vpack.c.b16 %v7369, %v7353
    %v8010 = vpack.c.b16 %v7370, %v7354
    %v8011 = vpack.c.b16 %v7371, %v7355
    %v8012 = vpack.c.b16 %v7372, %v7356
    %v8013 = vpack.c.b16 %v7389, %v7373
    %v8014 = vpack.c.b16 %v7390, %v7374
    %v8015 = vpack.c.b16 %v7391, %v7375
    %v8016 = vpack.c.b16 %v7392, %v7376
    %v8017 = vpack.c.b16 %v7393, %v7377
    %v8018 = vpack.c.b16 %v7394, %v7378
    %v8019 = vpack.c.b16 %v7395, %v7379
    %v8020 = vpack.c.b16 %v7396, %v7380
    %v8021 = vpack.c.b16 %v7397, %v7381
    %v8022 = vpack.c.b16 %v7398, %v7382
    %v8023 = vpack.c.b16 %v7399, %v7383
    %v8024 = vpack.c.b16 %v7400, %v7384
    %v8025 = vpack.c.b16 %v7401, %v7385
    %v8026 = vpack.c.b16 %v7402, %v7386
    %v8027 = vpack.c.b16 %v7403, %v7387
    %v8028 = vpack.c.b16 %v7404, %v7388
    %v8029 = vpack.c.b16 %v7421, %v7405
    %v8030 = vpack.c.b16 %v7422, %v7406
    %v8031 = vpack.c.b16 %v7423, %v7407
    %v8032 = vpack.c.b16 %v7424, %v7408
    %v8033 = vpack.c.b16 %v7425, %v7409
    %v8034 = vpack.c.b16 %v7426, %v7410
    %v8035 = vpack.c.b16 %v7427, %v7411
    %v8036 = vpack.c.b16 %v7428, %v7412
    %v8037 = vpack.c.b16 %v7429, %v7413
    %v8038 = vpack.c.b16 %v7430, %v7414
    %v8039 = vpack.c.b16 %v7431, %v7415
    %v8040 = vpack.c.b16 %v7432, %v7416
    %v8041 = vpack.c.b16 %v7433, %v7417
    %v8042 = vpack.c.b16 %v7434, %v7418
    %v8043 = vpack.c.b16 %v7435, %v7419
    %v8044 = vpack.c.b16 %v7436, %v7420
    %v8045 = vpack.c.b16 %v7453, %v7437
    %v8046 = vpack.c.b16 %v7454, %v7438
    %v8047 = vpack.c.b16 %v7455, %v7439
    %v8048 = vpack.c.b16 %v7456, %v7440
    %v8049 = vpack.c.b16 %v7457, %v7441
    %v8050 = vpack.c.b16 %v7458, %v7442
    %v8051 = vpack.c.b16 %v7459, %v7443
    %v8052 = vpack.c.b16 %v7460, %v7444
    %v8053 = vpack.c.b16 %v7461, %v7445
    %v8054 = vpack.c.b16 %v7462, %v7446
    %v8055 = vpack.c.b16 %v7463, %v7447
    %v8056 = vpack.c.b16 %v7464, %v7448
    %v8057 = vpack.c.b16 %v7465, %v7449
    %v8058 = vpack.c.b16 %v7466, %v7450
    %v8059 = vpack.c.b16 %v7467, %v7451
    %v8060 = vpack.c.b16 %v7468, %v7452
    %v8061 = vpack.c.b16 %v7485, %v7469
    %v8062 = vpack.c.b16 %v7486, %v7470
    %v8063 = vpack.c.b16 %v7487, %v7471
    %v8064 = vpack.c.b16 %v7488, %v7472
    %v8065 = vpack.c.b16 %v7489, %v7473
    %v8066 = vpack.c.b16 %v7490, %v7474
    %v8067 = vpack.c.b16 %v7491, %v7475
    %v8068 = vpack.c.b16 %v7492, %v7476
    %v8069 = vpack.c.b16 %v7493, %v7477
    %v8070 = vpack.c.b16 %v7494, %v7478
    %v8071 = vpack.c.b16 %v7495, %v7479
    %v8072 = vpack.c.b16 %v7496, %v7480
    %v8073 = vpack.c.b16 %v7497, %v7481
    %v8074 = vpack.c.b16 %v7498, %v7482
    %v8075 = vpack.c.b16 %v7499, %v7483
    %v8076 = vpack.c.b16 %v7500, %v7484
    %v8077 = vpack.c.b16 %v7517, %v7501
    %v8078 = vpack.c.b16 %v7518, %v7502
    %v8079 = vpack.c.b16 %v7519, %v7503
    %v8080 = vpack.c.b16 %v7520, %v7504
    %v8081 = vpack.c.b16 %v7521, %v7505
    %v8082 = vpack.c.b16 %v7522, %v7506
    %v8083 = vpack.c.b16 %v7523, %v7507
    %v8084 = vpack.c.b16 %v7524, %v7508
    %v8085 = vpack.c.b16 %v7525, %v7509
    %v8086 = vpack.c.b16 %v7526, %v7510
    %v8087 = vpack.c.b16 %v7527, %v7511
    %v8088 = vpack.c.b16 %v7528, %v7512
    %v8089 = vpack.c.b16 %v7529, %v7513
    %v8090 = vpack.c.b16 %v7530, %v7514
    %v8091 = vpack.c.b16 %v7531, %v7515
    %v8092 = vpack.c.b16 %v7532, %v7516
    %v8093 = vpack.c.b16 %v7549, %v7533
    %v8094 = vpack.c.b16 %v7550, %v7534
    %v8095 = vpack.c.b16 %v7551, %v7535
    %v8096 = vpack.c.b16 %v7552, %v7536
    %v8097 = vpack.c.b16 %v7553, %v7537
    %v8098 = vpack.c.b16 %v7554, %v7538
    %v8099 = vpack.c.b16 %v7555, %v7539
    %v8100 = vpack.c.b16 %v7556, %v7540
    %v8101 = vpack.c.b16 %v7557, %v7541
    %v8102 = vpack.c.b16 %v7558, %v7542
    %v8103 = vpack.c.b16 %v7559, %v7543
    %v8104 = vpack.c.b16 %v7560, %v7544
    %v8105 = vpack.c.b16 %v7561, %v7545
    %v8106 = vpack.c.b16 %v7562, %v7546
    %v8107 = vpack.c.b16 %v7563, %v7547
    %v8108 = vpack.c.b16 %v7564, %v7548
    %v8109 = vpack.c.b16 %v7581, %v7565
    %v8110 = vpack.c.b16 %v7582, %v7566
    %v8111 = vpack.c.b16 %v7583, %v7567
    %v8112 = vpack.c.b16 %v7584, %v7568
    %v8113 = vpack.c.b16 %v7585, %v7569
    %v8114 = vpack.c.b16 %v7586, %v7570
    %v8115 = vpack.c.b16 %v7587, %v7571
    %v8116 = vpack.c.b16 %v7588, %v7572
    %v8117 = vpack.c.b16 %v7589, %v7573
    %v8118 = vpack.c.b16 %v7590, %v7574
    %v8119 = vpack.c.b16 %v7591, %v7575
    %v8120 = vpack.c.b16 %v7592, %v7576
    %v8121 = vpack.c.b16 %v7593, %v7577
    %v8122 = vpack.c.b16 %v7594, %v7578
    %v8123 = vpack.c.b16 %v7595, %v7579
    %v8124 = vpack.c.b16 %v7596, %v7580
    %v8125 = vpack.c.b16 %v7613, %v7597
    %v8126 = vpack.c.b16 %v7614, %v7598
    %v8127 = vpack.c.b16 %v7615, %v7599
    %v8128 = vpack.c.b16 %v7616, %v7600
    %v8129 = vpack.c.b16 %v7617, %v7601
    %v8130 = vpack.c.b16 %v7618, %v7602
    %v8131 = vpack.c.b16 %v7619, %v7603
    %v8132 = vpack.c.b16 %v7620, %v7604
    %v8133 = vpack.c.b16 %v7621, %v7605
    %v8134 = vpack.c.b16 %v7622, %v7606
    %v8135 = vpack.c.b16 %v7623, %v7607
    %v8136 = vpack.c.b16 %v7624, %v7608
    %v8137 = vpack.c.b16 %v7625, %v7609
    %v8138 = vpack.c.b16 %v7626, %v7610
    %v8139 = vpack.c.b16 %v7627, %v7611
    %v8140 = vpack.c.b16 %v7628, %v7612
    %8653 = vmatprep.subr.bf16.mxu0 %v7630
    %8654 = vmatpush1.bf16.msra.mxu0 %v7629
    %8655 = vmatprep.subr.bf16.mxu0 %v7646
    %8656 = vmatpush1.bf16.msra.mxu0 %v7645
    %8657 = vmatprep.subr.bf16.mxu0 %v7662
    %8658 = vmatpush1.bf16.msra.mxu0 %v7661
    %8659 = vmatprep.subr.bf16.mxu0 %v7678
    %8660 = vmatpush1.bf16.msra.mxu0 %v7677
    %8661 = vmatprep.subr.bf16.mxu0 %v7694
    %8662 = vmatpush1.bf16.msra.mxu0 %v7693
    %8663 = vmatprep.subr.bf16.mxu0 %v7710
    %8664 = vmatpush1.bf16.msra.mxu0 %v7709
    %8665 = vmatprep.subr.bf16.mxu0 %v7726
    %8666 = vmatpush1.bf16.msra.mxu0 %v7725
    %8667 = vmatprep.subr.bf16.mxu0 %v7742
    %8668 = vmatpush1.bf16.msra.mxu0 %v7741
    %8669 = vmatprep.subr.bf16.mxu0 %v7758
    %8670 = vmatpush1.bf16.msra.mxu0 %v7757
    %8671 = vmatprep.subr.bf16.mxu0 %v7774
    %8672 = vmatpush1.bf16.msra.mxu0 %v7773
    %8673 = vmatprep.subr.bf16.mxu0 %v7790
    %8674 = vmatpush1.bf16.msra.mxu0 %v7789
    %8675 = vmatprep.subr.bf16.mxu0 %v7806
    %8676 = vmatpush1.bf16.msra.mxu0 %v7805
    %8677 = vmatprep.subr.bf16.mxu0 %v7822
    %8678 = vmatpush1.bf16.msra.mxu0 %v7821
    %8679 = vmatprep.subr.bf16.mxu0 %v7838
    %8680 = vmatpush1.bf16.msra.mxu0 %v7837
    %8681 = vmatprep.subr.bf16.mxu0 %v7854
    %8682 = vmatpush1.bf16.msra.mxu0 %v7853
    %8683 = vmatprep.subr.bf16.mxu0 %v7870
    %8684 = vmatpush1.bf16.msra.mxu0 %v7869
    %8685 = vmatprep.mubr.bf16.mxu0 %v5494
    %8686 = vmatmul.mubr.bf16.gmra.mrb[0].mxu0 %v5493
    %v8687 = vpop.f32.mrb[0].mxu0
    %v8688 = vadd.f32 %v6016, %v8687
    %v8689 = vpop.f32.mrb[0].mxu0
    %v8690 = vadd.f32 %v6020, %v8689
    %v8691 = vpop.f32.mrb[0].mxu0
    %v8692 = vpop.f32.mrb[0].mxu0
    %8693 = vdwg.mxu0
    %8694 = vmatprep.subr.bf16.mxu0 %v7886
    %8695 = vmatpush1.bf16.msra.mxu0 %v7885
    %8696 = vmatprep.subr.bf16.mxu0 %v7902
    %8697 = vmatpush1.bf16.msra.mxu0 %v7901
    %8698 = vmatprep.subr.bf16.mxu0 %v7918
    %8699 = vmatpush1.bf16.msra.mxu0 %v7917
    %8700 = vmatprep.subr.bf16.mxu0 %v7934
    %8701 = vmatpush1.bf16.msra.mxu0 %v7933
    %8702 = vmatprep.subr.bf16.mxu0 %v7950
    %8703 = vmatpush1.bf16.msra.mxu0 %v7949
    %8704 = vmatprep.subr.bf16.mxu0 %v7966
    %8705 = vmatpush1.bf16.msra.mxu0 %v7965
    %8706 = vmatprep.subr.bf16.mxu0 %v7982
    %8707 = vmatpush1.bf16.msra.mxu0 %v7981
    %8708 = vmatprep.subr.bf16.mxu0 %v7998
    %8709 = vmatpush1.bf16.msra.mxu0 %v7997
    %8710 = vmatprep.subr.bf16.mxu0 %v8014
    %8711 = vmatpush1.bf16.msra.mxu0 %v8013
    %8712 = vmatprep.subr.bf16.mxu0 %v8030
    %8713 = vmatpush1.bf16.msra.mxu0 %v8029
    %8714 = vmatprep.subr.bf16.mxu0 %v8046
    %8715 = vmatpush1.bf16.msra.mxu0 %v8045
    %8716 = vmatprep.subr.bf16.mxu0 %v8062
    %8717 = vmatpush1.bf16.msra.mxu0 %v8061
    %8718 = vmatprep.subr.bf16.mxu0 %v8078
    %8719 = vmatpush1.bf16.msra.mxu0 %v8077
    %8720 = vmatprep.subr.bf16.mxu0 %v8094
    %8721 = vmatpush1.bf16.msra.mxu0 %v8093
    %8722 = vmatprep.subr.bf16.mxu0 %v8110
    %8723 = vmatpush1.bf16.msra.mxu0 %v8109
    %8724 = vmatprep.subr.bf16.mxu0 %v8126
    %8725 = vmatpush1.bf16.msra.mxu0 %v8125
    %8726 = vmatprep.mubr.bf16.mxu0 %v5496
    %8727 = vmatmul.mubr.bf16.gmra.mrb[0].mxu0 %v5495
    %v8728 = vpop.f32.mrb[0].mxu0
    %v8729 = vadd.f32 %v8688, %v8728
    %v8730 = vpop.f32.mrb[0].mxu0
    %v8731 = vadd.f32 %v8690, %v8730
    %v8732 = vpop.f32.mrb[0].mxu0
    %v8733 = vpop.f32.mrb[0].mxu0
    %8734 = vdwg.mxu0
    %8735 = vmatprep.subr.bf16.mxu0 %v7632
    %8736 = vmatpush1.bf16.msra.mxu0 %v7631
    %8737 = vmatprep.subr.bf16.mxu0 %v7648
    %8738 = vmatpush1.bf16.msra.mxu0 %v7647
    %8739 = vmatprep.subr.bf16.mxu0 %v7664
    %8740 = vmatpush1.bf16.msra.mxu0 %v7663
    %8741 = vmatprep.subr.bf16.mxu0 %v7680
    %8742 = vmatpush1.bf16.msra.mxu0 %v7679
    %8743 = vmatprep.subr.bf16.mxu0 %v7696
    %8744 = vmatpush1.bf16.msra.mxu0 %v7695
    %8745 = vmatprep.subr.bf16.mxu0 %v7712
    %8746 = vmatpush1.bf16.msra.mxu0 %v7711
    %8747 = vmatprep.subr.bf16.mxu0 %v7728
    %8748 = vmatpush1.bf16.msra.mxu0 %v7727
    %8749 = vmatprep.subr.bf16.mxu0 %v7744
    %8750 = vmatpush1.bf16.msra.mxu0 %v7743
    %8751 = vmatprep.subr.bf16.mxu0 %v7760
    %8752 = vmatpush1.bf16.msra.mxu0 %v7759
    %8753 = vmatprep.subr.bf16.mxu0 %v7776
    %8754 = vmatpush1.bf16.msra.mxu0 %v7775
    %8755 = vmatprep.subr.bf16.mxu0 %v7792
    %8756 = vmatpush1.bf16.msra.mxu0 %v7791
    %8757 = vmatprep.subr.bf16.mxu0 %v7808
    %8758 = vmatpush1.bf16.msra.mxu0 %v7807
    %8759 = vmatprep.subr.bf16.mxu0 %v7824
    %8760 = vmatpush1.bf16.msra.mxu0 %v7823
    %8761 = vmatprep.subr.bf16.mxu0 %v7840
    %8762 = vmatpush1.bf16.msra.mxu0 %v7839
    %8763 = vmatprep.subr.bf16.mxu0 %v7856
    %8764 = vmatpush1.bf16.msra.mxu0 %v7855
    %8765 = vmatprep.subr.bf16.mxu0 %v7872
    %8766 = vmatpush1.bf16.msra.mxu0 %v7871
    %8767 = vmatprep.mubr.bf16.mxu0 %v5494
    %8768 = vmatmul.mubr.bf16.gmra.mrb[0].mxu0 %v5493
    %v8769 = vpop.f32.mrb[0].mxu0
    %v8770 = vadd.f32 %v6024, %v8769
    %v8771 = vpop.f32.mrb[0].mxu0
    %v8772 = vadd.f32 %v6028, %v8771
    %v8773 = vpop.f32.mrb[0].mxu0
    %v8774 = vpop.f32.mrb[0].mxu0
    %8775 = vdwg.mxu0
    %8776 = vmatprep.subr.bf16.mxu0 %v7888
    %8777 = vmatpush1.bf16.msra.mxu0 %v7887
    %8778 = vmatprep.subr.bf16.mxu0 %v7904
    %8779 = vmatpush1.bf16.msra.mxu0 %v7903
    %8780 = vmatprep.subr.bf16.mxu0 %v7920
    %8781 = vmatpush1.bf16.msra.mxu0 %v7919
    %8782 = vmatprep.subr.bf16.mxu0 %v7936
    %8783 = vmatpush1.bf16.msra.mxu0 %v7935
    %8784 = vmatprep.subr.bf16.mxu0 %v7952
    %8785 = vmatpush1.bf16.msra.mxu0 %v7951
    %8786 = vmatprep.subr.bf16.mxu0 %v7968
    %8787 = vmatpush1.bf16.msra.mxu0 %v7967
    %8788 = vmatprep.subr.bf16.mxu0 %v7984
    %8789 = vmatpush1.bf16.msra.mxu0 %v7983
    %8790 = vmatprep.subr.bf16.mxu0 %v8000
    %8791 = vmatpush1.bf16.msra.mxu0 %v7999
    %8792 = vmatprep.subr.bf16.mxu0 %v8016
    %8793 = vmatpush1.bf16.msra.mxu0 %v8015
    %8794 = vmatprep.subr.bf16.mxu0 %v8032
    %8795 = vmatpush1.bf16.msra.mxu0 %v8031
    %8796 = vmatprep.subr.bf16.mxu0 %v8048
    %8797 = vmatpush1.bf16.msra.mxu0 %v8047
    %8798 = vmatprep.subr.bf16.mxu0 %v8064
    %8799 = vmatpush1.bf16.msra.mxu0 %v8063
    %8800 = vmatprep.subr.bf16.mxu0 %v8080
    %8801 = vmatpush1.bf16.msra.mxu0 %v8079
    %8802 = vmatprep.subr.bf16.mxu0 %v8096
    %8803 = vmatpush1.bf16.msra.mxu0 %v8095
    %8804 = vmatprep.subr.bf16.mxu0 %v8112
    %8805 = vmatpush1.bf16.msra.mxu0 %v8111
    %8806 = vmatprep.subr.bf16.mxu0 %v8128
    %8807 = vmatpush1.bf16.msra.mxu0 %v8127
    %8808 = vmatprep.mubr.bf16.mxu0 %v5496
    %8809 = vmatmul.mubr.bf16.gmra.mrb[0].mxu0 %v5495
    %v8810 = vpop.f32.mrb[0].mxu0
    %v8811 = vadd.f32 %v8770, %v8810
    %v8812 = vpop.f32.mrb[0].mxu0
    %v8813 = vadd.f32 %v8772, %v8812
    %v8814 = vpop.f32.mrb[0].mxu0
    %v8815 = vpop.f32.mrb[0].mxu0
    %8816 = vdwg.mxu0
    %8817 = vmatprep.subr.bf16.mxu0 %v7634
    %8818 = vmatpush1.bf16.msra.mxu0 %v7633
    %8819 = vmatprep.subr.bf16.mxu0 %v7650
    %8820 = vmatpush1.bf16.msra.mxu0 %v7649
    %8821 = vmatprep.subr.bf16.mxu0 %v7666
    %8822 = vmatpush1.bf16.msra.mxu0 %v7665
    %8823 = vmatprep.subr.bf16.mxu0 %v7682
    %8824 = vmatpush1.bf16.msra.mxu0 %v7681
    %8825 = vmatprep.subr.bf16.mxu0 %v7698
    %8826 = vmatpush1.bf16.msra.mxu0 %v7697
    %8827 = vmatprep.subr.bf16.mxu0 %v7714
    %8828 = vmatpush1.bf16.msra.mxu0 %v7713
    %8829 = vmatprep.subr.bf16.mxu0 %v7730
    %8830 = vmatpush1.bf16.msra.mxu0 %v7729
    %8831 = vmatprep.subr.bf16.mxu0 %v7746
    %8832 = vmatpush1.bf16.msra.mxu0 %v7745
    %8833 = vmatprep.subr.bf16.mxu0 %v7762
    %8834 = vmatpush1.bf16.msra.mxu0 %v7761
    %8835 = vmatprep.subr.bf16.mxu0 %v7778
    %8836 = vmatpush1.bf16.msra.mxu0 %v7777
    %8837 = vmatprep.subr.bf16.mxu0 %v7794
    %8838 = vmatpush1.bf16.msra.mxu0 %v7793
    %8839 = vmatprep.subr.bf16.mxu0 %v7810
    %8840 = vmatpush1.bf16.msra.mxu0 %v7809
    %8841 = vmatprep.subr.bf16.mxu0 %v7826
    %8842 = vmatpush1.bf16.msra.mxu0 %v7825
    %8843 = vmatprep.subr.bf16.mxu0 %v7842
    %8844 = vmatpush1.bf16.msra.mxu0 %v7841
    %8845 = vmatprep.subr.bf16.mxu0 %v7858
    %8846 = vmatpush1.bf16.msra.mxu0 %v7857
    %8847 = vmatprep.subr.bf16.mxu0 %v7874
    %8848 = vmatpush1.bf16.msra.mxu0 %v7873
    %8849 = vmatprep.mubr.bf16.mxu0 %v5494
    %8850 = vmatmul.mubr.bf16.gmra.mrb[0].mxu0 %v5493
    %v8851 = vpop.f32.mrb[0].mxu0
    %v8852 = vadd.f32 %v6032, %v8851
    %v8853 = vpop.f32.mrb[0].mxu0
    %v8854 = vadd.f32 %v6036, %v8853
    %v8855 = vpop.f32.mrb[0].mxu0
    %v8856 = vpop.f32.mrb[0].mxu0
    %8857 = vdwg.mxu0
    %8858 = vmatprep.subr.bf16.mxu0 %v7890
    %8859 = vmatpush1.bf16.msra.mxu0 %v7889
    %8860 = vmatprep.subr.bf16.mxu0 %v7906
    %8861 = vmatpush1.bf16.msra.mxu0 %v7905
    %8862 = vmatprep.subr.bf16.mxu0 %v7922
    %8863 = vmatpush1.bf16.msra.mxu0 %v7921
    %8864 = vmatprep.subr.bf16.mxu0 %v7938
    %8865 = vmatpush1.bf16.msra.mxu0 %v7937
    %8866 = vmatprep.subr.bf16.mxu0 %v7954
    %8867 = vmatpush1.bf16.msra.mxu0 %v7953
    %8868 = vmatprep.subr.bf16.mxu0 %v7970
    %8869 = vmatpush1.bf16.msra.mxu0 %v7969
    %8870 = vmatprep.subr.bf16.mxu0 %v7986
    %8871 = vmatpush1.bf16.msra.mxu0 %v7985
    %8872 = vmatprep.subr.bf16.mxu0 %v8002
    %8873 = vmatpush1.bf16.msra.mxu0 %v8001
    %8874 = vmatprep.subr.bf16.mxu0 %v8018
    %8875 = vmatpush1.bf16.msra.mxu0 %v8017
    %8876 = vmatprep.subr.bf16.mxu0 %v8034
    %8877 = vmatpush1.bf16.msra.mxu0 %v8033
    %8878 = vmatprep.subr.bf16.mxu0 %v8050
    %8879 = vmatpush1.bf16.msra.mxu0 %v8049
    %8880 = vmatprep.subr.bf16.mxu0 %v8066
    %8881 = vmatpush1.bf16.msra.mxu0 %v8065
    %8882 = vmatprep.subr.bf16.mxu0 %v8082
    %8883 = vmatpush1.bf16.msra.mxu0 %v8081
    %8884 = vmatprep.subr.bf16.mxu0 %v8098
    %8885 = vmatpush1.bf16.msra.mxu0 %v8097
    %8886 = vmatprep.subr.bf16.mxu0 %v8114
    %8887 = vmatpush1.bf16.msra.mxu0 %v8113
    %8888 = vmatprep.subr.bf16.mxu0 %v8130
    %8889 = vmatpush1.bf16.msra.mxu0 %v8129
    %8890 = vmatprep.mubr.bf16.mxu0 %v5496
    %8891 = vmatmul.mubr.bf16.gmra.mrb[0].mxu0 %v5495
    %v8892 = vpop.f32.mrb[0].mxu0
    %v8893 = vadd.f32 %v8852, %v8892
    %v8894 = vpop.f32.mrb[0].mxu0
    %v8895 = vadd.f32 %v8854, %v8894
    %v8896 = vpop.f32.mrb[0].mxu0
    %v8897 = vpop.f32.mrb[0].mxu0
    %8898 = vdwg.mxu0
    %8899 = vmatprep.subr.bf16.mxu0 %v7636
    %8900 = vmatpush1.bf16.msra.mxu0 %v7635
    %8901 = vmatprep.subr.bf16.mxu0 %v7652
    %8902 = vmatpush1.bf16.msra.mxu0 %v7651
    %8903 = vmatprep.subr.bf16.mxu0 %v7668
    %8904 = vmatpush1.bf16.msra.mxu0 %v7667
    %8905 = vmatprep.subr.bf16.mxu0 %v7684
    %8906 = vmatpush1.bf16.msra.mxu0 %v7683
    %8907 = vmatprep.subr.bf16.mxu0 %v7700
    %8908 = vmatpush1.bf16.msra.mxu0 %v7699
    %8909 = vmatprep.subr.bf16.mxu0 %v7716
    %8910 = vmatpush1.bf16.msra.mxu0 %v7715
    %8911 = vmatprep.subr.bf16.mxu0 %v7732
    %8912 = vmatpush1.bf16.msra.mxu0 %v7731
    %8913 = vmatprep.subr.bf16.mxu0 %v7748
    %8914 = vmatpush1.bf16.msra.mxu0 %v7747
    %8915 = vmatprep.subr.bf16.mxu0 %v7764
    %8916 = vmatpush1.bf16.msra.mxu0 %v7763
    %8917 = vmatprep.subr.bf16.mxu0 %v7780
    %8918 = vmatpush1.bf16.msra.mxu0 %v7779
    %8919 = vmatprep.subr.bf16.mxu0 %v7796
    %8920 = vmatpush1.bf16.msra.mxu0 %v7795
    %8921 = vmatprep.subr.bf16.mxu0 %v7812
    %8922 = vmatpush1.bf16.msra.mxu0 %v7811
    %8923 = vmatprep.subr.bf16.mxu0 %v7828
    %8924 = vmatpush1.bf16.msra.mxu0 %v7827
    %8925 = vmatprep.subr.bf16.mxu0 %v7844
    %8926 = vmatpush1.bf16.msra.mxu0 %v7843
    %8927 = vmatprep.subr.bf16.mxu0 %v7860
    %8928 = vmatpush1.bf16.msra.mxu0 %v7859
    %8929 = vmatprep.subr.bf16.mxu0 %v7876
    %8930 = vmatpush1.bf16.msra.mxu0 %v7875
    %8931 = vmatprep.mubr.bf16.mxu0 %v5494
    %8932 = vmatmul.mubr.bf16.gmra.mrb[0].mxu0 %v5493
    %v8933 = vpop.f32.mrb[0].mxu0
    %v8934 = vadd.f32 %v6040, %v8933
    %v8935 = vpop.f32.mrb[0].mxu0
    %v8936 = vadd.f32 %v6044, %v8935
    %v8937 = vpop.f32.mrb[0].mxu0
    %v8938 = vpop.f32.mrb[0].mxu0
    %8939 = vdwg.mxu0
    %8940 = vmatprep.subr.bf16.mxu0 %v7892
    %8941 = vmatpush1.bf16.msra.mxu0 %v7891
    %8942 = vmatprep.subr.bf16.mxu0 %v7908
    %8943 = vmatpush1.bf16.msra.mxu0 %v7907
    %8944 = vmatprep.subr.bf16.mxu0 %v7924
    %8945 = vmatpush1.bf16.msra.mxu0 %v7923
    %8946 = vmatprep.subr.bf16.mxu0 %v7940
    %8947 = vmatpush1.bf16.msra.mxu0 %v7939
    %8948 = vmatprep.subr.bf16.mxu0 %v7956
    %8949 = vmatpush1.bf16.msra.mxu0 %v7955
    %8950 = vmatprep.subr.bf16.mxu0 %v7972
    %8951 = vmatpush1.bf16.msra.mxu0 %v7971
    %8952 = vmatprep.subr.bf16.mxu0 %v7988
    %8953 = vmatpush1.bf16.msra.mxu0 %v7987
    %8954 = vmatprep.subr.bf16.mxu0 %v8004
    %8955 = vmatpush1.bf16.msra.mxu0 %v8003
    %8956 = vmatprep.subr.bf16.mxu0 %v8020
    %8957 = vmatpush1.bf16.msra.mxu0 %v8019
    %8958 = vmatprep.subr.bf16.mxu0 %v8036
    %8959 = vmatpush1.bf16.msra.mxu0 %v8035
    %8960 = vmatprep.subr.bf16.mxu0 %v8052
    %8961 = vmatpush1.bf16.msra.mxu0 %v8051
    %8962 = vmatprep.subr.bf16.mxu0 %v8068
    %8963 = vmatpush1.bf16.msra.mxu0 %v8067
    %8964 = vmatprep.subr.bf16.mxu0 %v8084
    %8965 = vmatpush1.bf16.msra.mxu0 %v8083
    %8966 = vmatprep.subr.bf16.mxu0 %v8100
    %8967 = vmatpush1.bf16.msra.mxu0 %v8099
    %8968 = vmatprep.subr.bf16.mxu0 %v8116
    %8969 = vmatpush1.bf16.msra.mxu0 %v8115
    %8970 = vmatprep.subr.bf16.mxu0 %v8132
    %8971 = vmatpush1.bf16.msra.mxu0 %v8131
    %8972 = vmatprep.mubr.bf16.mxu0 %v5496
    %8973 = vmatmul.mubr.bf16.gmra.mrb[0].mxu0 %v5495
    %v8974 = vpop.f32.mrb[0].mxu0
    %v8975 = vadd.f32 %v8934, %v8974
    %v8976 = vpop.f32.mrb[0].mxu0
    %v8977 = vadd.f32 %v8936, %v8976
    %v8978 = vpop.f32.mrb[0].mxu0
    %v8979 = vpop.f32.mrb[0].mxu0
    %8980 = vdwg.mxu0
    %8981 = vmatprep.subr.bf16.mxu0 %v7638
    %8982 = vmatpush1.bf16.msra.mxu0 %v7637
    %8983 = vmatprep.subr.bf16.mxu0 %v7654
    %8984 = vmatpush1.bf16.msra.mxu0 %v7653
    %8985 = vmatprep.subr.bf16.mxu0 %v7670
    %8986 = vmatpush1.bf16.msra.mxu0 %v7669
    %8987 = vmatprep.subr.bf16.mxu0 %v7686
    %8988 = vmatpush1.bf16.msra.mxu0 %v7685
    %8989 = vmatprep.subr.bf16.mxu0 %v7702
    %8990 = vmatpush1.bf16.msra.mxu0 %v7701
    %8991 = vmatprep.subr.bf16.mxu0 %v7718
    %8992 = vmatpush1.bf16.msra.mxu0 %v7717
    %8993 = vmatprep.subr.bf16.mxu0 %v7734
    %8994 = vmatpush1.bf16.msra.mxu0 %v7733
    %8995 = vmatprep.subr.bf16.mxu0 %v7750
    %8996 = vmatpush1.bf16.msra.mxu0 %v7749
    %8997 = vmatprep.subr.bf16.mxu0 %v7766
    %8998 = vmatpush1.bf16.msra.mxu0 %v7765
    %8999 = vmatprep.subr.bf16.mxu0 %v7782
    %9000 = vmatpush1.bf16.msra.mxu0 %v7781
    %9001 = vmatprep.subr.bf16.mxu0 %v7798
    %9002 = vmatpush1.bf16.msra.mxu0 %v7797
    %9003 = vmatprep.subr.bf16.mxu0 %v7814
    %9004 = vmatpush1.bf16.msra.mxu0 %v7813
    %9005 = vmatprep.subr.bf16.mxu0 %v7830
    %9006 = vmatpush1.bf16.msra.mxu0 %v7829
    %9007 = vmatprep.subr.bf16.mxu0 %v7846
    %9008 = vmatpush1.bf16.msra.mxu0 %v7845
    %9009 = vmatprep.subr.bf16.mxu0 %v7862
    %9010 = vmatpush1.bf16.msra.mxu0 %v7861
    %9011 = vmatprep.subr.bf16.mxu0 %v7878
    %9012 = vmatpush1.bf16.msra.mxu0 %v7877
    %9013 = vmatprep.mubr.bf16.mxu0 %v5494
    %9014 = vmatmul.mubr.bf16.gmra.mrb[0].mxu0 %v5493
    %v9015 = vpop.f32.mrb[0].mxu0
    %v9016 = vadd.f32 %v6048, %v9015
    %v9017 = vpop.f32.mrb[0].mxu0
    %v9018 = vadd.f32 %v6052, %v9017
    %v9019 = vpop.f32.mrb[0].mxu0
    %v9020 = vpop.f32.mrb[0].mxu0
    %9021 = vdwg.mxu0
    %9022 = vmatprep.subr.bf16.mxu0 %v7894
    %9023 = vmatpush1.bf16.msra.mxu0 %v7893
    %9024 = vmatprep.subr.bf16.mxu0 %v7910
    %9025 = vmatpush1.bf16.msra.mxu0 %v7909
    %9026 = vmatprep.subr.bf16.mxu0 %v7926
    %9027 = vmatpush1.bf16.msra.mxu0 %v7925
    %9028 = vmatprep.subr.bf16.mxu0 %v7942
    %9029 = vmatpush1.bf16.msra.mxu0 %v7941
    %9030 = vmatprep.subr.bf16.mxu0 %v7958
    %9031 = vmatpush1.bf16.msra.mxu0 %v7957
    %9032 = vmatprep.subr.bf16.mxu0 %v7974
    %9033 = vmatpush1.bf16.msra.mxu0 %v7973
    %9034 = vmatprep.subr.bf16.mxu0 %v7990
    %9035 = vmatpush1.bf16.msra.mxu0 %v7989
    %9036 = vmatprep.subr.bf16.mxu0 %v8006
    %9037 = vmatpush1.bf16.msra.mxu0 %v8005
    %9038 = vmatprep.subr.bf16.mxu0 %v8022
    %9039 = vmatpush1.bf16.msra.mxu0 %v8021
    %9040 = vmatprep.subr.bf16.mxu0 %v8038
    %9041 = vmatpush1.bf16.msra.mxu0 %v8037
    %9042 = vmatprep.subr.bf16.mxu0 %v8054
    %9043 = vmatpush1.bf16.msra.mxu0 %v8053
    %9044 = vmatprep.subr.bf16.mxu0 %v8070
    %9045 = vmatpush1.bf16.msra.mxu0 %v8069
    %9046 = vmatprep.subr.bf16.mxu0 %v8086
    %9047 = vmatpush1.bf16.msra.mxu0 %v8085
    %9048 = vmatprep.subr.bf16.mxu0 %v8102
    %9049 = vmatpush1.bf16.msra.mxu0 %v8101
    %9050 = vmatprep.subr.bf16.mxu0 %v8118
    %9051 = vmatpush1.bf16.msra.mxu0 %v8117
    %9052 = vmatprep.subr.bf16.mxu0 %v8134
    %9053 = vmatpush1.bf16.msra.mxu0 %v8133
    %9054 = vmatprep.mubr.bf16.mxu0 %v5496
    %9055 = vmatmul.mubr.bf16.gmra.mrb[0].mxu0 %v5495
    %v9056 = vpop.f32.mrb[0].mxu0
    %v9057 = vadd.f32 %v9016, %v9056
    %v9058 = vpop.f32.mrb[0].mxu0
    %v9059 = vadd.f32 %v9018, %v9058
    %v9060 = vpop.f32.mrb[0].mxu0
    %v9061 = vpop.f32.mrb[0].mxu0
    %9062 = vdwg.mxu0
    %9063 = vmatprep.subr.bf16.mxu0 %v7640
    %9064 = vmatpush1.bf16.msra.mxu0 %v7639
    %9065 = vmatprep.subr.bf16.mxu0 %v7656
    %9066 = vmatpush1.bf16.msra.mxu0 %v7655
    %9067 = vmatprep.subr.bf16.mxu0 %v7672
    %9068 = vmatpush1.bf16.msra.mxu0 %v7671
    %9069 = vmatprep.subr.bf16.mxu0 %v7688
    %9070 = vmatpush1.bf16.msra.mxu0 %v7687
    %9071 = vmatprep.subr.bf16.mxu0 %v7704
    %9072 = vmatpush1.bf16.msra.mxu0 %v7703
    %9073 = vmatprep.subr.bf16.mxu0 %v7720
    %9074 = vmatpush1.bf16.msra.mxu0 %v7719
    %9075 = vmatprep.subr.bf16.mxu0 %v7736
    %9076 = vmatpush1.bf16.msra.mxu0 %v7735
    %9077 = vmatprep.subr.bf16.mxu0 %v7752
    %9078 = vmatpush1.bf16.msra.mxu0 %v7751
    %9079 = vmatprep.subr.bf16.mxu0 %v7768
    %9080 = vmatpush1.bf16.msra.mxu0 %v7767
    %9081 = vmatprep.subr.bf16.mxu0 %v7784
    %9082 = vmatpush1.bf16.msra.mxu0 %v7783
    %9083 = vmatprep.subr.bf16.mxu0 %v7800
    %9084 = vmatpush1.bf16.msra.mxu0 %v7799
    %9085 = vmatprep.subr.bf16.mxu0 %v7816
    %9086 = vmatpush1.bf16.msra.mxu0 %v7815
    %9087 = vmatprep.subr.bf16.mxu0 %v7832
    %9088 = vmatpush1.bf16.msra.mxu0 %v7831
    %9089 = vmatprep.subr.bf16.mxu0 %v7848
    %9090 = vmatpush1.bf16.msra.mxu0 %v7847
    %9091 = vmatprep.subr.bf16.mxu0 %v7864
    %9092 = vmatpush1.bf16.msra.mxu0 %v7863
    %9093 = vmatprep.subr.bf16.mxu0 %v7880
    %9094 = vmatpush1.bf16.msra.mxu0 %v7879
    %9095 = vmatprep.mubr.bf16.mxu0 %v5494
    %9096 = vmatmul.mubr.bf16.gmra.mrb[0].mxu0 %v5493
    %v9097 = vpop.f32.mrb[0].mxu0
    %v9098 = vadd.f32 %v6056, %v9097
    %v9099 = vpop.f32.mrb[0].mxu0
    %v9100 = vadd.f32 %v6060, %v9099
    %v9101 = vpop.f32.mrb[0].mxu0
    %v9102 = vpop.f32.mrb[0].mxu0
    %9103 = vdwg.mxu0
    %9104 = vmatprep.subr.bf16.mxu0 %v7896
    %9105 = vmatpush1.bf16.msra.mxu0 %v7895
    %9106 = vmatprep.subr.bf16.mxu0 %v7912
    %9107 = vmatpush1.bf16.msra.mxu0 %v7911
    %9108 = vmatprep.subr.bf16.mxu0 %v7928
    %9109 = vmatpush1.bf16.msra.mxu0 %v7927
    %9110 = vmatprep.subr.bf16.mxu0 %v7944
    %9111 = vmatpush1.bf16.msra.mxu0 %v7943
    %9112 = vmatprep.subr.bf16.mxu0 %v7960
    %9113 = vmatpush1.bf16.msra.mxu0 %v7959
    %9114 = vmatprep.subr.bf16.mxu0 %v7976
    %9115 = vmatpush1.bf16.msra.mxu0 %v7975
    %9116 = vmatprep.subr.bf16.mxu0 %v7992
    %9117 = vmatpush1.bf16.msra.mxu0 %v7991
    %9118 = vmatprep.subr.bf16.mxu0 %v8008
    %9119 = vmatpush1.bf16.msra.mxu0 %v8007
    %9120 = vmatprep.subr.bf16.mxu0 %v8024
    %9121 = vmatpush1.bf16.msra.mxu0 %v8023
    %9122 = vmatprep.subr.bf16.mxu0 %v8040
    %9123 = vmatpush1.bf16.msra.mxu0 %v8039
    %9124 = vmatprep.subr.bf16.mxu0 %v8056
    %9125 = vmatpush1.bf16.msra.mxu0 %v8055
    %9126 = vmatprep.subr.bf16.mxu0 %v8072
    %9127 = vmatpush1.bf16.msra.mxu0 %v8071
    %9128 = vmatprep.subr.bf16.mxu0 %v8088
    %9129 = vmatpush1.bf16.msra.mxu0 %v8087
    %9130 = vmatprep.subr.bf16.mxu0 %v8104
    %9131 = vmatpush1.bf16.msra.mxu0 %v8103
    %9132 = vmatprep.subr.bf16.mxu0 %v8120
    %9133 = vmatpush1.bf16.msra.mxu0 %v8119
    %9134 = vmatprep.subr.bf16.mxu0 %v8136
    %9135 = vmatpush1.bf16.msra.mxu0 %v8135
    %9136 = vmatprep.mubr.bf16.mxu0 %v5496
    %9137 = vmatmul.mubr.bf16.gmra.mrb[0].mxu0 %v5495
    %v9138 = vpop.f32.mrb[0].mxu0
    %v9139 = vadd.f32 %v9098, %v9138
    %v9140 = vpop.f32.mrb[0].mxu0
    %v9141 = vadd.f32 %v9100, %v9140
    %v9142 = vpop.f32.mrb[0].mxu0
    %v9143 = vpop.f32.mrb[0].mxu0
    %9144 = vdwg.mxu0
    %9145 = vmatprep.subr.bf16.mxu0 %v7642
    %9146 = vmatpush1.bf16.msra.mxu0 %v7641
    %9147 = vmatprep.subr.bf16.mxu0 %v7658
    %9148 = vmatpush1.bf16.msra.mxu0 %v7657
    %9149 = vmatprep.subr.bf16.mxu0 %v7674
    %9150 = vmatpush1.bf16.msra.mxu0 %v7673
    %9151 = vmatprep.subr.bf16.mxu0 %v7690
    %9152 = vmatpush1.bf16.msra.mxu0 %v7689
    %9153 = vmatprep.subr.bf16.mxu0 %v7706
    %9154 = vmatpush1.bf16.msra.mxu0 %v7705
    %9155 = vmatprep.subr.bf16.mxu0 %v7722
    %9156 = vmatpush1.bf16.msra.mxu0 %v7721
    %9157 = vmatprep.subr.bf16.mxu0 %v7738
    %9158 = vmatpush1.bf16.msra.mxu0 %v7737
    %9159 = vmatprep.subr.bf16.mxu0 %v7754
    %9160 = vmatpush1.bf16.msra.mxu0 %v7753
    %9161 = vmatprep.subr.bf16.mxu0 %v7770
    %9162 = vmatpush1.bf16.msra.mxu0 %v7769
    %9163 = vmatprep.subr.bf16.mxu0 %v7786
    %9164 = vmatpush1.bf16.msra.mxu0 %v7785
    %9165 = vmatprep.subr.bf16.mxu0 %v7802
    %9166 = vmatpush1.bf16.msra.mxu0 %v7801
    %9167 = vmatprep.subr.bf16.mxu0 %v7818
    %9168 = vmatpush1.bf16.msra.mxu0 %v7817
    %9169 = vmatprep.subr.bf16.mxu0 %v7834
    %9170 = vmatpush1.bf16.msra.mxu0 %v7833
    %9171 = vmatprep.subr.bf16.mxu0 %v7850
    %9172 = vmatpush1.bf16.msra.mxu0 %v7849
    %9173 = vmatprep.subr.bf16.mxu0 %v7866
    %9174 = vmatpush1.bf16.msra.mxu0 %v7865
    %9175 = vmatprep.subr.bf16.mxu0 %v7882
    %9176 = vmatpush1.bf16.msra.mxu0 %v7881
    %9177 = vmatprep.mubr.bf16.mxu0 %v5494
    %9178 = vmatmul.mubr.bf16.gmra.mrb[0].mxu0 %v5493
    %v9179 = vpop.f32.mrb[0].mxu0
    %v9180 = vadd.f32 %v6064, %v9179
    %v9181 = vpop.f32.mrb[0].mxu0
    %v9182 = vadd.f32 %v6068, %v9181
    %v9183 = vpop.f32.mrb[0].mxu0
    %v9184 = vpop.f32.mrb[0].mxu0
    %9185 = vdwg.mxu0
    %9186 = vmatprep.subr.bf16.mxu0 %v7898
    %9187 = vmatpush1.bf16.msra.mxu0 %v7897
    %9188 = vmatprep.subr.bf16.mxu0 %v7914
    %9189 = vmatpush1.bf16.msra.mxu0 %v7913
    %9190 = vmatprep.subr.bf16.mxu0 %v7930
    %9191 = vmatpush1.bf16.msra.mxu0 %v7929
    %9192 = vmatprep.subr.bf16.mxu0 %v7946
    %9193 = vmatpush1.bf16.msra.mxu0 %v7945
    %9194 = vmatprep.subr.bf16.mxu0 %v7962
    %9195 = vmatpush1.bf16.msra.mxu0 %v7961
    %9196 = vmatprep.subr.bf16.mxu0 %v7978
    %9197 = vmatpush1.bf16.msra.mxu0 %v7977
    %9198 = vmatprep.subr.bf16.mxu0 %v7994
    %9199 = vmatpush1.bf16.msra.mxu0 %v7993
    %9200 = vmatprep.subr.bf16.mxu0 %v8010
    %9201 = vmatpush1.bf16.msra.mxu0 %v8009
    %9202 = vmatprep.subr.bf16.mxu0 %v8026
    %9203 = vmatpush1.bf16.msra.mxu0 %v8025
    %9204 = vmatprep.subr.bf16.mxu0 %v8042
    %9205 = vmatpush1.bf16.msra.mxu0 %v8041
    %9206 = vmatprep.subr.bf16.mxu0 %v8058
    %9207 = vmatpush1.bf16.msra.mxu0 %v8057
    %9208 = vmatprep.subr.bf16.mxu0 %v8074
    %9209 = vmatpush1.bf16.msra.mxu0 %v8073
    %9210 = vmatprep.subr.bf16.mxu0 %v8090
    %9211 = vmatpush1.bf16.msra.mxu0 %v8089
    %9212 = vmatprep.subr.bf16.mxu0 %v8106
    %9213 = vmatpush1.bf16.msra.mxu0 %v8105
    %9214 = vmatprep.subr.bf16.mxu0 %v8122
    %9215 = vmatpush1.bf16.msra.mxu0 %v8121
    %9216 = vmatprep.subr.bf16.mxu0 %v8138
    %9217 = vmatpush1.bf16.msra.mxu0 %v8137
    %9218 = vmatprep.mubr.bf16.mxu0 %v5496
    %9219 = vmatmul.mubr.bf16.gmra.mrb[0].mxu0 %v5495
    %v9220 = vpop.f32.mrb[0].mxu0
    %v9221 = vadd.f32 %v9180, %v9220
    %v9222 = vpop.f32.mrb[0].mxu0
    %v9223 = vadd.f32 %v9182, %v9222
    %v9224 = vpop.f32.mrb[0].mxu0
    %v9225 = vpop.f32.mrb[0].mxu0
    %9226 = vdwg.mxu0
    %9227 = vmatprep.subr.bf16.mxu0 %v7644
    %9228 = vmatpush1.bf16.msra.mxu0 %v7643
    %9229 = vmatprep.subr.bf16.mxu0 %v7660
    %9230 = vmatpush1.bf16.msra.mxu0 %v7659
    %9231 = vmatprep.subr.bf16.mxu0 %v7676
    %9232 = vmatpush1.bf16.msra.mxu0 %v7675
    %9233 = vmatprep.subr.bf16.mxu0 %v7692
    %9234 = vmatpush1.bf16.msra.mxu0 %v7691
    %9235 = vmatprep.subr.bf16.mxu0 %v7708
    %9236 = vmatpush1.bf16.msra.mxu0 %v7707
    %9237 = vmatprep.subr.bf16.mxu0 %v7724
    %9238 = vmatpush1.bf16.msra.mxu0 %v7723
    %9239 = vmatprep.subr.bf16.mxu0 %v7740
    %9240 = vmatpush1.bf16.msra.mxu0 %v7739
    %9241 = vmatprep.subr.bf16.mxu0 %v7756
    %9242 = vmatpush1.bf16.msra.mxu0 %v7755
    %9243 = vmatprep.subr.bf16.mxu0 %v7772
    %9244 = vmatpush1.bf16.msra.mxu0 %v7771
    %9245 = vmatprep.subr.bf16.mxu0 %v7788
    %9246 = vmatpush1.bf16.msra.mxu0 %v7787
    %9247 = vmatprep.subr.bf16.mxu0 %v7804
    %9248 = vmatpush1.bf16.msra.mxu0 %v7803
    %9249 = vmatprep.subr.bf16.mxu0 %v7820
    %9250 = vmatpush1.bf16.msra.mxu0 %v7819
    %9251 = vmatprep.subr.bf16.mxu0 %v7836
    %9252 = vmatpush1.bf16.msra.mxu0 %v7835
    %9253 = vmatprep.subr.bf16.mxu0 %v7852
    %9254 = vmatpush1.bf16.msra.mxu0 %v7851
    %9255 = vmatprep.subr.bf16.mxu0 %v7868
    %9256 = vmatpush1.bf16.msra.mxu0 %v7867
    %9257 = vmatprep.subr.bf16.mxu0 %v7884
    %9258 = vmatpush1.bf16.msra.mxu0 %v7883
    %9259 = vmatprep.mubr.bf16.mxu0 %v5494
    %9260 = vmatmul.mubr.bf16.gmra.mrb[0].mxu0 %v5493
    %v9261 = vpop.f32.mrb[0].mxu0
    %v9262 = vadd.f32 %v6072, %v9261
    %v9263 = vpop.f32.mrb[0].mxu0
    %v9264 = vadd.f32 %v6076, %v9263
    %v9265 = vpop.f32.mrb[0].mxu0
    %v9266 = vpop.f32.mrb[0].mxu0
    %9267 = vdwg.mxu0
    %9268 = vmatprep.subr.bf16.mxu0 %v7900
    %9269 = vmatpush1.bf16.msra.mxu0 %v7899
    %9270 = vmatprep.subr.bf16.mxu0 %v7916
    %9271 = vmatpush1.bf16.msra.mxu0 %v7915
    %9272 = vmatprep.subr.bf16.mxu0 %v7932
    %9273 = vmatpush1.bf16.msra.mxu0 %v7931
    %9274 = vmatprep.subr.bf16.mxu0 %v7948
    %9275 = vmatpush1.bf16.msra.mxu0 %v7947
    %9276 = vmatprep.subr.bf16.mxu0 %v7964
    %9277 = vmatpush1.bf16.msra.mxu0 %v7963
    %9278 = vmatprep.subr.bf16.mxu0 %v7980
    %9279 = vmatpush1.bf16.msra.mxu0 %v7979
    %9280 = vmatprep.subr.bf16.mxu0 %v7996
    %9281 = vmatpush1.bf16.msra.mxu0 %v7995
    %9282 = vmatprep.subr.bf16.mxu0 %v8012
    %9283 = vmatpush1.bf16.msra.mxu0 %v8011
    %9284 = vmatprep.subr.bf16.mxu0 %v8028
    %9285 = vmatpush1.bf16.msra.mxu0 %v8027
    %9286 = vmatprep.subr.bf16.mxu0 %v8044
    %9287 = vmatpush1.bf16.msra.mxu0 %v8043
    %9288 = vmatprep.subr.bf16.mxu0 %v8060
    %9289 = vmatpush1.bf16.msra.mxu0 %v8059
    %9290 = vmatprep.subr.bf16.mxu0 %v8076
    %9291 = vmatpush1.bf16.msra.mxu0 %v8075
    %9292 = vmatprep.subr.bf16.mxu0 %v8092
    %9293 = vmatpush1.bf16.msra.mxu0 %v8091
    %9294 = vmatprep.subr.bf16.mxu0 %v8108
    %9295 = vmatpush1.bf16.msra.mxu0 %v8107
    %9296 = vmatprep.subr.bf16.mxu0 %v8124
    %9297 = vmatpush1.bf16.msra.mxu0 %v8123
    %9298 = vmatprep.subr.bf16.mxu0 %v8140
    %9299 = vmatpush1.bf16.msra.mxu0 %v8139
    %9300 = vmatprep.mubr.bf16.mxu0 %v5496
    %9301 = vmatmul.mubr.bf16.gmra.mrb[0].mxu0 %v5495
    %v9302 = vpop.f32.mrb[0].mxu0
    %v9303 = vadd.f32 %v9262, %v9302
    %v9304 = vpop.f32.mrb[0].mxu0
    %v9305 = vadd.f32 %v9264, %v9304
    %v9306 = vpop.f32.mrb[0].mxu0
    %v9307 = vpop.f32.mrb[0].mxu0
    %9308 = vdwg.mxu0
    %9309 = vst [vmem:[#allocation17] sm:$0xff] %v8729
    %9310 = vst [vmem:[#allocation17 + $0x8] sm:$0xff] %v8731
    %9311 = vst [vmem:[#allocation17 + $0x10] sm:$0xff] %v8811
    %9312 = vst [vmem:[#allocation17 + $0x18] sm:$0xff] %v8813
    %9313 = vst [vmem:[#allocation17 + $0x20] sm:$0xff] %v8893
    %9314 = vst [vmem:[#allocation17 + $0x28] sm:$0xff] %v8895
    %9315 = vst [vmem:[#allocation17 + $0x30] sm:$0xff] %v8975
    %9316 = vst [vmem:[#allocation17 + $0x38] sm:$0xff] %v8977
    %9317 = vst [vmem:[#allocation17 + $0x40] sm:$0xff] %v9057
    %9318 = vst [vmem:[#allocation17 + $0x48] sm:$0xff] %v9059
    %9319 = vst [vmem:[#allocation17 + $0x50] sm:$0xff] %v9139
    %9320 = vst [vmem:[#allocation17 + $0x58] sm:$0xff] %v9141
    %9321 = vst [vmem:[#allocation17 + $0x60] sm:$0xff] %v9221
    %9322 = vst [vmem:[#allocation17 + $0x68] sm:$0xff] %v9223
    %9323 = vst [vmem:[#allocation17 + $0x70] sm:$0xff] %v9303
    %9324 = vst [vmem:[#allocation17 + $0x78] sm:$0xff] %v9305
    // Predicated region
    $region74: #{_decoder_impl.1} parent=1 // pred_check
      _
    $region75: #{_decoder_impl.1} parent=1 // pred_check_branch
      %9326 = sbr.rel (0) target = $region77
    $region76: #{_decoder_impl.1} parent=1 // pred_region
      %s9328 = ssub.s32 2048, 2048
      %9329 = vsyncadd [#allocation4], %s9328
      %s9331 = sshll.u32 [#allocation17], 4
      %s9332 = int_to_ptr.vmem [resolvable:$true] %s9331
      %9334 = dma.vmem_to_hbm [thread:$0]  %s9332, 2048, %s9, [#allocation4]
    $region77: #{_decoder_impl.1} parent=1 // pred_fallthru
      _
    // Predicated region
    $region78: #{_decoder_impl.1} parent=1 // pred_check
      _
    $region79: #{_decoder_impl.1} parent=1 // pred_check_branch
      %9336 = sbr.rel (0) target = $region81
    $region80: #{_decoder_impl.1} parent=1 // pred_region
      %9337 = dma.done [#allocation4], 2048
    $region81: #{_decoder_impl.1} parent=1 // pred_fallthru
      _
    %9338 = vsyncpa [#allocation3], 1
    %9339 = vsyncpa [#allocation6], 1
    %9340 = vsyncpa [#allocation9], 1
    %9341 = vsyncpa [#allocation12], 1
    %9342 = vsyncpa [#allocation15], 1
    %9343 = vsyncpa [#allocation4], 1

</llo_original>
